<compile_context>
chip_gen: v7x
topology: tpu7x:2x2x1
jax: 0.10.0
libtpu: 0.0.40
codegen_flags: <defaults>
</compile_context>

<pallas_src>
import functools

import jax
import jax.numpy as jnp
from jax.experimental import pallas as pl
from jax.experimental.pallas import tpu as pltpu

INPUT_SIZE = 4
HIDDEN = 32
NUM_LAYERS = 2
NUM_DIRS = 2
OUTPUT_SIZE = 919
OUTPUT_PAD = 1024          # next multiple of 128 -> lane-dense output tile
SEQ_LEN = 8
BATCH = 2


# ----------------------------------------------------------------------------
# Pallas kernel
# ----------------------------------------------------------------------------
def _lstm_cell(gx, h, c, whh):
    """One LSTM step. gx = x@W_ih + b (precomputed, (B,4H)); whh = W_hh^T (H,4H)."""
    H = HIDDEN
    gates = gx + jnp.dot(h, whh, preferred_element_type=jnp.float32)      # (B, 4H)
    # PyTorch gate order: i, f, g, o
    i = jax.nn.sigmoid(gates[:, 0 * H:1 * H])
    f = jax.nn.sigmoid(gates[:, 1 * H:2 * H])
    g = jnp.tanh(gates[:, 2 * H:3 * H])
    o = jax.nn.sigmoid(gates[:, 3 * H:4 * H])
    c_new = f * c + i * g
    h_new = o * jnp.tanh(c_new)
    return h_new, c_new


def _fused_rnn_kernel(x_ref,
                      w0_ref, b0_ref, whh0f_ref, whh0b_ref,
                      w1_ref, b1_ref, whh1f_ref, whh1b_ref,
                      fcw_ref, fcb_ref,
                      out_ref,
                      seqf_ref, seqb_ref,
                      *, seq_len, batch):
    T, B, H = seq_len, batch, HIDDEN
    G = 4 * H                                         # 128 gate lanes per direction

    x = x_ref[...]                                    # (T*B, D), time-major rows

    # ---- layer 0: both directions' input projections in ONE hoisted dot ----
    gx0 = jnp.dot(x, w0_ref[...], preferred_element_type=jnp.float32) + b0_ref[...]
    gx0f = gx0[:, :G]                                 # 128-aligned lane slices (free)
    gx0b = gx0[:, G:]

    whh0f = whh0f_ref[...]
    whh0b = whh0b_ref[...]
    zero = jnp.zeros((B, H), jnp.float32)
    hf, cf, hb, cb = zero, zero, zero, zero
    # Fully unrolled time loop; fwd and bwd interleaved (independent chains overlap).
    # Layer-0 hidden sequences are streamed to VMEM scratch (off the recurrent chain).
    for t in range(T):
        tb = T - 1 - t                                # reverse direction: index math, no flip
        hf, cf = _lstm_cell(gx0f[t * B:(t + 1) * B, :], hf, cf, whh0f)
        hb, cb = _lstm_cell(gx0b[tb * B:(tb + 1) * B, :], hb, cb, whh0b)
        seqf_ref[t * B:(t + 1) * B, :] = hf
        seqb_ref[tb * B:(tb + 1) * B, :] = hb
    h0f, h0b = hf, hb                                 # PyTorch h_n[0], h_n[1]

    # ---- layer 1: time-batched input projections (2 dots total, off the chain) ----
    # Layer-1 input is concat(fwd, bwd) along features; instead of a lane concat,
    # split the packed W_ih into its fwd/bwd row halves and sum two dots.
    seq_f_all = seqf_ref[...]                         # (T*B, H)
    seq_b_all = seqb_ref[...]                         # (T*B, H)
    gx1 = (jnp.dot(seq_f_all, w1_ref[0:H, :], preferred_element_type=jnp.float32)
           + jnp.dot(seq_b_all, w1_ref[H:2 * H, :], preferred_element_type=jnp.float32)
           + b1_ref[...])                             # (T*B, 8H)
    gx1f = gx1[:, :G]
    gx1b = gx1[:, G:]

    whh1f = whh1f_ref[...]
    whh1b = whh1b_ref[...]
    hf, cf, hb, cb = zero, zero, zero, zero
    for t in range(T):
        tb = T - 1 - t
        hf, cf = _lstm_cell(gx1f[t * B:(t + 1) * B, :], hf, cf, whh1f)
        hb, cb = _lstm_cell(gx1b[tb * B:(tb + 1) * B, :], hb, cb, whh1b)
    h1f, h1b = hf, hb                                 # PyTorch h_n[2], h_n[3]

    # ---- FC head: concat([h0f,h0b,h1f,h1b]) @ W_fc^T + b, expressed as 4
    # 8-aligned row-block dots against the padded weight (avoids a lane concat).
    out = (jnp.dot(h0f, fcw_ref[0 * H:1 * H, :], preferred_element_type=jnp.float32)
           + jnp.dot(h0b, fcw_ref[1 * H:2 * H, :], preferred_element_type=jnp.float32)
           + jnp.dot(h1f, fcw_ref[2 * H:3 * H, :], preferred_element_type=jnp.float32)
           + jnp.dot(h1b, fcw_ref[3 * H:4 * H, :], preferred_element_type=jnp.float32)
           + fcb_ref[...])
    out_ref[...] = out


# ----------------------------------------------------------------------------
# Wrapper
# ----------------------------------------------------------------------------
def rnn_forward(x, params):
    """x: (T, B, input_size) -> (B, OUTPUT_SIZE)."""
    T, B, D = x.shape
    x2d = x.reshape(T * B, D)                         # time-major rows, reshaped outside kernel

    args = (x2d,
            params["w0"], params["b0"], params["whh0f"], params["whh0b"],
            params["w1"], params["b1"], params["whh1f"], params["whh1b"],
            params["fc_w"], params["fc_b"])

    def _full_spec(a):
        nd = a.ndim
        return pl.BlockSpec(a.shape, lambda i, _nd=nd: (0,) * _nd)

    kernel = functools.partial(_fused_rnn_kernel, seq_len=T, batch=B)
    out_padded = pl.pallas_call(
        kernel,
        out_shape=jax.ShapeDtypeStruct((B, OUTPUT_PAD), jnp.float32),
        grid=(1,),
        in_specs=[_full_spec(a) for a in args],
        out_specs=pl.BlockSpec((B, OUTPUT_PAD), lambda i: (0, 0)),
        scratch_shapes=[pltpu.VMEM((T * B, HIDDEN), jnp.float32),   # layer-0 fwd hiddens
                        pltpu.VMEM((T * B, HIDDEN), jnp.float32)],  # layer-0 bwd hiddens
        compiler_params=pltpu.CompilerParams(
            dimension_semantics=("arbitrary",)),
    )(*args)
    # TODO(synk): training-mode dropout (nn.Dropout + inter-layer LSTM dropout)
    # is not implemented; eval-mode identity semantics are used.
    return out_padded[:, :OUTPUT_SIZE]


# ----------------------------------------------------------------------------
# Parameter init (deterministic, PyTorch-style uniform(-1/sqrt(H), 1/sqrt(H)))
# Weights are packed for the kernel:
#   w{L}   : (in_dim, 8H)  = [W_ih(L,fwd)^T | W_ih(L,bwd)^T]   lane-concat
#   b{L}   : (1, 8H)       = [b_ih+b_hh (fwd) | b_ih+b_hh (bwd)]
#   whh{L}{f,b} : (H, 4H)  = W_hh^T per direction
#   fc_w   : (4H, 1024)    = W_fc^T zero-padded 919 -> 1024;  fc_b : (1, 1024)
# ----------------------------------------------------------------------------
def init_params(key):
    H = HIDDEN
    k = 1.0 / float(jnp.sqrt(H))
    keys = jax.random.split(key, NUM_LAYERS * NUM_DIRS * 4 + 2)
    idx = 0
    raw = {}
    for layer in range(NUM_LAYERS):
        in_dim = INPUT_SIZE if layer == 0 else NUM_DIRS * H
        for d in range(NUM_DIRS):
            w_ih = jax.random.uniform(keys[idx], (4 * H, in_dim),
                                      minval=-k, maxval=k); idx += 1
            w_hh = jax.random.uniform(keys[idx], (4 * H, H),
                                      minval=-k, maxval=k); idx += 1
            b_ih = jax.random.uniform(keys[idx], (4 * H,),
                                      minval=-k, maxval=k); idx += 1
            b_hh = jax.random.uniform(keys[idx], (4 * H,),
                                      minval=-k, maxval=k); idx += 1
            raw[(layer, d)] = (w_ih, w_hh, b_ih, b_hh)

    def pack_layer(layer):
        w_f, whh_f, bif, bhf = raw[(layer, 0)]
        w_b, whh_b, bib, bhb = raw[(layer, 1)]
        w = jnp.concatenate([w_f.T, w_b.T], axis=1)                   # (in_dim, 8H)
        b = jnp.concatenate([bif + bhf, bib + bhb])[None, :]          # (1, 8H)
        return w, b, whh_f.T, whh_b.T

    w0, b0, whh0f, whh0b = pack_layer(0)
    w1, b1, whh1f, whh1b = pack_layer(1)

    feat = H * NUM_LAYERS * NUM_DIRS
    kf = 1.0 / float(jnp.sqrt(feat))
    fc_w = jax.random.uniform(keys[idx], (OUTPUT_SIZE, feat),
                              minval=-kf, maxval=kf); idx += 1
    fc_b = jax.random.uniform(keys[idx], (OUTPUT_SIZE,),
                              minval=-kf, maxval=kf)
    fc_w_t = jnp.zeros((feat, OUTPUT_PAD), jnp.float32).at[:, :OUTPUT_SIZE].set(fc_w.T)
    fc_b_p = jnp.zeros((1, OUTPUT_PAD), jnp.float32).at[0, :OUTPUT_SIZE].set(fc_b)

    return {"w0": w0, "b0": b0, "whh0f": whh0f, "whh0b": whh0b,
            "w1": w1, "b1": b1, "whh1f": whh1f, "whh1b": whh1b,
            "fc_w": fc_w_t, "fc_b": fc_b_p}


# ----------------------------------------------------------------------------
# Pure-JAX reference (same packed params, HIGHEST-precision dots) for validation
# ----------------------------------------------------------------------------
def rnn_reference(x, params):
    T, B, _ = x.shape
    H = HIDDEN
    G = 4 * H
    hp = jax.lax.Precision.HIGHEST

    def cell(gx, h, c, whh):
        gates = gx + jnp.dot(h, whh, precision=hp)
        i = jax.nn.sigmoid(gates[:, 0 * H:1 * H])
        f = jax.nn.sigmoid(gates[:, 1 * H:2 * H])
        g = jnp.tanh(gates[:, 2 * H:3 * H])
        o = jax.nn.sigmoid(gates[:, 3 * H:4 * H])
        c = f * c + i * g
        return o * jnp.tanh(c), c

    def run_layer(inp, w, b, whhf, whhb):
        gx = jnp.einsum("tbf,fg->tbg", inp, w, precision=hp) + b       # (T,B,8H)
        gxf, gxb = gx[..., :G], gx[..., G:]
        zero = jnp.zeros((B, H), jnp.float32)
        hf, cf, hb, cb = zero, zero, zero, zero
        outs_f, outs_b = [None] * T, [None] * T
        for t in range(T):
            hf, cf = cell(gxf[t], hf, cf, whhf)
            outs_f[t] = hf
        for t in reversed(range(T)):
            hb, cb = cell(gxb[t], hb, cb, whhb)
            outs_b[t] = hb
        out = jnp.concatenate([jnp.stack(outs_f), jnp.stack(outs_b)], axis=-1)
        return out, hf, hb

    out0, h0f, h0b = run_layer(x, params["w0"], params["b0"],
                               params["whh0f"], params["whh0b"])
    _, h1f, h1b = run_layer(out0, params["w1"], params["b1"],
                            params["whh1f"], params["whh1b"])
    feat = jnp.concatenate([h0f, h0b, h1f, h1b], axis=1)               # (B, 4H)
    out = jnp.dot(feat, params["fc_w"], precision=hp) + params["fc_b"]
    return out[:, :OUTPUT_SIZE]


if __name__ == "__main__":
    key = jax.random.PRNGKey(0)
    pkey, xkey = jax.random.split(key)
    params = init_params(pkey)
    x = jax.random.normal(xkey, (SEQ_LEN, BATCH, INPUT_SIZE), dtype=jnp.float32)

    out = jax.block_until_ready(rnn_forward(x, params))
    assert out.shape == (BATCH, OUTPUT_SIZE), out.shape

    ref = jax.block_until_ready(rnn_reference(x, params))
    err = float(jnp.max(jnp.abs(out - ref)))
    assert err < 2e-2, f"max |kernel - reference| = {err}"

    print("KERNEL_OK")
</pallas_src>

<mosaic_0001>
module attributes {stable_mosaic.version = 11 : i64} {
  func.func @_fused_rnn_kernel(%arg0: i32, %arg1: memref<16x4xf32, #tpu.memory_space<vmem>>, %arg2: memref<4x256xf32, #tpu.memory_space<vmem>>, %arg3: memref<1x256xf32, #tpu.memory_space<vmem>>, %arg4: memref<32x128xf32, #tpu.memory_space<vmem>>, %arg5: memref<32x128xf32, #tpu.memory_space<vmem>>, %arg6: memref<64x256xf32, #tpu.memory_space<vmem>>, %arg7: memref<1x256xf32, #tpu.memory_space<vmem>>, %arg8: memref<32x128xf32, #tpu.memory_space<vmem>>, %arg9: memref<32x128xf32, #tpu.memory_space<vmem>>, %arg10: memref<128x1024xf32, #tpu.memory_space<vmem>>, %arg11: memref<1x1024xf32, #tpu.memory_space<vmem>>, %arg12: memref<2x1024xf32, #tpu.memory_space<vmem>>, %arg13: memref<16x32xf32, #tpu.memory_space<vmem>>, %arg14: memref<16x32xf32, #tpu.memory_space<vmem>>) attributes {dimension_semantics = [#tpu.dimension_semantics<arbitrary>], iteration_bounds = array<i64: 1>, scalar_prefetch = 0 : i64, scratch_operands = 2 : i64, tpu.core_type = #tpu.core_type<tc>, window_params = [{pipeline_mode = #tpu.pipeline_mode<synchronous>, transform_indices = @transform_0, window_bounds = array<i64: 16, 4>}, {pipeline_mode = #tpu.pipeline_mode<synchronous>, transform_indices = @transform_1, window_bounds = array<i64: 4, 256>}, {pipeline_mode = #tpu.pipeline_mode<synchronous>, transform_indices = @transform_2, window_bounds = array<i64: 1, 256>}, {pipeline_mode = #tpu.pipeline_mode<synchronous>, transform_indices = @transform_3, window_bounds = array<i64: 32, 128>}, {pipeline_mode = #tpu.pipeline_mode<synchronous>, transform_indices = @transform_4, window_bounds = array<i64: 32, 128>}, {pipeline_mode = #tpu.pipeline_mode<synchronous>, transform_indices = @transform_5, window_bounds = array<i64: 64, 256>}, {pipeline_mode = #tpu.pipeline_mode<synchronous>, transform_indices = @transform_6, window_bounds = array<i64: 1, 256>}, {pipeline_mode = #tpu.pipeline_mode<synchronous>, transform_indices = @transform_7, window_bounds = array<i64: 32, 128>}, {pipeline_mode = #tpu.pipeline_mode<synchronous>, transform_indices = @transform_8, window_bounds = array<i64: 32, 128>}, {pipeline_mode = #tpu.pipeline_mode<synchronous>, transform_indices = @transform_9, window_bounds = array<i64: 128, 1024>}, {pipeline_mode = #tpu.pipeline_mode<synchronous>, transform_indices = @transform_10, window_bounds = array<i64: 1, 1024>}, {pipeline_mode = #tpu.pipeline_mode<synchronous>, transform_indices = @transform_11, window_bounds = array<i64: 2, 1024>}]} {
    %c0 = arith.constant 0 : index
    %c0_0 = arith.constant 0 : index
    %0 = vector.load %arg1[%c0, %c0_0] : memref<16x4xf32, #tpu.memory_space<vmem>>, vector<16x4xf32>
    %c0_1 = arith.constant 0 : index
    %c0_2 = arith.constant 0 : index
    %1 = vector.load %arg2[%c0_1, %c0_2] : memref<4x256xf32, #tpu.memory_space<vmem>>, vector<4x256xf32>
    %cst = arith.constant dense<0.000000e+00> : vector<16x256xf32>
    %2 = tpu.matmul %0, %1, %cst {dimension_numbers = #tpu.dot_dimension_numbers<[1], [0], [0], [1], [0, 0, 1, 1], [], []>} : vector<16x4xf32>, vector<4x256xf32>, vector<16x256xf32> -> vector<16x256xf32>
    %c0_3 = arith.constant 0 : index
    %c0_4 = arith.constant 0 : index
    %3 = vector.load %arg3[%c0_3, %c0_4] : memref<1x256xf32, #tpu.memory_space<vmem>>, vector<1x256xf32>
    %4 = vector.broadcast %3 : vector<1x256xf32> to vector<16x256xf32>
    %5 = arith.addf %2, %4 : vector<16x256xf32>
    %6 = vector.extract_strided_slice %5 {offsets = [0, 0], sizes = [16, 128], strides = [1, 1]} : vector<16x256xf32> to vector<16x128xf32>
    %7 = vector.extract_strided_slice %5 {offsets = [0, 128], sizes = [16, 128], strides = [1, 1]} : vector<16x256xf32> to vector<16x128xf32>
    %c0_5 = arith.constant 0 : index
    %c0_6 = arith.constant 0 : index
    %8 = vector.load %arg4[%c0_5, %c0_6] : memref<32x128xf32, #tpu.memory_space<vmem>>, vector<32x128xf32>
    %c0_7 = arith.constant 0 : index
    %c0_8 = arith.constant 0 : index
    %9 = vector.load %arg5[%c0_7, %c0_8] : memref<32x128xf32, #tpu.memory_space<vmem>>, vector<32x128xf32>
    %cst_9 = arith.constant 0.000000e+00 : f32
    %10 = vector.broadcast %cst_9 : f32 to vector<2x32xf32>
    %11 = vector.extract_strided_slice %6 {offsets = [0, 0], sizes = [2, 128], strides = [1, 1]} : vector<16x128xf32> to vector<2x128xf32>
    %cst_10 = arith.constant dense<0.000000e+00> : vector<2x128xf32>
    %12 = tpu.matmul %10, %8, %cst_10 {dimension_numbers = #tpu.dot_dimension_numbers<[1], [0], [0], [1], [0, 0, 1, 1], [], []>} : vector<2x32xf32>, vector<32x128xf32>, vector<2x128xf32> -> vector<2x128xf32>
    %13 = arith.addf %11, %12 : vector<2x128xf32>
    %14 = vector.extract_strided_slice %13 {offsets = [0, 0], sizes = [2, 32], strides = [1, 1]} : vector<2x128xf32> to vector<2x32xf32>
    %15 = arith.negf %14 : vector<2x32xf32>
    %16 = math.exp %15 : vector<2x32xf32>
    %cst_11 = arith.constant 1.000000e+00 : f32
    %17 = vector.broadcast %cst_11 : f32 to vector<2x32xf32>
    %18 = arith.addf %17, %16 : vector<2x32xf32>
    %19 = arith.divf %17, %18 : vector<2x32xf32>
    %20 = vector.extract_strided_slice %13 {offsets = [0, 32], sizes = [2, 32], strides = [1, 1]} : vector<2x128xf32> to vector<2x32xf32>
    %21 = arith.negf %20 : vector<2x32xf32>
    %22 = math.exp %21 : vector<2x32xf32>
    %cst_12 = arith.constant 1.000000e+00 : f32
    %23 = vector.broadcast %cst_12 : f32 to vector<2x32xf32>
    %24 = arith.addf %23, %22 : vector<2x32xf32>
    %25 = arith.divf %23, %24 : vector<2x32xf32>
    %26 = vector.extract_strided_slice %13 {offsets = [0, 64], sizes = [2, 32], strides = [1, 1]} : vector<2x128xf32> to vector<2x32xf32>
    %27 = math.tanh %26 : vector<2x32xf32>
    %28 = vector.extract_strided_slice %13 {offsets = [0, 96], sizes = [2, 32], strides = [1, 1]} : vector<2x128xf32> to vector<2x32xf32>
    %29 = arith.negf %28 : vector<2x32xf32>
    %30 = math.exp %29 : vector<2x32xf32>
    %cst_13 = arith.constant 1.000000e+00 : f32
    %31 = vector.broadcast %cst_13 : f32 to vector<2x32xf32>
    %32 = arith.addf %31, %30 : vector<2x32xf32>
    %33 = arith.divf %31, %32 : vector<2x32xf32>
    %34 = arith.mulf %25, %10 : vector<2x32xf32>
    %35 = arith.mulf %19, %27 : vector<2x32xf32>
    %36 = arith.addf %34, %35 : vector<2x32xf32>
    %37 = math.tanh %36 : vector<2x32xf32>
    %38 = arith.mulf %33, %37 : vector<2x32xf32>
    %39 = vector.extract_strided_slice %7 {offsets = [14, 0], sizes = [2, 128], strides = [1, 1]} : vector<16x128xf32> to vector<2x128xf32>
    %cst_14 = arith.constant dense<0.000000e+00> : vector<2x128xf32>
    %40 = tpu.matmul %10, %9, %cst_14 {dimension_numbers = #tpu.dot_dimension_numbers<[1], [0], [0], [1], [0, 0, 1, 1], [], []>} : vector<2x32xf32>, vector<32x128xf32>, vector<2x128xf32> -> vector<2x128xf32>
    %41 = arith.addf %39, %40 : vector<2x128xf32>
    %42 = vector.extract_strided_slice %41 {offsets = [0, 0], sizes = [2, 32], strides = [1, 1]} : vector<2x128xf32> to vector<2x32xf32>
    %43 = arith.negf %42 : vector<2x32xf32>
    %44 = math.exp %43 : vector<2x32xf32>
    %cst_15 = arith.constant 1.000000e+00 : f32
    %45 = vector.broadcast %cst_15 : f32 to vector<2x32xf32>
    %46 = arith.addf %45, %44 : vector<2x32xf32>
    %47 = arith.divf %45, %46 : vector<2x32xf32>
    %48 = vector.extract_strided_slice %41 {offsets = [0, 32], sizes = [2, 32], strides = [1, 1]} : vector<2x128xf32> to vector<2x32xf32>
    %49 = arith.negf %48 : vector<2x32xf32>
    %50 = math.exp %49 : vector<2x32xf32>
    %cst_16 = arith.constant 1.000000e+00 : f32
    %51 = vector.broadcast %cst_16 : f32 to vector<2x32xf32>
    %52 = arith.addf %51, %50 : vector<2x32xf32>
    %53 = arith.divf %51, %52 : vector<2x32xf32>
    %54 = vector.extract_strided_slice %41 {offsets = [0, 64], sizes = [2, 32], strides = [1, 1]} : vector<2x128xf32> to vector<2x32xf32>
    %55 = math.tanh %54 : vector<2x32xf32>
    %56 = vector.extract_strided_slice %41 {offsets = [0, 96], sizes = [2, 32], strides = [1, 1]} : vector<2x128xf32> to vector<2x32xf32>
    %57 = arith.negf %56 : vector<2x32xf32>
    %58 = math.exp %57 : vector<2x32xf32>
    %cst_17 = arith.constant 1.000000e+00 : f32
    %59 = vector.broadcast %cst_17 : f32 to vector<2x32xf32>
    %60 = arith.addf %59, %58 : vector<2x32xf32>
    %61 = arith.divf %59, %60 : vector<2x32xf32>
    %62 = arith.mulf %53, %10 : vector<2x32xf32>
    %63 = arith.mulf %47, %55 : vector<2x32xf32>
    %64 = arith.addf %62, %63 : vector<2x32xf32>
    %65 = math.tanh %64 : vector<2x32xf32>
    %66 = arith.mulf %61, %65 : vector<2x32xf32>
    %c0_18 = arith.constant 0 : index
    %c0_19 = arith.constant 0 : index
    %67 = vector.load %arg13[%c0_18, %c0_19] : memref<16x32xf32, #tpu.memory_space<vmem>>, vector<2x32xf32>
    tpu.vector_store %arg13[%c0_18, %c0_19], %38 {strides = array<i32>} : memref<16x32xf32, #tpu.memory_space<vmem>>, vector<2x32xf32>,
    %c14 = arith.constant 14 : index
    %c0_20 = arith.constant 0 : index
    %68 = vector.load %arg14[%c14, %c0_20] : memref<16x32xf32, #tpu.memory_space<vmem>>, vector<2x32xf32>
    tpu.vector_store %arg14[%c14, %c0_20], %66 {strides = array<i32>} : memref<16x32xf32, #tpu.memory_space<vmem>>, vector<2x32xf32>,
    %69 = vector.extract_strided_slice %6 {offsets = [2, 0], sizes = [2, 128], strides = [1, 1]} : vector<16x128xf32> to vector<2x128xf32>
    %cst_21 = arith.constant dense<0.000000e+00> : vector<2x128xf32>
    %70 = tpu.matmul %38, %8, %cst_21 {dimension_numbers = #tpu.dot_dimension_numbers<[1], [0], [0], [1], [0, 0, 1, 1], [], []>} : vector<2x32xf32>, vector<32x128xf32>, vector<2x128xf32> -> vector<2x128xf32>
    %71 = arith.addf %69, %70 : vector<2x128xf32>
    %72 = vector.extract_strided_slice %71 {offsets = [0, 0], sizes = [2, 32], strides = [1, 1]} : vector<2x128xf32> to vector<2x32xf32>
    %73 = arith.negf %72 : vector<2x32xf32>
    %74 = math.exp %73 : vector<2x32xf32>
    %cst_22 = arith.constant 1.000000e+00 : f32
    %75 = vector.broadcast %cst_22 : f32 to vector<2x32xf32>
    %76 = arith.addf %75, %74 : vector<2x32xf32>
    %77 = arith.divf %75, %76 : vector<2x32xf32>
    %78 = vector.extract_strided_slice %71 {offsets = [0, 32], sizes = [2, 32], strides = [1, 1]} : vector<2x128xf32> to vector<2x32xf32>
    %79 = arith.negf %78 : vector<2x32xf32>
    %80 = math.exp %79 : vector<2x32xf32>
    %cst_23 = arith.constant 1.000000e+00 : f32
    %81 = vector.broadcast %cst_23 : f32 to vector<2x32xf32>
    %82 = arith.addf %81, %80 : vector<2x32xf32>
    %83 = arith.divf %81, %82 : vector<2x32xf32>
    %84 = vector.extract_strided_slice %71 {offsets = [0, 64], sizes = [2, 32], strides = [1, 1]} : vector<2x128xf32> to vector<2x32xf32>
    %85 = math.tanh %84 : vector<2x32xf32>
    %86 = vector.extract_strided_slice %71 {offsets = [0, 96], sizes = [2, 32], strides = [1, 1]} : vector<2x128xf32> to vector<2x32xf32>
    %87 = arith.negf %86 : vector<2x32xf32>
    %88 = math.exp %87 : vector<2x32xf32>
    %cst_24 = arith.constant 1.000000e+00 : f32
    %89 = vector.broadcast %cst_24 : f32 to vector<2x32xf32>
    %90 = arith.addf %89, %88 : vector<2x32xf32>
    %91 = arith.divf %89, %90 : vector<2x32xf32>
    %92 = arith.mulf %83, %36 : vector<2x32xf32>
    %93 = arith.mulf %77, %85 : vector<2x32xf32>
    %94 = arith.addf %92, %93 : vector<2x32xf32>
    %95 = math.tanh %94 : vector<2x32xf32>
    %96 = arith.mulf %91, %95 : vector<2x32xf32>
    %97 = vector.extract_strided_slice %7 {offsets = [12, 0], sizes = [2, 128], strides = [1, 1]} : vector<16x128xf32> to vector<2x128xf32>
    %cst_25 = arith.constant dense<0.000000e+00> : vector<2x128xf32>
    %98 = tpu.matmul %66, %9, %cst_25 {dimension_numbers = #tpu.dot_dimension_numbers<[1], [0], [0], [1], [0, 0, 1, 1], [], []>} : vector<2x32xf32>, vector<32x128xf32>, vector<2x128xf32> -> vector<2x128xf32>
    %99 = arith.addf %97, %98 : vector<2x128xf32>
    %100 = vector.extract_strided_slice %99 {offsets = [0, 0], sizes = [2, 32], strides = [1, 1]} : vector<2x128xf32> to vector<2x32xf32>
    %101 = arith.negf %100 : vector<2x32xf32>
    %102 = math.exp %101 : vector<2x32xf32>
    %cst_26 = arith.constant 1.000000e+00 : f32
    %103 = vector.broadcast %cst_26 : f32 to vector<2x32xf32>
    %104 = arith.addf %103, %102 : vector<2x32xf32>
    %105 = arith.divf %103, %104 : vector<2x32xf32>
    %106 = vector.extract_strided_slice %99 {offsets = [0, 32], sizes = [2, 32], strides = [1, 1]} : vector<2x128xf32> to vector<2x32xf32>
    %107 = arith.negf %106 : vector<2x32xf32>
    %108 = math.exp %107 : vector<2x32xf32>
    %cst_27 = arith.constant 1.000000e+00 : f32
    %109 = vector.broadcast %cst_27 : f32 to vector<2x32xf32>
    %110 = arith.addf %109, %108 : vector<2x32xf32>
    %111 = arith.divf %109, %110 : vector<2x32xf32>
    %112 = vector.extract_strided_slice %99 {offsets = [0, 64], sizes = [2, 32], strides = [1, 1]} : vector<2x128xf32> to vector<2x32xf32>
    %113 = math.tanh %112 : vector<2x32xf32>
    %114 = vector.extract_strided_slice %99 {offsets = [0, 96], sizes = [2, 32], strides = [1, 1]} : vector<2x128xf32> to vector<2x32xf32>
    %115 = arith.negf %114 : vector<2x32xf32>
    %116 = math.exp %115 : vector<2x32xf32>
    %cst_28 = arith.constant 1.000000e+00 : f32
    %117 = vector.broadcast %cst_28 : f32 to vector<2x32xf32>
    %118 = arith.addf %117, %116 : vector<2x32xf32>
    %119 = arith.divf %117, %118 : vector<2x32xf32>
    %120 = arith.mulf %111, %64 : vector<2x32xf32>
    %121 = arith.mulf %105, %113 : vector<2x32xf32>
    %122 = arith.addf %120, %121 : vector<2x32xf32>
    %123 = math.tanh %122 : vector<2x32xf32>
    %124 = arith.mulf %119, %123 : vector<2x32xf32>
    %c2 = arith.constant 2 : index
    %c0_29 = arith.constant 0 : index
    %125 = vector.load %arg13[%c2, %c0_29] : memref<16x32xf32, #tpu.memory_space<vmem>>, vector<2x32xf32>
    tpu.vector_store %arg13[%c2, %c0_29], %96 {strides = array<i32>} : memref<16x32xf32, #tpu.memory_space<vmem>>, vector<2x32xf32>,
    %c12 = arith.constant 12 : index
    %c0_30 = arith.constant 0 : index
    %126 = vector.load %arg14[%c12, %c0_30] : memref<16x32xf32, #tpu.memory_space<vmem>>, vector<2x32xf32>
    tpu.vector_store %arg14[%c12, %c0_30], %124 {strides = array<i32>} : memref<16x32xf32, #tpu.memory_space<vmem>>, vector<2x32xf32>,
    %127 = vector.extract_strided_slice %6 {offsets = [4, 0], sizes = [2, 128], strides = [1, 1]} : vector<16x128xf32> to vector<2x128xf32>
    %cst_31 = arith.constant dense<0.000000e+00> : vector<2x128xf32>
    %128 = tpu.matmul %96, %8, %cst_31 {dimension_numbers = #tpu.dot_dimension_numbers<[1], [0], [0], [1], [0, 0, 1, 1], [], []>} : vector<2x32xf32>, vector<32x128xf32>, vector<2x128xf32> -> vector<2x128xf32>
    %129 = arith.addf %127, %128 : vector<2x128xf32>
    %130 = vector.extract_strided_slice %129 {offsets = [0, 0], sizes = [2, 32], strides = [1, 1]} : vector<2x128xf32> to vector<2x32xf32>
    %131 = arith.negf %130 : vector<2x32xf32>
    %132 = math.exp %131 : vector<2x32xf32>
    %cst_32 = arith.constant 1.000000e+00 : f32
    %133 = vector.broadcast %cst_32 : f32 to vector<2x32xf32>
    %134 = arith.addf %133, %132 : vector<2x32xf32>
    %135 = arith.divf %133, %134 : vector<2x32xf32>
    %136 = vector.extract_strided_slice %129 {offsets = [0, 32], sizes = [2, 32], strides = [1, 1]} : vector<2x128xf32> to vector<2x32xf32>
    %137 = arith.negf %136 : vector<2x32xf32>
    %138 = math.exp %137 : vector<2x32xf32>
    %cst_33 = arith.constant 1.000000e+00 : f32
    %139 = vector.broadcast %cst_33 : f32 to vector<2x32xf32>
    %140 = arith.addf %139, %138 : vector<2x32xf32>
    %141 = arith.divf %139, %140 : vector<2x32xf32>
    %142 = vector.extract_strided_slice %129 {offsets = [0, 64], sizes = [2, 32], strides = [1, 1]} : vector<2x128xf32> to vector<2x32xf32>
    %143 = math.tanh %142 : vector<2x32xf32>
    %144 = vector.extract_strided_slice %129 {offsets = [0, 96], sizes = [2, 32], strides = [1, 1]} : vector<2x128xf32> to vector<2x32xf32>
    %145 = arith.negf %144 : vector<2x32xf32>
    %146 = math.exp %145 : vector<2x32xf32>
    %cst_34 = arith.constant 1.000000e+00 : f32
    %147 = vector.broadcast %cst_34 : f32 to vector<2x32xf32>
    %148 = arith.addf %147, %146 : vector<2x32xf32>
    %149 = arith.divf %147, %148 : vector<2x32xf32>
    %150 = arith.mulf %141, %94 : vector<2x32xf32>
    %151 = arith.mulf %135, %143 : vector<2x32xf32>
    %152 = arith.addf %150, %151 : vector<2x32xf32>
    %153 = math.tanh %152 : vector<2x32xf32>
    %154 = arith.mulf %149, %153 : vector<2x32xf32>
    %155 = vector.extract_strided_slice %7 {offsets = [10, 0], sizes = [2, 128], strides = [1, 1]} : vector<16x128xf32> to vector<2x128xf32>
    %cst_35 = arith.constant dense<0.000000e+00> : vector<2x128xf32>
    %156 = tpu.matmul %124, %9, %cst_35 {dimension_numbers = #tpu.dot_dimension_numbers<[1], [0], [0], [1], [0, 0, 1, 1], [], []>} : vector<2x32xf32>, vector<32x128xf32>, vector<2x128xf32> -> vector<2x128xf32>
    %157 = arith.addf %155, %156 : vector<2x128xf32>
    %158 = vector.extract_strided_slice %157 {offsets = [0, 0], sizes = [2, 32], strides = [1, 1]} : vector<2x128xf32> to vector<2x32xf32>
    %159 = arith.negf %158 : vector<2x32xf32>
    %160 = math.exp %159 : vector<2x32xf32>
    %cst_36 = arith.constant 1.000000e+00 : f32
    %161 = vector.broadcast %cst_36 : f32 to vector<2x32xf32>
    %162 = arith.addf %161, %160 : vector<2x32xf32>
    %163 = arith.divf %161, %162 : vector<2x32xf32>
    %164 = vector.extract_strided_slice %157 {offsets = [0, 32], sizes = [2, 32], strides = [1, 1]} : vector<2x128xf32> to vector<2x32xf32>
    %165 = arith.negf %164 : vector<2x32xf32>
    %166 = math.exp %165 : vector<2x32xf32>
    %cst_37 = arith.constant 1.000000e+00 : f32
    %167 = vector.broadcast %cst_37 : f32 to vector<2x32xf32>
    %168 = arith.addf %167, %166 : vector<2x32xf32>
    %169 = arith.divf %167, %168 : vector<2x32xf32>
    %170 = vector.extract_strided_slice %157 {offsets = [0, 64], sizes = [2, 32], strides = [1, 1]} : vector<2x128xf32> to vector<2x32xf32>
    %171 = math.tanh %170 : vector<2x32xf32>
    %172 = vector.extract_strided_slice %157 {offsets = [0, 96], sizes = [2, 32], strides = [1, 1]} : vector<2x128xf32> to vector<2x32xf32>
    %173 = arith.negf %172 : vector<2x32xf32>
    %174 = math.exp %173 : vector<2x32xf32>
    %cst_38 = arith.constant 1.000000e+00 : f32
    %175 = vector.broadcast %cst_38 : f32 to vector<2x32xf32>
    %176 = arith.addf %175, %174 : vector<2x32xf32>
    %177 = arith.divf %175, %176 : vector<2x32xf32>
    %178 = arith.mulf %169, %122 : vector<2x32xf32>
    %179 = arith.mulf %163, %171 : vector<2x32xf32>
    %180 = arith.addf %178, %179 : vector<2x32xf32>
    %181 = math.tanh %180 : vector<2x32xf32>
    %182 = arith.mulf %177, %181 : vector<2x32xf32>
    %c4 = arith.constant 4 : index
    %c0_39 = arith.constant 0 : index
    %183 = vector.load %arg13[%c4, %c0_39] : memref<16x32xf32, #tpu.memory_space<vmem>>, vector<2x32xf32>
    tpu.vector_store %arg13[%c4, %c0_39], %154 {strides = array<i32>} : memref<16x32xf32, #tpu.memory_space<vmem>>, vector<2x32xf32>,
    %c10 = arith.constant 10 : index
    %c0_40 = arith.constant 0 : index
    %184 = vector.load %arg14[%c10, %c0_40] : memref<16x32xf32, #tpu.memory_space<vmem>>, vector<2x32xf32>
    tpu.vector_store %arg14[%c10, %c0_40], %182 {strides = array<i32>} : memref<16x32xf32, #tpu.memory_space<vmem>>, vector<2x32xf32>,
    %185 = vector.extract_strided_slice %6 {offsets = [6, 0], sizes = [2, 128], strides = [1, 1]} : vector<16x128xf32> to vector<2x128xf32>
    %cst_41 = arith.constant dense<0.000000e+00> : vector<2x128xf32>
    %186 = tpu.matmul %154, %8, %cst_41 {dimension_numbers = #tpu.dot_dimension_numbers<[1], [0], [0], [1], [0, 0, 1, 1], [], []>} : vector<2x32xf32>, vector<32x128xf32>, vector<2x128xf32> -> vector<2x128xf32>
    %187 = arith.addf %185, %186 : vector<2x128xf32>
    %188 = vector.extract_strided_slice %187 {offsets = [0, 0], sizes = [2, 32], strides = [1, 1]} : vector<2x128xf32> to vector<2x32xf32>
    %189 = arith.negf %188 : vector<2x32xf32>
    %190 = math.exp %189 : vector<2x32xf32>
    %cst_42 = arith.constant 1.000000e+00 : f32
    %191 = vector.broadcast %cst_42 : f32 to vector<2x32xf32>
    %192 = arith.addf %191, %190 : vector<2x32xf32>
    %193 = arith.divf %191, %192 : vector<2x32xf32>
    %194 = vector.extract_strided_slice %187 {offsets = [0, 32], sizes = [2, 32], strides = [1, 1]} : vector<2x128xf32> to vector<2x32xf32>
    %195 = arith.negf %194 : vector<2x32xf32>
    %196 = math.exp %195 : vector<2x32xf32>
    %cst_43 = arith.constant 1.000000e+00 : f32
    %197 = vector.broadcast %cst_43 : f32 to vector<2x32xf32>
    %198 = arith.addf %197, %196 : vector<2x32xf32>
    %199 = arith.divf %197, %198 : vector<2x32xf32>
    %200 = vector.extract_strided_slice %187 {offsets = [0, 64], sizes = [2, 32], strides = [1, 1]} : vector<2x128xf32> to vector<2x32xf32>
    %201 = math.tanh %200 : vector<2x32xf32>
    %202 = vector.extract_strided_slice %187 {offsets = [0, 96], sizes = [2, 32], strides = [1, 1]} : vector<2x128xf32> to vector<2x32xf32>
    %203 = arith.negf %202 : vector<2x32xf32>
    %204 = math.exp %203 : vector<2x32xf32>
    %cst_44 = arith.constant 1.000000e+00 : f32
    %205 = vector.broadcast %cst_44 : f32 to vector<2x32xf32>
    %206 = arith.addf %205, %204 : vector<2x32xf32>
    %207 = arith.divf %205, %206 : vector<2x32xf32>
    %208 = arith.mulf %199, %152 : vector<2x32xf32>
    %209 = arith.mulf %193, %201 : vector<2x32xf32>
    %210 = arith.addf %208, %209 : vector<2x32xf32>
    %211 = math.tanh %210 : vector<2x32xf32>
    %212 = arith.mulf %207, %211 : vector<2x32xf32>
    %213 = vector.extract_strided_slice %7 {offsets = [8, 0], sizes = [2, 128], strides = [1, 1]} : vector<16x128xf32> to vector<2x128xf32>
    %cst_45 = arith.constant dense<0.000000e+00> : vector<2x128xf32>
    %214 = tpu.matmul %182, %9, %cst_45 {dimension_numbers = #tpu.dot_dimension_numbers<[1], [0], [0], [1], [0, 0, 1, 1], [], []>} : vector<2x32xf32>, vector<32x128xf32>, vector<2x128xf32> -> vector<2x128xf32>
    %215 = arith.addf %213, %214 : vector<2x128xf32>
    %216 = vector.extract_strided_slice %215 {offsets = [0, 0], sizes = [2, 32], strides = [1, 1]} : vector<2x128xf32> to vector<2x32xf32>
    %217 = arith.negf %216 : vector<2x32xf32>
    %218 = math.exp %217 : vector<2x32xf32>
    %cst_46 = arith.constant 1.000000e+00 : f32
    %219 = vector.broadcast %cst_46 : f32 to vector<2x32xf32>
    %220 = arith.addf %219, %218 : vector<2x32xf32>
    %221 = arith.divf %219, %220 : vector<2x32xf32>
    %222 = vector.extract_strided_slice %215 {offsets = [0, 32], sizes = [2, 32], strides = [1, 1]} : vector<2x128xf32> to vector<2x32xf32>
    %223 = arith.negf %222 : vector<2x32xf32>
    %224 = math.exp %223 : vector<2x32xf32>
    %cst_47 = arith.constant 1.000000e+00 : f32
    %225 = vector.broadcast %cst_47 : f32 to vector<2x32xf32>
    %226 = arith.addf %225, %224 : vector<2x32xf32>
    %227 = arith.divf %225, %226 : vector<2x32xf32>
    %228 = vector.extract_strided_slice %215 {offsets = [0, 64], sizes = [2, 32], strides = [1, 1]} : vector<2x128xf32> to vector<2x32xf32>
    %229 = math.tanh %228 : vector<2x32xf32>
    %230 = vector.extract_strided_slice %215 {offsets = [0, 96], sizes = [2, 32], strides = [1, 1]} : vector<2x128xf32> to vector<2x32xf32>
    %231 = arith.negf %230 : vector<2x32xf32>
    %232 = math.exp %231 : vector<2x32xf32>
    %cst_48 = arith.constant 1.000000e+00 : f32
    %233 = vector.broadcast %cst_48 : f32 to vector<2x32xf32>
    %234 = arith.addf %233, %232 : vector<2x32xf32>
    %235 = arith.divf %233, %234 : vector<2x32xf32>
    %236 = arith.mulf %227, %180 : vector<2x32xf32>
    %237 = arith.mulf %221, %229 : vector<2x32xf32>
    %238 = arith.addf %236, %237 : vector<2x32xf32>
    %239 = math.tanh %238 : vector<2x32xf32>
    %240 = arith.mulf %235, %239 : vector<2x32xf32>
    %c6 = arith.constant 6 : index
    %c0_49 = arith.constant 0 : index
    %241 = vector.load %arg13[%c6, %c0_49] : memref<16x32xf32, #tpu.memory_space<vmem>>, vector<2x32xf32>
    tpu.vector_store %arg13[%c6, %c0_49], %212 {strides = array<i32>} : memref<16x32xf32, #tpu.memory_space<vmem>>, vector<2x32xf32>,
    %c8 = arith.constant 8 : index
    %c0_50 = arith.constant 0 : index
    %242 = vector.load %arg14[%c8, %c0_50] : memref<16x32xf32, #tpu.memory_space<vmem>>, vector<2x32xf32>
    tpu.vector_store %arg14[%c8, %c0_50], %240 {strides = array<i32>} : memref<16x32xf32, #tpu.memory_space<vmem>>, vector<2x32xf32>,
    %243 = vector.extract_strided_slice %6 {offsets = [8, 0], sizes = [2, 128], strides = [1, 1]} : vector<16x128xf32> to vector<2x128xf32>
    %cst_51 = arith.constant dense<0.000000e+00> : vector<2x128xf32>
    %244 = tpu.matmul %212, %8, %cst_51 {dimension_numbers = #tpu.dot_dimension_numbers<[1], [0], [0], [1], [0, 0, 1, 1], [], []>} : vector<2x32xf32>, vector<32x128xf32>, vector<2x128xf32> -> vector<2x128xf32>
    %245 = arith.addf %243, %244 : vector<2x128xf32>
    %246 = vector.extract_strided_slice %245 {offsets = [0, 0], sizes = [2, 32], strides = [1, 1]} : vector<2x128xf32> to vector<2x32xf32>
    %247 = arith.negf %246 : vector<2x32xf32>
    %248 = math.exp %247 : vector<2x32xf32>
    %cst_52 = arith.constant 1.000000e+00 : f32
    %249 = vector.broadcast %cst_52 : f32 to vector<2x32xf32>
    %250 = arith.addf %249, %248 : vector<2x32xf32>
    %251 = arith.divf %249, %250 : vector<2x32xf32>
    %252 = vector.extract_strided_slice %245 {offsets = [0, 32], sizes = [2, 32], strides = [1, 1]} : vector<2x128xf32> to vector<2x32xf32>
    %253 = arith.negf %252 : vector<2x32xf32>
    %254 = math.exp %253 : vector<2x32xf32>
    %cst_53 = arith.constant 1.000000e+00 : f32
    %255 = vector.broadcast %cst_53 : f32 to vector<2x32xf32>
    %256 = arith.addf %255, %254 : vector<2x32xf32>
    %257 = arith.divf %255, %256 : vector<2x32xf32>
    %258 = vector.extract_strided_slice %245 {offsets = [0, 64], sizes = [2, 32], strides = [1, 1]} : vector<2x128xf32> to vector<2x32xf32>
    %259 = math.tanh %258 : vector<2x32xf32>
    %260 = vector.extract_strided_slice %245 {offsets = [0, 96], sizes = [2, 32], strides = [1, 1]} : vector<2x128xf32> to vector<2x32xf32>
    %261 = arith.negf %260 : vector<2x32xf32>
    %262 = math.exp %261 : vector<2x32xf32>
    %cst_54 = arith.constant 1.000000e+00 : f32
    %263 = vector.broadcast %cst_54 : f32 to vector<2x32xf32>
    %264 = arith.addf %263, %262 : vector<2x32xf32>
    %265 = arith.divf %263, %264 : vector<2x32xf32>
    %266 = arith.mulf %257, %210 : vector<2x32xf32>
    %267 = arith.mulf %251, %259 : vector<2x32xf32>
    %268 = arith.addf %266, %267 : vector<2x32xf32>
    %269 = math.tanh %268 : vector<2x32xf32>
    %270 = arith.mulf %265, %269 : vector<2x32xf32>
    %271 = vector.extract_strided_slice %7 {offsets = [6, 0], sizes = [2, 128], strides = [1, 1]} : vector<16x128xf32> to vector<2x128xf32>
    %cst_55 = arith.constant dense<0.000000e+00> : vector<2x128xf32>
    %272 = tpu.matmul %240, %9, %cst_55 {dimension_numbers = #tpu.dot_dimension_numbers<[1], [0], [0], [1], [0, 0, 1, 1], [], []>} : vector<2x32xf32>, vector<32x128xf32>, vector<2x128xf32> -> vector<2x128xf32>
    %273 = arith.addf %271, %272 : vector<2x128xf32>
    %274 = vector.extract_strided_slice %273 {offsets = [0, 0], sizes = [2, 32], strides = [1, 1]} : vector<2x128xf32> to vector<2x32xf32>
    %275 = arith.negf %274 : vector<2x32xf32>
    %276 = math.exp %275 : vector<2x32xf32>
    %cst_56 = arith.constant 1.000000e+00 : f32
    %277 = vector.broadcast %cst_56 : f32 to vector<2x32xf32>
    %278 = arith.addf %277, %276 : vector<2x32xf32>
    %279 = arith.divf %277, %278 : vector<2x32xf32>
    %280 = vector.extract_strided_slice %273 {offsets = [0, 32], sizes = [2, 32], strides = [1, 1]} : vector<2x128xf32> to vector<2x32xf32>
    %281 = arith.negf %280 : vector<2x32xf32>
    %282 = math.exp %281 : vector<2x32xf32>
    %cst_57 = arith.constant 1.000000e+00 : f32
    %283 = vector.broadcast %cst_57 : f32 to vector<2x32xf32>
    %284 = arith.addf %283, %282 : vector<2x32xf32>
    %285 = arith.divf %283, %284 : vector<2x32xf32>
    %286 = vector.extract_strided_slice %273 {offsets = [0, 64], sizes = [2, 32], strides = [1, 1]} : vector<2x128xf32> to vector<2x32xf32>
    %287 = math.tanh %286 : vector<2x32xf32>
    %288 = vector.extract_strided_slice %273 {offsets = [0, 96], sizes = [2, 32], strides = [1, 1]} : vector<2x128xf32> to vector<2x32xf32>
    %289 = arith.negf %288 : vector<2x32xf32>
    %290 = math.exp %289 : vector<2x32xf32>
    %cst_58 = arith.constant 1.000000e+00 : f32
    %291 = vector.broadcast %cst_58 : f32 to vector<2x32xf32>
    %292 = arith.addf %291, %290 : vector<2x32xf32>
    %293 = arith.divf %291, %292 : vector<2x32xf32>
    %294 = arith.mulf %285, %238 : vector<2x32xf32>
    %295 = arith.mulf %279, %287 : vector<2x32xf32>
    %296 = arith.addf %294, %295 : vector<2x32xf32>
    %297 = math.tanh %296 : vector<2x32xf32>
    %298 = arith.mulf %293, %297 : vector<2x32xf32>
    %c8_59 = arith.constant 8 : index
    %c0_60 = arith.constant 0 : index
    %299 = vector.load %arg13[%c8_59, %c0_60] : memref<16x32xf32, #tpu.memory_space<vmem>>, vector<2x32xf32>
    tpu.vector_store %arg13[%c8_59, %c0_60], %270 {strides = array<i32>} : memref<16x32xf32, #tpu.memory_space<vmem>>, vector<2x32xf32>,
    %c6_61 = arith.constant 6 : index
    %c0_62 = arith.constant 0 : index
    %300 = vector.load %arg14[%c6_61, %c0_62] : memref<16x32xf32, #tpu.memory_space<vmem>>, vector<2x32xf32>
    tpu.vector_store %arg14[%c6_61, %c0_62], %298 {strides = array<i32>} : memref<16x32xf32, #tpu.memory_space<vmem>>, vector<2x32xf32>,
    %301 = vector.extract_strided_slice %6 {offsets = [10, 0], sizes = [2, 128], strides = [1, 1]} : vector<16x128xf32> to vector<2x128xf32>
    %cst_63 = arith.constant dense<0.000000e+00> : vector<2x128xf32>
    %302 = tpu.matmul %270, %8, %cst_63 {dimension_numbers = #tpu.dot_dimension_numbers<[1], [0], [0], [1], [0, 0, 1, 1], [], []>} : vector<2x32xf32>, vector<32x128xf32>, vector<2x128xf32> -> vector<2x128xf32>
    %303 = arith.addf %301, %302 : vector<2x128xf32>
    %304 = vector.extract_strided_slice %303 {offsets = [0, 0], sizes = [2, 32], strides = [1, 1]} : vector<2x128xf32> to vector<2x32xf32>
    %305 = arith.negf %304 : vector<2x32xf32>
    %306 = math.exp %305 : vector<2x32xf32>
    %cst_64 = arith.constant 1.000000e+00 : f32
    %307 = vector.broadcast %cst_64 : f32 to vector<2x32xf32>
    %308 = arith.addf %307, %306 : vector<2x32xf32>
    %309 = arith.divf %307, %308 : vector<2x32xf32>
    %310 = vector.extract_strided_slice %303 {offsets = [0, 32], sizes = [2, 32], strides = [1, 1]} : vector<2x128xf32> to vector<2x32xf32>
    %311 = arith.negf %310 : vector<2x32xf32>
    %312 = math.exp %311 : vector<2x32xf32>
    %cst_65 = arith.constant 1.000000e+00 : f32
    %313 = vector.broadcast %cst_65 : f32 to vector<2x32xf32>
    %314 = arith.addf %313, %312 : vector<2x32xf32>
    %315 = arith.divf %313, %314 : vector<2x32xf32>
    %316 = vector.extract_strided_slice %303 {offsets = [0, 64], sizes = [2, 32], strides = [1, 1]} : vector<2x128xf32> to vector<2x32xf32>
    %317 = math.tanh %316 : vector<2x32xf32>
    %318 = vector.extract_strided_slice %303 {offsets = [0, 96], sizes = [2, 32], strides = [1, 1]} : vector<2x128xf32> to vector<2x32xf32>
    %319 = arith.negf %318 : vector<2x32xf32>
    %320 = math.exp %319 : vector<2x32xf32>
    %cst_66 = arith.constant 1.000000e+00 : f32
    %321 = vector.broadcast %cst_66 : f32 to vector<2x32xf32>
    %322 = arith.addf %321, %320 : vector<2x32xf32>
    %323 = arith.divf %321, %322 : vector<2x32xf32>
    %324 = arith.mulf %315, %268 : vector<2x32xf32>
    %325 = arith.mulf %309, %317 : vector<2x32xf32>
    %326 = arith.addf %324, %325 : vector<2x32xf32>
    %327 = math.tanh %326 : vector<2x32xf32>
    %328 = arith.mulf %323, %327 : vector<2x32xf32>
    %329 = vector.extract_strided_slice %7 {offsets = [4, 0], sizes = [2, 128], strides = [1, 1]} : vector<16x128xf32> to vector<2x128xf32>
    %cst_67 = arith.constant dense<0.000000e+00> : vector<2x128xf32>
    %330 = tpu.matmul %298, %9, %cst_67 {dimension_numbers = #tpu.dot_dimension_numbers<[1], [0], [0], [1], [0, 0, 1, 1], [], []>} : vector<2x32xf32>, vector<32x128xf32>, vector<2x128xf32> -> vector<2x128xf32>
    %331 = arith.addf %329, %330 : vector<2x128xf32>
    %332 = vector.extract_strided_slice %331 {offsets = [0, 0], sizes = [2, 32], strides = [1, 1]} : vector<2x128xf32> to vector<2x32xf32>
    %333 = arith.negf %332 : vector<2x32xf32>
    %334 = math.exp %333 : vector<2x32xf32>
    %cst_68 = arith.constant 1.000000e+00 : f32
    %335 = vector.broadcast %cst_68 : f32 to vector<2x32xf32>
    %336 = arith.addf %335, %334 : vector<2x32xf32>
    %337 = arith.divf %335, %336 : vector<2x32xf32>
    %338 = vector.extract_strided_slice %331 {offsets = [0, 32], sizes = [2, 32], strides = [1, 1]} : vector<2x128xf32> to vector<2x32xf32>
    %339 = arith.negf %338 : vector<2x32xf32>
    %340 = math.exp %339 : vector<2x32xf32>
    %cst_69 = arith.constant 1.000000e+00 : f32
    %341 = vector.broadcast %cst_69 : f32 to vector<2x32xf32>
    %342 = arith.addf %341, %340 : vector<2x32xf32>
    %343 = arith.divf %341, %342 : vector<2x32xf32>
    %344 = vector.extract_strided_slice %331 {offsets = [0, 64], sizes = [2, 32], strides = [1, 1]} : vector<2x128xf32> to vector<2x32xf32>
    %345 = math.tanh %344 : vector<2x32xf32>
    %346 = vector.extract_strided_slice %331 {offsets = [0, 96], sizes = [2, 32], strides = [1, 1]} : vector<2x128xf32> to vector<2x32xf32>
    %347 = arith.negf %346 : vector<2x32xf32>
    %348 = math.exp %347 : vector<2x32xf32>
    %cst_70 = arith.constant 1.000000e+00 : f32
    %349 = vector.broadcast %cst_70 : f32 to vector<2x32xf32>
    %350 = arith.addf %349, %348 : vector<2x32xf32>
    %351 = arith.divf %349, %350 : vector<2x32xf32>
    %352 = arith.mulf %343, %296 : vector<2x32xf32>
    %353 = arith.mulf %337, %345 : vector<2x32xf32>
    %354 = arith.addf %352, %353 : vector<2x32xf32>
    %355 = math.tanh %354 : vector<2x32xf32>
    %356 = arith.mulf %351, %355 : vector<2x32xf32>
    %c10_71 = arith.constant 10 : index
    %c0_72 = arith.constant 0 : index
    %357 = vector.load %arg13[%c10_71, %c0_72] : memref<16x32xf32, #tpu.memory_space<vmem>>, vector<2x32xf32>
    tpu.vector_store %arg13[%c10_71, %c0_72], %328 {strides = array<i32>} : memref<16x32xf32, #tpu.memory_space<vmem>>, vector<2x32xf32>,
    %c4_73 = arith.constant 4 : index
    %c0_74 = arith.constant 0 : index
    %358 = vector.load %arg14[%c4_73, %c0_74] : memref<16x32xf32, #tpu.memory_space<vmem>>, vector<2x32xf32>
    tpu.vector_store %arg14[%c4_73, %c0_74], %356 {strides = array<i32>} : memref<16x32xf32, #tpu.memory_space<vmem>>, vector<2x32xf32>,
    %359 = vector.extract_strided_slice %6 {offsets = [12, 0], sizes = [2, 128], strides = [1, 1]} : vector<16x128xf32> to vector<2x128xf32>
    %cst_75 = arith.constant dense<0.000000e+00> : vector<2x128xf32>
    %360 = tpu.matmul %328, %8, %cst_75 {dimension_numbers = #tpu.dot_dimension_numbers<[1], [0], [0], [1], [0, 0, 1, 1], [], []>} : vector<2x32xf32>, vector<32x128xf32>, vector<2x128xf32> -> vector<2x128xf32>
    %361 = arith.addf %359, %360 : vector<2x128xf32>
    %362 = vector.extract_strided_slice %361 {offsets = [0, 0], sizes = [2, 32], strides = [1, 1]} : vector<2x128xf32> to vector<2x32xf32>
    %363 = arith.negf %362 : vector<2x32xf32>
    %364 = math.exp %363 : vector<2x32xf32>
    %cst_76 = arith.constant 1.000000e+00 : f32
    %365 = vector.broadcast %cst_76 : f32 to vector<2x32xf32>
    %366 = arith.addf %365, %364 : vector<2x32xf32>
    %367 = arith.divf %365, %366 : vector<2x32xf32>
    %368 = vector.extract_strided_slice %361 {offsets = [0, 32], sizes = [2, 32], strides = [1, 1]} : vector<2x128xf32> to vector<2x32xf32>
    %369 = arith.negf %368 : vector<2x32xf32>
    %370 = math.exp %369 : vector<2x32xf32>
    %cst_77 = arith.constant 1.000000e+00 : f32
    %371 = vector.broadcast %cst_77 : f32 to vector<2x32xf32>
    %372 = arith.addf %371, %370 : vector<2x32xf32>
    %373 = arith.divf %371, %372 : vector<2x32xf32>
    %374 = vector.extract_strided_slice %361 {offsets = [0, 64], sizes = [2, 32], strides = [1, 1]} : vector<2x128xf32> to vector<2x32xf32>
    %375 = math.tanh %374 : vector<2x32xf32>
    %376 = vector.extract_strided_slice %361 {offsets = [0, 96], sizes = [2, 32], strides = [1, 1]} : vector<2x128xf32> to vector<2x32xf32>
    %377 = arith.negf %376 : vector<2x32xf32>
    %378 = math.exp %377 : vector<2x32xf32>
    %cst_78 = arith.constant 1.000000e+00 : f32
    %379 = vector.broadcast %cst_78 : f32 to vector<2x32xf32>
    %380 = arith.addf %379, %378 : vector<2x32xf32>
    %381 = arith.divf %379, %380 : vector<2x32xf32>
    %382 = arith.mulf %373, %326 : vector<2x32xf32>
    %383 = arith.mulf %367, %375 : vector<2x32xf32>
    %384 = arith.addf %382, %383 : vector<2x32xf32>
    %385 = math.tanh %384 : vector<2x32xf32>
    %386 = arith.mulf %381, %385 : vector<2x32xf32>
    %387 = vector.extract_strided_slice %7 {offsets = [2, 0], sizes = [2, 128], strides = [1, 1]} : vector<16x128xf32> to vector<2x128xf32>
    %cst_79 = arith.constant dense<0.000000e+00> : vector<2x128xf32>
    %388 = tpu.matmul %356, %9, %cst_79 {dimension_numbers = #tpu.dot_dimension_numbers<[1], [0], [0], [1], [0, 0, 1, 1], [], []>} : vector<2x32xf32>, vector<32x128xf32>, vector<2x128xf32> -> vector<2x128xf32>
    %389 = arith.addf %387, %388 : vector<2x128xf32>
    %390 = vector.extract_strided_slice %389 {offsets = [0, 0], sizes = [2, 32], strides = [1, 1]} : vector<2x128xf32> to vector<2x32xf32>
    %391 = arith.negf %390 : vector<2x32xf32>
    %392 = math.exp %391 : vector<2x32xf32>
    %cst_80 = arith.constant 1.000000e+00 : f32
    %393 = vector.broadcast %cst_80 : f32 to vector<2x32xf32>
    %394 = arith.addf %393, %392 : vector<2x32xf32>
    %395 = arith.divf %393, %394 : vector<2x32xf32>
    %396 = vector.extract_strided_slice %389 {offsets = [0, 32], sizes = [2, 32], strides = [1, 1]} : vector<2x128xf32> to vector<2x32xf32>
    %397 = arith.negf %396 : vector<2x32xf32>
    %398 = math.exp %397 : vector<2x32xf32>
    %cst_81 = arith.constant 1.000000e+00 : f32
    %399 = vector.broadcast %cst_81 : f32 to vector<2x32xf32>
    %400 = arith.addf %399, %398 : vector<2x32xf32>
    %401 = arith.divf %399, %400 : vector<2x32xf32>
    %402 = vector.extract_strided_slice %389 {offsets = [0, 64], sizes = [2, 32], strides = [1, 1]} : vector<2x128xf32> to vector<2x32xf32>
    %403 = math.tanh %402 : vector<2x32xf32>
    %404 = vector.extract_strided_slice %389 {offsets = [0, 96], sizes = [2, 32], strides = [1, 1]} : vector<2x128xf32> to vector<2x32xf32>
    %405 = arith.negf %404 : vector<2x32xf32>
    %406 = math.exp %405 : vector<2x32xf32>
    %cst_82 = arith.constant 1.000000e+00 : f32
    %407 = vector.broadcast %cst_82 : f32 to vector<2x32xf32>
    %408 = arith.addf %407, %406 : vector<2x32xf32>
    %409 = arith.divf %407, %408 : vector<2x32xf32>
    %410 = arith.mulf %401, %354 : vector<2x32xf32>
    %411 = arith.mulf %395, %403 : vector<2x32xf32>
    %412 = arith.addf %410, %411 : vector<2x32xf32>
    %413 = math.tanh %412 : vector<2x32xf32>
    %414 = arith.mulf %409, %413 : vector<2x32xf32>
    %c12_83 = arith.constant 12 : index
    %c0_84 = arith.constant 0 : index
    %415 = vector.load %arg13[%c12_83, %c0_84] : memref<16x32xf32, #tpu.memory_space<vmem>>, vector<2x32xf32>
    tpu.vector_store %arg13[%c12_83, %c0_84], %386 {strides = array<i32>} : memref<16x32xf32, #tpu.memory_space<vmem>>, vector<2x32xf32>,
    %c2_85 = arith.constant 2 : index
    %c0_86 = arith.constant 0 : index
    %416 = vector.load %arg14[%c2_85, %c0_86] : memref<16x32xf32, #tpu.memory_space<vmem>>, vector<2x32xf32>
    tpu.vector_store %arg14[%c2_85, %c0_86], %414 {strides = array<i32>} : memref<16x32xf32, #tpu.memory_space<vmem>>, vector<2x32xf32>,
    %417 = vector.extract_strided_slice %6 {offsets = [14, 0], sizes = [2, 128], strides = [1, 1]} : vector<16x128xf32> to vector<2x128xf32>
    %cst_87 = arith.constant dense<0.000000e+00> : vector<2x128xf32>
    %418 = tpu.matmul %386, %8, %cst_87 {dimension_numbers = #tpu.dot_dimension_numbers<[1], [0], [0], [1], [0, 0, 1, 1], [], []>} : vector<2x32xf32>, vector<32x128xf32>, vector<2x128xf32> -> vector<2x128xf32>
    %419 = arith.addf %417, %418 : vector<2x128xf32>
    %420 = vector.extract_strided_slice %419 {offsets = [0, 0], sizes = [2, 32], strides = [1, 1]} : vector<2x128xf32> to vector<2x32xf32>
    %421 = arith.negf %420 : vector<2x32xf32>
    %422 = math.exp %421 : vector<2x32xf32>
    %cst_88 = arith.constant 1.000000e+00 : f32
    %423 = vector.broadcast %cst_88 : f32 to vector<2x32xf32>
    %424 = arith.addf %423, %422 : vector<2x32xf32>
    %425 = arith.divf %423, %424 : vector<2x32xf32>
    %426 = vector.extract_strided_slice %419 {offsets = [0, 32], sizes = [2, 32], strides = [1, 1]} : vector<2x128xf32> to vector<2x32xf32>
    %427 = arith.negf %426 : vector<2x32xf32>
    %428 = math.exp %427 : vector<2x32xf32>
    %cst_89 = arith.constant 1.000000e+00 : f32
    %429 = vector.broadcast %cst_89 : f32 to vector<2x32xf32>
    %430 = arith.addf %429, %428 : vector<2x32xf32>
    %431 = arith.divf %429, %430 : vector<2x32xf32>
    %432 = vector.extract_strided_slice %419 {offsets = [0, 64], sizes = [2, 32], strides = [1, 1]} : vector<2x128xf32> to vector<2x32xf32>
    %433 = math.tanh %432 : vector<2x32xf32>
    %434 = vector.extract_strided_slice %419 {offsets = [0, 96], sizes = [2, 32], strides = [1, 1]} : vector<2x128xf32> to vector<2x32xf32>
    %435 = arith.negf %434 : vector<2x32xf32>
    %436 = math.exp %435 : vector<2x32xf32>
    %cst_90 = arith.constant 1.000000e+00 : f32
    %437 = vector.broadcast %cst_90 : f32 to vector<2x32xf32>
    %438 = arith.addf %437, %436 : vector<2x32xf32>
    %439 = arith.divf %437, %438 : vector<2x32xf32>
    %440 = arith.mulf %431, %384 : vector<2x32xf32>
    %441 = arith.mulf %425, %433 : vector<2x32xf32>
    %442 = arith.addf %440, %441 : vector<2x32xf32>
    %443 = math.tanh %442 : vector<2x32xf32>
    %444 = arith.mulf %439, %443 : vector<2x32xf32>
    %445 = vector.extract_strided_slice %7 {offsets = [0, 0], sizes = [2, 128], strides = [1, 1]} : vector<16x128xf32> to vector<2x128xf32>
    %cst_91 = arith.constant dense<0.000000e+00> : vector<2x128xf32>
    %446 = tpu.matmul %414, %9, %cst_91 {dimension_numbers = #tpu.dot_dimension_numbers<[1], [0], [0], [1], [0, 0, 1, 1], [], []>} : vector<2x32xf32>, vector<32x128xf32>, vector<2x128xf32> -> vector<2x128xf32>
    %447 = arith.addf %445, %446 : vector<2x128xf32>
    %448 = vector.extract_strided_slice %447 {offsets = [0, 0], sizes = [2, 32], strides = [1, 1]} : vector<2x128xf32> to vector<2x32xf32>
    %449 = arith.negf %448 : vector<2x32xf32>
    %450 = math.exp %449 : vector<2x32xf32>
    %cst_92 = arith.constant 1.000000e+00 : f32
    %451 = vector.broadcast %cst_92 : f32 to vector<2x32xf32>
    %452 = arith.addf %451, %450 : vector<2x32xf32>
    %453 = arith.divf %451, %452 : vector<2x32xf32>
    %454 = vector.extract_strided_slice %447 {offsets = [0, 32], sizes = [2, 32], strides = [1, 1]} : vector<2x128xf32> to vector<2x32xf32>
    %455 = arith.negf %454 : vector<2x32xf32>
    %456 = math.exp %455 : vector<2x32xf32>
    %cst_93 = arith.constant 1.000000e+00 : f32
    %457 = vector.broadcast %cst_93 : f32 to vector<2x32xf32>
    %458 = arith.addf %457, %456 : vector<2x32xf32>
    %459 = arith.divf %457, %458 : vector<2x32xf32>
    %460 = vector.extract_strided_slice %447 {offsets = [0, 64], sizes = [2, 32], strides = [1, 1]} : vector<2x128xf32> to vector<2x32xf32>
    %461 = math.tanh %460 : vector<2x32xf32>
    %462 = vector.extract_strided_slice %447 {offsets = [0, 96], sizes = [2, 32], strides = [1, 1]} : vector<2x128xf32> to vector<2x32xf32>
    %463 = arith.negf %462 : vector<2x32xf32>
    %464 = math.exp %463 : vector<2x32xf32>
    %cst_94 = arith.constant 1.000000e+00 : f32
    %465 = vector.broadcast %cst_94 : f32 to vector<2x32xf32>
    %466 = arith.addf %465, %464 : vector<2x32xf32>
    %467 = arith.divf %465, %466 : vector<2x32xf32>
    %468 = arith.mulf %459, %412 : vector<2x32xf32>
    %469 = arith.mulf %453, %461 : vector<2x32xf32>
    %470 = arith.addf %468, %469 : vector<2x32xf32>
    %471 = math.tanh %470 : vector<2x32xf32>
    %472 = arith.mulf %467, %471 : vector<2x32xf32>
    %c14_95 = arith.constant 14 : index
    %c0_96 = arith.constant 0 : index
    %473 = vector.load %arg13[%c14_95, %c0_96] : memref<16x32xf32, #tpu.memory_space<vmem>>, vector<2x32xf32>
    tpu.vector_store %arg13[%c14_95, %c0_96], %444 {strides = array<i32>} : memref<16x32xf32, #tpu.memory_space<vmem>>, vector<2x32xf32>,
    %c0_97 = arith.constant 0 : index
    %c0_98 = arith.constant 0 : index
    %474 = vector.load %arg14[%c0_97, %c0_98] : memref<16x32xf32, #tpu.memory_space<vmem>>, vector<2x32xf32>
    tpu.vector_store %arg14[%c0_97, %c0_98], %472 {strides = array<i32>} : memref<16x32xf32, #tpu.memory_space<vmem>>, vector<2x32xf32>,
    %c0_99 = arith.constant 0 : index
    %c0_100 = arith.constant 0 : index
    %475 = vector.load %arg13[%c0_99, %c0_100] : memref<16x32xf32, #tpu.memory_space<vmem>>, vector<16x32xf32>
    %c0_101 = arith.constant 0 : index
    %c0_102 = arith.constant 0 : index
    %476 = vector.load %arg14[%c0_101, %c0_102] : memref<16x32xf32, #tpu.memory_space<vmem>>, vector<16x32xf32>
    %c0_103 = arith.constant 0 : index
    %c0_104 = arith.constant 0 : index
    %477 = vector.load %arg6[%c0_103, %c0_104] : memref<64x256xf32, #tpu.memory_space<vmem>>, vector<32x256xf32>
    %cst_105 = arith.constant dense<0.000000e+00> : vector<16x256xf32>
    %478 = tpu.matmul %475, %477, %cst_105 {dimension_numbers = #tpu.dot_dimension_numbers<[1], [0], [0], [1], [0, 0, 1, 1], [], []>} : vector<16x32xf32>, vector<32x256xf32>, vector<16x256xf32> -> vector<16x256xf32>
    %c32 = arith.constant 32 : index
    %c0_106 = arith.constant 0 : index
    %479 = vector.load %arg6[%c32, %c0_106] : memref<64x256xf32, #tpu.memory_space<vmem>>, vector<32x256xf32>
    %cst_107 = arith.constant dense<0.000000e+00> : vector<16x256xf32>
    %480 = tpu.matmul %476, %479, %cst_107 {dimension_numbers = #tpu.dot_dimension_numbers<[1], [0], [0], [1], [0, 0, 1, 1], [], []>} : vector<16x32xf32>, vector<32x256xf32>, vector<16x256xf32> -> vector<16x256xf32>
    %481 = arith.addf %478, %480 : vector<16x256xf32>
    %c0_108 = arith.constant 0 : index
    %c0_109 = arith.constant 0 : index
    %482 = vector.load %arg7[%c0_108, %c0_109] : memref<1x256xf32, #tpu.memory_space<vmem>>, vector<1x256xf32>
    %483 = vector.broadcast %482 : vector<1x256xf32> to vector<16x256xf32>
    %484 = arith.addf %481, %483 : vector<16x256xf32>
    %485 = vector.extract_strided_slice %484 {offsets = [0, 0], sizes = [16, 128], strides = [1, 1]} : vector<16x256xf32> to vector<16x128xf32>
    %486 = vector.extract_strided_slice %484 {offsets = [0, 128], sizes = [16, 128], strides = [1, 1]} : vector<16x256xf32> to vector<16x128xf32>
    %c0_110 = arith.constant 0 : index
    %c0_111 = arith.constant 0 : index
    %487 = vector.load %arg8[%c0_110, %c0_111] : memref<32x128xf32, #tpu.memory_space<vmem>>, vector<32x128xf32>
    %c0_112 = arith.constant 0 : index
    %c0_113 = arith.constant 0 : index
    %488 = vector.load %arg9[%c0_112, %c0_113] : memref<32x128xf32, #tpu.memory_space<vmem>>, vector<32x128xf32>
    %489 = vector.extract_strided_slice %485 {offsets = [0, 0], sizes = [2, 128], strides = [1, 1]} : vector<16x128xf32> to vector<2x128xf32>
    %cst_114 = arith.constant dense<0.000000e+00> : vector<2x128xf32>
    %490 = tpu.matmul %10, %487, %cst_114 {dimension_numbers = #tpu.dot_dimension_numbers<[1], [0], [0], [1], [0, 0, 1, 1], [], []>} : vector<2x32xf32>, vector<32x128xf32>, vector<2x128xf32> -> vector<2x128xf32>
    %491 = arith.addf %489, %490 : vector<2x128xf32>
    %492 = vector.extract_strided_slice %491 {offsets = [0, 0], sizes = [2, 32], strides = [1, 1]} : vector<2x128xf32> to vector<2x32xf32>
    %493 = arith.negf %492 : vector<2x32xf32>
    %494 = math.exp %493 : vector<2x32xf32>
    %cst_115 = arith.constant 1.000000e+00 : f32
    %495 = vector.broadcast %cst_115 : f32 to vector<2x32xf32>
    %496 = arith.addf %495, %494 : vector<2x32xf32>
    %497 = arith.divf %495, %496 : vector<2x32xf32>
    %498 = vector.extract_strided_slice %491 {offsets = [0, 32], sizes = [2, 32], strides = [1, 1]} : vector<2x128xf32> to vector<2x32xf32>
    %499 = arith.negf %498 : vector<2x32xf32>
    %500 = math.exp %499 : vector<2x32xf32>
    %cst_116 = arith.constant 1.000000e+00 : f32
    %501 = vector.broadcast %cst_116 : f32 to vector<2x32xf32>
    %502 = arith.addf %501, %500 : vector<2x32xf32>
    %503 = arith.divf %501, %502 : vector<2x32xf32>
    %504 = vector.extract_strided_slice %491 {offsets = [0, 64], sizes = [2, 32], strides = [1, 1]} : vector<2x128xf32> to vector<2x32xf32>
    %505 = math.tanh %504 : vector<2x32xf32>
    %506 = vector.extract_strided_slice %491 {offsets = [0, 96], sizes = [2, 32], strides = [1, 1]} : vector<2x128xf32> to vector<2x32xf32>
    %507 = arith.negf %506 : vector<2x32xf32>
    %508 = math.exp %507 : vector<2x32xf32>
    %cst_117 = arith.constant 1.000000e+00 : f32
    %509 = vector.broadcast %cst_117 : f32 to vector<2x32xf32>
    %510 = arith.addf %509, %508 : vector<2x32xf32>
    %511 = arith.divf %509, %510 : vector<2x32xf32>
    %512 = arith.mulf %503, %10 : vector<2x32xf32>
    %513 = arith.mulf %497, %505 : vector<2x32xf32>
    %514 = arith.addf %512, %513 : vector<2x32xf32>
    %515 = math.tanh %514 : vector<2x32xf32>
    %516 = arith.mulf %511, %515 : vector<2x32xf32>
    %517 = vector.extract_strided_slice %486 {offsets = [14, 0], sizes = [2, 128], strides = [1, 1]} : vector<16x128xf32> to vector<2x128xf32>
    %cst_118 = arith.constant dense<0.000000e+00> : vector<2x128xf32>
    %518 = tpu.matmul %10, %488, %cst_118 {dimension_numbers = #tpu.dot_dimension_numbers<[1], [0], [0], [1], [0, 0, 1, 1], [], []>} : vector<2x32xf32>, vector<32x128xf32>, vector<2x128xf32> -> vector<2x128xf32>
    %519 = arith.addf %517, %518 : vector<2x128xf32>
    %520 = vector.extract_strided_slice %519 {offsets = [0, 0], sizes = [2, 32], strides = [1, 1]} : vector<2x128xf32> to vector<2x32xf32>
    %521 = arith.negf %520 : vector<2x32xf32>
    %522 = math.exp %521 : vector<2x32xf32>
    %cst_119 = arith.constant 1.000000e+00 : f32
    %523 = vector.broadcast %cst_119 : f32 to vector<2x32xf32>
    %524 = arith.addf %523, %522 : vector<2x32xf32>
    %525 = arith.divf %523, %524 : vector<2x32xf32>
    %526 = vector.extract_strided_slice %519 {offsets = [0, 32], sizes = [2, 32], strides = [1, 1]} : vector<2x128xf32> to vector<2x32xf32>
    %527 = arith.negf %526 : vector<2x32xf32>
    %528 = math.exp %527 : vector<2x32xf32>
    %cst_120 = arith.constant 1.000000e+00 : f32
    %529 = vector.broadcast %cst_120 : f32 to vector<2x32xf32>
    %530 = arith.addf %529, %528 : vector<2x32xf32>
    %531 = arith.divf %529, %530 : vector<2x32xf32>
    %532 = vector.extract_strided_slice %519 {offsets = [0, 64], sizes = [2, 32], strides = [1, 1]} : vector<2x128xf32> to vector<2x32xf32>
    %533 = math.tanh %532 : vector<2x32xf32>
    %534 = vector.extract_strided_slice %519 {offsets = [0, 96], sizes = [2, 32], strides = [1, 1]} : vector<2x128xf32> to vector<2x32xf32>
    %535 = arith.negf %534 : vector<2x32xf32>
    %536 = math.exp %535 : vector<2x32xf32>
    %cst_121 = arith.constant 1.000000e+00 : f32
    %537 = vector.broadcast %cst_121 : f32 to vector<2x32xf32>
    %538 = arith.addf %537, %536 : vector<2x32xf32>
    %539 = arith.divf %537, %538 : vector<2x32xf32>
    %540 = arith.mulf %531, %10 : vector<2x32xf32>
    %541 = arith.mulf %525, %533 : vector<2x32xf32>
    %542 = arith.addf %540, %541 : vector<2x32xf32>
    %543 = math.tanh %542 : vector<2x32xf32>
    %544 = arith.mulf %539, %543 : vector<2x32xf32>
    %545 = vector.extract_strided_slice %485 {offsets = [2, 0], sizes = [2, 128], strides = [1, 1]} : vector<16x128xf32> to vector<2x128xf32>
    %cst_122 = arith.constant dense<0.000000e+00> : vector<2x128xf32>
    %546 = tpu.matmul %516, %487, %cst_122 {dimension_numbers = #tpu.dot_dimension_numbers<[1], [0], [0], [1], [0, 0, 1, 1], [], []>} : vector<2x32xf32>, vector<32x128xf32>, vector<2x128xf32> -> vector<2x128xf32>
    %547 = arith.addf %545, %546 : vector<2x128xf32>
    %548 = vector.extract_strided_slice %547 {offsets = [0, 0], sizes = [2, 32], strides = [1, 1]} : vector<2x128xf32> to vector<2x32xf32>
    %549 = arith.negf %548 : vector<2x32xf32>
    %550 = math.exp %549 : vector<2x32xf32>
    %cst_123 = arith.constant 1.000000e+00 : f32
    %551 = vector.broadcast %cst_123 : f32 to vector<2x32xf32>
    %552 = arith.addf %551, %550 : vector<2x32xf32>
    %553 = arith.divf %551, %552 : vector<2x32xf32>
    %554 = vector.extract_strided_slice %547 {offsets = [0, 32], sizes = [2, 32], strides = [1, 1]} : vector<2x128xf32> to vector<2x32xf32>
    %555 = arith.negf %554 : vector<2x32xf32>
    %556 = math.exp %555 : vector<2x32xf32>
    %cst_124 = arith.constant 1.000000e+00 : f32
    %557 = vector.broadcast %cst_124 : f32 to vector<2x32xf32>
    %558 = arith.addf %557, %556 : vector<2x32xf32>
    %559 = arith.divf %557, %558 : vector<2x32xf32>
    %560 = vector.extract_strided_slice %547 {offsets = [0, 64], sizes = [2, 32], strides = [1, 1]} : vector<2x128xf32> to vector<2x32xf32>
    %561 = math.tanh %560 : vector<2x32xf32>
    %562 = vector.extract_strided_slice %547 {offsets = [0, 96], sizes = [2, 32], strides = [1, 1]} : vector<2x128xf32> to vector<2x32xf32>
    %563 = arith.negf %562 : vector<2x32xf32>
    %564 = math.exp %563 : vector<2x32xf32>
    %cst_125 = arith.constant 1.000000e+00 : f32
    %565 = vector.broadcast %cst_125 : f32 to vector<2x32xf32>
    %566 = arith.addf %565, %564 : vector<2x32xf32>
    %567 = arith.divf %565, %566 : vector<2x32xf32>
    %568 = arith.mulf %559, %514 : vector<2x32xf32>
    %569 = arith.mulf %553, %561 : vector<2x32xf32>
    %570 = arith.addf %568, %569 : vector<2x32xf32>
    %571 = math.tanh %570 : vector<2x32xf32>
    %572 = arith.mulf %567, %571 : vector<2x32xf32>
    %573 = vector.extract_strided_slice %486 {offsets = [12, 0], sizes = [2, 128], strides = [1, 1]} : vector<16x128xf32> to vector<2x128xf32>
    %cst_126 = arith.constant dense<0.000000e+00> : vector<2x128xf32>
    %574 = tpu.matmul %544, %488, %cst_126 {dimension_numbers = #tpu.dot_dimension_numbers<[1], [0], [0], [1], [0, 0, 1, 1], [], []>} : vector<2x32xf32>, vector<32x128xf32>, vector<2x128xf32> -> vector<2x128xf32>
    %575 = arith.addf %573, %574 : vector<2x128xf32>
    %576 = vector.extract_strided_slice %575 {offsets = [0, 0], sizes = [2, 32], strides = [1, 1]} : vector<2x128xf32> to vector<2x32xf32>
    %577 = arith.negf %576 : vector<2x32xf32>
    %578 = math.exp %577 : vector<2x32xf32>
    %cst_127 = arith.constant 1.000000e+00 : f32
    %579 = vector.broadcast %cst_127 : f32 to vector<2x32xf32>
    %580 = arith.addf %579, %578 : vector<2x32xf32>
    %581 = arith.divf %579, %580 : vector<2x32xf32>
    %582 = vector.extract_strided_slice %575 {offsets = [0, 32], sizes = [2, 32], strides = [1, 1]} : vector<2x128xf32> to vector<2x32xf32>
    %583 = arith.negf %582 : vector<2x32xf32>
    %584 = math.exp %583 : vector<2x32xf32>
    %cst_128 = arith.constant 1.000000e+00 : f32
    %585 = vector.broadcast %cst_128 : f32 to vector<2x32xf32>
    %586 = arith.addf %585, %584 : vector<2x32xf32>
    %587 = arith.divf %585, %586 : vector<2x32xf32>
    %588 = vector.extract_strided_slice %575 {offsets = [0, 64], sizes = [2, 32], strides = [1, 1]} : vector<2x128xf32> to vector<2x32xf32>
    %589 = math.tanh %588 : vector<2x32xf32>
    %590 = vector.extract_strided_slice %575 {offsets = [0, 96], sizes = [2, 32], strides = [1, 1]} : vector<2x128xf32> to vector<2x32xf32>
    %591 = arith.negf %590 : vector<2x32xf32>
    %592 = math.exp %591 : vector<2x32xf32>
    %cst_129 = arith.constant 1.000000e+00 : f32
    %593 = vector.broadcast %cst_129 : f32 to vector<2x32xf32>
    %594 = arith.addf %593, %592 : vector<2x32xf32>
    %595 = arith.divf %593, %594 : vector<2x32xf32>
    %596 = arith.mulf %587, %542 : vector<2x32xf32>
    %597 = arith.mulf %581, %589 : vector<2x32xf32>
    %598 = arith.addf %596, %597 : vector<2x32xf32>
    %599 = math.tanh %598 : vector<2x32xf32>
    %600 = arith.mulf %595, %599 : vector<2x32xf32>
    %601 = vector.extract_strided_slice %485 {offsets = [4, 0], sizes = [2, 128], strides = [1, 1]} : vector<16x128xf32> to vector<2x128xf32>
    %cst_130 = arith.constant dense<0.000000e+00> : vector<2x128xf32>
    %602 = tpu.matmul %572, %487, %cst_130 {dimension_numbers = #tpu.dot_dimension_numbers<[1], [0], [0], [1], [0, 0, 1, 1], [], []>} : vector<2x32xf32>, vector<32x128xf32>, vector<2x128xf32> -> vector<2x128xf32>
    %603 = arith.addf %601, %602 : vector<2x128xf32>
    %604 = vector.extract_strided_slice %603 {offsets = [0, 0], sizes = [2, 32], strides = [1, 1]} : vector<2x128xf32> to vector<2x32xf32>
    %605 = arith.negf %604 : vector<2x32xf32>
    %606 = math.exp %605 : vector<2x32xf32>
    %cst_131 = arith.constant 1.000000e+00 : f32
    %607 = vector.broadcast %cst_131 : f32 to vector<2x32xf32>
    %608 = arith.addf %607, %606 : vector<2x32xf32>
    %609 = arith.divf %607, %608 : vector<2x32xf32>
    %610 = vector.extract_strided_slice %603 {offsets = [0, 32], sizes = [2, 32], strides = [1, 1]} : vector<2x128xf32> to vector<2x32xf32>
    %611 = arith.negf %610 : vector<2x32xf32>
    %612 = math.exp %611 : vector<2x32xf32>
    %cst_132 = arith.constant 1.000000e+00 : f32
    %613 = vector.broadcast %cst_132 : f32 to vector<2x32xf32>
    %614 = arith.addf %613, %612 : vector<2x32xf32>
    %615 = arith.divf %613, %614 : vector<2x32xf32>
    %616 = vector.extract_strided_slice %603 {offsets = [0, 64], sizes = [2, 32], strides = [1, 1]} : vector<2x128xf32> to vector<2x32xf32>
    %617 = math.tanh %616 : vector<2x32xf32>
    %618 = vector.extract_strided_slice %603 {offsets = [0, 96], sizes = [2, 32], strides = [1, 1]} : vector<2x128xf32> to vector<2x32xf32>
    %619 = arith.negf %618 : vector<2x32xf32>
    %620 = math.exp %619 : vector<2x32xf32>
    %cst_133 = arith.constant 1.000000e+00 : f32
    %621 = vector.broadcast %cst_133 : f32 to vector<2x32xf32>
    %622 = arith.addf %621, %620 : vector<2x32xf32>
    %623 = arith.divf %621, %622 : vector<2x32xf32>
    %624 = arith.mulf %615, %570 : vector<2x32xf32>
    %625 = arith.mulf %609, %617 : vector<2x32xf32>
    %626 = arith.addf %624, %625 : vector<2x32xf32>
    %627 = math.tanh %626 : vector<2x32xf32>
    %628 = arith.mulf %623, %627 : vector<2x32xf32>
    %629 = vector.extract_strided_slice %486 {offsets = [10, 0], sizes = [2, 128], strides = [1, 1]} : vector<16x128xf32> to vector<2x128xf32>
    %cst_134 = arith.constant dense<0.000000e+00> : vector<2x128xf32>
    %630 = tpu.matmul %600, %488, %cst_134 {dimension_numbers = #tpu.dot_dimension_numbers<[1], [0], [0], [1], [0, 0, 1, 1], [], []>} : vector<2x32xf32>, vector<32x128xf32>, vector<2x128xf32> -> vector<2x128xf32>
    %631 = arith.addf %629, %630 : vector<2x128xf32>
    %632 = vector.extract_strided_slice %631 {offsets = [0, 0], sizes = [2, 32], strides = [1, 1]} : vector<2x128xf32> to vector<2x32xf32>
    %633 = arith.negf %632 : vector<2x32xf32>
    %634 = math.exp %633 : vector<2x32xf32>
    %cst_135 = arith.constant 1.000000e+00 : f32
    %635 = vector.broadcast %cst_135 : f32 to vector<2x32xf32>
    %636 = arith.addf %635, %634 : vector<2x32xf32>
    %637 = arith.divf %635, %636 : vector<2x32xf32>
    %638 = vector.extract_strided_slice %631 {offsets = [0, 32], sizes = [2, 32], strides = [1, 1]} : vector<2x128xf32> to vector<2x32xf32>
    %639 = arith.negf %638 : vector<2x32xf32>
    %640 = math.exp %639 : vector<2x32xf32>
    %cst_136 = arith.constant 1.000000e+00 : f32
    %641 = vector.broadcast %cst_136 : f32 to vector<2x32xf32>
    %642 = arith.addf %641, %640 : vector<2x32xf32>
    %643 = arith.divf %641, %642 : vector<2x32xf32>
    %644 = vector.extract_strided_slice %631 {offsets = [0, 64], sizes = [2, 32], strides = [1, 1]} : vector<2x128xf32> to vector<2x32xf32>
    %645 = math.tanh %644 : vector<2x32xf32>
    %646 = vector.extract_strided_slice %631 {offsets = [0, 96], sizes = [2, 32], strides = [1, 1]} : vector<2x128xf32> to vector<2x32xf32>
    %647 = arith.negf %646 : vector<2x32xf32>
    %648 = math.exp %647 : vector<2x32xf32>
    %cst_137 = arith.constant 1.000000e+00 : f32
    %649 = vector.broadcast %cst_137 : f32 to vector<2x32xf32>
    %650 = arith.addf %649, %648 : vector<2x32xf32>
    %651 = arith.divf %649, %650 : vector<2x32xf32>
    %652 = arith.mulf %643, %598 : vector<2x32xf32>
    %653 = arith.mulf %637, %645 : vector<2x32xf32>
    %654 = arith.addf %652, %653 : vector<2x32xf32>
    %655 = math.tanh %654 : vector<2x32xf32>
    %656 = arith.mulf %651, %655 : vector<2x32xf32>
    %657 = vector.extract_strided_slice %485 {offsets = [6, 0], sizes = [2, 128], strides = [1, 1]} : vector<16x128xf32> to vector<2x128xf32>
    %cst_138 = arith.constant dense<0.000000e+00> : vector<2x128xf32>
    %658 = tpu.matmul %628, %487, %cst_138 {dimension_numbers = #tpu.dot_dimension_numbers<[1], [0], [0], [1], [0, 0, 1, 1], [], []>} : vector<2x32xf32>, vector<32x128xf32>, vector<2x128xf32> -> vector<2x128xf32>
    %659 = arith.addf %657, %658 : vector<2x128xf32>
    %660 = vector.extract_strided_slice %659 {offsets = [0, 0], sizes = [2, 32], strides = [1, 1]} : vector<2x128xf32> to vector<2x32xf32>
    %661 = arith.negf %660 : vector<2x32xf32>
    %662 = math.exp %661 : vector<2x32xf32>
    %cst_139 = arith.constant 1.000000e+00 : f32
    %663 = vector.broadcast %cst_139 : f32 to vector<2x32xf32>
    %664 = arith.addf %663, %662 : vector<2x32xf32>
    %665 = arith.divf %663, %664 : vector<2x32xf32>
    %666 = vector.extract_strided_slice %659 {offsets = [0, 32], sizes = [2, 32], strides = [1, 1]} : vector<2x128xf32> to vector<2x32xf32>
    %667 = arith.negf %666 : vector<2x32xf32>
    %668 = math.exp %667 : vector<2x32xf32>
    %cst_140 = arith.constant 1.000000e+00 : f32
    %669 = vector.broadcast %cst_140 : f32 to vector<2x32xf32>
    %670 = arith.addf %669, %668 : vector<2x32xf32>
    %671 = arith.divf %669, %670 : vector<2x32xf32>
    %672 = vector.extract_strided_slice %659 {offsets = [0, 64], sizes = [2, 32], strides = [1, 1]} : vector<2x128xf32> to vector<2x32xf32>
    %673 = math.tanh %672 : vector<2x32xf32>
    %674 = vector.extract_strided_slice %659 {offsets = [0, 96], sizes = [2, 32], strides = [1, 1]} : vector<2x128xf32> to vector<2x32xf32>
    %675 = arith.negf %674 : vector<2x32xf32>
    %676 = math.exp %675 : vector<2x32xf32>
    %cst_141 = arith.constant 1.000000e+00 : f32
    %677 = vector.broadcast %cst_141 : f32 to vector<2x32xf32>
    %678 = arith.addf %677, %676 : vector<2x32xf32>
    %679 = arith.divf %677, %678 : vector<2x32xf32>
    %680 = arith.mulf %671, %626 : vector<2x32xf32>
    %681 = arith.mulf %665, %673 : vector<2x32xf32>
    %682 = arith.addf %680, %681 : vector<2x32xf32>
    %683 = math.tanh %682 : vector<2x32xf32>
    %684 = arith.mulf %679, %683 : vector<2x32xf32>
    %685 = vector.extract_strided_slice %486 {offsets = [8, 0], sizes = [2, 128], strides = [1, 1]} : vector<16x128xf32> to vector<2x128xf32>
    %cst_142 = arith.constant dense<0.000000e+00> : vector<2x128xf32>
    %686 = tpu.matmul %656, %488, %cst_142 {dimension_numbers = #tpu.dot_dimension_numbers<[1], [0], [0], [1], [0, 0, 1, 1], [], []>} : vector<2x32xf32>, vector<32x128xf32>, vector<2x128xf32> -> vector<2x128xf32>
    %687 = arith.addf %685, %686 : vector<2x128xf32>
    %688 = vector.extract_strided_slice %687 {offsets = [0, 0], sizes = [2, 32], strides = [1, 1]} : vector<2x128xf32> to vector<2x32xf32>
    %689 = arith.negf %688 : vector<2x32xf32>
    %690 = math.exp %689 : vector<2x32xf32>
    %cst_143 = arith.constant 1.000000e+00 : f32
    %691 = vector.broadcast %cst_143 : f32 to vector<2x32xf32>
    %692 = arith.addf %691, %690 : vector<2x32xf32>
    %693 = arith.divf %691, %692 : vector<2x32xf32>
    %694 = vector.extract_strided_slice %687 {offsets = [0, 32], sizes = [2, 32], strides = [1, 1]} : vector<2x128xf32> to vector<2x32xf32>
    %695 = arith.negf %694 : vector<2x32xf32>
    %696 = math.exp %695 : vector<2x32xf32>
    %cst_144 = arith.constant 1.000000e+00 : f32
    %697 = vector.broadcast %cst_144 : f32 to vector<2x32xf32>
    %698 = arith.addf %697, %696 : vector<2x32xf32>
    %699 = arith.divf %697, %698 : vector<2x32xf32>
    %700 = vector.extract_strided_slice %687 {offsets = [0, 64], sizes = [2, 32], strides = [1, 1]} : vector<2x128xf32> to vector<2x32xf32>
    %701 = math.tanh %700 : vector<2x32xf32>
    %702 = vector.extract_strided_slice %687 {offsets = [0, 96], sizes = [2, 32], strides = [1, 1]} : vector<2x128xf32> to vector<2x32xf32>
    %703 = arith.negf %702 : vector<2x32xf32>
    %704 = math.exp %703 : vector<2x32xf32>
    %cst_145 = arith.constant 1.000000e+00 : f32
    %705 = vector.broadcast %cst_145 : f32 to vector<2x32xf32>
    %706 = arith.addf %705, %704 : vector<2x32xf32>
    %707 = arith.divf %705, %706 : vector<2x32xf32>
    %708 = arith.mulf %699, %654 : vector<2x32xf32>
    %709 = arith.mulf %693, %701 : vector<2x32xf32>
    %710 = arith.addf %708, %709 : vector<2x32xf32>
    %711 = math.tanh %710 : vector<2x32xf32>
    %712 = arith.mulf %707, %711 : vector<2x32xf32>
    %713 = vector.extract_strided_slice %485 {offsets = [8, 0], sizes = [2, 128], strides = [1, 1]} : vector<16x128xf32> to vector<2x128xf32>
    %cst_146 = arith.constant dense<0.000000e+00> : vector<2x128xf32>
    %714 = tpu.matmul %684, %487, %cst_146 {dimension_numbers = #tpu.dot_dimension_numbers<[1], [0], [0], [1], [0, 0, 1, 1], [], []>} : vector<2x32xf32>, vector<32x128xf32>, vector<2x128xf32> -> vector<2x128xf32>
    %715 = arith.addf %713, %714 : vector<2x128xf32>
    %716 = vector.extract_strided_slice %715 {offsets = [0, 0], sizes = [2, 32], strides = [1, 1]} : vector<2x128xf32> to vector<2x32xf32>
    %717 = arith.negf %716 : vector<2x32xf32>
    %718 = math.exp %717 : vector<2x32xf32>
    %cst_147 = arith.constant 1.000000e+00 : f32
    %719 = vector.broadcast %cst_147 : f32 to vector<2x32xf32>
    %720 = arith.addf %719, %718 : vector<2x32xf32>
    %721 = arith.divf %719, %720 : vector<2x32xf32>
    %722 = vector.extract_strided_slice %715 {offsets = [0, 32], sizes = [2, 32], strides = [1, 1]} : vector<2x128xf32> to vector<2x32xf32>
    %723 = arith.negf %722 : vector<2x32xf32>
    %724 = math.exp %723 : vector<2x32xf32>
    %cst_148 = arith.constant 1.000000e+00 : f32
    %725 = vector.broadcast %cst_148 : f32 to vector<2x32xf32>
    %726 = arith.addf %725, %724 : vector<2x32xf32>
    %727 = arith.divf %725, %726 : vector<2x32xf32>
    %728 = vector.extract_strided_slice %715 {offsets = [0, 64], sizes = [2, 32], strides = [1, 1]} : vector<2x128xf32> to vector<2x32xf32>
    %729 = math.tanh %728 : vector<2x32xf32>
    %730 = vector.extract_strided_slice %715 {offsets = [0, 96], sizes = [2, 32], strides = [1, 1]} : vector<2x128xf32> to vector<2x32xf32>
    %731 = arith.negf %730 : vector<2x32xf32>
    %732 = math.exp %731 : vector<2x32xf32>
    %cst_149 = arith.constant 1.000000e+00 : f32
    %733 = vector.broadcast %cst_149 : f32 to vector<2x32xf32>
    %734 = arith.addf %733, %732 : vector<2x32xf32>
    %735 = arith.divf %733, %734 : vector<2x32xf32>
    %736 = arith.mulf %727, %682 : vector<2x32xf32>
    %737 = arith.mulf %721, %729 : vector<2x32xf32>
    %738 = arith.addf %736, %737 : vector<2x32xf32>
    %739 = math.tanh %738 : vector<2x32xf32>
    %740 = arith.mulf %735, %739 : vector<2x32xf32>
    %741 = vector.extract_strided_slice %486 {offsets = [6, 0], sizes = [2, 128], strides = [1, 1]} : vector<16x128xf32> to vector<2x128xf32>
    %cst_150 = arith.constant dense<0.000000e+00> : vector<2x128xf32>
    %742 = tpu.matmul %712, %488, %cst_150 {dimension_numbers = #tpu.dot_dimension_numbers<[1], [0], [0], [1], [0, 0, 1, 1], [], []>} : vector<2x32xf32>, vector<32x128xf32>, vector<2x128xf32> -> vector<2x128xf32>
    %743 = arith.addf %741, %742 : vector<2x128xf32>
    %744 = vector.extract_strided_slice %743 {offsets = [0, 0], sizes = [2, 32], strides = [1, 1]} : vector<2x128xf32> to vector<2x32xf32>
    %745 = arith.negf %744 : vector<2x32xf32>
    %746 = math.exp %745 : vector<2x32xf32>
    %cst_151 = arith.constant 1.000000e+00 : f32
    %747 = vector.broadcast %cst_151 : f32 to vector<2x32xf32>
    %748 = arith.addf %747, %746 : vector<2x32xf32>
    %749 = arith.divf %747, %748 : vector<2x32xf32>
    %750 = vector.extract_strided_slice %743 {offsets = [0, 32], sizes = [2, 32], strides = [1, 1]} : vector<2x128xf32> to vector<2x32xf32>
    %751 = arith.negf %750 : vector<2x32xf32>
    %752 = math.exp %751 : vector<2x32xf32>
    %cst_152 = arith.constant 1.000000e+00 : f32
    %753 = vector.broadcast %cst_152 : f32 to vector<2x32xf32>
    %754 = arith.addf %753, %752 : vector<2x32xf32>
    %755 = arith.divf %753, %754 : vector<2x32xf32>
    %756 = vector.extract_strided_slice %743 {offsets = [0, 64], sizes = [2, 32], strides = [1, 1]} : vector<2x128xf32> to vector<2x32xf32>
    %757 = math.tanh %756 : vector<2x32xf32>
    %758 = vector.extract_strided_slice %743 {offsets = [0, 96], sizes = [2, 32], strides = [1, 1]} : vector<2x128xf32> to vector<2x32xf32>
    %759 = arith.negf %758 : vector<2x32xf32>
    %760 = math.exp %759 : vector<2x32xf32>
    %cst_153 = arith.constant 1.000000e+00 : f32
    %761 = vector.broadcast %cst_153 : f32 to vector<2x32xf32>
    %762 = arith.addf %761, %760 : vector<2x32xf32>
    %763 = arith.divf %761, %762 : vector<2x32xf32>
    %764 = arith.mulf %755, %710 : vector<2x32xf32>
    %765 = arith.mulf %749, %757 : vector<2x32xf32>
    %766 = arith.addf %764, %765 : vector<2x32xf32>
    %767 = math.tanh %766 : vector<2x32xf32>
    %768 = arith.mulf %763, %767 : vector<2x32xf32>
    %769 = vector.extract_strided_slice %485 {offsets = [10, 0], sizes = [2, 128], strides = [1, 1]} : vector<16x128xf32> to vector<2x128xf32>
    %cst_154 = arith.constant dense<0.000000e+00> : vector<2x128xf32>
    %770 = tpu.matmul %740, %487, %cst_154 {dimension_numbers = #tpu.dot_dimension_numbers<[1], [0], [0], [1], [0, 0, 1, 1], [], []>} : vector<2x32xf32>, vector<32x128xf32>, vector<2x128xf32> -> vector<2x128xf32>
    %771 = arith.addf %769, %770 : vector<2x128xf32>
    %772 = vector.extract_strided_slice %771 {offsets = [0, 0], sizes = [2, 32], strides = [1, 1]} : vector<2x128xf32> to vector<2x32xf32>
    %773 = arith.negf %772 : vector<2x32xf32>
    %774 = math.exp %773 : vector<2x32xf32>
    %cst_155 = arith.constant 1.000000e+00 : f32
    %775 = vector.broadcast %cst_155 : f32 to vector<2x32xf32>
    %776 = arith.addf %775, %774 : vector<2x32xf32>
    %777 = arith.divf %775, %776 : vector<2x32xf32>
    %778 = vector.extract_strided_slice %771 {offsets = [0, 32], sizes = [2, 32], strides = [1, 1]} : vector<2x128xf32> to vector<2x32xf32>
    %779 = arith.negf %778 : vector<2x32xf32>
    %780 = math.exp %779 : vector<2x32xf32>
    %cst_156 = arith.constant 1.000000e+00 : f32
    %781 = vector.broadcast %cst_156 : f32 to vector<2x32xf32>
    %782 = arith.addf %781, %780 : vector<2x32xf32>
    %783 = arith.divf %781, %782 : vector<2x32xf32>
    %784 = vector.extract_strided_slice %771 {offsets = [0, 64], sizes = [2, 32], strides = [1, 1]} : vector<2x128xf32> to vector<2x32xf32>
    %785 = math.tanh %784 : vector<2x32xf32>
    %786 = vector.extract_strided_slice %771 {offsets = [0, 96], sizes = [2, 32], strides = [1, 1]} : vector<2x128xf32> to vector<2x32xf32>
    %787 = arith.negf %786 : vector<2x32xf32>
    %788 = math.exp %787 : vector<2x32xf32>
    %cst_157 = arith.constant 1.000000e+00 : f32
    %789 = vector.broadcast %cst_157 : f32 to vector<2x32xf32>
    %790 = arith.addf %789, %788 : vector<2x32xf32>
    %791 = arith.divf %789, %790 : vector<2x32xf32>
    %792 = arith.mulf %783, %738 : vector<2x32xf32>
    %793 = arith.mulf %777, %785 : vector<2x32xf32>
    %794 = arith.addf %792, %793 : vector<2x32xf32>
    %795 = math.tanh %794 : vector<2x32xf32>
    %796 = arith.mulf %791, %795 : vector<2x32xf32>
    %797 = vector.extract_strided_slice %486 {offsets = [4, 0], sizes = [2, 128], strides = [1, 1]} : vector<16x128xf32> to vector<2x128xf32>
    %cst_158 = arith.constant dense<0.000000e+00> : vector<2x128xf32>
    %798 = tpu.matmul %768, %488, %cst_158 {dimension_numbers = #tpu.dot_dimension_numbers<[1], [0], [0], [1], [0, 0, 1, 1], [], []>} : vector<2x32xf32>, vector<32x128xf32>, vector<2x128xf32> -> vector<2x128xf32>
    %799 = arith.addf %797, %798 : vector<2x128xf32>
    %800 = vector.extract_strided_slice %799 {offsets = [0, 0], sizes = [2, 32], strides = [1, 1]} : vector<2x128xf32> to vector<2x32xf32>
    %801 = arith.negf %800 : vector<2x32xf32>
    %802 = math.exp %801 : vector<2x32xf32>
    %cst_159 = arith.constant 1.000000e+00 : f32
    %803 = vector.broadcast %cst_159 : f32 to vector<2x32xf32>
    %804 = arith.addf %803, %802 : vector<2x32xf32>
    %805 = arith.divf %803, %804 : vector<2x32xf32>
    %806 = vector.extract_strided_slice %799 {offsets = [0, 32], sizes = [2, 32], strides = [1, 1]} : vector<2x128xf32> to vector<2x32xf32>
    %807 = arith.negf %806 : vector<2x32xf32>
    %808 = math.exp %807 : vector<2x32xf32>
    %cst_160 = arith.constant 1.000000e+00 : f32
    %809 = vector.broadcast %cst_160 : f32 to vector<2x32xf32>
    %810 = arith.addf %809, %808 : vector<2x32xf32>
    %811 = arith.divf %809, %810 : vector<2x32xf32>
    %812 = vector.extract_strided_slice %799 {offsets = [0, 64], sizes = [2, 32], strides = [1, 1]} : vector<2x128xf32> to vector<2x32xf32>
    %813 = math.tanh %812 : vector<2x32xf32>
    %814 = vector.extract_strided_slice %799 {offsets = [0, 96], sizes = [2, 32], strides = [1, 1]} : vector<2x128xf32> to vector<2x32xf32>
    %815 = arith.negf %814 : vector<2x32xf32>
    %816 = math.exp %815 : vector<2x32xf32>
    %cst_161 = arith.constant 1.000000e+00 : f32
    %817 = vector.broadcast %cst_161 : f32 to vector<2x32xf32>
    %818 = arith.addf %817, %816 : vector<2x32xf32>
    %819 = arith.divf %817, %818 : vector<2x32xf32>
    %820 = arith.mulf %811, %766 : vector<2x32xf32>
    %821 = arith.mulf %805, %813 : vector<2x32xf32>
    %822 = arith.addf %820, %821 : vector<2x32xf32>
    %823 = math.tanh %822 : vector<2x32xf32>
    %824 = arith.mulf %819, %823 : vector<2x32xf32>
    %825 = vector.extract_strided_slice %485 {offsets = [12, 0], sizes = [2, 128], strides = [1, 1]} : vector<16x128xf32> to vector<2x128xf32>
    %cst_162 = arith.constant dense<0.000000e+00> : vector<2x128xf32>
    %826 = tpu.matmul %796, %487, %cst_162 {dimension_numbers = #tpu.dot_dimension_numbers<[1], [0], [0], [1], [0, 0, 1, 1], [], []>} : vector<2x32xf32>, vector<32x128xf32>, vector<2x128xf32> -> vector<2x128xf32>
    %827 = arith.addf %825, %826 : vector<2x128xf32>
    %828 = vector.extract_strided_slice %827 {offsets = [0, 0], sizes = [2, 32], strides = [1, 1]} : vector<2x128xf32> to vector<2x32xf32>
    %829 = arith.negf %828 : vector<2x32xf32>
    %830 = math.exp %829 : vector<2x32xf32>
    %cst_163 = arith.constant 1.000000e+00 : f32
    %831 = vector.broadcast %cst_163 : f32 to vector<2x32xf32>
    %832 = arith.addf %831, %830 : vector<2x32xf32>
    %833 = arith.divf %831, %832 : vector<2x32xf32>
    %834 = vector.extract_strided_slice %827 {offsets = [0, 32], sizes = [2, 32], strides = [1, 1]} : vector<2x128xf32> to vector<2x32xf32>
    %835 = arith.negf %834 : vector<2x32xf32>
    %836 = math.exp %835 : vector<2x32xf32>
    %cst_164 = arith.constant 1.000000e+00 : f32
    %837 = vector.broadcast %cst_164 : f32 to vector<2x32xf32>
    %838 = arith.addf %837, %836 : vector<2x32xf32>
    %839 = arith.divf %837, %838 : vector<2x32xf32>
    %840 = vector.extract_strided_slice %827 {offsets = [0, 64], sizes = [2, 32], strides = [1, 1]} : vector<2x128xf32> to vector<2x32xf32>
    %841 = math.tanh %840 : vector<2x32xf32>
    %842 = vector.extract_strided_slice %827 {offsets = [0, 96], sizes = [2, 32], strides = [1, 1]} : vector<2x128xf32> to vector<2x32xf32>
    %843 = arith.negf %842 : vector<2x32xf32>
    %844 = math.exp %843 : vector<2x32xf32>
    %cst_165 = arith.constant 1.000000e+00 : f32
    %845 = vector.broadcast %cst_165 : f32 to vector<2x32xf32>
    %846 = arith.addf %845, %844 : vector<2x32xf32>
    %847 = arith.divf %845, %846 : vector<2x32xf32>
    %848 = arith.mulf %839, %794 : vector<2x32xf32>
    %849 = arith.mulf %833, %841 : vector<2x32xf32>
    %850 = arith.addf %848, %849 : vector<2x32xf32>
    %851 = math.tanh %850 : vector<2x32xf32>
    %852 = arith.mulf %847, %851 : vector<2x32xf32>
    %853 = vector.extract_strided_slice %486 {offsets = [2, 0], sizes = [2, 128], strides = [1, 1]} : vector<16x128xf32> to vector<2x128xf32>
    %cst_166 = arith.constant dense<0.000000e+00> : vector<2x128xf32>
    %854 = tpu.matmul %824, %488, %cst_166 {dimension_numbers = #tpu.dot_dimension_numbers<[1], [0], [0], [1], [0, 0, 1, 1], [], []>} : vector<2x32xf32>, vector<32x128xf32>, vector<2x128xf32> -> vector<2x128xf32>
    %855 = arith.addf %853, %854 : vector<2x128xf32>
    %856 = vector.extract_strided_slice %855 {offsets = [0, 0], sizes = [2, 32], strides = [1, 1]} : vector<2x128xf32> to vector<2x32xf32>
    %857 = arith.negf %856 : vector<2x32xf32>
    %858 = math.exp %857 : vector<2x32xf32>
    %cst_167 = arith.constant 1.000000e+00 : f32
    %859 = vector.broadcast %cst_167 : f32 to vector<2x32xf32>
    %860 = arith.addf %859, %858 : vector<2x32xf32>
    %861 = arith.divf %859, %860 : vector<2x32xf32>
    %862 = vector.extract_strided_slice %855 {offsets = [0, 32], sizes = [2, 32], strides = [1, 1]} : vector<2x128xf32> to vector<2x32xf32>
    %863 = arith.negf %862 : vector<2x32xf32>
    %864 = math.exp %863 : vector<2x32xf32>
    %cst_168 = arith.constant 1.000000e+00 : f32
    %865 = vector.broadcast %cst_168 : f32 to vector<2x32xf32>
    %866 = arith.addf %865, %864 : vector<2x32xf32>
    %867 = arith.divf %865, %866 : vector<2x32xf32>
    %868 = vector.extract_strided_slice %855 {offsets = [0, 64], sizes = [2, 32], strides = [1, 1]} : vector<2x128xf32> to vector<2x32xf32>
    %869 = math.tanh %868 : vector<2x32xf32>
    %870 = vector.extract_strided_slice %855 {offsets = [0, 96], sizes = [2, 32], strides = [1, 1]} : vector<2x128xf32> to vector<2x32xf32>
    %871 = arith.negf %870 : vector<2x32xf32>
    %872 = math.exp %871 : vector<2x32xf32>
    %cst_169 = arith.constant 1.000000e+00 : f32
    %873 = vector.broadcast %cst_169 : f32 to vector<2x32xf32>
    %874 = arith.addf %873, %872 : vector<2x32xf32>
    %875 = arith.divf %873, %874 : vector<2x32xf32>
    %876 = arith.mulf %867, %822 : vector<2x32xf32>
    %877 = arith.mulf %861, %869 : vector<2x32xf32>
    %878 = arith.addf %876, %877 : vector<2x32xf32>
    %879 = math.tanh %878 : vector<2x32xf32>
    %880 = arith.mulf %875, %879 : vector<2x32xf32>
    %881 = vector.extract_strided_slice %485 {offsets = [14, 0], sizes = [2, 128], strides = [1, 1]} : vector<16x128xf32> to vector<2x128xf32>
    %cst_170 = arith.constant dense<0.000000e+00> : vector<2x128xf32>
    %882 = tpu.matmul %852, %487, %cst_170 {dimension_numbers = #tpu.dot_dimension_numbers<[1], [0], [0], [1], [0, 0, 1, 1], [], []>} : vector<2x32xf32>, vector<32x128xf32>, vector<2x128xf32> -> vector<2x128xf32>
    %883 = arith.addf %881, %882 : vector<2x128xf32>
    %884 = vector.extract_strided_slice %883 {offsets = [0, 0], sizes = [2, 32], strides = [1, 1]} : vector<2x128xf32> to vector<2x32xf32>
    %885 = arith.negf %884 : vector<2x32xf32>
    %886 = math.exp %885 : vector<2x32xf32>
    %cst_171 = arith.constant 1.000000e+00 : f32
    %887 = vector.broadcast %cst_171 : f32 to vector<2x32xf32>
    %888 = arith.addf %887, %886 : vector<2x32xf32>
    %889 = arith.divf %887, %888 : vector<2x32xf32>
    %890 = vector.extract_strided_slice %883 {offsets = [0, 32], sizes = [2, 32], strides = [1, 1]} : vector<2x128xf32> to vector<2x32xf32>
    %891 = arith.negf %890 : vector<2x32xf32>
    %892 = math.exp %891 : vector<2x32xf32>
    %cst_172 = arith.constant 1.000000e+00 : f32
    %893 = vector.broadcast %cst_172 : f32 to vector<2x32xf32>
    %894 = arith.addf %893, %892 : vector<2x32xf32>
    %895 = arith.divf %893, %894 : vector<2x32xf32>
    %896 = vector.extract_strided_slice %883 {offsets = [0, 64], sizes = [2, 32], strides = [1, 1]} : vector<2x128xf32> to vector<2x32xf32>
    %897 = math.tanh %896 : vector<2x32xf32>
    %898 = vector.extract_strided_slice %883 {offsets = [0, 96], sizes = [2, 32], strides = [1, 1]} : vector<2x128xf32> to vector<2x32xf32>
    %899 = arith.negf %898 : vector<2x32xf32>
    %900 = math.exp %899 : vector<2x32xf32>
    %cst_173 = arith.constant 1.000000e+00 : f32
    %901 = vector.broadcast %cst_173 : f32 to vector<2x32xf32>
    %902 = arith.addf %901, %900 : vector<2x32xf32>
    %903 = arith.divf %901, %902 : vector<2x32xf32>
    %904 = arith.mulf %895, %850 : vector<2x32xf32>
    %905 = arith.mulf %889, %897 : vector<2x32xf32>
    %906 = arith.addf %904, %905 : vector<2x32xf32>
    %907 = math.tanh %906 : vector<2x32xf32>
    %908 = arith.mulf %903, %907 : vector<2x32xf32>
    %909 = vector.extract_strided_slice %486 {offsets = [0, 0], sizes = [2, 128], strides = [1, 1]} : vector<16x128xf32> to vector<2x128xf32>
    %cst_174 = arith.constant dense<0.000000e+00> : vector<2x128xf32>
    %910 = tpu.matmul %880, %488, %cst_174 {dimension_numbers = #tpu.dot_dimension_numbers<[1], [0], [0], [1], [0, 0, 1, 1], [], []>} : vector<2x32xf32>, vector<32x128xf32>, vector<2x128xf32> -> vector<2x128xf32>
    %911 = arith.addf %909, %910 : vector<2x128xf32>
    %912 = vector.extract_strided_slice %911 {offsets = [0, 0], sizes = [2, 32], strides = [1, 1]} : vector<2x128xf32> to vector<2x32xf32>
    %913 = arith.negf %912 : vector<2x32xf32>
    %914 = math.exp %913 : vector<2x32xf32>
    %cst_175 = arith.constant 1.000000e+00 : f32
    %915 = vector.broadcast %cst_175 : f32 to vector<2x32xf32>
    %916 = arith.addf %915, %914 : vector<2x32xf32>
    %917 = arith.divf %915, %916 : vector<2x32xf32>
    %918 = vector.extract_strided_slice %911 {offsets = [0, 32], sizes = [2, 32], strides = [1, 1]} : vector<2x128xf32> to vector<2x32xf32>
    %919 = arith.negf %918 : vector<2x32xf32>
    %920 = math.exp %919 : vector<2x32xf32>
    %cst_176 = arith.constant 1.000000e+00 : f32
    %921 = vector.broadcast %cst_176 : f32 to vector<2x32xf32>
    %922 = arith.addf %921, %920 : vector<2x32xf32>
    %923 = arith.divf %921, %922 : vector<2x32xf32>
    %924 = vector.extract_strided_slice %911 {offsets = [0, 64], sizes = [2, 32], strides = [1, 1]} : vector<2x128xf32> to vector<2x32xf32>
    %925 = math.tanh %924 : vector<2x32xf32>
    %926 = vector.extract_strided_slice %911 {offsets = [0, 96], sizes = [2, 32], strides = [1, 1]} : vector<2x128xf32> to vector<2x32xf32>
    %927 = arith.negf %926 : vector<2x32xf32>
    %928 = math.exp %927 : vector<2x32xf32>
    %cst_177 = arith.constant 1.000000e+00 : f32
    %929 = vector.broadcast %cst_177 : f32 to vector<2x32xf32>
    %930 = arith.addf %929, %928 : vector<2x32xf32>
    %931 = arith.divf %929, %930 : vector<2x32xf32>
    %932 = arith.mulf %923, %878 : vector<2x32xf32>
    %933 = arith.mulf %917, %925 : vector<2x32xf32>
    %934 = arith.addf %932, %933 : vector<2x32xf32>
    %935 = math.tanh %934 : vector<2x32xf32>
    %936 = arith.mulf %931, %935 : vector<2x32xf32>
    %c0_178 = arith.constant 0 : index
    %c0_179 = arith.constant 0 : index
    %937 = vector.load %arg10[%c0_178, %c0_179] : memref<128x1024xf32, #tpu.memory_space<vmem>>, vector<32x1024xf32>
    %cst_180 = arith.constant dense<0.000000e+00> : vector<2x1024xf32>
    %938 = tpu.matmul %444, %937, %cst_180 {dimension_numbers = #tpu.dot_dimension_numbers<[1], [0], [0], [1], [0, 0, 1, 1], [], []>} : vector<2x32xf32>, vector<32x1024xf32>, vector<2x1024xf32> -> vector<2x1024xf32>
    %c32_181 = arith.constant 32 : index
    %c0_182 = arith.constant 0 : index
    %939 = vector.load %arg10[%c32_181, %c0_182] : memref<128x1024xf32, #tpu.memory_space<vmem>>, vector<32x1024xf32>
    %cst_183 = arith.constant dense<0.000000e+00> : vector<2x1024xf32>
    %940 = tpu.matmul %472, %939, %cst_183 {dimension_numbers = #tpu.dot_dimension_numbers<[1], [0], [0], [1], [0, 0, 1, 1], [], []>} : vector<2x32xf32>, vector<32x1024xf32>, vector<2x1024xf32> -> vector<2x1024xf32>
    %941 = arith.addf %938, %940 : vector<2x1024xf32>
    %c64 = arith.constant 64 : index
    %c0_184 = arith.constant 0 : index
    %942 = vector.load %arg10[%c64, %c0_184] : memref<128x1024xf32, #tpu.memory_space<vmem>>, vector<32x1024xf32>
    %cst_185 = arith.constant dense<0.000000e+00> : vector<2x1024xf32>
    %943 = tpu.matmul %908, %942, %cst_185 {dimension_numbers = #tpu.dot_dimension_numbers<[1], [0], [0], [1], [0, 0, 1, 1], [], []>} : vector<2x32xf32>, vector<32x1024xf32>, vector<2x1024xf32> -> vector<2x1024xf32>
    %944 = arith.addf %941, %943 : vector<2x1024xf32>
    %c96 = arith.constant 96 : index
    %c0_186 = arith.constant 0 : index
    %945 = vector.load %arg10[%c96, %c0_186] : memref<128x1024xf32, #tpu.memory_space<vmem>>, vector<32x1024xf32>
    %cst_187 = arith.constant dense<0.000000e+00> : vector<2x1024xf32>
    %946 = tpu.matmul %936, %945, %cst_187 {dimension_numbers = #tpu.dot_dimension_numbers<[1], [0], [0], [1], [0, 0, 1, 1], [], []>} : vector<2x32xf32>, vector<32x1024xf32>, vector<2x1024xf32> -> vector<2x1024xf32>
    %947 = arith.addf %944, %946 : vector<2x1024xf32>
    %c0_188 = arith.constant 0 : index
    %c0_189 = arith.constant 0 : index
    %948 = vector.load %arg11[%c0_188, %c0_189] : memref<1x1024xf32, #tpu.memory_space<vmem>>, vector<1x1024xf32>
    %949 = vector.broadcast %948 : vector<1x1024xf32> to vector<2x1024xf32>
    %950 = arith.addf %947, %949 : vector<2x1024xf32>
    %c0_190 = arith.constant 0 : index
    %c0_191 = arith.constant 0 : index
    %951 = vector.load %arg12[%c0_190, %c0_191] : memref<2x1024xf32, #tpu.memory_space<vmem>>, vector<2x1024xf32>
    tpu.vector_store %arg12[%c0_190, %c0_191], %950 {strides = array<i32>} : memref<2x1024xf32, #tpu.memory_space<vmem>>, vector<2x1024xf32>,
    return
  }
  func.func @transform_0(%arg0: i32) -> (i32, i32) {
    %c0_i32 = arith.constant 0 : i32
    %c0_i32_0 = arith.constant 0 : i32
    %c0_i32_1 = arith.constant 0 : i32
    return %c0_i32, %c0_i32_0 : i32, i32
  }
  func.func @transform_1(%arg0: i32) -> (i32, i32) {
    %c0_i32 = arith.constant 0 : i32
    %c0_i32_0 = arith.constant 0 : i32
    %c0_i32_1 = arith.constant 0 : i32
    return %c0_i32, %c0_i32_0 : i32, i32
  }
  func.func @transform_2(%arg0: i32) -> (i32, i32) {
    %c0_i32 = arith.constant 0 : i32
    %c0_i32_0 = arith.constant 0 : i32
    %c0_i32_1 = arith.constant 0 : i32
    return %c0_i32, %c0_i32_0 : i32, i32
  }
  func.func @transform_3(%arg0: i32) -> (i32, i32) {
    %c0_i32 = arith.constant 0 : i32
    %c0_i32_0 = arith.constant 0 : i32
    %c0_i32_1 = arith.constant 0 : i32
    return %c0_i32, %c0_i32_0 : i32, i32
  }
  func.func @transform_4(%arg0: i32) -> (i32, i32) {
    %c0_i32 = arith.constant 0 : i32
    %c0_i32_0 = arith.constant 0 : i32
    %c0_i32_1 = arith.constant 0 : i32
    return %c0_i32, %c0_i32_0 : i32, i32
  }
  func.func @transform_5(%arg0: i32) -> (i32, i32) {
    %c0_i32 = arith.constant 0 : i32
    %c0_i32_0 = arith.constant 0 : i32
    %c0_i32_1 = arith.constant 0 : i32
    return %c0_i32, %c0_i32_0 : i32, i32
  }
  func.func @transform_6(%arg0: i32) -> (i32, i32) {
    %c0_i32 = arith.constant 0 : i32
    %c0_i32_0 = arith.constant 0 : i32
    %c0_i32_1 = arith.constant 0 : i32
    return %c0_i32, %c0_i32_0 : i32, i32
  }
  func.func @transform_7(%arg0: i32) -> (i32, i32) {
    %c0_i32 = arith.constant 0 : i32
    %c0_i32_0 = arith.constant 0 : i32
    %c0_i32_1 = arith.constant 0 : i32
    return %c0_i32, %c0_i32_0 : i32, i32
  }
  func.func @transform_8(%arg0: i32) -> (i32, i32) {
    %c0_i32 = arith.constant 0 : i32
    %c0_i32_0 = arith.constant 0 : i32
    %c0_i32_1 = arith.constant 0 : i32
    return %c0_i32, %c0_i32_0 : i32, i32
  }
  func.func @transform_9(%arg0: i32) -> (i32, i32) {
    %c0_i32 = arith.constant 0 : i32
    %c0_i32_0 = arith.constant 0 : i32
    %c0_i32_1 = arith.constant 0 : i32
    return %c0_i32, %c0_i32_0 : i32, i32
  }
  func.func @transform_10(%arg0: i32) -> (i32, i32) {
    %c0_i32 = arith.constant 0 : i32
    %c0_i32_0 = arith.constant 0 : i32
    %c0_i32_1 = arith.constant 0 : i32
    return %c0_i32, %c0_i32_0 : i32, i32
  }
  func.func @transform_11(%arg0: i32) -> (i32, i32) {
    %c0_i32 = arith.constant 0 : i32
    %c0_i32_0 = arith.constant 0 : i32
    %c0_i32_1 = arith.constant 0 : i32
    return %c0_i32, %c0_i32_0 : i32, i32
  }
}

</mosaic_0001>

<llo_original>
// kernel: tpu_custom_call.1
$region0: #{tpu_custom_call.1}
  #allocation0 [shape = 'u32[]', space=smem, size = 0x4, offset = 0x4, fixed_abs, tag = 'smem constant byte address 0x4 - core index']
  #allocation1 [shape = 'u32[144,128]{1,0:T(1,128)}', space=vmem, size = 0x12000, scoped, tag = 'internal scratch']
  #allocation2 [shape = 'f32[16,32]{1,0:T(8,128)}', space=vmem, size = 0x2000, scoped, tag = 'scratch operand']
  #allocation3 [shape = 'f32[16,32]{1,0:T(8,128)}', space=vmem, size = 0x2000, scoped, tag = 'scratch operand']
  %s0 = inlined_call_operand.vmem [shape: f32[16,4], index: 0, kind: input, shape index: {}]
  %s1 = inlined_call_operand.hbm [shape: f32[4,256], index: 1, kind: input, shape index: {}]
  %s2 = inlined_call_operand.vmem [shape: f32[1,256], index: 2, kind: input, shape index: {}]
  %s3 = inlined_call_operand.hbm [shape: f32[32,128], index: 3, kind: input, shape index: {}]
  %s4 = inlined_call_operand.vmem [shape: f32[32,128], index: 4, kind: input, shape index: {}]
  %s5 = inlined_call_operand.hbm [shape: f32[64,256], index: 5, kind: input, shape index: {}]
  %s6 = inlined_call_operand.hbm [shape: f32[1,256], index: 6, kind: input, shape index: {}]
  %s7 = inlined_call_operand.hbm [shape: f32[32,128], index: 7, kind: input, shape index: {}]
  %s8 = inlined_call_operand.hbm [shape: f32[32,128], index: 8, kind: input, shape index: {}]
  %s9 = inlined_call_operand.hbm [shape: f32[128,1024], index: 9, kind: input, shape index: {}]
  %s10 = inlined_call_operand.vmem [shape: f32[1,1024], index: 10, kind: input, shape index: {}]
  %s11 = inlined_call_operand.hbm [shape: f32[2,1024], index: 11, kind: output, shape index: {}]
  %s12 = sld [smem:[#allocation0]]
  $region82: #{tpu_custom_call.1} parent=0
    _
  %s14 = ssub.s32 1, %s12
  %s15 = scalar_select 0, %s14, %s12
  $region1: #{tpu_custom_call.1} parent=0
    #allocation4 [shape = 'u8[4096]{0}', space=vmem, size = 0x1000, scoped, tag = 'input window, operand 1, single buffered']
    #allocation5 [shape = 's32[1]{0}', space=sflag, size = 0x4, scoped, tag = 'scoped memory for tpu_custom_call.1']
    #allocation6 [shape = 's32[1]{0}', space=sflag, size = 0x4, scoped, tag = 'scoped memory for tpu_custom_call.1']
    #allocation7 [shape = 'u8[16384]{0}', space=vmem, size = 0x4000, scoped, tag = 'input window, operand 3, single buffered']
    #allocation8 [shape = 's32[1]{0}', space=sflag, size = 0x4, scoped, tag = 'scoped memory for tpu_custom_call.1']
    #allocation9 [shape = 'u8[65536]{0}', space=vmem, size = 0x10000, scoped, tag = 'input window, operand 5, single buffered']
    #allocation10 [shape = 'u8[1024]{0}', space=vmem, size = 0x400, scoped, tag = 'input window, operand 6, single buffered']
    #allocation11 [shape = 's32[1]{0}', space=sflag, size = 0x4, scoped, tag = 'scoped memory for tpu_custom_call.1']
    #allocation12 [shape = 'u8[16384]{0}', space=vmem, size = 0x4000, scoped, tag = 'input window, operand 7, single buffered']
    #allocation13 [shape = 'u8[16384]{0}', space=vmem, size = 0x4000, scoped, tag = 'input window, operand 8, single buffered']
    #allocation14 [shape = 's32[1]{0}', space=sflag, size = 0x4, scoped, tag = 'scoped memory for tpu_custom_call.1']
    #allocation15 [shape = 'u8[524288]{0}', space=vmem, size = 0x80000, scoped, tag = 'input window, operand 9, single buffered']
    #allocation16 [shape = 'u8[8192]{0}', space=vmem, size = 0x2000, scoped, tag = 'output window, operand 0, single buffered']
    %16 = vsyncpa [#allocation5], 0
    %17 = vsyncpa [#allocation8], 0
    %18 = vsyncpa [#allocation11], 0
    %19 = vsyncpa [#allocation14], 0
    %20 = vsyncpa [#allocation6], 0
    // Predicated region
    $region2: #{tpu_custom_call.1} parent=1 // pred_check
      _
    $region3: #{tpu_custom_call.1} parent=1 // pred_check_branch
      %22 = sbr.rel (0) target = $region5
    $region4: #{tpu_custom_call.1} parent=1 // pred_region
      _
    $region5: #{tpu_custom_call.1} parent=1 // pred_fallthru
      _
    // Predicated region
    $region6: #{tpu_custom_call.1} parent=1 // pred_check
      _
    $region7: #{tpu_custom_call.1} parent=1 // pred_check_branch
      %24 = sbr.rel (0) target = $region9
    $region8: #{tpu_custom_call.1} parent=1 // pred_region
      %s26 = ssub.s32 128, 128
      %27 = vsyncadd [#allocation5], %s26
      %s29 = sshll.u32 [#allocation4], 4
      %s30 = int_to_ptr.vmem [resolvable:$true] %s29
      %32 = dma.hbm_to_vmem [thread:$0]  %s1, 128, %s30, [#allocation5]
    $region9: #{tpu_custom_call.1} parent=1 // pred_fallthru
      _
    // Predicated region
    $region10: #{tpu_custom_call.1} parent=1 // pred_check
      _
    $region11: #{tpu_custom_call.1} parent=1 // pred_check_branch
      %34 = sbr.rel (0) target = $region13
    $region12: #{tpu_custom_call.1} parent=1 // pred_region
      _
    $region13: #{tpu_custom_call.1} parent=1 // pred_fallthru
      _
    // Predicated region
    $region14: #{tpu_custom_call.1} parent=1 // pred_check
      _
    $region15: #{tpu_custom_call.1} parent=1 // pred_check_branch
      %36 = sbr.rel (0) target = $region17
    $region16: #{tpu_custom_call.1} parent=1 // pred_region
      %s38 = ssub.s32 512, 512
      %39 = vsyncadd [#allocation8], %s38
      %s40 = sshll.u32 [#allocation7], 4
      %s41 = int_to_ptr.vmem [resolvable:$true] %s40
      %46 = dma.hbm_to_vmem [thread:$0]  %s3, 512, %s41, [#allocation8], 128, 128, 8
    $region17: #{tpu_custom_call.1} parent=1 // pred_fallthru
      _
    // Predicated region
    $region18: #{tpu_custom_call.1} parent=1 // pred_check
      _
    $region19: #{tpu_custom_call.1} parent=1 // pred_check_branch
      %48 = sbr.rel (0) target = $region21
    $region20: #{tpu_custom_call.1} parent=1 // pred_region
      _
    $region21: #{tpu_custom_call.1} parent=1 // pred_fallthru
      _
    // Predicated region
    $region22: #{tpu_custom_call.1} parent=1 // pred_check
      _
    $region23: #{tpu_custom_call.1} parent=1 // pred_check_branch
      %50 = sbr.rel (0) target = $region25
    $region24: #{tpu_custom_call.1} parent=1 // pred_region
      %s52 = ssub.s32 2048, 2048
      %53 = vsyncadd [#allocation8], %s52
      %s54 = sshll.u32 [#allocation9], 4
      %s55 = int_to_ptr.vmem [resolvable:$true] %s54
      %60 = dma.hbm_to_vmem [thread:$0]  %s5, 2048, %s55, [#allocation8], 256, 256, 16
    $region25: #{tpu_custom_call.1} parent=1 // pred_fallthru
      _
    // Predicated region
    $region26: #{tpu_custom_call.1} parent=1 // pred_check
      _
    $region27: #{tpu_custom_call.1} parent=1 // pred_check_branch
      %62 = sbr.rel (0) target = $region29
    $region28: #{tpu_custom_call.1} parent=1 // pred_region
      %s64 = ssub.s32 32, 32
      %65 = vsyncadd [#allocation11], %s64
      %s67 = sshll.u32 [#allocation10], 4
      %s68 = int_to_ptr.vmem [resolvable:$true] %s67
      %70 = dma.hbm_to_vmem [thread:$0]  %s6, 32, %s68, [#allocation11]
    $region29: #{tpu_custom_call.1} parent=1 // pred_fallthru
      _
    // Predicated region
    $region30: #{tpu_custom_call.1} parent=1 // pred_check
      _
    $region31: #{tpu_custom_call.1} parent=1 // pred_check_branch
      %72 = sbr.rel (0) target = $region33
    $region32: #{tpu_custom_call.1} parent=1 // pred_region
      %s74 = ssub.s32 512, 512
      %75 = vsyncadd [#allocation11], %s74
      %s76 = sshll.u32 [#allocation12], 4
      %s77 = int_to_ptr.vmem [resolvable:$true] %s76
      %82 = dma.hbm_to_vmem [thread:$0]  %s7, 512, %s77, [#allocation11], 128, 128, 8
    $region33: #{tpu_custom_call.1} parent=1 // pred_fallthru
      _
    // Predicated region
    $region34: #{tpu_custom_call.1} parent=1 // pred_check
      _
    $region35: #{tpu_custom_call.1} parent=1 // pred_check_branch
      %84 = sbr.rel (0) target = $region37
    $region36: #{tpu_custom_call.1} parent=1 // pred_region
      %s86 = ssub.s32 512, 512
      %87 = vsyncadd [#allocation14], %s86
      %s88 = sshll.u32 [#allocation13], 4
      %s89 = int_to_ptr.vmem [resolvable:$true] %s88
      %94 = dma.hbm_to_vmem [thread:$0]  %s8, 512, %s89, [#allocation14], 128, 128, 8
    $region37: #{tpu_custom_call.1} parent=1 // pred_fallthru
      _
    // Predicated region
    $region38: #{tpu_custom_call.1} parent=1 // pred_check
      _
    $region39: #{tpu_custom_call.1} parent=1 // pred_check_branch
      %96 = sbr.rel (0) target = $region41
    $region40: #{tpu_custom_call.1} parent=1 // pred_region
      %s98 = ssub.s32 16384, 16384
      %99 = vsyncadd [#allocation14], %s98
      %s100 = sshll.u32 [#allocation15], 4
      %s101 = int_to_ptr.vmem [resolvable:$true] %s100
      %106 = dma.hbm_to_vmem [thread:$0]  %s9, 16384, %s101, [#allocation14], 1024, 1024, 64
    $region41: #{tpu_custom_call.1} parent=1 // pred_fallthru
      _
    // Predicated region
    $region42: #{tpu_custom_call.1} parent=1 // pred_check
      _
    $region43: #{tpu_custom_call.1} parent=1 // pred_check_branch
      %108 = sbr.rel (0) target = $region45
    $region44: #{tpu_custom_call.1} parent=1 // pred_region
      _
    $region45: #{tpu_custom_call.1} parent=1 // pred_fallthru
      _
    // Predicated region
    $region46: #{tpu_custom_call.1} parent=1 // pred_check
      _
    $region47: #{tpu_custom_call.1} parent=1 // pred_check_branch
      %110 = sbr.rel (0) target = $region49
    $region48: #{tpu_custom_call.1} parent=1 // pred_region
      %111 = dma.done [#allocation5], 128
    $region49: #{tpu_custom_call.1} parent=1 // pred_fallthru
      _
    // Predicated region
    $region50: #{tpu_custom_call.1} parent=1 // pred_check
      _
    $region51: #{tpu_custom_call.1} parent=1 // pred_check_branch
      %113 = sbr.rel (0) target = $region53
    $region52: #{tpu_custom_call.1} parent=1 // pred_region
      %114 = dma.done [#allocation8], 512
    $region53: #{tpu_custom_call.1} parent=1 // pred_fallthru
      _
    // Predicated region
    $region54: #{tpu_custom_call.1} parent=1 // pred_check
      _
    $region55: #{tpu_custom_call.1} parent=1 // pred_check_branch
      %116 = sbr.rel (0) target = $region57
    $region56: #{tpu_custom_call.1} parent=1 // pred_region
      %117 = dma.done [#allocation8], 2048
    $region57: #{tpu_custom_call.1} parent=1 // pred_fallthru
      _
    // Predicated region
    $region58: #{tpu_custom_call.1} parent=1 // pred_check
      _
    $region59: #{tpu_custom_call.1} parent=1 // pred_check_branch
      %119 = sbr.rel (0) target = $region61
    $region60: #{tpu_custom_call.1} parent=1 // pred_region
      %120 = dma.done [#allocation11], 32
    $region61: #{tpu_custom_call.1} parent=1 // pred_fallthru
      _
    // Predicated region
    $region62: #{tpu_custom_call.1} parent=1 // pred_check
      _
    $region63: #{tpu_custom_call.1} parent=1 // pred_check_branch
      %122 = sbr.rel (0) target = $region65
    $region64: #{tpu_custom_call.1} parent=1 // pred_region
      %123 = dma.done [#allocation11], 512
    $region65: #{tpu_custom_call.1} parent=1 // pred_fallthru
      _
    // Predicated region
    $region66: #{tpu_custom_call.1} parent=1 // pred_check
      _
    $region67: #{tpu_custom_call.1} parent=1 // pred_check_branch
      %125 = sbr.rel (0) target = $region69
    $region68: #{tpu_custom_call.1} parent=1 // pred_region
      %126 = dma.done [#allocation14], 512
    $region69: #{tpu_custom_call.1} parent=1 // pred_fallthru
      _
    // Predicated region
    $region70: #{tpu_custom_call.1} parent=1 // pred_check
      _
    $region71: #{tpu_custom_call.1} parent=1 // pred_check_branch
      %128 = sbr.rel (0) target = $region73
    $region72: #{tpu_custom_call.1} parent=1 // pred_region
      %129 = dma.done [#allocation14], 16384
    $region73: #{tpu_custom_call.1} parent=1 // pred_fallthru
      _
    %v130 = vld [vmem:[%s0] sm:$0xff]
    %v131 = vld [vmem:[%s0 + $0x8] sm:$0xff]
    %v132 = vld [vmem:[#allocation4] sm:$0xff]
    %v133 = vld [vmem:[%s2] sm:$0x3]
    %v135 = vlaneseq
    %v136 = vshrl.u32 %v135, 7
    %v137 = vsub.s32 0, %v136
    %v138 = vrot.slane %v133, %v137
    %v139 = vlaneseq
    %v140 = vshrl.u32 %v139, 7
    %v141 = vsub.s32 1, %v140
    %v142 = vrot.slane %v133, %v141
    %v146 = vcombine.high %v132, %v132
    %vm147 = vcmask 31744
    %v149 = vsel %vm147, %v130, 0
    %v152 = vsel %vm147, %v131, 0
    %vm154 = vcmask 1043456
    %v155 = vsel %vm154, %v132, 0
    %v157 = vsel %vm154, %v146, 0
    %159 = vmatprep.subr.mxu0 %v157
    %160 = vmatpush1.msra.mxu0 %v155
    %161 = vmatprep.subr.mxu0 0.0
    %162 = vmatpush1.msra.mxu0 0.0
    %163 = vmatprep.subr.mxu0 0.0
    %164 = vmatpush1.msra.mxu0 0.0
    %165 = vmatprep.subr.mxu0 0.0
    %166 = vmatpush1.msra.mxu0 0.0
    %167 = vmatprep.subr.mxu0 0.0
    %168 = vmatpush1.msra.mxu0 0.0
    %169 = vmatprep.subr.mxu0 0.0
    %170 = vmatpush1.msra.mxu0 0.0
    %171 = vmatprep.subr.mxu0 0.0
    %172 = vmatpush1.msra.mxu0 0.0
    %173 = vmatprep.subr.mxu0 0.0
    %174 = vmatpush1.msra.mxu0 0.0
    %175 = vmatprep.subr.mxu0 0.0
    %176 = vmatpush1.msra.mxu0 0.0
    %177 = vmatprep.subr.mxu0 0.0
    %178 = vmatpush1.msra.mxu0 0.0
    %179 = vmatprep.subr.mxu0 0.0
    %180 = vmatpush1.msra.mxu0 0.0
    %181 = vmatprep.subr.mxu0 0.0
    %182 = vmatpush1.msra.mxu0 0.0
    %183 = vmatprep.subr.mxu0 0.0
    %184 = vmatpush1.msra.mxu0 0.0
    %185 = vmatprep.subr.mxu0 0.0
    %186 = vmatpush1.msra.mxu0 0.0
    %187 = vmatprep.subr.mxu0 0.0
    %188 = vmatpush1.msra.mxu0 0.0
    %189 = vmatprep.subr.mxu0 0.0
    %190 = vmatpush1.msra.mxu0 0.0
    %191 = vmatprep.subr.mxu0 0.0
    %192 = vmatpush1.msra.mxu0 0.0
    %193 = vmatprep.subr.mxu0 0.0
    %194 = vmatpush1.msra.mxu0 0.0
    %195 = vmatprep.subr.mxu0 0.0
    %196 = vmatpush1.msra.mxu0 0.0
    %197 = vmatprep.subr.mxu0 0.0
    %198 = vmatpush1.msra.mxu0 0.0
    %199 = vmatprep.subr.mxu0 0.0
    %200 = vmatpush1.msra.mxu0 0.0
    %201 = vmatprep.subr.mxu0 0.0
    %202 = vmatpush1.msra.mxu0 0.0
    %203 = vmatprep.subr.mxu0 0.0
    %204 = vmatpush1.msra.mxu0 0.0
    %205 = vmatprep.subr.mxu0 0.0
    %206 = vmatpush1.msra.mxu0 0.0
    %207 = vmatprep.subr.mxu0 0.0
    %208 = vmatpush1.msra.mxu0 0.0
    %209 = vmatprep.subr.mxu0 0.0
    %210 = vmatpush1.msra.mxu0 0.0
    %211 = vmatprep.subr.mxu0 0.0
    %212 = vmatpush1.msra.mxu0 0.0
    %213 = vmatprep.subr.mxu0 0.0
    %214 = vmatpush1.msra.mxu0 0.0
    %215 = vmatprep.subr.mxu0 0.0
    %216 = vmatpush1.msra.mxu0 0.0
    %217 = vmatprep.subr.mxu0 0.0
    %218 = vmatpush1.msra.mxu0 0.0
    %219 = vmatprep.subr.mxu0 0.0
    %220 = vmatpush1.msra.mxu0 0.0
    %221 = vmatprep.subr.mxu0 0.0
    %222 = vmatpush1.msra.mxu0 0.0
    %223 = vmatprep.mubr.f32.mxu0 0.0
    %224 = vmatmul.mubr.f32.gmra.mrb[0].mxu0 %v149
    %v225 = vpop.f32.mrb[0].mxu0
    %v226 = vadd.f32 %v138, %v225
    %v227 = vpop.f32.mrb[0].mxu0
    %v228 = vadd.f32 %v142, %v227
    %229 = vmatprep.mubr.f32.mxu0 0.0
    %230 = vmatmul.mubr.f32.gmra.mrb[0].mxu0 %v152
    %v231 = vpop.f32.mrb[0].mxu0
    %v232 = vadd.f32 %v138, %v231
    %v233 = vpop.f32.mrb[0].mxu0
    %v234 = vadd.f32 %v142, %v233
    %235 = vdwg.mxu0
    %v236 = vld [vmem:[#allocation7] sm:$0xff]
    %v237 = vld [vmem:[#allocation7 + $0x8] sm:$0xff]
    %v238 = vld [vmem:[#allocation7 + $0x10] sm:$0xff]
    %v239 = vld [vmem:[#allocation7 + $0x18] sm:$0xff]
    %v240 = vld [vmem:[%s4] sm:$0xff]
    %v241 = vld [vmem:[%s4 + $0x8] sm:$0xff]
    %v242 = vld [vmem:[%s4 + $0x10] sm:$0xff]
    %v243 = vld [vmem:[%s4 + $0x18] sm:$0xff]
    %vm244 = vcmask 261120
    %v246 = vsel %vm244, 0.0, 0
    %248 = vmatprep.subr.mxu0 0.0
    %249 = vmatpush1.msra.mxu0 %v236
    %250 = vmatprep.subr.mxu0 0.0
    %251 = vmatpush1.msra.mxu0 %v237
    %252 = vmatprep.subr.mxu0 0.0
    %253 = vmatpush1.msra.mxu0 %v238
    %254 = vmatprep.subr.mxu0 0.0
    %255 = vmatpush1.msra.mxu0 %v239
    %256 = vmatprep.subr.mxu0 0.0
    %257 = vmatpush1.msra.mxu0 0.0
    %258 = vmatprep.subr.mxu0 0.0
    %259 = vmatpush1.msra.mxu0 0.0
    %260 = vmatprep.subr.mxu0 0.0
    %261 = vmatpush1.msra.mxu0 0.0
    %262 = vmatprep.subr.mxu0 0.0
    %263 = vmatpush1.msra.mxu0 0.0
    %264 = vmatprep.subr.mxu0 0.0
    %265 = vmatpush1.msra.mxu0 0.0
    %266 = vmatprep.subr.mxu0 0.0
    %267 = vmatpush1.msra.mxu0 0.0
    %268 = vmatprep.subr.mxu0 0.0
    %269 = vmatpush1.msra.mxu0 0.0
    %270 = vmatprep.subr.mxu0 0.0
    %271 = vmatpush1.msra.mxu0 0.0
    %272 = vmatprep.subr.mxu0 0.0
    %273 = vmatpush1.msra.mxu0 0.0
    %274 = vmatprep.subr.mxu0 0.0
    %275 = vmatpush1.msra.mxu0 0.0
    %276 = vmatprep.subr.mxu0 0.0
    %277 = vmatpush1.msra.mxu0 0.0
    %278 = vmatprep.subr.mxu0 0.0
    %279 = vmatpush1.msra.mxu0 0.0
    %280 = vmatprep.subr.mxu0 0.0
    %281 = vmatpush1.msra.mxu0 0.0
    %282 = vmatprep.subr.mxu0 0.0
    %283 = vmatpush1.msra.mxu0 0.0
    %284 = vmatprep.subr.mxu0 0.0
    %285 = vmatpush1.msra.mxu0 0.0
    %286 = vmatprep.subr.mxu0 0.0
    %287 = vmatpush1.msra.mxu0 0.0
    %288 = vmatprep.subr.mxu0 0.0
    %289 = vmatpush1.msra.mxu0 0.0
    %290 = vmatprep.subr.mxu0 0.0
    %291 = vmatpush1.msra.mxu0 0.0
    %292 = vmatprep.subr.mxu0 0.0
    %293 = vmatpush1.msra.mxu0 0.0
    %294 = vmatprep.subr.mxu0 0.0
    %295 = vmatpush1.msra.mxu0 0.0
    %296 = vmatprep.subr.mxu0 0.0
    %297 = vmatpush1.msra.mxu0 0.0
    %298 = vmatprep.subr.mxu0 0.0
    %299 = vmatpush1.msra.mxu0 0.0
    %300 = vmatprep.subr.mxu0 0.0
    %301 = vmatpush1.msra.mxu0 0.0
    %302 = vmatprep.subr.mxu0 0.0
    %303 = vmatpush1.msra.mxu0 0.0
    %304 = vmatprep.subr.mxu0 0.0
    %305 = vmatpush1.msra.mxu0 0.0
    %306 = vmatprep.subr.mxu0 0.0
    %307 = vmatpush1.msra.mxu0 0.0
    %308 = vmatprep.subr.mxu0 0.0
    %309 = vmatpush1.msra.mxu0 0.0
    %310 = vmatprep.subr.mxu0 0.0
    %311 = vmatpush1.msra.mxu0 0.0
    %312 = vmatprep.mubr.f32.mxu0 0.0
    %313 = vmatmul.mubr.f32.gmra.mrb[0].mxu0 %v246
    %v314 = vpop.f32.mrb[0].mxu0
    %v315 = vadd.f32 0.0, %v314
    %v316 = vpop.f32.mrb[0].mxu0
    %317 = vdwg.mxu0
    %v318 = vadd.f32 %v226, %v315
    %v319 = vxor.u32 %v318, 2147483648
    %v320 = vmul.f32 %v319, 1.442695
    %v321 = vpow.pop %v320
    %v322 = vadd.f32 %v321, 1.0
    %v323 = vrcp.pop %v322
    %v324 = vmul.f32 1.0, %v323
    %v325 = vtanh.pop %v318
    %v326 = vmul.f32 %v324, 0.0
    %328 = vrot.lane.b32.xlu0 %v325, 64
    %v329 = vpop.permute.xlu0 %328
    %v331 = vmul.f32 %v324, %v329
    %333 = vrot.lane.b32.xlu0 %v331, 32
    %v334 = vpop.permute.xlu0 %333
    %v336 = vadd.f32 %v326, %v334
    %v337 = vtanh.pop %v336
    %339 = vrot.lane.b32.xlu0 %v337, 64
    %v340 = vpop.permute.xlu0 %339
    %v342 = vmul.f32 %v324, %v340
    %343 = vmatprep.subr.mxu0 0.0
    %344 = vmatpush1.msra.mxu0 %v240
    %345 = vmatprep.subr.mxu0 0.0
    %346 = vmatpush1.msra.mxu0 %v241
    %347 = vmatprep.subr.mxu0 0.0
    %348 = vmatpush1.msra.mxu0 %v242
    %349 = vmatprep.subr.mxu0 0.0
    %350 = vmatpush1.msra.mxu0 %v243
    %351 = vmatprep.subr.mxu0 0.0
    %352 = vmatpush1.msra.mxu0 0.0
    %353 = vmatprep.subr.mxu0 0.0
    %354 = vmatpush1.msra.mxu0 0.0
    %355 = vmatprep.subr.mxu0 0.0
    %356 = vmatpush1.msra.mxu0 0.0
    %357 = vmatprep.subr.mxu0 0.0
    %358 = vmatpush1.msra.mxu0 0.0
    %359 = vmatprep.subr.mxu0 0.0
    %360 = vmatpush1.msra.mxu0 0.0
    %361 = vmatprep.subr.mxu0 0.0
    %362 = vmatpush1.msra.mxu0 0.0
    %363 = vmatprep.subr.mxu0 0.0
    %364 = vmatpush1.msra.mxu0 0.0
    %365 = vmatprep.subr.mxu0 0.0
    %366 = vmatpush1.msra.mxu0 0.0
    %367 = vmatprep.subr.mxu0 0.0
    %368 = vmatpush1.msra.mxu0 0.0
    %369 = vmatprep.subr.mxu0 0.0
    %370 = vmatpush1.msra.mxu0 0.0
    %371 = vmatprep.subr.mxu0 0.0
    %372 = vmatpush1.msra.mxu0 0.0
    %373 = vmatprep.subr.mxu0 0.0
    %374 = vmatpush1.msra.mxu0 0.0
    %375 = vmatprep.subr.mxu0 0.0
    %376 = vmatpush1.msra.mxu0 0.0
    %377 = vmatprep.subr.mxu0 0.0
    %378 = vmatpush1.msra.mxu0 0.0
    %379 = vmatprep.subr.mxu0 0.0
    %380 = vmatpush1.msra.mxu0 0.0
    %381 = vmatprep.subr.mxu0 0.0
    %382 = vmatpush1.msra.mxu0 0.0
    %383 = vmatprep.subr.mxu0 0.0
    %384 = vmatpush1.msra.mxu0 0.0
    %385 = vmatprep.subr.mxu0 0.0
    %386 = vmatpush1.msra.mxu0 0.0
    %387 = vmatprep.subr.mxu0 0.0
    %388 = vmatpush1.msra.mxu0 0.0
    %389 = vmatprep.subr.mxu0 0.0
    %390 = vmatpush1.msra.mxu0 0.0
    %391 = vmatprep.subr.mxu0 0.0
    %392 = vmatpush1.msra.mxu0 0.0
    %393 = vmatprep.subr.mxu0 0.0
    %394 = vmatpush1.msra.mxu0 0.0
    %395 = vmatprep.subr.mxu0 0.0
    %396 = vmatpush1.msra.mxu0 0.0
    %397 = vmatprep.subr.mxu0 0.0
    %398 = vmatpush1.msra.mxu0 0.0
    %399 = vmatprep.subr.mxu0 0.0
    %400 = vmatpush1.msra.mxu0 0.0
    %401 = vmatprep.subr.mxu0 0.0
    %402 = vmatpush1.msra.mxu0 0.0
    %403 = vmatprep.subr.mxu0 0.0
    %404 = vmatpush1.msra.mxu0 0.0
    %405 = vmatprep.subr.mxu0 0.0
    %406 = vmatpush1.msra.mxu0 0.0
    %407 = vmatprep.mubr.f32.mxu0 0.0
    %408 = vmatmul.mubr.f32.gmra.mrb[0].mxu0 %v246
    %v409 = vpop.f32.mrb[0].mxu0
    %v410 = vadd.f32 0.0, %v409
    %v411 = vpop.f32.mrb[0].mxu0
    %412 = vdwg.mxu0
    %v414 = vrot.slane %v410, 2
    %v416 = vadd.f32 %v234, %v414
    %v417 = vxor.u32 %v416, 2147483648
    %v418 = vmul.f32 %v417, 1.442695
    %v419 = vpow.pop %v418
    %v420 = vadd.f32 %v419, 1.0
    %v421 = vrcp.pop %v420
    %v422 = vmul.f32 1.0, %v421
    %v423 = vtanh.pop %v416
    %v424 = vmul.f32 %v422, 0.0
    %426 = vrot.lane.b32.xlu0 %v423, 64
    %v427 = vpop.permute.xlu0 %426
    %v429 = vmul.f32 %v422, %v427
    %431 = vrot.lane.b32.xlu0 %v429, 32
    %v432 = vpop.permute.xlu0 %431
    %v434 = vadd.f32 %v424, %v432
    %v435 = vtanh.pop %v434
    %437 = vrot.lane.b32.xlu0 %v435, 64
    %v438 = vpop.permute.xlu0 %437
    %v440 = vmul.f32 %v422, %v438
    %442 = vrot.lane.b32.xlu0 %v342, 32
    %v443 = vpop.permute.xlu0 %442
    %vm445 = vcmask 254976
    %446 = vst.msk [vmem:[#allocation2] sm:$0x3] %vm445, %v443
    %448 = vrot.lane.b32.xlu0 %v440, 32
    %v449 = vpop.permute.xlu0 %448
    %vm451 = vcmask 261126
    %452 = vst.msk [vmem:[#allocation3 + $0x8] sm:$0xc0] %vm451, %v449
    %v453 = vsel %vm244, %v443, 0
    %455 = vmatprep.subr.mxu0 0.0
    %456 = vmatpush1.msra.mxu0 %v236
    %457 = vmatprep.subr.mxu0 0.0
    %458 = vmatpush1.msra.mxu0 %v237
    %459 = vmatprep.subr.mxu0 0.0
    %460 = vmatpush1.msra.mxu0 %v238
    %461 = vmatprep.subr.mxu0 0.0
    %462 = vmatpush1.msra.mxu0 %v239
    %463 = vmatprep.subr.mxu0 0.0
    %464 = vmatpush1.msra.mxu0 0.0
    %465 = vmatprep.subr.mxu0 0.0
    %466 = vmatpush1.msra.mxu0 0.0
    %467 = vmatprep.subr.mxu0 0.0
    %468 = vmatpush1.msra.mxu0 0.0
    %469 = vmatprep.subr.mxu0 0.0
    %470 = vmatpush1.msra.mxu0 0.0
    %471 = vmatprep.subr.mxu0 0.0
    %472 = vmatpush1.msra.mxu0 0.0
    %473 = vmatprep.subr.mxu0 0.0
    %474 = vmatpush1.msra.mxu0 0.0
    %475 = vmatprep.subr.mxu0 0.0
    %476 = vmatpush1.msra.mxu0 0.0
    %477 = vmatprep.subr.mxu0 0.0
    %478 = vmatpush1.msra.mxu0 0.0
    %479 = vmatprep.subr.mxu0 0.0
    %480 = vmatpush1.msra.mxu0 0.0
    %481 = vmatprep.subr.mxu0 0.0
    %482 = vmatpush1.msra.mxu0 0.0
    %483 = vmatprep.subr.mxu0 0.0
    %484 = vmatpush1.msra.mxu0 0.0
    %485 = vmatprep.subr.mxu0 0.0
    %486 = vmatpush1.msra.mxu0 0.0
    %487 = vmatprep.subr.mxu0 0.0
    %488 = vmatpush1.msra.mxu0 0.0
    %489 = vmatprep.subr.mxu0 0.0
    %490 = vmatpush1.msra.mxu0 0.0
    %491 = vmatprep.subr.mxu0 0.0
    %492 = vmatpush1.msra.mxu0 0.0
    %493 = vmatprep.subr.mxu0 0.0
    %494 = vmatpush1.msra.mxu0 0.0
    %495 = vmatprep.subr.mxu0 0.0
    %496 = vmatpush1.msra.mxu0 0.0
    %497 = vmatprep.subr.mxu0 0.0
    %498 = vmatpush1.msra.mxu0 0.0
    %499 = vmatprep.subr.mxu0 0.0
    %500 = vmatpush1.msra.mxu0 0.0
    %501 = vmatprep.subr.mxu0 0.0
    %502 = vmatpush1.msra.mxu0 0.0
    %503 = vmatprep.subr.mxu0 0.0
    %504 = vmatpush1.msra.mxu0 0.0
    %505 = vmatprep.subr.mxu0 0.0
    %506 = vmatpush1.msra.mxu0 0.0
    %507 = vmatprep.subr.mxu0 0.0
    %508 = vmatpush1.msra.mxu0 0.0
    %509 = vmatprep.subr.mxu0 0.0
    %510 = vmatpush1.msra.mxu0 0.0
    %511 = vmatprep.subr.mxu0 0.0
    %512 = vmatpush1.msra.mxu0 0.0
    %513 = vmatprep.subr.mxu0 0.0
    %514 = vmatpush1.msra.mxu0 0.0
    %515 = vmatprep.subr.mxu0 0.0
    %516 = vmatpush1.msra.mxu0 0.0
    %517 = vmatprep.subr.mxu0 0.0
    %518 = vmatpush1.msra.mxu0 0.0
    %519 = vmatprep.mubr.f32.mxu0 0.0
    %520 = vmatmul.mubr.f32.gmra.mrb[0].mxu0 %v453
    %v521 = vpop.f32.mrb[0].mxu0
    %v522 = vadd.f32 0.0, %v521
    %v523 = vpop.f32.mrb[0].mxu0
    %524 = vdwg.mxu0
    %v526 = vrot.slane %v522, 6
    %v528 = vadd.f32 %v226, %v526
    %v529 = vxor.u32 %v528, 2147483648
    %v530 = vmul.f32 %v529, 1.442695
    %v531 = vpow.pop %v530
    %v532 = vadd.f32 %v531, 1.0
    %v533 = vrcp.pop %v532
    %v534 = vmul.f32 1.0, %v533
    %v535 = vtanh.pop %v528
    %v537 = vrot.slane %v336, 6
    %v539 = vmul.f32 %v534, %v537
    %541 = vrot.lane.b32.xlu0 %v535, 64
    %v542 = vpop.permute.xlu0 %541
    %v544 = vmul.f32 %v534, %v542
    %546 = vrot.lane.b32.xlu0 %v544, 32
    %v547 = vpop.permute.xlu0 %546
    %v549 = vadd.f32 %v539, %v547
    %v550 = vtanh.pop %v549
    %552 = vrot.lane.b32.xlu0 %v550, 64
    %v553 = vpop.permute.xlu0 %552
    %v555 = vmul.f32 %v534, %v553
    %v556 = vrot.slane %v440, 6
    %557 = vrot.lane.b32.xlu0 %v556, 32
    %v558 = vpop.permute.xlu0 %557
    %v559 = vsel %vm244, %v558, 0
    %561 = vmatprep.subr.mxu0 0.0
    %562 = vmatpush1.msra.mxu0 %v240
    %563 = vmatprep.subr.mxu0 0.0
    %564 = vmatpush1.msra.mxu0 %v241
    %565 = vmatprep.subr.mxu0 0.0
    %566 = vmatpush1.msra.mxu0 %v242
    %567 = vmatprep.subr.mxu0 0.0
    %568 = vmatpush1.msra.mxu0 %v243
    %569 = vmatprep.subr.mxu0 0.0
    %570 = vmatpush1.msra.mxu0 0.0
    %571 = vmatprep.subr.mxu0 0.0
    %572 = vmatpush1.msra.mxu0 0.0
    %573 = vmatprep.subr.mxu0 0.0
    %574 = vmatpush1.msra.mxu0 0.0
    %575 = vmatprep.subr.mxu0 0.0
    %576 = vmatpush1.msra.mxu0 0.0
    %577 = vmatprep.subr.mxu0 0.0
    %578 = vmatpush1.msra.mxu0 0.0
    %579 = vmatprep.subr.mxu0 0.0
    %580 = vmatpush1.msra.mxu0 0.0
    %581 = vmatprep.subr.mxu0 0.0
    %582 = vmatpush1.msra.mxu0 0.0
    %583 = vmatprep.subr.mxu0 0.0
    %584 = vmatpush1.msra.mxu0 0.0
    %585 = vmatprep.subr.mxu0 0.0
    %586 = vmatpush1.msra.mxu0 0.0
    %587 = vmatprep.subr.mxu0 0.0
    %588 = vmatpush1.msra.mxu0 0.0
    %589 = vmatprep.subr.mxu0 0.0
    %590 = vmatpush1.msra.mxu0 0.0
    %591 = vmatprep.subr.mxu0 0.0
    %592 = vmatpush1.msra.mxu0 0.0
    %593 = vmatprep.subr.mxu0 0.0
    %594 = vmatpush1.msra.mxu0 0.0
    %595 = vmatprep.subr.mxu0 0.0
    %596 = vmatpush1.msra.mxu0 0.0
    %597 = vmatprep.subr.mxu0 0.0
    %598 = vmatpush1.msra.mxu0 0.0
    %599 = vmatprep.subr.mxu0 0.0
    %600 = vmatpush1.msra.mxu0 0.0
    %601 = vmatprep.subr.mxu0 0.0
    %602 = vmatpush1.msra.mxu0 0.0
    %603 = vmatprep.subr.mxu0 0.0
    %604 = vmatpush1.msra.mxu0 0.0
    %605 = vmatprep.subr.mxu0 0.0
    %606 = vmatpush1.msra.mxu0 0.0
    %607 = vmatprep.subr.mxu0 0.0
    %608 = vmatpush1.msra.mxu0 0.0
    %609 = vmatprep.subr.mxu0 0.0
    %610 = vmatpush1.msra.mxu0 0.0
    %611 = vmatprep.subr.mxu0 0.0
    %612 = vmatpush1.msra.mxu0 0.0
    %613 = vmatprep.subr.mxu0 0.0
    %614 = vmatpush1.msra.mxu0 0.0
    %615 = vmatprep.subr.mxu0 0.0
    %616 = vmatpush1.msra.mxu0 0.0
    %617 = vmatprep.subr.mxu0 0.0
    %618 = vmatpush1.msra.mxu0 0.0
    %619 = vmatprep.subr.mxu0 0.0
    %620 = vmatpush1.msra.mxu0 0.0
    %621 = vmatprep.subr.mxu0 0.0
    %622 = vmatpush1.msra.mxu0 0.0
    %623 = vmatprep.subr.mxu0 0.0
    %624 = vmatpush1.msra.mxu0 0.0
    %625 = vmatprep.mubr.f32.mxu0 0.0
    %626 = vmatmul.mubr.f32.gmra.mrb[0].mxu0 %v559
    %v627 = vpop.f32.mrb[0].mxu0
    %v628 = vadd.f32 0.0, %v627
    %v629 = vpop.f32.mrb[0].mxu0
    %630 = vdwg.mxu0
    %v632 = vrot.slane %v628, 4
    %v634 = vadd.f32 %v234, %v632
    %v635 = vxor.u32 %v634, 2147483648
    %v636 = vmul.f32 %v635, 1.442695
    %v637 = vpow.pop %v636
    %v638 = vadd.f32 %v637, 1.0
    %v639 = vrcp.pop %v638
    %v640 = vmul.f32 1.0, %v639
    %v641 = vtanh.pop %v634
    %v643 = vrot.slane %v434, 2
    %v645 = vmul.f32 %v640, %v643
    %647 = vrot.lane.b32.xlu0 %v641, 64
    %v648 = vpop.permute.xlu0 %647
    %v650 = vmul.f32 %v640, %v648
    %652 = vrot.lane.b32.xlu0 %v650, 32
    %v653 = vpop.permute.xlu0 %652
    %v655 = vadd.f32 %v645, %v653
    %v656 = vtanh.pop %v655
    %658 = vrot.lane.b32.xlu0 %v656, 64
    %v659 = vpop.permute.xlu0 %658
    %v661 = vmul.f32 %v640, %v659
    %663 = vrot.lane.b32.xlu0 %v555, 32
    %v664 = vpop.permute.xlu0 %663
    %vm666 = vcmask 257026
    %667 = vst.msk [vmem:[#allocation2] sm:$0xc] %vm666, %v664
    %669 = vrot.lane.b32.xlu0 %v661, 32
    %v670 = vpop.permute.xlu0 %669
    %vm672 = vcmask 259076
    %673 = vst.msk [vmem:[#allocation3 + $0x8] sm:$0x30] %vm672, %v670
    %v674 = vrot.slane %v555, 2
    %675 = vrot.lane.b32.xlu0 %v674, 32
    %v676 = vpop.permute.xlu0 %675
    %v677 = vsel %vm244, %v676, 0
    %679 = vmatprep.subr.mxu0 0.0
    %680 = vmatpush1.msra.mxu0 %v236
    %681 = vmatprep.subr.mxu0 0.0
    %682 = vmatpush1.msra.mxu0 %v237
    %683 = vmatprep.subr.mxu0 0.0
    %684 = vmatpush1.msra.mxu0 %v238
    %685 = vmatprep.subr.mxu0 0.0
    %686 = vmatpush1.msra.mxu0 %v239
    %687 = vmatprep.subr.mxu0 0.0
    %688 = vmatpush1.msra.mxu0 0.0
    %689 = vmatprep.subr.mxu0 0.0
    %690 = vmatpush1.msra.mxu0 0.0
    %691 = vmatprep.subr.mxu0 0.0
    %692 = vmatpush1.msra.mxu0 0.0
    %693 = vmatprep.subr.mxu0 0.0
    %694 = vmatpush1.msra.mxu0 0.0
    %695 = vmatprep.subr.mxu0 0.0
    %696 = vmatpush1.msra.mxu0 0.0
    %697 = vmatprep.subr.mxu0 0.0
    %698 = vmatpush1.msra.mxu0 0.0
    %699 = vmatprep.subr.mxu0 0.0
    %700 = vmatpush1.msra.mxu0 0.0
    %701 = vmatprep.subr.mxu0 0.0
    %702 = vmatpush1.msra.mxu0 0.0
    %703 = vmatprep.subr.mxu0 0.0
    %704 = vmatpush1.msra.mxu0 0.0
    %705 = vmatprep.subr.mxu0 0.0
    %706 = vmatpush1.msra.mxu0 0.0
    %707 = vmatprep.subr.mxu0 0.0
    %708 = vmatpush1.msra.mxu0 0.0
    %709 = vmatprep.subr.mxu0 0.0
    %710 = vmatpush1.msra.mxu0 0.0
    %711 = vmatprep.subr.mxu0 0.0
    %712 = vmatpush1.msra.mxu0 0.0
    %713 = vmatprep.subr.mxu0 0.0
    %714 = vmatpush1.msra.mxu0 0.0
    %715 = vmatprep.subr.mxu0 0.0
    %716 = vmatpush1.msra.mxu0 0.0
    %717 = vmatprep.subr.mxu0 0.0
    %718 = vmatpush1.msra.mxu0 0.0
    %719 = vmatprep.subr.mxu0 0.0
    %720 = vmatpush1.msra.mxu0 0.0
    %721 = vmatprep.subr.mxu0 0.0
    %722 = vmatpush1.msra.mxu0 0.0
    %723 = vmatprep.subr.mxu0 0.0
    %724 = vmatpush1.msra.mxu0 0.0
    %725 = vmatprep.subr.mxu0 0.0
    %726 = vmatpush1.msra.mxu0 0.0
    %727 = vmatprep.subr.mxu0 0.0
    %728 = vmatpush1.msra.mxu0 0.0
    %729 = vmatprep.subr.mxu0 0.0
    %730 = vmatpush1.msra.mxu0 0.0
    %731 = vmatprep.subr.mxu0 0.0
    %732 = vmatpush1.msra.mxu0 0.0
    %733 = vmatprep.subr.mxu0 0.0
    %734 = vmatpush1.msra.mxu0 0.0
    %735 = vmatprep.subr.mxu0 0.0
    %736 = vmatpush1.msra.mxu0 0.0
    %737 = vmatprep.subr.mxu0 0.0
    %738 = vmatpush1.msra.mxu0 0.0
    %739 = vmatprep.subr.mxu0 0.0
    %740 = vmatpush1.msra.mxu0 0.0
    %741 = vmatprep.subr.mxu0 0.0
    %742 = vmatpush1.msra.mxu0 0.0
    %743 = vmatprep.mubr.f32.mxu0 0.0
    %744 = vmatmul.mubr.f32.gmra.mrb[0].mxu0 %v677
    %v745 = vpop.f32.mrb[0].mxu0
    %v746 = vadd.f32 0.0, %v745
    %v747 = vpop.f32.mrb[0].mxu0
    %748 = vdwg.mxu0
    %v750 = vrot.slane %v746, 4
    %v752 = vadd.f32 %v226, %v750
    %v753 = vxor.u32 %v752, 2147483648
    %v754 = vmul.f32 %v753, 1.442695
    %v755 = vpow.pop %v754
    %v756 = vadd.f32 %v755, 1.0
    %v757 = vrcp.pop %v756
    %v758 = vmul.f32 1.0, %v757
    %v759 = vtanh.pop %v752
    %v761 = vrot.slane %v549, 6
    %v763 = vmul.f32 %v758, %v761
    %765 = vrot.lane.b32.xlu0 %v759, 64
    %v766 = vpop.permute.xlu0 %765
    %v768 = vmul.f32 %v758, %v766
    %770 = vrot.lane.b32.xlu0 %v768, 32
    %v771 = vpop.permute.xlu0 %770
    %v773 = vadd.f32 %v763, %v771
    %v774 = vtanh.pop %v773
    %776 = vrot.lane.b32.xlu0 %v774, 64
    %v777 = vpop.permute.xlu0 %776
    %v779 = vmul.f32 %v758, %v777
    %v780 = vrot.slane %v661, 4
    %781 = vrot.lane.b32.xlu0 %v780, 32
    %v782 = vpop.permute.xlu0 %781
    %v783 = vsel %vm244, %v782, 0
    %785 = vmatprep.subr.mxu0 0.0
    %786 = vmatpush1.msra.mxu0 %v240
    %787 = vmatprep.subr.mxu0 0.0
    %788 = vmatpush1.msra.mxu0 %v241
    %789 = vmatprep.subr.mxu0 0.0
    %790 = vmatpush1.msra.mxu0 %v242
    %791 = vmatprep.subr.mxu0 0.0
    %792 = vmatpush1.msra.mxu0 %v243
    %793 = vmatprep.subr.mxu0 0.0
    %794 = vmatpush1.msra.mxu0 0.0
    %795 = vmatprep.subr.mxu0 0.0
    %796 = vmatpush1.msra.mxu0 0.0
    %797 = vmatprep.subr.mxu0 0.0
    %798 = vmatpush1.msra.mxu0 0.0
    %799 = vmatprep.subr.mxu0 0.0
    %800 = vmatpush1.msra.mxu0 0.0
    %801 = vmatprep.subr.mxu0 0.0
    %802 = vmatpush1.msra.mxu0 0.0
    %803 = vmatprep.subr.mxu0 0.0
    %804 = vmatpush1.msra.mxu0 0.0
    %805 = vmatprep.subr.mxu0 0.0
    %806 = vmatpush1.msra.mxu0 0.0
    %807 = vmatprep.subr.mxu0 0.0
    %808 = vmatpush1.msra.mxu0 0.0
    %809 = vmatprep.subr.mxu0 0.0
    %810 = vmatpush1.msra.mxu0 0.0
    %811 = vmatprep.subr.mxu0 0.0
    %812 = vmatpush1.msra.mxu0 0.0
    %813 = vmatprep.subr.mxu0 0.0
    %814 = vmatpush1.msra.mxu0 0.0
    %815 = vmatprep.subr.mxu0 0.0
    %816 = vmatpush1.msra.mxu0 0.0
    %817 = vmatprep.subr.mxu0 0.0
    %818 = vmatpush1.msra.mxu0 0.0
    %819 = vmatprep.subr.mxu0 0.0
    %820 = vmatpush1.msra.mxu0 0.0
    %821 = vmatprep.subr.mxu0 0.0
    %822 = vmatpush1.msra.mxu0 0.0
    %823 = vmatprep.subr.mxu0 0.0
    %824 = vmatpush1.msra.mxu0 0.0
    %825 = vmatprep.subr.mxu0 0.0
    %826 = vmatpush1.msra.mxu0 0.0
    %827 = vmatprep.subr.mxu0 0.0
    %828 = vmatpush1.msra.mxu0 0.0
    %829 = vmatprep.subr.mxu0 0.0
    %830 = vmatpush1.msra.mxu0 0.0
    %831 = vmatprep.subr.mxu0 0.0
    %832 = vmatpush1.msra.mxu0 0.0
    %833 = vmatprep.subr.mxu0 0.0
    %834 = vmatpush1.msra.mxu0 0.0
    %835 = vmatprep.subr.mxu0 0.0
    %836 = vmatpush1.msra.mxu0 0.0
    %837 = vmatprep.subr.mxu0 0.0
    %838 = vmatpush1.msra.mxu0 0.0
    %839 = vmatprep.subr.mxu0 0.0
    %840 = vmatpush1.msra.mxu0 0.0
    %841 = vmatprep.subr.mxu0 0.0
    %842 = vmatpush1.msra.mxu0 0.0
    %843 = vmatprep.subr.mxu0 0.0
    %844 = vmatpush1.msra.mxu0 0.0
    %845 = vmatprep.subr.mxu0 0.0
    %846 = vmatpush1.msra.mxu0 0.0
    %847 = vmatprep.subr.mxu0 0.0
    %848 = vmatpush1.msra.mxu0 0.0
    %849 = vmatprep.mubr.f32.mxu0 0.0
    %850 = vmatmul.mubr.f32.gmra.mrb[0].mxu0 %v783
    %v851 = vpop.f32.mrb[0].mxu0
    %v852 = vadd.f32 0.0, %v851
    %v853 = vpop.f32.mrb[0].mxu0
    %854 = vdwg.mxu0
    %v856 = vrot.slane %v852, 6
    %v858 = vadd.f32 %v234, %v856
    %v859 = vxor.u32 %v858, 2147483648
    %v860 = vmul.f32 %v859, 1.442695
    %v861 = vpow.pop %v860
    %v862 = vadd.f32 %v861, 1.0
    %v863 = vrcp.pop %v862
    %v864 = vmul.f32 1.0, %v863
    %v865 = vtanh.pop %v858
    %v867 = vrot.slane %v655, 2
    %v869 = vmul.f32 %v864, %v867
    %871 = vrot.lane.b32.xlu0 %v865, 64
    %v872 = vpop.permute.xlu0 %871
    %v874 = vmul.f32 %v864, %v872
    %876 = vrot.lane.b32.xlu0 %v874, 32
    %v877 = vpop.permute.xlu0 %876
    %v879 = vadd.f32 %v869, %v877
    %v880 = vtanh.pop %v879
    %882 = vrot.lane.b32.xlu0 %v880, 64
    %v883 = vpop.permute.xlu0 %882
    %v885 = vmul.f32 %v864, %v883
    %887 = vrot.lane.b32.xlu0 %v779, 32
    %v888 = vpop.permute.xlu0 %887
    %890 = vst.msk [vmem:[#allocation2] sm:$0x30] %vm672, %v888
    %892 = vrot.lane.b32.xlu0 %v885, 32
    %v893 = vpop.permute.xlu0 %892
    %895 = vst.msk [vmem:[#allocation3 + $0x8] sm:$0xc] %vm666, %v893
    %v896 = vrot.slane %v779, 4
    %897 = vrot.lane.b32.xlu0 %v896, 32
    %v898 = vpop.permute.xlu0 %897
    %v899 = vsel %vm244, %v898, 0
    %901 = vmatprep.subr.mxu0 0.0
    %902 = vmatpush1.msra.mxu0 %v236
    %903 = vmatprep.subr.mxu0 0.0
    %904 = vmatpush1.msra.mxu0 %v237
    %905 = vmatprep.subr.mxu0 0.0
    %906 = vmatpush1.msra.mxu0 %v238
    %907 = vmatprep.subr.mxu0 0.0
    %908 = vmatpush1.msra.mxu0 %v239
    %909 = vmatprep.subr.mxu0 0.0
    %910 = vmatpush1.msra.mxu0 0.0
    %911 = vmatprep.subr.mxu0 0.0
    %912 = vmatpush1.msra.mxu0 0.0
    %913 = vmatprep.subr.mxu0 0.0
    %914 = vmatpush1.msra.mxu0 0.0
    %915 = vmatprep.subr.mxu0 0.0
    %916 = vmatpush1.msra.mxu0 0.0
    %917 = vmatprep.subr.mxu0 0.0
    %918 = vmatpush1.msra.mxu0 0.0
    %919 = vmatprep.subr.mxu0 0.0
    %920 = vmatpush1.msra.mxu0 0.0
    %921 = vmatprep.subr.mxu0 0.0
    %922 = vmatpush1.msra.mxu0 0.0
    %923 = vmatprep.subr.mxu0 0.0
    %924 = vmatpush1.msra.mxu0 0.0
    %925 = vmatprep.subr.mxu0 0.0
    %926 = vmatpush1.msra.mxu0 0.0
    %927 = vmatprep.subr.mxu0 0.0
    %928 = vmatpush1.msra.mxu0 0.0
    %929 = vmatprep.subr.mxu0 0.0
    %930 = vmatpush1.msra.mxu0 0.0
    %931 = vmatprep.subr.mxu0 0.0
    %932 = vmatpush1.msra.mxu0 0.0
    %933 = vmatprep.subr.mxu0 0.0
    %934 = vmatpush1.msra.mxu0 0.0
    %935 = vmatprep.subr.mxu0 0.0
    %936 = vmatpush1.msra.mxu0 0.0
    %937 = vmatprep.subr.mxu0 0.0
    %938 = vmatpush1.msra.mxu0 0.0
    %939 = vmatprep.subr.mxu0 0.0
    %940 = vmatpush1.msra.mxu0 0.0
    %941 = vmatprep.subr.mxu0 0.0
    %942 = vmatpush1.msra.mxu0 0.0
    %943 = vmatprep.subr.mxu0 0.0
    %944 = vmatpush1.msra.mxu0 0.0
    %945 = vmatprep.subr.mxu0 0.0
    %946 = vmatpush1.msra.mxu0 0.0
    %947 = vmatprep.subr.mxu0 0.0
    %948 = vmatpush1.msra.mxu0 0.0
    %949 = vmatprep.subr.mxu0 0.0
    %950 = vmatpush1.msra.mxu0 0.0
    %951 = vmatprep.subr.mxu0 0.0
    %952 = vmatpush1.msra.mxu0 0.0
    %953 = vmatprep.subr.mxu0 0.0
    %954 = vmatpush1.msra.mxu0 0.0
    %955 = vmatprep.subr.mxu0 0.0
    %956 = vmatpush1.msra.mxu0 0.0
    %957 = vmatprep.subr.mxu0 0.0
    %958 = vmatpush1.msra.mxu0 0.0
    %959 = vmatprep.subr.mxu0 0.0
    %960 = vmatpush1.msra.mxu0 0.0
    %961 = vmatprep.subr.mxu0 0.0
    %962 = vmatpush1.msra.mxu0 0.0
    %963 = vmatprep.subr.mxu0 0.0
    %964 = vmatpush1.msra.mxu0 0.0
    %965 = vmatprep.mubr.f32.mxu0 0.0
    %966 = vmatmul.mubr.f32.gmra.mrb[0].mxu0 %v899
    %v967 = vpop.f32.mrb[0].mxu0
    %v968 = vadd.f32 0.0, %v967
    %v969 = vpop.f32.mrb[0].mxu0
    %970 = vdwg.mxu0
    %v972 = vrot.slane %v968, 2
    %v974 = vadd.f32 %v226, %v972
    %v975 = vxor.u32 %v974, 2147483648
    %v976 = vmul.f32 %v975, 1.442695
    %v977 = vpow.pop %v976
    %v978 = vadd.f32 %v977, 1.0
    %v979 = vrcp.pop %v978
    %v980 = vmul.f32 1.0, %v979
    %v981 = vtanh.pop %v974
    %v983 = vrot.slane %v773, 6
    %v985 = vmul.f32 %v980, %v983
    %987 = vrot.lane.b32.xlu0 %v981, 64
    %v988 = vpop.permute.xlu0 %987
    %v990 = vmul.f32 %v980, %v988
    %992 = vrot.lane.b32.xlu0 %v990, 32
    %v993 = vpop.permute.xlu0 %992
    %v995 = vadd.f32 %v985, %v993
    %v996 = vtanh.pop %v995
    %998 = vrot.lane.b32.xlu0 %v996, 64
    %v999 = vpop.permute.xlu0 %998
    %v1001 = vmul.f32 %v980, %v999
    %v1002 = vrot.slane %v885, 2
    %1003 = vrot.lane.b32.xlu0 %v1002, 32
    %v1004 = vpop.permute.xlu0 %1003
    %v1005 = vsel %vm244, %v1004, 0
    %1007 = vmatprep.subr.mxu0 0.0
    %1008 = vmatpush1.msra.mxu0 %v240
    %1009 = vmatprep.subr.mxu0 0.0
    %1010 = vmatpush1.msra.mxu0 %v241
    %1011 = vmatprep.subr.mxu0 0.0
    %1012 = vmatpush1.msra.mxu0 %v242
    %1013 = vmatprep.subr.mxu0 0.0
    %1014 = vmatpush1.msra.mxu0 %v243
    %1015 = vmatprep.subr.mxu0 0.0
    %1016 = vmatpush1.msra.mxu0 0.0
    %1017 = vmatprep.subr.mxu0 0.0
    %1018 = vmatpush1.msra.mxu0 0.0
    %1019 = vmatprep.subr.mxu0 0.0
    %1020 = vmatpush1.msra.mxu0 0.0
    %1021 = vmatprep.subr.mxu0 0.0
    %1022 = vmatpush1.msra.mxu0 0.0
    %1023 = vmatprep.subr.mxu0 0.0
    %1024 = vmatpush1.msra.mxu0 0.0
    %1025 = vmatprep.subr.mxu0 0.0
    %1026 = vmatpush1.msra.mxu0 0.0
    %1027 = vmatprep.subr.mxu0 0.0
    %1028 = vmatpush1.msra.mxu0 0.0
    %1029 = vmatprep.subr.mxu0 0.0
    %1030 = vmatpush1.msra.mxu0 0.0
    %1031 = vmatprep.subr.mxu0 0.0
    %1032 = vmatpush1.msra.mxu0 0.0
    %1033 = vmatprep.subr.mxu0 0.0
    %1034 = vmatpush1.msra.mxu0 0.0
    %1035 = vmatprep.subr.mxu0 0.0
    %1036 = vmatpush1.msra.mxu0 0.0
    %1037 = vmatprep.subr.mxu0 0.0
    %1038 = vmatpush1.msra.mxu0 0.0
    %1039 = vmatprep.subr.mxu0 0.0
    %1040 = vmatpush1.msra.mxu0 0.0
    %1041 = vmatprep.subr.mxu0 0.0
    %1042 = vmatpush1.msra.mxu0 0.0
    %1043 = vmatprep.subr.mxu0 0.0
    %1044 = vmatpush1.msra.mxu0 0.0
    %1045 = vmatprep.subr.mxu0 0.0
    %1046 = vmatpush1.msra.mxu0 0.0
    %1047 = vmatprep.subr.mxu0 0.0
    %1048 = vmatpush1.msra.mxu0 0.0
    %1049 = vmatprep.subr.mxu0 0.0
    %1050 = vmatpush1.msra.mxu0 0.0
    %1051 = vmatprep.subr.mxu0 0.0
    %1052 = vmatpush1.msra.mxu0 0.0
    %1053 = vmatprep.subr.mxu0 0.0
    %1054 = vmatpush1.msra.mxu0 0.0
    %1055 = vmatprep.subr.mxu0 0.0
    %1056 = vmatpush1.msra.mxu0 0.0
    %1057 = vmatprep.subr.mxu0 0.0
    %1058 = vmatpush1.msra.mxu0 0.0
    %1059 = vmatprep.subr.mxu0 0.0
    %1060 = vmatpush1.msra.mxu0 0.0
    %1061 = vmatprep.subr.mxu0 0.0
    %1062 = vmatpush1.msra.mxu0 0.0
    %1063 = vmatprep.subr.mxu0 0.0
    %1064 = vmatpush1.msra.mxu0 0.0
    %1065 = vmatprep.subr.mxu0 0.0
    %1066 = vmatpush1.msra.mxu0 0.0
    %1067 = vmatprep.subr.mxu0 0.0
    %1068 = vmatpush1.msra.mxu0 0.0
    %1069 = vmatprep.subr.mxu0 0.0
    %1070 = vmatpush1.msra.mxu0 0.0
    %1071 = vmatprep.mubr.f32.mxu0 0.0
    %1072 = vmatmul.mubr.f32.gmra.mrb[0].mxu0 %v1005
    %v1073 = vpop.f32.mrb[0].mxu0
    %v1074 = vadd.f32 0.0, %v1073
    %v1075 = vpop.f32.mrb[0].mxu0
    %1076 = vdwg.mxu0
    %v1077 = vadd.f32 %v234, %v1074
    %v1078 = vxor.u32 %v1077, 2147483648
    %v1079 = vmul.f32 %v1078, 1.442695
    %v1080 = vpow.pop %v1079
    %v1081 = vadd.f32 %v1080, 1.0
    %v1082 = vrcp.pop %v1081
    %v1083 = vmul.f32 1.0, %v1082
    %v1084 = vtanh.pop %v1077
    %v1086 = vrot.slane %v879, 2
    %v1088 = vmul.f32 %v1083, %v1086
    %1090 = vrot.lane.b32.xlu0 %v1084, 64
    %v1091 = vpop.permute.xlu0 %1090
    %v1093 = vmul.f32 %v1083, %v1091
    %1095 = vrot.lane.b32.xlu0 %v1093, 32
    %v1096 = vpop.permute.xlu0 %1095
    %v1098 = vadd.f32 %v1088, %v1096
    %v1099 = vtanh.pop %v1098
    %1101 = vrot.lane.b32.xlu0 %v1099, 64
    %v1102 = vpop.permute.xlu0 %1101
    %v1104 = vmul.f32 %v1083, %v1102
    %1106 = vrot.lane.b32.xlu0 %v1001, 32
    %v1107 = vpop.permute.xlu0 %1106
    %1109 = vst.msk [vmem:[#allocation2] sm:$0xc0] %vm451, %v1107
    %1111 = vrot.lane.b32.xlu0 %v1104, 32
    %v1112 = vpop.permute.xlu0 %1111
    %1114 = vst.msk [vmem:[#allocation3 + $0x8] sm:$0x3] %vm445, %v1112
    %v1115 = vrot.slane %v1001, 6
    %1116 = vrot.lane.b32.xlu0 %v1115, 32
    %v1117 = vpop.permute.xlu0 %1116
    %v1118 = vsel %vm244, %v1117, 0
    %1120 = vmatprep.subr.mxu0 0.0
    %1121 = vmatpush1.msra.mxu0 %v236
    %1122 = vmatprep.subr.mxu0 0.0
    %1123 = vmatpush1.msra.mxu0 %v237
    %1124 = vmatprep.subr.mxu0 0.0
    %1125 = vmatpush1.msra.mxu0 %v238
    %1126 = vmatprep.subr.mxu0 0.0
    %1127 = vmatpush1.msra.mxu0 %v239
    %1128 = vmatprep.subr.mxu0 0.0
    %1129 = vmatpush1.msra.mxu0 0.0
    %1130 = vmatprep.subr.mxu0 0.0
    %1131 = vmatpush1.msra.mxu0 0.0
    %1132 = vmatprep.subr.mxu0 0.0
    %1133 = vmatpush1.msra.mxu0 0.0
    %1134 = vmatprep.subr.mxu0 0.0
    %1135 = vmatpush1.msra.mxu0 0.0
    %1136 = vmatprep.subr.mxu0 0.0
    %1137 = vmatpush1.msra.mxu0 0.0
    %1138 = vmatprep.subr.mxu0 0.0
    %1139 = vmatpush1.msra.mxu0 0.0
    %1140 = vmatprep.subr.mxu0 0.0
    %1141 = vmatpush1.msra.mxu0 0.0
    %1142 = vmatprep.subr.mxu0 0.0
    %1143 = vmatpush1.msra.mxu0 0.0
    %1144 = vmatprep.subr.mxu0 0.0
    %1145 = vmatpush1.msra.mxu0 0.0
    %1146 = vmatprep.subr.mxu0 0.0
    %1147 = vmatpush1.msra.mxu0 0.0
    %1148 = vmatprep.subr.mxu0 0.0
    %1149 = vmatpush1.msra.mxu0 0.0
    %1150 = vmatprep.subr.mxu0 0.0
    %1151 = vmatpush1.msra.mxu0 0.0
    %1152 = vmatprep.subr.mxu0 0.0
    %1153 = vmatpush1.msra.mxu0 0.0
    %1154 = vmatprep.subr.mxu0 0.0
    %1155 = vmatpush1.msra.mxu0 0.0
    %1156 = vmatprep.subr.mxu0 0.0
    %1157 = vmatpush1.msra.mxu0 0.0
    %1158 = vmatprep.subr.mxu0 0.0
    %1159 = vmatpush1.msra.mxu0 0.0
    %1160 = vmatprep.subr.mxu0 0.0
    %1161 = vmatpush1.msra.mxu0 0.0
    %1162 = vmatprep.subr.mxu0 0.0
    %1163 = vmatpush1.msra.mxu0 0.0
    %1164 = vmatprep.subr.mxu0 0.0
    %1165 = vmatpush1.msra.mxu0 0.0
    %1166 = vmatprep.subr.mxu0 0.0
    %1167 = vmatpush1.msra.mxu0 0.0
    %1168 = vmatprep.subr.mxu0 0.0
    %1169 = vmatpush1.msra.mxu0 0.0
    %1170 = vmatprep.subr.mxu0 0.0
    %1171 = vmatpush1.msra.mxu0 0.0
    %1172 = vmatprep.subr.mxu0 0.0
    %1173 = vmatpush1.msra.mxu0 0.0
    %1174 = vmatprep.subr.mxu0 0.0
    %1175 = vmatpush1.msra.mxu0 0.0
    %1176 = vmatprep.subr.mxu0 0.0
    %1177 = vmatpush1.msra.mxu0 0.0
    %1178 = vmatprep.subr.mxu0 0.0
    %1179 = vmatpush1.msra.mxu0 0.0
    %1180 = vmatprep.subr.mxu0 0.0
    %1181 = vmatpush1.msra.mxu0 0.0
    %1182 = vmatprep.subr.mxu0 0.0
    %1183 = vmatpush1.msra.mxu0 0.0
    %1184 = vmatprep.mubr.f32.mxu0 0.0
    %1185 = vmatmul.mubr.f32.gmra.mrb[0].mxu0 %v1118
    %v1186 = vpop.f32.mrb[0].mxu0
    %v1187 = vadd.f32 0.0, %v1186
    %v1188 = vpop.f32.mrb[0].mxu0
    %1189 = vdwg.mxu0
    %v1190 = vadd.f32 %v232, %v1187
    %v1191 = vxor.u32 %v1190, 2147483648
    %v1192 = vmul.f32 %v1191, 1.442695
    %v1193 = vpow.pop %v1192
    %v1194 = vadd.f32 %v1193, 1.0
    %v1195 = vrcp.pop %v1194
    %v1196 = vmul.f32 1.0, %v1195
    %v1197 = vtanh.pop %v1190
    %v1199 = vrot.slane %v995, 6
    %v1201 = vmul.f32 %v1196, %v1199
    %1203 = vrot.lane.b32.xlu0 %v1197, 64
    %v1204 = vpop.permute.xlu0 %1203
    %v1206 = vmul.f32 %v1196, %v1204
    %1208 = vrot.lane.b32.xlu0 %v1206, 32
    %v1209 = vpop.permute.xlu0 %1208
    %v1211 = vadd.f32 %v1201, %v1209
    %v1212 = vtanh.pop %v1211
    %1214 = vrot.lane.b32.xlu0 %v1212, 64
    %v1215 = vpop.permute.xlu0 %1214
    %v1217 = vmul.f32 %v1196, %v1215
    %v1218 = vsel %vm244, %v1112, 0
    %1220 = vmatprep.subr.mxu0 0.0
    %1221 = vmatpush1.msra.mxu0 %v240
    %1222 = vmatprep.subr.mxu0 0.0
    %1223 = vmatpush1.msra.mxu0 %v241
    %1224 = vmatprep.subr.mxu0 0.0
    %1225 = vmatpush1.msra.mxu0 %v242
    %1226 = vmatprep.subr.mxu0 0.0
    %1227 = vmatpush1.msra.mxu0 %v243
    %1228 = vmatprep.subr.mxu0 0.0
    %1229 = vmatpush1.msra.mxu0 0.0
    %1230 = vmatprep.subr.mxu0 0.0
    %1231 = vmatpush1.msra.mxu0 0.0
    %1232 = vmatprep.subr.mxu0 0.0
    %1233 = vmatpush1.msra.mxu0 0.0
    %1234 = vmatprep.subr.mxu0 0.0
    %1235 = vmatpush1.msra.mxu0 0.0
    %1236 = vmatprep.subr.mxu0 0.0
    %1237 = vmatpush1.msra.mxu0 0.0
    %1238 = vmatprep.subr.mxu0 0.0
    %1239 = vmatpush1.msra.mxu0 0.0
    %1240 = vmatprep.subr.mxu0 0.0
    %1241 = vmatpush1.msra.mxu0 0.0
    %1242 = vmatprep.subr.mxu0 0.0
    %1243 = vmatpush1.msra.mxu0 0.0
    %1244 = vmatprep.subr.mxu0 0.0
    %1245 = vmatpush1.msra.mxu0 0.0
    %1246 = vmatprep.subr.mxu0 0.0
    %1247 = vmatpush1.msra.mxu0 0.0
    %1248 = vmatprep.subr.mxu0 0.0
    %1249 = vmatpush1.msra.mxu0 0.0
    %1250 = vmatprep.subr.mxu0 0.0
    %1251 = vmatpush1.msra.mxu0 0.0
    %1252 = vmatprep.subr.mxu0 0.0
    %1253 = vmatpush1.msra.mxu0 0.0
    %1254 = vmatprep.subr.mxu0 0.0
    %1255 = vmatpush1.msra.mxu0 0.0
    %1256 = vmatprep.subr.mxu0 0.0
    %1257 = vmatpush1.msra.mxu0 0.0
    %1258 = vmatprep.subr.mxu0 0.0
    %1259 = vmatpush1.msra.mxu0 0.0
    %1260 = vmatprep.subr.mxu0 0.0
    %1261 = vmatpush1.msra.mxu0 0.0
    %1262 = vmatprep.subr.mxu0 0.0
    %1263 = vmatpush1.msra.mxu0 0.0
    %1264 = vmatprep.subr.mxu0 0.0
    %1265 = vmatpush1.msra.mxu0 0.0
    %1266 = vmatprep.subr.mxu0 0.0
    %1267 = vmatpush1.msra.mxu0 0.0
    %1268 = vmatprep.subr.mxu0 0.0
    %1269 = vmatpush1.msra.mxu0 0.0
    %1270 = vmatprep.subr.mxu0 0.0
    %1271 = vmatpush1.msra.mxu0 0.0
    %1272 = vmatprep.subr.mxu0 0.0
    %1273 = vmatpush1.msra.mxu0 0.0
    %1274 = vmatprep.subr.mxu0 0.0
    %1275 = vmatpush1.msra.mxu0 0.0
    %1276 = vmatprep.subr.mxu0 0.0
    %1277 = vmatpush1.msra.mxu0 0.0
    %1278 = vmatprep.subr.mxu0 0.0
    %1279 = vmatpush1.msra.mxu0 0.0
    %1280 = vmatprep.subr.mxu0 0.0
    %1281 = vmatpush1.msra.mxu0 0.0
    %1282 = vmatprep.subr.mxu0 0.0
    %1283 = vmatpush1.msra.mxu0 0.0
    %1284 = vmatprep.mubr.f32.mxu0 0.0
    %1285 = vmatmul.mubr.f32.gmra.mrb[0].mxu0 %v1218
    %v1286 = vpop.f32.mrb[0].mxu0
    %v1287 = vadd.f32 0.0, %v1286
    %v1288 = vpop.f32.mrb[0].mxu0
    %1289 = vdwg.mxu0
    %v1291 = vrot.slane %v1287, 2
    %v1293 = vadd.f32 %v228, %v1291
    %v1294 = vxor.u32 %v1293, 2147483648
    %v1295 = vmul.f32 %v1294, 1.442695
    %v1296 = vpow.pop %v1295
    %v1297 = vadd.f32 %v1296, 1.0
    %v1298 = vrcp.pop %v1297
    %v1299 = vmul.f32 1.0, %v1298
    %v1300 = vtanh.pop %v1293
    %v1302 = vrot.slane %v1098, 2
    %v1304 = vmul.f32 %v1299, %v1302
    %1306 = vrot.lane.b32.xlu0 %v1300, 64
    %v1307 = vpop.permute.xlu0 %1306
    %v1309 = vmul.f32 %v1299, %v1307
    %1311 = vrot.lane.b32.xlu0 %v1309, 32
    %v1312 = vpop.permute.xlu0 %1311
    %v1314 = vadd.f32 %v1304, %v1312
    %v1315 = vtanh.pop %v1314
    %1317 = vrot.lane.b32.xlu0 %v1315, 64
    %v1318 = vpop.permute.xlu0 %1317
    %v1320 = vmul.f32 %v1299, %v1318
    %1322 = vrot.lane.b32.xlu0 %v1217, 32
    %v1323 = vpop.permute.xlu0 %1322
    %1325 = vst.msk [vmem:[#allocation2 + $0x8] sm:$0x3] %vm445, %v1323
    %1327 = vrot.lane.b32.xlu0 %v1320, 32
    %v1328 = vpop.permute.xlu0 %1327
    %1330 = vst.msk [vmem:[#allocation3] sm:$0xc0] %vm451, %v1328
    %v1331 = vsel %vm244, %v1323, 0
    %1333 = vmatprep.subr.mxu0 0.0
    %1334 = vmatpush1.msra.mxu0 %v236
    %1335 = vmatprep.subr.mxu0 0.0
    %1336 = vmatpush1.msra.mxu0 %v237
    %1337 = vmatprep.subr.mxu0 0.0
    %1338 = vmatpush1.msra.mxu0 %v238
    %1339 = vmatprep.subr.mxu0 0.0
    %1340 = vmatpush1.msra.mxu0 %v239
    %1341 = vmatprep.subr.mxu0 0.0
    %1342 = vmatpush1.msra.mxu0 0.0
    %1343 = vmatprep.subr.mxu0 0.0
    %1344 = vmatpush1.msra.mxu0 0.0
    %1345 = vmatprep.subr.mxu0 0.0
    %1346 = vmatpush1.msra.mxu0 0.0
    %1347 = vmatprep.subr.mxu0 0.0
    %1348 = vmatpush1.msra.mxu0 0.0
    %1349 = vmatprep.subr.mxu0 0.0
    %1350 = vmatpush1.msra.mxu0 0.0
    %1351 = vmatprep.subr.mxu0 0.0
    %1352 = vmatpush1.msra.mxu0 0.0
    %1353 = vmatprep.subr.mxu0 0.0
    %1354 = vmatpush1.msra.mxu0 0.0
    %1355 = vmatprep.subr.mxu0 0.0
    %1356 = vmatpush1.msra.mxu0 0.0
    %1357 = vmatprep.subr.mxu0 0.0
    %1358 = vmatpush1.msra.mxu0 0.0
    %1359 = vmatprep.subr.mxu0 0.0
    %1360 = vmatpush1.msra.mxu0 0.0
    %1361 = vmatprep.subr.mxu0 0.0
    %1362 = vmatpush1.msra.mxu0 0.0
    %1363 = vmatprep.subr.mxu0 0.0
    %1364 = vmatpush1.msra.mxu0 0.0
    %1365 = vmatprep.subr.mxu0 0.0
    %1366 = vmatpush1.msra.mxu0 0.0
    %1367 = vmatprep.subr.mxu0 0.0
    %1368 = vmatpush1.msra.mxu0 0.0
    %1369 = vmatprep.subr.mxu0 0.0
    %1370 = vmatpush1.msra.mxu0 0.0
    %1371 = vmatprep.subr.mxu0 0.0
    %1372 = vmatpush1.msra.mxu0 0.0
    %1373 = vmatprep.subr.mxu0 0.0
    %1374 = vmatpush1.msra.mxu0 0.0
    %1375 = vmatprep.subr.mxu0 0.0
    %1376 = vmatpush1.msra.mxu0 0.0
    %1377 = vmatprep.subr.mxu0 0.0
    %1378 = vmatpush1.msra.mxu0 0.0
    %1379 = vmatprep.subr.mxu0 0.0
    %1380 = vmatpush1.msra.mxu0 0.0
    %1381 = vmatprep.subr.mxu0 0.0
    %1382 = vmatpush1.msra.mxu0 0.0
    %1383 = vmatprep.subr.mxu0 0.0
    %1384 = vmatpush1.msra.mxu0 0.0
    %1385 = vmatprep.subr.mxu0 0.0
    %1386 = vmatpush1.msra.mxu0 0.0
    %1387 = vmatprep.subr.mxu0 0.0
    %1388 = vmatpush1.msra.mxu0 0.0
    %1389 = vmatprep.subr.mxu0 0.0
    %1390 = vmatpush1.msra.mxu0 0.0
    %1391 = vmatprep.subr.mxu0 0.0
    %1392 = vmatpush1.msra.mxu0 0.0
    %1393 = vmatprep.subr.mxu0 0.0
    %1394 = vmatpush1.msra.mxu0 0.0
    %1395 = vmatprep.subr.mxu0 0.0
    %1396 = vmatpush1.msra.mxu0 0.0
    %1397 = vmatprep.mubr.f32.mxu0 0.0
    %1398 = vmatmul.mubr.f32.gmra.mrb[0].mxu0 %v1331
    %v1399 = vpop.f32.mrb[0].mxu0
    %v1400 = vadd.f32 0.0, %v1399
    %v1401 = vpop.f32.mrb[0].mxu0
    %1402 = vdwg.mxu0
    %v1404 = vrot.slane %v1400, 6
    %v1406 = vadd.f32 %v232, %v1404
    %v1407 = vxor.u32 %v1406, 2147483648
    %v1408 = vmul.f32 %v1407, 1.442695
    %v1409 = vpow.pop %v1408
    %v1410 = vadd.f32 %v1409, 1.0
    %v1411 = vrcp.pop %v1410
    %v1412 = vmul.f32 1.0, %v1411
    %v1413 = vtanh.pop %v1406
    %v1415 = vrot.slane %v1211, 6
    %v1417 = vmul.f32 %v1412, %v1415
    %1419 = vrot.lane.b32.xlu0 %v1413, 64
    %v1420 = vpop.permute.xlu0 %1419
    %v1422 = vmul.f32 %v1412, %v1420
    %1424 = vrot.lane.b32.xlu0 %v1422, 32
    %v1425 = vpop.permute.xlu0 %1424
    %v1427 = vadd.f32 %v1417, %v1425
    %v1428 = vtanh.pop %v1427
    %1430 = vrot.lane.b32.xlu0 %v1428, 64
    %v1431 = vpop.permute.xlu0 %1430
    %v1433 = vmul.f32 %v1412, %v1431
    %v1434 = vrot.slane %v1320, 6
    %1435 = vrot.lane.b32.xlu0 %v1434, 32
    %v1436 = vpop.permute.xlu0 %1435
    %v1437 = vsel %vm244, %v1436, 0
    %1439 = vmatprep.subr.mxu0 0.0
    %1440 = vmatpush1.msra.mxu0 %v240
    %1441 = vmatprep.subr.mxu0 0.0
    %1442 = vmatpush1.msra.mxu0 %v241
    %1443 = vmatprep.subr.mxu0 0.0
    %1444 = vmatpush1.msra.mxu0 %v242
    %1445 = vmatprep.subr.mxu0 0.0
    %1446 = vmatpush1.msra.mxu0 %v243
    %1447 = vmatprep.subr.mxu0 0.0
    %1448 = vmatpush1.msra.mxu0 0.0
    %1449 = vmatprep.subr.mxu0 0.0
    %1450 = vmatpush1.msra.mxu0 0.0
    %1451 = vmatprep.subr.mxu0 0.0
    %1452 = vmatpush1.msra.mxu0 0.0
    %1453 = vmatprep.subr.mxu0 0.0
    %1454 = vmatpush1.msra.mxu0 0.0
    %1455 = vmatprep.subr.mxu0 0.0
    %1456 = vmatpush1.msra.mxu0 0.0
    %1457 = vmatprep.subr.mxu0 0.0
    %1458 = vmatpush1.msra.mxu0 0.0
    %1459 = vmatprep.subr.mxu0 0.0
    %1460 = vmatpush1.msra.mxu0 0.0
    %1461 = vmatprep.subr.mxu0 0.0
    %1462 = vmatpush1.msra.mxu0 0.0
    %1463 = vmatprep.subr.mxu0 0.0
    %1464 = vmatpush1.msra.mxu0 0.0
    %1465 = vmatprep.subr.mxu0 0.0
    %1466 = vmatpush1.msra.mxu0 0.0
    %1467 = vmatprep.subr.mxu0 0.0
    %1468 = vmatpush1.msra.mxu0 0.0
    %1469 = vmatprep.subr.mxu0 0.0
    %1470 = vmatpush1.msra.mxu0 0.0
    %1471 = vmatprep.subr.mxu0 0.0
    %1472 = vmatpush1.msra.mxu0 0.0
    %1473 = vmatprep.subr.mxu0 0.0
    %1474 = vmatpush1.msra.mxu0 0.0
    %1475 = vmatprep.subr.mxu0 0.0
    %1476 = vmatpush1.msra.mxu0 0.0
    %1477 = vmatprep.subr.mxu0 0.0
    %1478 = vmatpush1.msra.mxu0 0.0
    %1479 = vmatprep.subr.mxu0 0.0
    %1480 = vmatpush1.msra.mxu0 0.0
    %1481 = vmatprep.subr.mxu0 0.0
    %1482 = vmatpush1.msra.mxu0 0.0
    %1483 = vmatprep.subr.mxu0 0.0
    %1484 = vmatpush1.msra.mxu0 0.0
    %1485 = vmatprep.subr.mxu0 0.0
    %1486 = vmatpush1.msra.mxu0 0.0
    %1487 = vmatprep.subr.mxu0 0.0
    %1488 = vmatpush1.msra.mxu0 0.0
    %1489 = vmatprep.subr.mxu0 0.0
    %1490 = vmatpush1.msra.mxu0 0.0
    %1491 = vmatprep.subr.mxu0 0.0
    %1492 = vmatpush1.msra.mxu0 0.0
    %1493 = vmatprep.subr.mxu0 0.0
    %1494 = vmatpush1.msra.mxu0 0.0
    %1495 = vmatprep.subr.mxu0 0.0
    %1496 = vmatpush1.msra.mxu0 0.0
    %1497 = vmatprep.subr.mxu0 0.0
    %1498 = vmatpush1.msra.mxu0 0.0
    %1499 = vmatprep.subr.mxu0 0.0
    %1500 = vmatpush1.msra.mxu0 0.0
    %1501 = vmatprep.subr.mxu0 0.0
    %1502 = vmatpush1.msra.mxu0 0.0
    %1503 = vmatprep.mubr.f32.mxu0 0.0
    %1504 = vmatmul.mubr.f32.gmra.mrb[0].mxu0 %v1437
    %v1505 = vpop.f32.mrb[0].mxu0
    %v1506 = vadd.f32 0.0, %v1505
    %v1507 = vpop.f32.mrb[0].mxu0
    %1508 = vdwg.mxu0
    %v1510 = vrot.slane %v1506, 4
    %v1512 = vadd.f32 %v228, %v1510
    %v1513 = vxor.u32 %v1512, 2147483648
    %v1514 = vmul.f32 %v1513, 1.442695
    %v1515 = vpow.pop %v1514
    %v1516 = vadd.f32 %v1515, 1.0
    %v1517 = vrcp.pop %v1516
    %v1518 = vmul.f32 1.0, %v1517
    %v1519 = vtanh.pop %v1512
    %v1521 = vrot.slane %v1314, 2
    %v1523 = vmul.f32 %v1518, %v1521
    %1525 = vrot.lane.b32.xlu0 %v1519, 64
    %v1526 = vpop.permute.xlu0 %1525
    %v1528 = vmul.f32 %v1518, %v1526
    %1530 = vrot.lane.b32.xlu0 %v1528, 32
    %v1531 = vpop.permute.xlu0 %1530
    %v1533 = vadd.f32 %v1523, %v1531
    %v1534 = vtanh.pop %v1533
    %1536 = vrot.lane.b32.xlu0 %v1534, 64
    %v1537 = vpop.permute.xlu0 %1536
    %v1539 = vmul.f32 %v1518, %v1537
    %1541 = vrot.lane.b32.xlu0 %v1433, 32
    %v1542 = vpop.permute.xlu0 %1541
    %1544 = vst.msk [vmem:[#allocation2 + $0x8] sm:$0xc] %vm666, %v1542
    %1546 = vrot.lane.b32.xlu0 %v1539, 32
    %v1547 = vpop.permute.xlu0 %1546
    %1549 = vst.msk [vmem:[#allocation3] sm:$0x30] %vm672, %v1547
    %v1550 = vrot.slane %v1433, 2
    %1551 = vrot.lane.b32.xlu0 %v1550, 32
    %v1552 = vpop.permute.xlu0 %1551
    %v1553 = vsel %vm244, %v1552, 0
    %1555 = vmatprep.subr.mxu0 0.0
    %1556 = vmatpush1.msra.mxu0 %v236
    %1557 = vmatprep.subr.mxu0 0.0
    %1558 = vmatpush1.msra.mxu0 %v237
    %1559 = vmatprep.subr.mxu0 0.0
    %1560 = vmatpush1.msra.mxu0 %v238
    %1561 = vmatprep.subr.mxu0 0.0
    %1562 = vmatpush1.msra.mxu0 %v239
    %1563 = vmatprep.subr.mxu0 0.0
    %1564 = vmatpush1.msra.mxu0 0.0
    %1565 = vmatprep.subr.mxu0 0.0
    %1566 = vmatpush1.msra.mxu0 0.0
    %1567 = vmatprep.subr.mxu0 0.0
    %1568 = vmatpush1.msra.mxu0 0.0
    %1569 = vmatprep.subr.mxu0 0.0
    %1570 = vmatpush1.msra.mxu0 0.0
    %1571 = vmatprep.subr.mxu0 0.0
    %1572 = vmatpush1.msra.mxu0 0.0
    %1573 = vmatprep.subr.mxu0 0.0
    %1574 = vmatpush1.msra.mxu0 0.0
    %1575 = vmatprep.subr.mxu0 0.0
    %1576 = vmatpush1.msra.mxu0 0.0
    %1577 = vmatprep.subr.mxu0 0.0
    %1578 = vmatpush1.msra.mxu0 0.0
    %1579 = vmatprep.subr.mxu0 0.0
    %1580 = vmatpush1.msra.mxu0 0.0
    %1581 = vmatprep.subr.mxu0 0.0
    %1582 = vmatpush1.msra.mxu0 0.0
    %1583 = vmatprep.subr.mxu0 0.0
    %1584 = vmatpush1.msra.mxu0 0.0
    %1585 = vmatprep.subr.mxu0 0.0
    %1586 = vmatpush1.msra.mxu0 0.0
    %1587 = vmatprep.subr.mxu0 0.0
    %1588 = vmatpush1.msra.mxu0 0.0
    %1589 = vmatprep.subr.mxu0 0.0
    %1590 = vmatpush1.msra.mxu0 0.0
    %1591 = vmatprep.subr.mxu0 0.0
    %1592 = vmatpush1.msra.mxu0 0.0
    %1593 = vmatprep.subr.mxu0 0.0
    %1594 = vmatpush1.msra.mxu0 0.0
    %1595 = vmatprep.subr.mxu0 0.0
    %1596 = vmatpush1.msra.mxu0 0.0
    %1597 = vmatprep.subr.mxu0 0.0
    %1598 = vmatpush1.msra.mxu0 0.0
    %1599 = vmatprep.subr.mxu0 0.0
    %1600 = vmatpush1.msra.mxu0 0.0
    %1601 = vmatprep.subr.mxu0 0.0
    %1602 = vmatpush1.msra.mxu0 0.0
    %1603 = vmatprep.subr.mxu0 0.0
    %1604 = vmatpush1.msra.mxu0 0.0
    %1605 = vmatprep.subr.mxu0 0.0
    %1606 = vmatpush1.msra.mxu0 0.0
    %1607 = vmatprep.subr.mxu0 0.0
    %1608 = vmatpush1.msra.mxu0 0.0
    %1609 = vmatprep.subr.mxu0 0.0
    %1610 = vmatpush1.msra.mxu0 0.0
    %1611 = vmatprep.subr.mxu0 0.0
    %1612 = vmatpush1.msra.mxu0 0.0
    %1613 = vmatprep.subr.mxu0 0.0
    %1614 = vmatpush1.msra.mxu0 0.0
    %1615 = vmatprep.subr.mxu0 0.0
    %1616 = vmatpush1.msra.mxu0 0.0
    %1617 = vmatprep.subr.mxu0 0.0
    %1618 = vmatpush1.msra.mxu0 0.0
    %1619 = vmatprep.mubr.f32.mxu0 0.0
    %1620 = vmatmul.mubr.f32.gmra.mrb[0].mxu0 %v1553
    %v1621 = vpop.f32.mrb[0].mxu0
    %v1622 = vadd.f32 0.0, %v1621
    %v1623 = vpop.f32.mrb[0].mxu0
    %1624 = vdwg.mxu0
    %v1626 = vrot.slane %v1622, 4
    %v1628 = vadd.f32 %v232, %v1626
    %v1629 = vxor.u32 %v1628, 2147483648
    %v1630 = vmul.f32 %v1629, 1.442695
    %v1631 = vpow.pop %v1630
    %v1632 = vadd.f32 %v1631, 1.0
    %v1633 = vrcp.pop %v1632
    %v1634 = vmul.f32 1.0, %v1633
    %v1635 = vtanh.pop %v1628
    %v1637 = vrot.slane %v1427, 6
    %v1639 = vmul.f32 %v1634, %v1637
    %1641 = vrot.lane.b32.xlu0 %v1635, 64
    %v1642 = vpop.permute.xlu0 %1641
    %v1644 = vmul.f32 %v1634, %v1642
    %1646 = vrot.lane.b32.xlu0 %v1644, 32
    %v1647 = vpop.permute.xlu0 %1646
    %v1649 = vadd.f32 %v1639, %v1647
    %v1650 = vtanh.pop %v1649
    %1652 = vrot.lane.b32.xlu0 %v1650, 64
    %v1653 = vpop.permute.xlu0 %1652
    %v1655 = vmul.f32 %v1634, %v1653
    %v1656 = vrot.slane %v1539, 4
    %1657 = vrot.lane.b32.xlu0 %v1656, 32
    %v1658 = vpop.permute.xlu0 %1657
    %v1659 = vsel %vm244, %v1658, 0
    %1661 = vmatprep.subr.mxu0 0.0
    %1662 = vmatpush1.msra.mxu0 %v240
    %1663 = vmatprep.subr.mxu0 0.0
    %1664 = vmatpush1.msra.mxu0 %v241
    %1665 = vmatprep.subr.mxu0 0.0
    %1666 = vmatpush1.msra.mxu0 %v242
    %1667 = vmatprep.subr.mxu0 0.0
    %1668 = vmatpush1.msra.mxu0 %v243
    %1669 = vmatprep.subr.mxu0 0.0
    %1670 = vmatpush1.msra.mxu0 0.0
    %1671 = vmatprep.subr.mxu0 0.0
    %1672 = vmatpush1.msra.mxu0 0.0
    %1673 = vmatprep.subr.mxu0 0.0
    %1674 = vmatpush1.msra.mxu0 0.0
    %1675 = vmatprep.subr.mxu0 0.0
    %1676 = vmatpush1.msra.mxu0 0.0
    %1677 = vmatprep.subr.mxu0 0.0
    %1678 = vmatpush1.msra.mxu0 0.0
    %1679 = vmatprep.subr.mxu0 0.0
    %1680 = vmatpush1.msra.mxu0 0.0
    %1681 = vmatprep.subr.mxu0 0.0
    %1682 = vmatpush1.msra.mxu0 0.0
    %1683 = vmatprep.subr.mxu0 0.0
    %1684 = vmatpush1.msra.mxu0 0.0
    %1685 = vmatprep.subr.mxu0 0.0
    %1686 = vmatpush1.msra.mxu0 0.0
    %1687 = vmatprep.subr.mxu0 0.0
    %1688 = vmatpush1.msra.mxu0 0.0
    %1689 = vmatprep.subr.mxu0 0.0
    %1690 = vmatpush1.msra.mxu0 0.0
    %1691 = vmatprep.subr.mxu0 0.0
    %1692 = vmatpush1.msra.mxu0 0.0
    %1693 = vmatprep.subr.mxu0 0.0
    %1694 = vmatpush1.msra.mxu0 0.0
    %1695 = vmatprep.subr.mxu0 0.0
    %1696 = vmatpush1.msra.mxu0 0.0
    %1697 = vmatprep.subr.mxu0 0.0
    %1698 = vmatpush1.msra.mxu0 0.0
    %1699 = vmatprep.subr.mxu0 0.0
    %1700 = vmatpush1.msra.mxu0 0.0
    %1701 = vmatprep.subr.mxu0 0.0
    %1702 = vmatpush1.msra.mxu0 0.0
    %1703 = vmatprep.subr.mxu0 0.0
    %1704 = vmatpush1.msra.mxu0 0.0
    %1705 = vmatprep.subr.mxu0 0.0
    %1706 = vmatpush1.msra.mxu0 0.0
    %1707 = vmatprep.subr.mxu0 0.0
    %1708 = vmatpush1.msra.mxu0 0.0
    %1709 = vmatprep.subr.mxu0 0.0
    %1710 = vmatpush1.msra.mxu0 0.0
    %1711 = vmatprep.subr.mxu0 0.0
    %1712 = vmatpush1.msra.mxu0 0.0
    %1713 = vmatprep.subr.mxu0 0.0
    %1714 = vmatpush1.msra.mxu0 0.0
    %1715 = vmatprep.subr.mxu0 0.0
    %1716 = vmatpush1.msra.mxu0 0.0
    %1717 = vmatprep.subr.mxu0 0.0
    %1718 = vmatpush1.msra.mxu0 0.0
    %1719 = vmatprep.subr.mxu0 0.0
    %1720 = vmatpush1.msra.mxu0 0.0
    %1721 = vmatprep.subr.mxu0 0.0
    %1722 = vmatpush1.msra.mxu0 0.0
    %1723 = vmatprep.subr.mxu0 0.0
    %1724 = vmatpush1.msra.mxu0 0.0
    %1725 = vmatprep.mubr.f32.mxu0 0.0
    %1726 = vmatmul.mubr.f32.gmra.mrb[0].mxu0 %v1659
    %v1727 = vpop.f32.mrb[0].mxu0
    %v1728 = vadd.f32 0.0, %v1727
    %v1729 = vpop.f32.mrb[0].mxu0
    %1730 = vdwg.mxu0
    %v1732 = vrot.slane %v1728, 6
    %v1734 = vadd.f32 %v228, %v1732
    %v1735 = vxor.u32 %v1734, 2147483648
    %v1736 = vmul.f32 %v1735, 1.442695
    %v1737 = vpow.pop %v1736
    %v1738 = vadd.f32 %v1737, 1.0
    %v1739 = vrcp.pop %v1738
    %v1740 = vmul.f32 1.0, %v1739
    %v1741 = vtanh.pop %v1734
    %v1743 = vrot.slane %v1533, 2
    %v1745 = vmul.f32 %v1740, %v1743
    %1747 = vrot.lane.b32.xlu0 %v1741, 64
    %v1748 = vpop.permute.xlu0 %1747
    %v1750 = vmul.f32 %v1740, %v1748
    %1752 = vrot.lane.b32.xlu0 %v1750, 32
    %v1753 = vpop.permute.xlu0 %1752
    %v1755 = vadd.f32 %v1745, %v1753
    %v1756 = vtanh.pop %v1755
    %1758 = vrot.lane.b32.xlu0 %v1756, 64
    %v1759 = vpop.permute.xlu0 %1758
    %v1761 = vmul.f32 %v1740, %v1759
    %1763 = vrot.lane.b32.xlu0 %v1655, 32
    %v1764 = vpop.permute.xlu0 %1763
    %1766 = vst.msk [vmem:[#allocation2 + $0x8] sm:$0x30] %vm672, %v1764
    %1768 = vrot.lane.b32.xlu0 %v1761, 32
    %v1769 = vpop.permute.xlu0 %1768
    %1771 = vst.msk [vmem:[#allocation3] sm:$0xc] %vm666, %v1769
    %v1772 = vrot.slane %v1655, 4
    %1773 = vrot.lane.b32.xlu0 %v1772, 32
    %v1774 = vpop.permute.xlu0 %1773
    %v1775 = vsel %vm244, %v1774, 0
    %1777 = vmatprep.subr.mxu0 0.0
    %1778 = vmatpush1.msra.mxu0 %v236
    %1779 = vmatprep.subr.mxu0 0.0
    %1780 = vmatpush1.msra.mxu0 %v237
    %1781 = vmatprep.subr.mxu0 0.0
    %1782 = vmatpush1.msra.mxu0 %v238
    %1783 = vmatprep.subr.mxu0 0.0
    %1784 = vmatpush1.msra.mxu0 %v239
    %1785 = vmatprep.subr.mxu0 0.0
    %1786 = vmatpush1.msra.mxu0 0.0
    %1787 = vmatprep.subr.mxu0 0.0
    %1788 = vmatpush1.msra.mxu0 0.0
    %1789 = vmatprep.subr.mxu0 0.0
    %1790 = vmatpush1.msra.mxu0 0.0
    %1791 = vmatprep.subr.mxu0 0.0
    %1792 = vmatpush1.msra.mxu0 0.0
    %1793 = vmatprep.subr.mxu0 0.0
    %1794 = vmatpush1.msra.mxu0 0.0
    %1795 = vmatprep.subr.mxu0 0.0
    %1796 = vmatpush1.msra.mxu0 0.0
    %1797 = vmatprep.subr.mxu0 0.0
    %1798 = vmatpush1.msra.mxu0 0.0
    %1799 = vmatprep.subr.mxu0 0.0
    %1800 = vmatpush1.msra.mxu0 0.0
    %1801 = vmatprep.subr.mxu0 0.0
    %1802 = vmatpush1.msra.mxu0 0.0
    %1803 = vmatprep.subr.mxu0 0.0
    %1804 = vmatpush1.msra.mxu0 0.0
    %1805 = vmatprep.subr.mxu0 0.0
    %1806 = vmatpush1.msra.mxu0 0.0
    %1807 = vmatprep.subr.mxu0 0.0
    %1808 = vmatpush1.msra.mxu0 0.0
    %1809 = vmatprep.subr.mxu0 0.0
    %1810 = vmatpush1.msra.mxu0 0.0
    %1811 = vmatprep.subr.mxu0 0.0
    %1812 = vmatpush1.msra.mxu0 0.0
    %1813 = vmatprep.subr.mxu0 0.0
    %1814 = vmatpush1.msra.mxu0 0.0
    %1815 = vmatprep.subr.mxu0 0.0
    %1816 = vmatpush1.msra.mxu0 0.0
    %1817 = vmatprep.subr.mxu0 0.0
    %1818 = vmatpush1.msra.mxu0 0.0
    %1819 = vmatprep.subr.mxu0 0.0
    %1820 = vmatpush1.msra.mxu0 0.0
    %1821 = vmatprep.subr.mxu0 0.0
    %1822 = vmatpush1.msra.mxu0 0.0
    %1823 = vmatprep.subr.mxu0 0.0
    %1824 = vmatpush1.msra.mxu0 0.0
    %1825 = vmatprep.subr.mxu0 0.0
    %1826 = vmatpush1.msra.mxu0 0.0
    %1827 = vmatprep.subr.mxu0 0.0
    %1828 = vmatpush1.msra.mxu0 0.0
    %1829 = vmatprep.subr.mxu0 0.0
    %1830 = vmatpush1.msra.mxu0 0.0
    %1831 = vmatprep.subr.mxu0 0.0
    %1832 = vmatpush1.msra.mxu0 0.0
    %1833 = vmatprep.subr.mxu0 0.0
    %1834 = vmatpush1.msra.mxu0 0.0
    %1835 = vmatprep.subr.mxu0 0.0
    %1836 = vmatpush1.msra.mxu0 0.0
    %1837 = vmatprep.subr.mxu0 0.0
    %1838 = vmatpush1.msra.mxu0 0.0
    %1839 = vmatprep.subr.mxu0 0.0
    %1840 = vmatpush1.msra.mxu0 0.0
    %1841 = vmatprep.mubr.f32.mxu0 0.0
    %1842 = vmatmul.mubr.f32.gmra.mrb[0].mxu0 %v1775
    %v1843 = vpop.f32.mrb[0].mxu0
    %v1844 = vadd.f32 0.0, %v1843
    %v1845 = vpop.f32.mrb[0].mxu0
    %1846 = vdwg.mxu0
    %v1848 = vrot.slane %v1844, 2
    %v1850 = vadd.f32 %v232, %v1848
    %v1851 = vxor.u32 %v1850, 2147483648
    %v1852 = vmul.f32 %v1851, 1.442695
    %v1853 = vpow.pop %v1852
    %v1854 = vadd.f32 %v1853, 1.0
    %v1855 = vrcp.pop %v1854
    %v1856 = vmul.f32 1.0, %v1855
    %v1857 = vtanh.pop %v1850
    %v1859 = vrot.slane %v1649, 6
    %v1861 = vmul.f32 %v1856, %v1859
    %1863 = vrot.lane.b32.xlu0 %v1857, 64
    %v1864 = vpop.permute.xlu0 %1863
    %v1866 = vmul.f32 %v1856, %v1864
    %1868 = vrot.lane.b32.xlu0 %v1866, 32
    %v1869 = vpop.permute.xlu0 %1868
    %v1871 = vadd.f32 %v1861, %v1869
    %v1872 = vtanh.pop %v1871
    %1874 = vrot.lane.b32.xlu0 %v1872, 64
    %v1875 = vpop.permute.xlu0 %1874
    %v1877 = vmul.f32 %v1856, %v1875
    %v1878 = vrot.slane %v1761, 2
    %1879 = vrot.lane.b32.xlu0 %v1878, 32
    %v1880 = vpop.permute.xlu0 %1879
    %v1881 = vsel %vm244, %v1880, 0
    %1883 = vmatprep.subr.mxu0 0.0
    %1884 = vmatpush1.msra.mxu0 %v240
    %1885 = vmatprep.subr.mxu0 0.0
    %1886 = vmatpush1.msra.mxu0 %v241
    %1887 = vmatprep.subr.mxu0 0.0
    %1888 = vmatpush1.msra.mxu0 %v242
    %1889 = vmatprep.subr.mxu0 0.0
    %1890 = vmatpush1.msra.mxu0 %v243
    %1891 = vmatprep.subr.mxu0 0.0
    %1892 = vmatpush1.msra.mxu0 0.0
    %1893 = vmatprep.subr.mxu0 0.0
    %1894 = vmatpush1.msra.mxu0 0.0
    %1895 = vmatprep.subr.mxu0 0.0
    %1896 = vmatpush1.msra.mxu0 0.0
    %1897 = vmatprep.subr.mxu0 0.0
    %1898 = vmatpush1.msra.mxu0 0.0
    %1899 = vmatprep.subr.mxu0 0.0
    %1900 = vmatpush1.msra.mxu0 0.0
    %1901 = vmatprep.subr.mxu0 0.0
    %1902 = vmatpush1.msra.mxu0 0.0
    %1903 = vmatprep.subr.mxu0 0.0
    %1904 = vmatpush1.msra.mxu0 0.0
    %1905 = vmatprep.subr.mxu0 0.0
    %1906 = vmatpush1.msra.mxu0 0.0
    %1907 = vmatprep.subr.mxu0 0.0
    %1908 = vmatpush1.msra.mxu0 0.0
    %1909 = vmatprep.subr.mxu0 0.0
    %1910 = vmatpush1.msra.mxu0 0.0
    %1911 = vmatprep.subr.mxu0 0.0
    %1912 = vmatpush1.msra.mxu0 0.0
    %1913 = vmatprep.subr.mxu0 0.0
    %1914 = vmatpush1.msra.mxu0 0.0
    %1915 = vmatprep.subr.mxu0 0.0
    %1916 = vmatpush1.msra.mxu0 0.0
    %1917 = vmatprep.subr.mxu0 0.0
    %1918 = vmatpush1.msra.mxu0 0.0
    %1919 = vmatprep.subr.mxu0 0.0
    %1920 = vmatpush1.msra.mxu0 0.0
    %1921 = vmatprep.subr.mxu0 0.0
    %1922 = vmatpush1.msra.mxu0 0.0
    %1923 = vmatprep.subr.mxu0 0.0
    %1924 = vmatpush1.msra.mxu0 0.0
    %1925 = vmatprep.subr.mxu0 0.0
    %1926 = vmatpush1.msra.mxu0 0.0
    %1927 = vmatprep.subr.mxu0 0.0
    %1928 = vmatpush1.msra.mxu0 0.0
    %1929 = vmatprep.subr.mxu0 0.0
    %1930 = vmatpush1.msra.mxu0 0.0
    %1931 = vmatprep.subr.mxu0 0.0
    %1932 = vmatpush1.msra.mxu0 0.0
    %1933 = vmatprep.subr.mxu0 0.0
    %1934 = vmatpush1.msra.mxu0 0.0
    %1935 = vmatprep.subr.mxu0 0.0
    %1936 = vmatpush1.msra.mxu0 0.0
    %1937 = vmatprep.subr.mxu0 0.0
    %1938 = vmatpush1.msra.mxu0 0.0
    %1939 = vmatprep.subr.mxu0 0.0
    %1940 = vmatpush1.msra.mxu0 0.0
    %1941 = vmatprep.subr.mxu0 0.0
    %1942 = vmatpush1.msra.mxu0 0.0
    %1943 = vmatprep.subr.mxu0 0.0
    %1944 = vmatpush1.msra.mxu0 0.0
    %1945 = vmatprep.subr.mxu0 0.0
    %1946 = vmatpush1.msra.mxu0 0.0
    %1947 = vmatprep.mubr.f32.mxu0 0.0
    %1948 = vmatmul.mubr.f32.gmra.mrb[0].mxu0 %v1881
    %v1949 = vpop.f32.mrb[0].mxu0
    %v1950 = vadd.f32 0.0, %v1949
    %v1951 = vpop.f32.mrb[0].mxu0
    %1952 = vdwg.mxu0
    %v1953 = vadd.f32 %v228, %v1950
    %v1954 = vxor.u32 %v1953, 2147483648
    %v1955 = vmul.f32 %v1954, 1.442695
    %v1956 = vpow.pop %v1955
    %v1957 = vadd.f32 %v1956, 1.0
    %v1958 = vrcp.pop %v1957
    %v1959 = vmul.f32 1.0, %v1958
    %v1960 = vtanh.pop %v1953
    %v1962 = vrot.slane %v1755, 2
    %v1964 = vmul.f32 %v1959, %v1962
    %1966 = vrot.lane.b32.xlu0 %v1960, 64
    %v1967 = vpop.permute.xlu0 %1966
    %v1969 = vmul.f32 %v1959, %v1967
    %1971 = vrot.lane.b32.xlu0 %v1969, 32
    %v1972 = vpop.permute.xlu0 %1971
    %v1974 = vadd.f32 %v1964, %v1972
    %v1975 = vtanh.pop %v1974
    %1977 = vrot.lane.b32.xlu0 %v1975, 64
    %v1978 = vpop.permute.xlu0 %1977
    %v1980 = vmul.f32 %v1959, %v1978
    %1982 = vrot.lane.b32.xlu0 %v1877, 32
    %v1983 = vpop.permute.xlu0 %1982
    %1985 = vst.msk [vmem:[#allocation2 + $0x8] sm:$0xc0] %vm451, %v1983
    %1987 = vrot.lane.b32.xlu0 %v1980, 32
    %v1988 = vpop.permute.xlu0 %1987
    %1990 = vst.msk [vmem:[#allocation3] sm:$0x3] %vm445, %v1988
    %v1991 = vld [vmem:[#allocation2] sm:$0xff]
    %v1992 = vld [vmem:[#allocation2 + $0x8] sm:$0xff]
    %v1993 = vld [vmem:[#allocation3] sm:$0xff]
    %v1994 = vld [vmem:[#allocation3 + $0x8] sm:$0xff]
    %v1995 = vld [vmem:[#allocation9] sm:$0xff]
    %v1996 = vld [vmem:[#allocation9 + $0x8] sm:$0xff]
    %v1997 = vld [vmem:[#allocation9 + $0x10] sm:$0xff]
    %v1998 = vld [vmem:[#allocation9 + $0x18] sm:$0xff]
    %v1999 = vld [vmem:[#allocation9 + $0x20] sm:$0xff]
    %v2000 = vld [vmem:[#allocation9 + $0x28] sm:$0xff]
    %v2001 = vld [vmem:[#allocation9 + $0x30] sm:$0xff]
    %v2002 = vld [vmem:[#allocation9 + $0x38] sm:$0xff]
    %v2003 = vld [vmem:[#allocation9 + $0x40] sm:$0xff]
    %v2004 = vld [vmem:[#allocation9 + $0x48] sm:$0xff]
    %v2005 = vld [vmem:[#allocation9 + $0x50] sm:$0xff]
    %v2006 = vld [vmem:[#allocation9 + $0x58] sm:$0xff]
    %v2007 = vld [vmem:[#allocation9 + $0x60] sm:$0xff]
    %v2008 = vld [vmem:[#allocation9 + $0x68] sm:$0xff]
    %v2009 = vld [vmem:[#allocation9 + $0x70] sm:$0xff]
    %v2010 = vld [vmem:[#allocation9 + $0x78] sm:$0xff]
    %v2012 = vsel %vm244, %v1993, 0
    %v2015 = vsel %vm244, %v1994, 0
    %2017 = vmatprep.subr.mxu0 %v2004
    %2018 = vmatpush1.msra.mxu0 %v2003
    %2019 = vmatprep.subr.mxu0 %v2006
    %2020 = vmatpush1.msra.mxu0 %v2005
    %2021 = vmatprep.subr.mxu0 %v2008
    %2022 = vmatpush1.msra.mxu0 %v2007
    %2023 = vmatprep.subr.mxu0 %v2010
    %2024 = vmatpush1.msra.mxu0 %v2009
    %2025 = vmatprep.subr.mxu0 0.0
    %2026 = vmatpush1.msra.mxu0 0.0
    %2027 = vmatprep.subr.mxu0 0.0
    %2028 = vmatpush1.msra.mxu0 0.0
    %2029 = vmatprep.subr.mxu0 0.0
    %2030 = vmatpush1.msra.mxu0 0.0
    %2031 = vmatprep.subr.mxu0 0.0
    %2032 = vmatpush1.msra.mxu0 0.0
    %2033 = vmatprep.subr.mxu0 0.0
    %2034 = vmatpush1.msra.mxu0 0.0
    %2035 = vmatprep.subr.mxu0 0.0
    %2036 = vmatpush1.msra.mxu0 0.0
    %2037 = vmatprep.subr.mxu0 0.0
    %2038 = vmatpush1.msra.mxu0 0.0
    %2039 = vmatprep.subr.mxu0 0.0
    %2040 = vmatpush1.msra.mxu0 0.0
    %2041 = vmatprep.subr.mxu0 0.0
    %2042 = vmatpush1.msra.mxu0 0.0
    %2043 = vmatprep.subr.mxu0 0.0
    %2044 = vmatpush1.msra.mxu0 0.0
    %2045 = vmatprep.subr.mxu0 0.0
    %2046 = vmatpush1.msra.mxu0 0.0
    %2047 = vmatprep.subr.mxu0 0.0
    %2048 = vmatpush1.msra.mxu0 0.0
    %2049 = vmatprep.subr.mxu0 0.0
    %2050 = vmatpush1.msra.mxu0 0.0
    %2051 = vmatprep.subr.mxu0 0.0
    %2052 = vmatpush1.msra.mxu0 0.0
    %2053 = vmatprep.subr.mxu0 0.0
    %2054 = vmatpush1.msra.mxu0 0.0
    %2055 = vmatprep.subr.mxu0 0.0
    %2056 = vmatpush1.msra.mxu0 0.0
    %2057 = vmatprep.subr.mxu0 0.0
    %2058 = vmatpush1.msra.mxu0 0.0
    %2059 = vmatprep.subr.mxu0 0.0
    %2060 = vmatpush1.msra.mxu0 0.0
    %2061 = vmatprep.subr.mxu0 0.0
    %2062 = vmatpush1.msra.mxu0 0.0
    %2063 = vmatprep.subr.mxu0 0.0
    %2064 = vmatpush1.msra.mxu0 0.0
    %2065 = vmatprep.subr.mxu0 0.0
    %2066 = vmatpush1.msra.mxu0 0.0
    %2067 = vmatprep.subr.mxu0 0.0
    %2068 = vmatpush1.msra.mxu0 0.0
    %2069 = vmatprep.subr.mxu0 0.0
    %2070 = vmatpush1.msra.mxu0 0.0
    %2071 = vmatprep.subr.mxu0 0.0
    %2072 = vmatpush1.msra.mxu0 0.0
    %2073 = vmatprep.subr.mxu0 0.0
    %2074 = vmatpush1.msra.mxu0 0.0
    %2075 = vmatprep.subr.mxu0 0.0
    %2076 = vmatpush1.msra.mxu0 0.0
    %2077 = vmatprep.subr.mxu0 0.0
    %2078 = vmatpush1.msra.mxu0 0.0
    %2079 = vmatprep.subr.mxu0 0.0
    %2080 = vmatpush1.msra.mxu0 0.0
    %2081 = vmatprep.mubr.f32.mxu0 0.0
    %2082 = vmatmul.mubr.f32.gmra.mrb[0].mxu0 %v2012
    %v2083 = vpop.f32.mrb[0].mxu0
    %v2084 = vadd.f32 0.0, %v2083
    %v2085 = vpop.f32.mrb[0].mxu0
    %v2086 = vadd.f32 0.0, %v2085
    %2087 = vmatprep.mubr.f32.mxu0 0.0
    %2088 = vmatmul.mubr.f32.gmra.mrb[0].mxu0 %v2015
    %v2089 = vpop.f32.mrb[0].mxu0
    %v2090 = vadd.f32 0.0, %v2089
    %v2091 = vpop.f32.mrb[0].mxu0
    %v2092 = vadd.f32 0.0, %v2091
    %2093 = vdwg.mxu0
    %v2095 = vsel %vm244, %v1991, 0
    %v2098 = vsel %vm244, %v1992, 0
    %2100 = vmatprep.subr.mxu0 %v1996
    %2101 = vmatpush1.msra.mxu0 %v1995
    %2102 = vmatprep.subr.mxu0 %v1998
    %2103 = vmatpush1.msra.mxu0 %v1997
    %2104 = vmatprep.subr.mxu0 %v2000
    %2105 = vmatpush1.msra.mxu0 %v1999
    %2106 = vmatprep.subr.mxu0 %v2002
    %2107 = vmatpush1.msra.mxu0 %v2001
    %2108 = vmatprep.subr.mxu0 0.0
    %2109 = vmatpush1.msra.mxu0 0.0
    %2110 = vmatprep.subr.mxu0 0.0
    %2111 = vmatpush1.msra.mxu0 0.0
    %2112 = vmatprep.subr.mxu0 0.0
    %2113 = vmatpush1.msra.mxu0 0.0
    %2114 = vmatprep.subr.mxu0 0.0
    %2115 = vmatpush1.msra.mxu0 0.0
    %2116 = vmatprep.subr.mxu0 0.0
    %2117 = vmatpush1.msra.mxu0 0.0
    %2118 = vmatprep.subr.mxu0 0.0
    %2119 = vmatpush1.msra.mxu0 0.0
    %2120 = vmatprep.subr.mxu0 0.0
    %2121 = vmatpush1.msra.mxu0 0.0
    %2122 = vmatprep.subr.mxu0 0.0
    %2123 = vmatpush1.msra.mxu0 0.0
    %2124 = vmatprep.subr.mxu0 0.0
    %2125 = vmatpush1.msra.mxu0 0.0
    %2126 = vmatprep.subr.mxu0 0.0
    %2127 = vmatpush1.msra.mxu0 0.0
    %2128 = vmatprep.subr.mxu0 0.0
    %2129 = vmatpush1.msra.mxu0 0.0
    %2130 = vmatprep.subr.mxu0 0.0
    %2131 = vmatpush1.msra.mxu0 0.0
    %2132 = vmatprep.subr.mxu0 0.0
    %2133 = vmatpush1.msra.mxu0 0.0
    %2134 = vmatprep.subr.mxu0 0.0
    %2135 = vmatpush1.msra.mxu0 0.0
    %2136 = vmatprep.subr.mxu0 0.0
    %2137 = vmatpush1.msra.mxu0 0.0
    %2138 = vmatprep.subr.mxu0 0.0
    %2139 = vmatpush1.msra.mxu0 0.0
    %2140 = vmatprep.subr.mxu0 0.0
    %2141 = vmatpush1.msra.mxu0 0.0
    %2142 = vmatprep.subr.mxu0 0.0
    %2143 = vmatpush1.msra.mxu0 0.0
    %2144 = vmatprep.subr.mxu0 0.0
    %2145 = vmatpush1.msra.mxu0 0.0
    %2146 = vmatprep.subr.mxu0 0.0
    %2147 = vmatpush1.msra.mxu0 0.0
    %2148 = vmatprep.subr.mxu0 0.0
    %2149 = vmatpush1.msra.mxu0 0.0
    %2150 = vmatprep.subr.mxu0 0.0
    %2151 = vmatpush1.msra.mxu0 0.0
    %2152 = vmatprep.subr.mxu0 0.0
    %2153 = vmatpush1.msra.mxu0 0.0
    %2154 = vmatprep.subr.mxu0 0.0
    %2155 = vmatpush1.msra.mxu0 0.0
    %2156 = vmatprep.subr.mxu0 0.0
    %2157 = vmatpush1.msra.mxu0 0.0
    %2158 = vmatprep.subr.mxu0 0.0
    %2159 = vmatpush1.msra.mxu0 0.0
    %2160 = vmatprep.subr.mxu0 0.0
    %2161 = vmatpush1.msra.mxu0 0.0
    %2162 = vmatprep.subr.mxu0 0.0
    %2163 = vmatpush1.msra.mxu0 0.0
    %2164 = vmatprep.mubr.f32.mxu0 0.0
    %2165 = vmatmul.mubr.f32.gmra.mrb[0].mxu0 %v2095
    %v2166 = vpop.f32.mrb[0].mxu0
    %v2167 = vadd.f32 %v2084, %v2166
    %v2168 = vpop.f32.mrb[0].mxu0
    %v2169 = vadd.f32 %v2086, %v2168
    %2170 = vmatprep.mubr.f32.mxu0 0.0
    %2171 = vmatmul.mubr.f32.gmra.mrb[0].mxu0 %v2098
    %v2172 = vpop.f32.mrb[0].mxu0
    %v2173 = vadd.f32 %v2090, %v2172
    %v2174 = vpop.f32.mrb[0].mxu0
    %v2175 = vadd.f32 %v2092, %v2174
    %2176 = vdwg.mxu0
    %v2177 = vld [vmem:[#allocation10] sm:$0x3]
    %v2179 = vlaneseq
    %v2180 = vshrl.u32 %v2179, 7
    %v2181 = vsub.s32 0, %v2180
    %v2182 = vrot.slane %v2177, %v2181
    %v2183 = vlaneseq
    %v2184 = vshrl.u32 %v2183, 7
    %v2185 = vsub.s32 1, %v2184
    %v2186 = vrot.slane %v2177, %v2185
    %v2189 = vadd.f32 %v2167, %v2182
    %v2190 = vadd.f32 %v2169, %v2186
    %v2191 = vadd.f32 %v2173, %v2182
    %v2192 = vadd.f32 %v2175, %v2186
    %v2193 = vld [vmem:[#allocation12] sm:$0xff]
    %v2194 = vld [vmem:[#allocation12 + $0x8] sm:$0xff]
    %v2195 = vld [vmem:[#allocation12 + $0x10] sm:$0xff]
    %v2196 = vld [vmem:[#allocation12 + $0x18] sm:$0xff]
    %v2197 = vld [vmem:[#allocation13] sm:$0xff]
    %v2198 = vld [vmem:[#allocation13 + $0x8] sm:$0xff]
    %v2199 = vld [vmem:[#allocation13 + $0x10] sm:$0xff]
    %v2200 = vld [vmem:[#allocation13 + $0x18] sm:$0xff]
    %2201 = vmatprep.subr.mxu0 0.0
    %2202 = vmatpush1.msra.mxu0 %v2193
    %2203 = vmatprep.subr.mxu0 0.0
    %2204 = vmatpush1.msra.mxu0 %v2194
    %2205 = vmatprep.subr.mxu0 0.0
    %2206 = vmatpush1.msra.mxu0 %v2195
    %2207 = vmatprep.subr.mxu0 0.0
    %2208 = vmatpush1.msra.mxu0 %v2196
    %2209 = vmatprep.subr.mxu0 0.0
    %2210 = vmatpush1.msra.mxu0 0.0
    %2211 = vmatprep.subr.mxu0 0.0
    %2212 = vmatpush1.msra.mxu0 0.0
    %2213 = vmatprep.subr.mxu0 0.0
    %2214 = vmatpush1.msra.mxu0 0.0
    %2215 = vmatprep.subr.mxu0 0.0
    %2216 = vmatpush1.msra.mxu0 0.0
    %2217 = vmatprep.subr.mxu0 0.0
    %2218 = vmatpush1.msra.mxu0 0.0
    %2219 = vmatprep.subr.mxu0 0.0
    %2220 = vmatpush1.msra.mxu0 0.0
    %2221 = vmatprep.subr.mxu0 0.0
    %2222 = vmatpush1.msra.mxu0 0.0
    %2223 = vmatprep.subr.mxu0 0.0
    %2224 = vmatpush1.msra.mxu0 0.0
    %2225 = vmatprep.subr.mxu0 0.0
    %2226 = vmatpush1.msra.mxu0 0.0
    %2227 = vmatprep.subr.mxu0 0.0
    %2228 = vmatpush1.msra.mxu0 0.0
    %2229 = vmatprep.subr.mxu0 0.0
    %2230 = vmatpush1.msra.mxu0 0.0
    %2231 = vmatprep.subr.mxu0 0.0
    %2232 = vmatpush1.msra.mxu0 0.0
    %2233 = vmatprep.subr.mxu0 0.0
    %2234 = vmatpush1.msra.mxu0 0.0
    %2235 = vmatprep.subr.mxu0 0.0
    %2236 = vmatpush1.msra.mxu0 0.0
    %2237 = vmatprep.subr.mxu0 0.0
    %2238 = vmatpush1.msra.mxu0 0.0
    %2239 = vmatprep.subr.mxu0 0.0
    %2240 = vmatpush1.msra.mxu0 0.0
    %2241 = vmatprep.subr.mxu0 0.0
    %2242 = vmatpush1.msra.mxu0 0.0
    %2243 = vmatprep.subr.mxu0 0.0
    %2244 = vmatpush1.msra.mxu0 0.0
    %2245 = vmatprep.subr.mxu0 0.0
    %2246 = vmatpush1.msra.mxu0 0.0
    %2247 = vmatprep.subr.mxu0 0.0
    %2248 = vmatpush1.msra.mxu0 0.0
    %2249 = vmatprep.subr.mxu0 0.0
    %2250 = vmatpush1.msra.mxu0 0.0
    %2251 = vmatprep.subr.mxu0 0.0
    %2252 = vmatpush1.msra.mxu0 0.0
    %2253 = vmatprep.subr.mxu0 0.0
    %2254 = vmatpush1.msra.mxu0 0.0
    %2255 = vmatprep.subr.mxu0 0.0
    %2256 = vmatpush1.msra.mxu0 0.0
    %2257 = vmatprep.subr.mxu0 0.0
    %2258 = vmatpush1.msra.mxu0 0.0
    %2259 = vmatprep.subr.mxu0 0.0
    %2260 = vmatpush1.msra.mxu0 0.0
    %2261 = vmatprep.subr.mxu0 0.0
    %2262 = vmatpush1.msra.mxu0 0.0
    %2263 = vmatprep.subr.mxu0 0.0
    %2264 = vmatpush1.msra.mxu0 0.0
    %2265 = vmatprep.mubr.f32.mxu0 0.0
    %2266 = vmatmul.mubr.f32.gmra.mrb[0].mxu0 %v246
    %v2267 = vpop.f32.mrb[0].mxu0
    %v2268 = vadd.f32 0.0, %v2267
    %v2269 = vpop.f32.mrb[0].mxu0
    %2270 = vdwg.mxu0
    %v2271 = vadd.f32 %v2189, %v2268
    %v2272 = vxor.u32 %v2271, 2147483648
    %v2273 = vmul.f32 %v2272, 1.442695
    %v2274 = vpow.pop %v2273
    %v2275 = vadd.f32 %v2274, 1.0
    %v2276 = vrcp.pop %v2275
    %v2277 = vmul.f32 1.0, %v2276
    %v2278 = vtanh.pop %v2271
    %v2279 = vmul.f32 %v2277, 0.0
    %2281 = vrot.lane.b32.xlu0 %v2278, 64
    %v2282 = vpop.permute.xlu0 %2281
    %v2284 = vmul.f32 %v2277, %v2282
    %2286 = vrot.lane.b32.xlu0 %v2284, 32
    %v2287 = vpop.permute.xlu0 %2286
    %v2289 = vadd.f32 %v2279, %v2287
    %v2290 = vtanh.pop %v2289
    %2292 = vrot.lane.b32.xlu0 %v2290, 64
    %v2293 = vpop.permute.xlu0 %2292
    %v2295 = vmul.f32 %v2277, %v2293
    %2296 = vmatprep.subr.mxu0 0.0
    %2297 = vmatpush1.msra.mxu0 %v2197
    %2298 = vmatprep.subr.mxu0 0.0
    %2299 = vmatpush1.msra.mxu0 %v2198
    %2300 = vmatprep.subr.mxu0 0.0
    %2301 = vmatpush1.msra.mxu0 %v2199
    %2302 = vmatprep.subr.mxu0 0.0
    %2303 = vmatpush1.msra.mxu0 %v2200
    %2304 = vmatprep.subr.mxu0 0.0
    %2305 = vmatpush1.msra.mxu0 0.0
    %2306 = vmatprep.subr.mxu0 0.0
    %2307 = vmatpush1.msra.mxu0 0.0
    %2308 = vmatprep.subr.mxu0 0.0
    %2309 = vmatpush1.msra.mxu0 0.0
    %2310 = vmatprep.subr.mxu0 0.0
    %2311 = vmatpush1.msra.mxu0 0.0
    %2312 = vmatprep.subr.mxu0 0.0
    %2313 = vmatpush1.msra.mxu0 0.0
    %2314 = vmatprep.subr.mxu0 0.0
    %2315 = vmatpush1.msra.mxu0 0.0
    %2316 = vmatprep.subr.mxu0 0.0
    %2317 = vmatpush1.msra.mxu0 0.0
    %2318 = vmatprep.subr.mxu0 0.0
    %2319 = vmatpush1.msra.mxu0 0.0
    %2320 = vmatprep.subr.mxu0 0.0
    %2321 = vmatpush1.msra.mxu0 0.0
    %2322 = vmatprep.subr.mxu0 0.0
    %2323 = vmatpush1.msra.mxu0 0.0
    %2324 = vmatprep.subr.mxu0 0.0
    %2325 = vmatpush1.msra.mxu0 0.0
    %2326 = vmatprep.subr.mxu0 0.0
    %2327 = vmatpush1.msra.mxu0 0.0
    %2328 = vmatprep.subr.mxu0 0.0
    %2329 = vmatpush1.msra.mxu0 0.0
    %2330 = vmatprep.subr.mxu0 0.0
    %2331 = vmatpush1.msra.mxu0 0.0
    %2332 = vmatprep.subr.mxu0 0.0
    %2333 = vmatpush1.msra.mxu0 0.0
    %2334 = vmatprep.subr.mxu0 0.0
    %2335 = vmatpush1.msra.mxu0 0.0
    %2336 = vmatprep.subr.mxu0 0.0
    %2337 = vmatpush1.msra.mxu0 0.0
    %2338 = vmatprep.subr.mxu0 0.0
    %2339 = vmatpush1.msra.mxu0 0.0
    %2340 = vmatprep.subr.mxu0 0.0
    %2341 = vmatpush1.msra.mxu0 0.0
    %2342 = vmatprep.subr.mxu0 0.0
    %2343 = vmatpush1.msra.mxu0 0.0
    %2344 = vmatprep.subr.mxu0 0.0
    %2345 = vmatpush1.msra.mxu0 0.0
    %2346 = vmatprep.subr.mxu0 0.0
    %2347 = vmatpush1.msra.mxu0 0.0
    %2348 = vmatprep.subr.mxu0 0.0
    %2349 = vmatpush1.msra.mxu0 0.0
    %2350 = vmatprep.subr.mxu0 0.0
    %2351 = vmatpush1.msra.mxu0 0.0
    %2352 = vmatprep.subr.mxu0 0.0
    %2353 = vmatpush1.msra.mxu0 0.0
    %2354 = vmatprep.subr.mxu0 0.0
    %2355 = vmatpush1.msra.mxu0 0.0
    %2356 = vmatprep.subr.mxu0 0.0
    %2357 = vmatpush1.msra.mxu0 0.0
    %2358 = vmatprep.subr.mxu0 0.0
    %2359 = vmatpush1.msra.mxu0 0.0
    %2360 = vmatprep.mubr.f32.mxu0 0.0
    %2361 = vmatmul.mubr.f32.gmra.mrb[0].mxu0 %v246
    %v2362 = vpop.f32.mrb[0].mxu0
    %v2363 = vadd.f32 0.0, %v2362
    %v2364 = vpop.f32.mrb[0].mxu0
    %2365 = vdwg.mxu0
    %v2367 = vrot.slane %v2363, 2
    %v2369 = vadd.f32 %v2192, %v2367
    %v2370 = vxor.u32 %v2369, 2147483648
    %v2371 = vmul.f32 %v2370, 1.442695
    %v2372 = vpow.pop %v2371
    %v2373 = vadd.f32 %v2372, 1.0
    %v2374 = vrcp.pop %v2373
    %v2375 = vmul.f32 1.0, %v2374
    %v2376 = vtanh.pop %v2369
    %v2377 = vmul.f32 %v2375, 0.0
    %2379 = vrot.lane.b32.xlu0 %v2376, 64
    %v2380 = vpop.permute.xlu0 %2379
    %v2382 = vmul.f32 %v2375, %v2380
    %2384 = vrot.lane.b32.xlu0 %v2382, 32
    %v2385 = vpop.permute.xlu0 %2384
    %v2387 = vadd.f32 %v2377, %v2385
    %v2388 = vtanh.pop %v2387
    %2390 = vrot.lane.b32.xlu0 %v2388, 64
    %v2391 = vpop.permute.xlu0 %2390
    %v2393 = vmul.f32 %v2375, %v2391
    %2395 = vrot.lane.b32.xlu0 %v2295, 32
    %v2396 = vpop.permute.xlu0 %2395
    %v2397 = vsel %vm244, %v2396, 0
    %2399 = vmatprep.subr.mxu0 0.0
    %2400 = vmatpush1.msra.mxu0 %v2193
    %2401 = vmatprep.subr.mxu0 0.0
    %2402 = vmatpush1.msra.mxu0 %v2194
    %2403 = vmatprep.subr.mxu0 0.0
    %2404 = vmatpush1.msra.mxu0 %v2195
    %2405 = vmatprep.subr.mxu0 0.0
    %2406 = vmatpush1.msra.mxu0 %v2196
    %2407 = vmatprep.subr.mxu0 0.0
    %2408 = vmatpush1.msra.mxu0 0.0
    %2409 = vmatprep.subr.mxu0 0.0
    %2410 = vmatpush1.msra.mxu0 0.0
    %2411 = vmatprep.subr.mxu0 0.0
    %2412 = vmatpush1.msra.mxu0 0.0
    %2413 = vmatprep.subr.mxu0 0.0
    %2414 = vmatpush1.msra.mxu0 0.0
    %2415 = vmatprep.subr.mxu0 0.0
    %2416 = vmatpush1.msra.mxu0 0.0
    %2417 = vmatprep.subr.mxu0 0.0
    %2418 = vmatpush1.msra.mxu0 0.0
    %2419 = vmatprep.subr.mxu0 0.0
    %2420 = vmatpush1.msra.mxu0 0.0
    %2421 = vmatprep.subr.mxu0 0.0
    %2422 = vmatpush1.msra.mxu0 0.0
    %2423 = vmatprep.subr.mxu0 0.0
    %2424 = vmatpush1.msra.mxu0 0.0
    %2425 = vmatprep.subr.mxu0 0.0
    %2426 = vmatpush1.msra.mxu0 0.0
    %2427 = vmatprep.subr.mxu0 0.0
    %2428 = vmatpush1.msra.mxu0 0.0
    %2429 = vmatprep.subr.mxu0 0.0
    %2430 = vmatpush1.msra.mxu0 0.0
    %2431 = vmatprep.subr.mxu0 0.0
    %2432 = vmatpush1.msra.mxu0 0.0
    %2433 = vmatprep.subr.mxu0 0.0
    %2434 = vmatpush1.msra.mxu0 0.0
    %2435 = vmatprep.subr.mxu0 0.0
    %2436 = vmatpush1.msra.mxu0 0.0
    %2437 = vmatprep.subr.mxu0 0.0
    %2438 = vmatpush1.msra.mxu0 0.0
    %2439 = vmatprep.subr.mxu0 0.0
    %2440 = vmatpush1.msra.mxu0 0.0
    %2441 = vmatprep.subr.mxu0 0.0
    %2442 = vmatpush1.msra.mxu0 0.0
    %2443 = vmatprep.subr.mxu0 0.0
    %2444 = vmatpush1.msra.mxu0 0.0
    %2445 = vmatprep.subr.mxu0 0.0
    %2446 = vmatpush1.msra.mxu0 0.0
    %2447 = vmatprep.subr.mxu0 0.0
    %2448 = vmatpush1.msra.mxu0 0.0
    %2449 = vmatprep.subr.mxu0 0.0
    %2450 = vmatpush1.msra.mxu0 0.0
    %2451 = vmatprep.subr.mxu0 0.0
    %2452 = vmatpush1.msra.mxu0 0.0
    %2453 = vmatprep.subr.mxu0 0.0
    %2454 = vmatpush1.msra.mxu0 0.0
    %2455 = vmatprep.subr.mxu0 0.0
    %2456 = vmatpush1.msra.mxu0 0.0
    %2457 = vmatprep.subr.mxu0 0.0
    %2458 = vmatpush1.msra.mxu0 0.0
    %2459 = vmatprep.subr.mxu0 0.0
    %2460 = vmatpush1.msra.mxu0 0.0
    %2461 = vmatprep.subr.mxu0 0.0
    %2462 = vmatpush1.msra.mxu0 0.0
    %2463 = vmatprep.mubr.f32.mxu0 0.0
    %2464 = vmatmul.mubr.f32.gmra.mrb[0].mxu0 %v2397
    %v2465 = vpop.f32.mrb[0].mxu0
    %v2466 = vadd.f32 0.0, %v2465
    %v2467 = vpop.f32.mrb[0].mxu0
    %2468 = vdwg.mxu0
    %v2470 = vrot.slane %v2466, 6
    %v2472 = vadd.f32 %v2189, %v2470
    %v2473 = vxor.u32 %v2472, 2147483648
    %v2474 = vmul.f32 %v2473, 1.442695
    %v2475 = vpow.pop %v2474
    %v2476 = vadd.f32 %v2475, 1.0
    %v2477 = vrcp.pop %v2476
    %v2478 = vmul.f32 1.0, %v2477
    %v2479 = vtanh.pop %v2472
    %v2481 = vrot.slane %v2289, 6
    %v2483 = vmul.f32 %v2478, %v2481
    %2485 = vrot.lane.b32.xlu0 %v2479, 64
    %v2486 = vpop.permute.xlu0 %2485
    %v2488 = vmul.f32 %v2478, %v2486
    %2490 = vrot.lane.b32.xlu0 %v2488, 32
    %v2491 = vpop.permute.xlu0 %2490
    %v2493 = vadd.f32 %v2483, %v2491
    %v2494 = vtanh.pop %v2493
    %2496 = vrot.lane.b32.xlu0 %v2494, 64
    %v2497 = vpop.permute.xlu0 %2496
    %v2499 = vmul.f32 %v2478, %v2497
    %v2501 = vrot.slane %v2393, 6
    %2502 = vrot.lane.b32.xlu0 %v2501, 32
    %v2503 = vpop.permute.xlu0 %2502
    %v2504 = vsel %vm244, %v2503, 0
    %2506 = vmatprep.subr.mxu0 0.0
    %2507 = vmatpush1.msra.mxu0 %v2197
    %2508 = vmatprep.subr.mxu0 0.0
    %2509 = vmatpush1.msra.mxu0 %v2198
    %2510 = vmatprep.subr.mxu0 0.0
    %2511 = vmatpush1.msra.mxu0 %v2199
    %2512 = vmatprep.subr.mxu0 0.0
    %2513 = vmatpush1.msra.mxu0 %v2200
    %2514 = vmatprep.subr.mxu0 0.0
    %2515 = vmatpush1.msra.mxu0 0.0
    %2516 = vmatprep.subr.mxu0 0.0
    %2517 = vmatpush1.msra.mxu0 0.0
    %2518 = vmatprep.subr.mxu0 0.0
    %2519 = vmatpush1.msra.mxu0 0.0
    %2520 = vmatprep.subr.mxu0 0.0
    %2521 = vmatpush1.msra.mxu0 0.0
    %2522 = vmatprep.subr.mxu0 0.0
    %2523 = vmatpush1.msra.mxu0 0.0
    %2524 = vmatprep.subr.mxu0 0.0
    %2525 = vmatpush1.msra.mxu0 0.0
    %2526 = vmatprep.subr.mxu0 0.0
    %2527 = vmatpush1.msra.mxu0 0.0
    %2528 = vmatprep.subr.mxu0 0.0
    %2529 = vmatpush1.msra.mxu0 0.0
    %2530 = vmatprep.subr.mxu0 0.0
    %2531 = vmatpush1.msra.mxu0 0.0
    %2532 = vmatprep.subr.mxu0 0.0
    %2533 = vmatpush1.msra.mxu0 0.0
    %2534 = vmatprep.subr.mxu0 0.0
    %2535 = vmatpush1.msra.mxu0 0.0
    %2536 = vmatprep.subr.mxu0 0.0
    %2537 = vmatpush1.msra.mxu0 0.0
    %2538 = vmatprep.subr.mxu0 0.0
    %2539 = vmatpush1.msra.mxu0 0.0
    %2540 = vmatprep.subr.mxu0 0.0
    %2541 = vmatpush1.msra.mxu0 0.0
    %2542 = vmatprep.subr.mxu0 0.0
    %2543 = vmatpush1.msra.mxu0 0.0
    %2544 = vmatprep.subr.mxu0 0.0
    %2545 = vmatpush1.msra.mxu0 0.0
    %2546 = vmatprep.subr.mxu0 0.0
    %2547 = vmatpush1.msra.mxu0 0.0
    %2548 = vmatprep.subr.mxu0 0.0
    %2549 = vmatpush1.msra.mxu0 0.0
    %2550 = vmatprep.subr.mxu0 0.0
    %2551 = vmatpush1.msra.mxu0 0.0
    %2552 = vmatprep.subr.mxu0 0.0
    %2553 = vmatpush1.msra.mxu0 0.0
    %2554 = vmatprep.subr.mxu0 0.0
    %2555 = vmatpush1.msra.mxu0 0.0
    %2556 = vmatprep.subr.mxu0 0.0
    %2557 = vmatpush1.msra.mxu0 0.0
    %2558 = vmatprep.subr.mxu0 0.0
    %2559 = vmatpush1.msra.mxu0 0.0
    %2560 = vmatprep.subr.mxu0 0.0
    %2561 = vmatpush1.msra.mxu0 0.0
    %2562 = vmatprep.subr.mxu0 0.0
    %2563 = vmatpush1.msra.mxu0 0.0
    %2564 = vmatprep.subr.mxu0 0.0
    %2565 = vmatpush1.msra.mxu0 0.0
    %2566 = vmatprep.subr.mxu0 0.0
    %2567 = vmatpush1.msra.mxu0 0.0
    %2568 = vmatprep.subr.mxu0 0.0
    %2569 = vmatpush1.msra.mxu0 0.0
    %2570 = vmatprep.mubr.f32.mxu0 0.0
    %2571 = vmatmul.mubr.f32.gmra.mrb[0].mxu0 %v2504
    %v2572 = vpop.f32.mrb[0].mxu0
    %v2573 = vadd.f32 0.0, %v2572
    %v2574 = vpop.f32.mrb[0].mxu0
    %2575 = vdwg.mxu0
    %v2577 = vrot.slane %v2573, 4
    %v2579 = vadd.f32 %v2192, %v2577
    %v2580 = vxor.u32 %v2579, 2147483648
    %v2581 = vmul.f32 %v2580, 1.442695
    %v2582 = vpow.pop %v2581
    %v2583 = vadd.f32 %v2582, 1.0
    %v2584 = vrcp.pop %v2583
    %v2585 = vmul.f32 1.0, %v2584
    %v2586 = vtanh.pop %v2579
    %v2588 = vrot.slane %v2387, 2
    %v2590 = vmul.f32 %v2585, %v2588
    %2592 = vrot.lane.b32.xlu0 %v2586, 64
    %v2593 = vpop.permute.xlu0 %2592
    %v2595 = vmul.f32 %v2585, %v2593
    %2597 = vrot.lane.b32.xlu0 %v2595, 32
    %v2598 = vpop.permute.xlu0 %2597
    %v2600 = vadd.f32 %v2590, %v2598
    %v2601 = vtanh.pop %v2600
    %2603 = vrot.lane.b32.xlu0 %v2601, 64
    %v2604 = vpop.permute.xlu0 %2603
    %v2606 = vmul.f32 %v2585, %v2604
    %v2608 = vrot.slane %v2499, 2
    %2609 = vrot.lane.b32.xlu0 %v2608, 32
    %v2610 = vpop.permute.xlu0 %2609
    %v2611 = vsel %vm244, %v2610, 0
    %2613 = vmatprep.subr.mxu0 0.0
    %2614 = vmatpush1.msra.mxu0 %v2193
    %2615 = vmatprep.subr.mxu0 0.0
    %2616 = vmatpush1.msra.mxu0 %v2194
    %2617 = vmatprep.subr.mxu0 0.0
    %2618 = vmatpush1.msra.mxu0 %v2195
    %2619 = vmatprep.subr.mxu0 0.0
    %2620 = vmatpush1.msra.mxu0 %v2196
    %2621 = vmatprep.subr.mxu0 0.0
    %2622 = vmatpush1.msra.mxu0 0.0
    %2623 = vmatprep.subr.mxu0 0.0
    %2624 = vmatpush1.msra.mxu0 0.0
    %2625 = vmatprep.subr.mxu0 0.0
    %2626 = vmatpush1.msra.mxu0 0.0
    %2627 = vmatprep.subr.mxu0 0.0
    %2628 = vmatpush1.msra.mxu0 0.0
    %2629 = vmatprep.subr.mxu0 0.0
    %2630 = vmatpush1.msra.mxu0 0.0
    %2631 = vmatprep.subr.mxu0 0.0
    %2632 = vmatpush1.msra.mxu0 0.0
    %2633 = vmatprep.subr.mxu0 0.0
    %2634 = vmatpush1.msra.mxu0 0.0
    %2635 = vmatprep.subr.mxu0 0.0
    %2636 = vmatpush1.msra.mxu0 0.0
    %2637 = vmatprep.subr.mxu0 0.0
    %2638 = vmatpush1.msra.mxu0 0.0
    %2639 = vmatprep.subr.mxu0 0.0
    %2640 = vmatpush1.msra.mxu0 0.0
    %2641 = vmatprep.subr.mxu0 0.0
    %2642 = vmatpush1.msra.mxu0 0.0
    %2643 = vmatprep.subr.mxu0 0.0
    %2644 = vmatpush1.msra.mxu0 0.0
    %2645 = vmatprep.subr.mxu0 0.0
    %2646 = vmatpush1.msra.mxu0 0.0
    %2647 = vmatprep.subr.mxu0 0.0
    %2648 = vmatpush1.msra.mxu0 0.0
    %2649 = vmatprep.subr.mxu0 0.0
    %2650 = vmatpush1.msra.mxu0 0.0
    %2651 = vmatprep.subr.mxu0 0.0
    %2652 = vmatpush1.msra.mxu0 0.0
    %2653 = vmatprep.subr.mxu0 0.0
    %2654 = vmatpush1.msra.mxu0 0.0
    %2655 = vmatprep.subr.mxu0 0.0
    %2656 = vmatpush1.msra.mxu0 0.0
    %2657 = vmatprep.subr.mxu0 0.0
    %2658 = vmatpush1.msra.mxu0 0.0
    %2659 = vmatprep.subr.mxu0 0.0
    %2660 = vmatpush1.msra.mxu0 0.0
    %2661 = vmatprep.subr.mxu0 0.0
    %2662 = vmatpush1.msra.mxu0 0.0
    %2663 = vmatprep.subr.mxu0 0.0
    %2664 = vmatpush1.msra.mxu0 0.0
    %2665 = vmatprep.subr.mxu0 0.0
    %2666 = vmatpush1.msra.mxu0 0.0
    %2667 = vmatprep.subr.mxu0 0.0
    %2668 = vmatpush1.msra.mxu0 0.0
    %2669 = vmatprep.subr.mxu0 0.0
    %2670 = vmatpush1.msra.mxu0 0.0
    %2671 = vmatprep.subr.mxu0 0.0
    %2672 = vmatpush1.msra.mxu0 0.0
    %2673 = vmatprep.subr.mxu0 0.0
    %2674 = vmatpush1.msra.mxu0 0.0
    %2675 = vmatprep.subr.mxu0 0.0
    %2676 = vmatpush1.msra.mxu0 0.0
    %2677 = vmatprep.mubr.f32.mxu0 0.0
    %2678 = vmatmul.mubr.f32.gmra.mrb[0].mxu0 %v2611
    %v2679 = vpop.f32.mrb[0].mxu0
    %v2680 = vadd.f32 0.0, %v2679
    %v2681 = vpop.f32.mrb[0].mxu0
    %2682 = vdwg.mxu0
    %v2684 = vrot.slane %v2680, 4
    %v2686 = vadd.f32 %v2189, %v2684
    %v2687 = vxor.u32 %v2686, 2147483648
    %v2688 = vmul.f32 %v2687, 1.442695
    %v2689 = vpow.pop %v2688
    %v2690 = vadd.f32 %v2689, 1.0
    %v2691 = vrcp.pop %v2690
    %v2692 = vmul.f32 1.0, %v2691
    %v2693 = vtanh.pop %v2686
    %v2695 = vrot.slane %v2493, 6
    %v2697 = vmul.f32 %v2692, %v2695
    %2699 = vrot.lane.b32.xlu0 %v2693, 64
    %v2700 = vpop.permute.xlu0 %2699
    %v2702 = vmul.f32 %v2692, %v2700
    %2704 = vrot.lane.b32.xlu0 %v2702, 32
    %v2705 = vpop.permute.xlu0 %2704
    %v2707 = vadd.f32 %v2697, %v2705
    %v2708 = vtanh.pop %v2707
    %2710 = vrot.lane.b32.xlu0 %v2708, 64
    %v2711 = vpop.permute.xlu0 %2710
    %v2713 = vmul.f32 %v2692, %v2711
    %v2715 = vrot.slane %v2606, 4
    %2716 = vrot.lane.b32.xlu0 %v2715, 32
    %v2717 = vpop.permute.xlu0 %2716
    %v2718 = vsel %vm244, %v2717, 0
    %2720 = vmatprep.subr.mxu0 0.0
    %2721 = vmatpush1.msra.mxu0 %v2197
    %2722 = vmatprep.subr.mxu0 0.0
    %2723 = vmatpush1.msra.mxu0 %v2198
    %2724 = vmatprep.subr.mxu0 0.0
    %2725 = vmatpush1.msra.mxu0 %v2199
    %2726 = vmatprep.subr.mxu0 0.0
    %2727 = vmatpush1.msra.mxu0 %v2200
    %2728 = vmatprep.subr.mxu0 0.0
    %2729 = vmatpush1.msra.mxu0 0.0
    %2730 = vmatprep.subr.mxu0 0.0
    %2731 = vmatpush1.msra.mxu0 0.0
    %2732 = vmatprep.subr.mxu0 0.0
    %2733 = vmatpush1.msra.mxu0 0.0
    %2734 = vmatprep.subr.mxu0 0.0
    %2735 = vmatpush1.msra.mxu0 0.0
    %2736 = vmatprep.subr.mxu0 0.0
    %2737 = vmatpush1.msra.mxu0 0.0
    %2738 = vmatprep.subr.mxu0 0.0
    %2739 = vmatpush1.msra.mxu0 0.0
    %2740 = vmatprep.subr.mxu0 0.0
    %2741 = vmatpush1.msra.mxu0 0.0
    %2742 = vmatprep.subr.mxu0 0.0
    %2743 = vmatpush1.msra.mxu0 0.0
    %2744 = vmatprep.subr.mxu0 0.0
    %2745 = vmatpush1.msra.mxu0 0.0
    %2746 = vmatprep.subr.mxu0 0.0
    %2747 = vmatpush1.msra.mxu0 0.0
    %2748 = vmatprep.subr.mxu0 0.0
    %2749 = vmatpush1.msra.mxu0 0.0
    %2750 = vmatprep.subr.mxu0 0.0
    %2751 = vmatpush1.msra.mxu0 0.0
    %2752 = vmatprep.subr.mxu0 0.0
    %2753 = vmatpush1.msra.mxu0 0.0
    %2754 = vmatprep.subr.mxu0 0.0
    %2755 = vmatpush1.msra.mxu0 0.0
    %2756 = vmatprep.subr.mxu0 0.0
    %2757 = vmatpush1.msra.mxu0 0.0
    %2758 = vmatprep.subr.mxu0 0.0
    %2759 = vmatpush1.msra.mxu0 0.0
    %2760 = vmatprep.subr.mxu0 0.0
    %2761 = vmatpush1.msra.mxu0 0.0
    %2762 = vmatprep.subr.mxu0 0.0
    %2763 = vmatpush1.msra.mxu0 0.0
    %2764 = vmatprep.subr.mxu0 0.0
    %2765 = vmatpush1.msra.mxu0 0.0
    %2766 = vmatprep.subr.mxu0 0.0
    %2767 = vmatpush1.msra.mxu0 0.0
    %2768 = vmatprep.subr.mxu0 0.0
    %2769 = vmatpush1.msra.mxu0 0.0
    %2770 = vmatprep.subr.mxu0 0.0
    %2771 = vmatpush1.msra.mxu0 0.0
    %2772 = vmatprep.subr.mxu0 0.0
    %2773 = vmatpush1.msra.mxu0 0.0
    %2774 = vmatprep.subr.mxu0 0.0
    %2775 = vmatpush1.msra.mxu0 0.0
    %2776 = vmatprep.subr.mxu0 0.0
    %2777 = vmatpush1.msra.mxu0 0.0
    %2778 = vmatprep.subr.mxu0 0.0
    %2779 = vmatpush1.msra.mxu0 0.0
    %2780 = vmatprep.subr.mxu0 0.0
    %2781 = vmatpush1.msra.mxu0 0.0
    %2782 = vmatprep.subr.mxu0 0.0
    %2783 = vmatpush1.msra.mxu0 0.0
    %2784 = vmatprep.mubr.f32.mxu0 0.0
    %2785 = vmatmul.mubr.f32.gmra.mrb[0].mxu0 %v2718
    %v2786 = vpop.f32.mrb[0].mxu0
    %v2787 = vadd.f32 0.0, %v2786
    %v2788 = vpop.f32.mrb[0].mxu0
    %2789 = vdwg.mxu0
    %v2791 = vrot.slane %v2787, 6
    %v2793 = vadd.f32 %v2192, %v2791
    %v2794 = vxor.u32 %v2793, 2147483648
    %v2795 = vmul.f32 %v2794, 1.442695
    %v2796 = vpow.pop %v2795
    %v2797 = vadd.f32 %v2796, 1.0
    %v2798 = vrcp.pop %v2797
    %v2799 = vmul.f32 1.0, %v2798
    %v2800 = vtanh.pop %v2793
    %v2802 = vrot.slane %v2600, 2
    %v2804 = vmul.f32 %v2799, %v2802
    %2806 = vrot.lane.b32.xlu0 %v2800, 64
    %v2807 = vpop.permute.xlu0 %2806
    %v2809 = vmul.f32 %v2799, %v2807
    %2811 = vrot.lane.b32.xlu0 %v2809, 32
    %v2812 = vpop.permute.xlu0 %2811
    %v2814 = vadd.f32 %v2804, %v2812
    %v2815 = vtanh.pop %v2814
    %2817 = vrot.lane.b32.xlu0 %v2815, 64
    %v2818 = vpop.permute.xlu0 %2817
    %v2820 = vmul.f32 %v2799, %v2818
    %v2822 = vrot.slane %v2713, 4
    %2823 = vrot.lane.b32.xlu0 %v2822, 32
    %v2824 = vpop.permute.xlu0 %2823
    %v2825 = vsel %vm244, %v2824, 0
    %2827 = vmatprep.subr.mxu0 0.0
    %2828 = vmatpush1.msra.mxu0 %v2193
    %2829 = vmatprep.subr.mxu0 0.0
    %2830 = vmatpush1.msra.mxu0 %v2194
    %2831 = vmatprep.subr.mxu0 0.0
    %2832 = vmatpush1.msra.mxu0 %v2195
    %2833 = vmatprep.subr.mxu0 0.0
    %2834 = vmatpush1.msra.mxu0 %v2196
    %2835 = vmatprep.subr.mxu0 0.0
    %2836 = vmatpush1.msra.mxu0 0.0
    %2837 = vmatprep.subr.mxu0 0.0
    %2838 = vmatpush1.msra.mxu0 0.0
    %2839 = vmatprep.subr.mxu0 0.0
    %2840 = vmatpush1.msra.mxu0 0.0
    %2841 = vmatprep.subr.mxu0 0.0
    %2842 = vmatpush1.msra.mxu0 0.0
    %2843 = vmatprep.subr.mxu0 0.0
    %2844 = vmatpush1.msra.mxu0 0.0
    %2845 = vmatprep.subr.mxu0 0.0
    %2846 = vmatpush1.msra.mxu0 0.0
    %2847 = vmatprep.subr.mxu0 0.0
    %2848 = vmatpush1.msra.mxu0 0.0
    %2849 = vmatprep.subr.mxu0 0.0
    %2850 = vmatpush1.msra.mxu0 0.0
    %2851 = vmatprep.subr.mxu0 0.0
    %2852 = vmatpush1.msra.mxu0 0.0
    %2853 = vmatprep.subr.mxu0 0.0
    %2854 = vmatpush1.msra.mxu0 0.0
    %2855 = vmatprep.subr.mxu0 0.0
    %2856 = vmatpush1.msra.mxu0 0.0
    %2857 = vmatprep.subr.mxu0 0.0
    %2858 = vmatpush1.msra.mxu0 0.0
    %2859 = vmatprep.subr.mxu0 0.0
    %2860 = vmatpush1.msra.mxu0 0.0
    %2861 = vmatprep.subr.mxu0 0.0
    %2862 = vmatpush1.msra.mxu0 0.0
    %2863 = vmatprep.subr.mxu0 0.0
    %2864 = vmatpush1.msra.mxu0 0.0
    %2865 = vmatprep.subr.mxu0 0.0
    %2866 = vmatpush1.msra.mxu0 0.0
    %2867 = vmatprep.subr.mxu0 0.0
    %2868 = vmatpush1.msra.mxu0 0.0
    %2869 = vmatprep.subr.mxu0 0.0
    %2870 = vmatpush1.msra.mxu0 0.0
    %2871 = vmatprep.subr.mxu0 0.0
    %2872 = vmatpush1.msra.mxu0 0.0
    %2873 = vmatprep.subr.mxu0 0.0
    %2874 = vmatpush1.msra.mxu0 0.0
    %2875 = vmatprep.subr.mxu0 0.0
    %2876 = vmatpush1.msra.mxu0 0.0
    %2877 = vmatprep.subr.mxu0 0.0
    %2878 = vmatpush1.msra.mxu0 0.0
    %2879 = vmatprep.subr.mxu0 0.0
    %2880 = vmatpush1.msra.mxu0 0.0
    %2881 = vmatprep.subr.mxu0 0.0
    %2882 = vmatpush1.msra.mxu0 0.0
    %2883 = vmatprep.subr.mxu0 0.0
    %2884 = vmatpush1.msra.mxu0 0.0
    %2885 = vmatprep.subr.mxu0 0.0
    %2886 = vmatpush1.msra.mxu0 0.0
    %2887 = vmatprep.subr.mxu0 0.0
    %2888 = vmatpush1.msra.mxu0 0.0
    %2889 = vmatprep.subr.mxu0 0.0
    %2890 = vmatpush1.msra.mxu0 0.0
    %2891 = vmatprep.mubr.f32.mxu0 0.0
    %2892 = vmatmul.mubr.f32.gmra.mrb[0].mxu0 %v2825
    %v2893 = vpop.f32.mrb[0].mxu0
    %v2894 = vadd.f32 0.0, %v2893
    %v2895 = vpop.f32.mrb[0].mxu0
    %2896 = vdwg.mxu0
    %v2898 = vrot.slane %v2894, 2
    %v2900 = vadd.f32 %v2189, %v2898
    %v2901 = vxor.u32 %v2900, 2147483648
    %v2902 = vmul.f32 %v2901, 1.442695
    %v2903 = vpow.pop %v2902
    %v2904 = vadd.f32 %v2903, 1.0
    %v2905 = vrcp.pop %v2904
    %v2906 = vmul.f32 1.0, %v2905
    %v2907 = vtanh.pop %v2900
    %v2909 = vrot.slane %v2707, 6
    %v2911 = vmul.f32 %v2906, %v2909
    %2913 = vrot.lane.b32.xlu0 %v2907, 64
    %v2914 = vpop.permute.xlu0 %2913
    %v2916 = vmul.f32 %v2906, %v2914
    %2918 = vrot.lane.b32.xlu0 %v2916, 32
    %v2919 = vpop.permute.xlu0 %2918
    %v2921 = vadd.f32 %v2911, %v2919
    %v2922 = vtanh.pop %v2921
    %2924 = vrot.lane.b32.xlu0 %v2922, 64
    %v2925 = vpop.permute.xlu0 %2924
    %v2927 = vmul.f32 %v2906, %v2925
    %v2929 = vrot.slane %v2820, 2
    %2930 = vrot.lane.b32.xlu0 %v2929, 32
    %v2931 = vpop.permute.xlu0 %2930
    %v2932 = vsel %vm244, %v2931, 0
    %2934 = vmatprep.subr.mxu0 0.0
    %2935 = vmatpush1.msra.mxu0 %v2197
    %2936 = vmatprep.subr.mxu0 0.0
    %2937 = vmatpush1.msra.mxu0 %v2198
    %2938 = vmatprep.subr.mxu0 0.0
    %2939 = vmatpush1.msra.mxu0 %v2199
    %2940 = vmatprep.subr.mxu0 0.0
    %2941 = vmatpush1.msra.mxu0 %v2200
    %2942 = vmatprep.subr.mxu0 0.0
    %2943 = vmatpush1.msra.mxu0 0.0
    %2944 = vmatprep.subr.mxu0 0.0
    %2945 = vmatpush1.msra.mxu0 0.0
    %2946 = vmatprep.subr.mxu0 0.0
    %2947 = vmatpush1.msra.mxu0 0.0
    %2948 = vmatprep.subr.mxu0 0.0
    %2949 = vmatpush1.msra.mxu0 0.0
    %2950 = vmatprep.subr.mxu0 0.0
    %2951 = vmatpush1.msra.mxu0 0.0
    %2952 = vmatprep.subr.mxu0 0.0
    %2953 = vmatpush1.msra.mxu0 0.0
    %2954 = vmatprep.subr.mxu0 0.0
    %2955 = vmatpush1.msra.mxu0 0.0
    %2956 = vmatprep.subr.mxu0 0.0
    %2957 = vmatpush1.msra.mxu0 0.0
    %2958 = vmatprep.subr.mxu0 0.0
    %2959 = vmatpush1.msra.mxu0 0.0
    %2960 = vmatprep.subr.mxu0 0.0
    %2961 = vmatpush1.msra.mxu0 0.0
    %2962 = vmatprep.subr.mxu0 0.0
    %2963 = vmatpush1.msra.mxu0 0.0
    %2964 = vmatprep.subr.mxu0 0.0
    %2965 = vmatpush1.msra.mxu0 0.0
    %2966 = vmatprep.subr.mxu0 0.0
    %2967 = vmatpush1.msra.mxu0 0.0
    %2968 = vmatprep.subr.mxu0 0.0
    %2969 = vmatpush1.msra.mxu0 0.0
    %2970 = vmatprep.subr.mxu0 0.0
    %2971 = vmatpush1.msra.mxu0 0.0
    %2972 = vmatprep.subr.mxu0 0.0
    %2973 = vmatpush1.msra.mxu0 0.0
    %2974 = vmatprep.subr.mxu0 0.0
    %2975 = vmatpush1.msra.mxu0 0.0
    %2976 = vmatprep.subr.mxu0 0.0
    %2977 = vmatpush1.msra.mxu0 0.0
    %2978 = vmatprep.subr.mxu0 0.0
    %2979 = vmatpush1.msra.mxu0 0.0
    %2980 = vmatprep.subr.mxu0 0.0
    %2981 = vmatpush1.msra.mxu0 0.0
    %2982 = vmatprep.subr.mxu0 0.0
    %2983 = vmatpush1.msra.mxu0 0.0
    %2984 = vmatprep.subr.mxu0 0.0
    %2985 = vmatpush1.msra.mxu0 0.0
    %2986 = vmatprep.subr.mxu0 0.0
    %2987 = vmatpush1.msra.mxu0 0.0
    %2988 = vmatprep.subr.mxu0 0.0
    %2989 = vmatpush1.msra.mxu0 0.0
    %2990 = vmatprep.subr.mxu0 0.0
    %2991 = vmatpush1.msra.mxu0 0.0
    %2992 = vmatprep.subr.mxu0 0.0
    %2993 = vmatpush1.msra.mxu0 0.0
    %2994 = vmatprep.subr.mxu0 0.0
    %2995 = vmatpush1.msra.mxu0 0.0
    %2996 = vmatprep.subr.mxu0 0.0
    %2997 = vmatpush1.msra.mxu0 0.0
    %2998 = vmatprep.mubr.f32.mxu0 0.0
    %2999 = vmatmul.mubr.f32.gmra.mrb[0].mxu0 %v2932
    %v3000 = vpop.f32.mrb[0].mxu0
    %v3001 = vadd.f32 0.0, %v3000
    %v3002 = vpop.f32.mrb[0].mxu0
    %3003 = vdwg.mxu0
    %v3004 = vadd.f32 %v2192, %v3001
    %v3005 = vxor.u32 %v3004, 2147483648
    %v3006 = vmul.f32 %v3005, 1.442695
    %v3007 = vpow.pop %v3006
    %v3008 = vadd.f32 %v3007, 1.0
    %v3009 = vrcp.pop %v3008
    %v3010 = vmul.f32 1.0, %v3009
    %v3011 = vtanh.pop %v3004
    %v3013 = vrot.slane %v2814, 2
    %v3015 = vmul.f32 %v3010, %v3013
    %3017 = vrot.lane.b32.xlu0 %v3011, 64
    %v3018 = vpop.permute.xlu0 %3017
    %v3020 = vmul.f32 %v3010, %v3018
    %3022 = vrot.lane.b32.xlu0 %v3020, 32
    %v3023 = vpop.permute.xlu0 %3022
    %v3025 = vadd.f32 %v3015, %v3023
    %v3026 = vtanh.pop %v3025
    %3028 = vrot.lane.b32.xlu0 %v3026, 64
    %v3029 = vpop.permute.xlu0 %3028
    %v3031 = vmul.f32 %v3010, %v3029
    %v3033 = vrot.slane %v2927, 6
    %3034 = vrot.lane.b32.xlu0 %v3033, 32
    %v3035 = vpop.permute.xlu0 %3034
    %v3036 = vsel %vm244, %v3035, 0
    %3038 = vmatprep.subr.mxu0 0.0
    %3039 = vmatpush1.msra.mxu0 %v2193
    %3040 = vmatprep.subr.mxu0 0.0
    %3041 = vmatpush1.msra.mxu0 %v2194
    %3042 = vmatprep.subr.mxu0 0.0
    %3043 = vmatpush1.msra.mxu0 %v2195
    %3044 = vmatprep.subr.mxu0 0.0
    %3045 = vmatpush1.msra.mxu0 %v2196
    %3046 = vmatprep.subr.mxu0 0.0
    %3047 = vmatpush1.msra.mxu0 0.0
    %3048 = vmatprep.subr.mxu0 0.0
    %3049 = vmatpush1.msra.mxu0 0.0
    %3050 = vmatprep.subr.mxu0 0.0
    %3051 = vmatpush1.msra.mxu0 0.0
    %3052 = vmatprep.subr.mxu0 0.0
    %3053 = vmatpush1.msra.mxu0 0.0
    %3054 = vmatprep.subr.mxu0 0.0
    %3055 = vmatpush1.msra.mxu0 0.0
    %3056 = vmatprep.subr.mxu0 0.0
    %3057 = vmatpush1.msra.mxu0 0.0
    %3058 = vmatprep.subr.mxu0 0.0
    %3059 = vmatpush1.msra.mxu0 0.0
    %3060 = vmatprep.subr.mxu0 0.0
    %3061 = vmatpush1.msra.mxu0 0.0
    %3062 = vmatprep.subr.mxu0 0.0
    %3063 = vmatpush1.msra.mxu0 0.0
    %3064 = vmatprep.subr.mxu0 0.0
    %3065 = vmatpush1.msra.mxu0 0.0
    %3066 = vmatprep.subr.mxu0 0.0
    %3067 = vmatpush1.msra.mxu0 0.0
    %3068 = vmatprep.subr.mxu0 0.0
    %3069 = vmatpush1.msra.mxu0 0.0
    %3070 = vmatprep.subr.mxu0 0.0
    %3071 = vmatpush1.msra.mxu0 0.0
    %3072 = vmatprep.subr.mxu0 0.0
    %3073 = vmatpush1.msra.mxu0 0.0
    %3074 = vmatprep.subr.mxu0 0.0
    %3075 = vmatpush1.msra.mxu0 0.0
    %3076 = vmatprep.subr.mxu0 0.0
    %3077 = vmatpush1.msra.mxu0 0.0
    %3078 = vmatprep.subr.mxu0 0.0
    %3079 = vmatpush1.msra.mxu0 0.0
    %3080 = vmatprep.subr.mxu0 0.0
    %3081 = vmatpush1.msra.mxu0 0.0
    %3082 = vmatprep.subr.mxu0 0.0
    %3083 = vmatpush1.msra.mxu0 0.0
    %3084 = vmatprep.subr.mxu0 0.0
    %3085 = vmatpush1.msra.mxu0 0.0
    %3086 = vmatprep.subr.mxu0 0.0
    %3087 = vmatpush1.msra.mxu0 0.0
    %3088 = vmatprep.subr.mxu0 0.0
    %3089 = vmatpush1.msra.mxu0 0.0
    %3090 = vmatprep.subr.mxu0 0.0
    %3091 = vmatpush1.msra.mxu0 0.0
    %3092 = vmatprep.subr.mxu0 0.0
    %3093 = vmatpush1.msra.mxu0 0.0
    %3094 = vmatprep.subr.mxu0 0.0
    %3095 = vmatpush1.msra.mxu0 0.0
    %3096 = vmatprep.subr.mxu0 0.0
    %3097 = vmatpush1.msra.mxu0 0.0
    %3098 = vmatprep.subr.mxu0 0.0
    %3099 = vmatpush1.msra.mxu0 0.0
    %3100 = vmatprep.subr.mxu0 0.0
    %3101 = vmatpush1.msra.mxu0 0.0
    %3102 = vmatprep.mubr.f32.mxu0 0.0
    %3103 = vmatmul.mubr.f32.gmra.mrb[0].mxu0 %v3036
    %v3104 = vpop.f32.mrb[0].mxu0
    %v3105 = vadd.f32 0.0, %v3104
    %v3106 = vpop.f32.mrb[0].mxu0
    %3107 = vdwg.mxu0
    %v3108 = vadd.f32 %v2191, %v3105
    %v3109 = vxor.u32 %v3108, 2147483648
    %v3110 = vmul.f32 %v3109, 1.442695
    %v3111 = vpow.pop %v3110
    %v3112 = vadd.f32 %v3111, 1.0
    %v3113 = vrcp.pop %v3112
    %v3114 = vmul.f32 1.0, %v3113
    %v3115 = vtanh.pop %v3108
    %v3117 = vrot.slane %v2921, 6
    %v3119 = vmul.f32 %v3114, %v3117
    %3121 = vrot.lane.b32.xlu0 %v3115, 64
    %v3122 = vpop.permute.xlu0 %3121
    %v3124 = vmul.f32 %v3114, %v3122
    %3126 = vrot.lane.b32.xlu0 %v3124, 32
    %v3127 = vpop.permute.xlu0 %3126
    %v3129 = vadd.f32 %v3119, %v3127
    %v3130 = vtanh.pop %v3129
    %3132 = vrot.lane.b32.xlu0 %v3130, 64
    %v3133 = vpop.permute.xlu0 %3132
    %v3135 = vmul.f32 %v3114, %v3133
    %3137 = vrot.lane.b32.xlu0 %v3031, 32
    %v3138 = vpop.permute.xlu0 %3137
    %v3139 = vsel %vm244, %v3138, 0
    %3141 = vmatprep.subr.mxu0 0.0
    %3142 = vmatpush1.msra.mxu0 %v2197
    %3143 = vmatprep.subr.mxu0 0.0
    %3144 = vmatpush1.msra.mxu0 %v2198
    %3145 = vmatprep.subr.mxu0 0.0
    %3146 = vmatpush1.msra.mxu0 %v2199
    %3147 = vmatprep.subr.mxu0 0.0
    %3148 = vmatpush1.msra.mxu0 %v2200
    %3149 = vmatprep.subr.mxu0 0.0
    %3150 = vmatpush1.msra.mxu0 0.0
    %3151 = vmatprep.subr.mxu0 0.0
    %3152 = vmatpush1.msra.mxu0 0.0
    %3153 = vmatprep.subr.mxu0 0.0
    %3154 = vmatpush1.msra.mxu0 0.0
    %3155 = vmatprep.subr.mxu0 0.0
    %3156 = vmatpush1.msra.mxu0 0.0
    %3157 = vmatprep.subr.mxu0 0.0
    %3158 = vmatpush1.msra.mxu0 0.0
    %3159 = vmatprep.subr.mxu0 0.0
    %3160 = vmatpush1.msra.mxu0 0.0
    %3161 = vmatprep.subr.mxu0 0.0
    %3162 = vmatpush1.msra.mxu0 0.0
    %3163 = vmatprep.subr.mxu0 0.0
    %3164 = vmatpush1.msra.mxu0 0.0
    %3165 = vmatprep.subr.mxu0 0.0
    %3166 = vmatpush1.msra.mxu0 0.0
    %3167 = vmatprep.subr.mxu0 0.0
    %3168 = vmatpush1.msra.mxu0 0.0
    %3169 = vmatprep.subr.mxu0 0.0
    %3170 = vmatpush1.msra.mxu0 0.0
    %3171 = vmatprep.subr.mxu0 0.0
    %3172 = vmatpush1.msra.mxu0 0.0
    %3173 = vmatprep.subr.mxu0 0.0
    %3174 = vmatpush1.msra.mxu0 0.0
    %3175 = vmatprep.subr.mxu0 0.0
    %3176 = vmatpush1.msra.mxu0 0.0
    %3177 = vmatprep.subr.mxu0 0.0
    %3178 = vmatpush1.msra.mxu0 0.0
    %3179 = vmatprep.subr.mxu0 0.0
    %3180 = vmatpush1.msra.mxu0 0.0
    %3181 = vmatprep.subr.mxu0 0.0
    %3182 = vmatpush1.msra.mxu0 0.0
    %3183 = vmatprep.subr.mxu0 0.0
    %3184 = vmatpush1.msra.mxu0 0.0
    %3185 = vmatprep.subr.mxu0 0.0
    %3186 = vmatpush1.msra.mxu0 0.0
    %3187 = vmatprep.subr.mxu0 0.0
    %3188 = vmatpush1.msra.mxu0 0.0
    %3189 = vmatprep.subr.mxu0 0.0
    %3190 = vmatpush1.msra.mxu0 0.0
    %3191 = vmatprep.subr.mxu0 0.0
    %3192 = vmatpush1.msra.mxu0 0.0
    %3193 = vmatprep.subr.mxu0 0.0
    %3194 = vmatpush1.msra.mxu0 0.0
    %3195 = vmatprep.subr.mxu0 0.0
    %3196 = vmatpush1.msra.mxu0 0.0
    %3197 = vmatprep.subr.mxu0 0.0
    %3198 = vmatpush1.msra.mxu0 0.0
    %3199 = vmatprep.subr.mxu0 0.0
    %3200 = vmatpush1.msra.mxu0 0.0
    %3201 = vmatprep.subr.mxu0 0.0
    %3202 = vmatpush1.msra.mxu0 0.0
    %3203 = vmatprep.subr.mxu0 0.0
    %3204 = vmatpush1.msra.mxu0 0.0
    %3205 = vmatprep.mubr.f32.mxu0 0.0
    %3206 = vmatmul.mubr.f32.gmra.mrb[0].mxu0 %v3139
    %v3207 = vpop.f32.mrb[0].mxu0
    %v3208 = vadd.f32 0.0, %v3207
    %v3209 = vpop.f32.mrb[0].mxu0
    %3210 = vdwg.mxu0
    %v3212 = vrot.slane %v3208, 2
    %v3214 = vadd.f32 %v2190, %v3212
    %v3215 = vxor.u32 %v3214, 2147483648
    %v3216 = vmul.f32 %v3215, 1.442695
    %v3217 = vpow.pop %v3216
    %v3218 = vadd.f32 %v3217, 1.0
    %v3219 = vrcp.pop %v3218
    %v3220 = vmul.f32 1.0, %v3219
    %v3221 = vtanh.pop %v3214
    %v3223 = vrot.slane %v3025, 2
    %v3225 = vmul.f32 %v3220, %v3223
    %3227 = vrot.lane.b32.xlu0 %v3221, 64
    %v3228 = vpop.permute.xlu0 %3227
    %v3230 = vmul.f32 %v3220, %v3228
    %3232 = vrot.lane.b32.xlu0 %v3230, 32
    %v3233 = vpop.permute.xlu0 %3232
    %v3235 = vadd.f32 %v3225, %v3233
    %v3236 = vtanh.pop %v3235
    %3238 = vrot.lane.b32.xlu0 %v3236, 64
    %v3239 = vpop.permute.xlu0 %3238
    %v3241 = vmul.f32 %v3220, %v3239
    %3243 = vrot.lane.b32.xlu0 %v3135, 32
    %v3244 = vpop.permute.xlu0 %3243
    %v3245 = vsel %vm244, %v3244, 0
    %3247 = vmatprep.subr.mxu0 0.0
    %3248 = vmatpush1.msra.mxu0 %v2193
    %3249 = vmatprep.subr.mxu0 0.0
    %3250 = vmatpush1.msra.mxu0 %v2194
    %3251 = vmatprep.subr.mxu0 0.0
    %3252 = vmatpush1.msra.mxu0 %v2195
    %3253 = vmatprep.subr.mxu0 0.0
    %3254 = vmatpush1.msra.mxu0 %v2196
    %3255 = vmatprep.subr.mxu0 0.0
    %3256 = vmatpush1.msra.mxu0 0.0
    %3257 = vmatprep.subr.mxu0 0.0
    %3258 = vmatpush1.msra.mxu0 0.0
    %3259 = vmatprep.subr.mxu0 0.0
    %3260 = vmatpush1.msra.mxu0 0.0
    %3261 = vmatprep.subr.mxu0 0.0
    %3262 = vmatpush1.msra.mxu0 0.0
    %3263 = vmatprep.subr.mxu0 0.0
    %3264 = vmatpush1.msra.mxu0 0.0
    %3265 = vmatprep.subr.mxu0 0.0
    %3266 = vmatpush1.msra.mxu0 0.0
    %3267 = vmatprep.subr.mxu0 0.0
    %3268 = vmatpush1.msra.mxu0 0.0
    %3269 = vmatprep.subr.mxu0 0.0
    %3270 = vmatpush1.msra.mxu0 0.0
    %3271 = vmatprep.subr.mxu0 0.0
    %3272 = vmatpush1.msra.mxu0 0.0
    %3273 = vmatprep.subr.mxu0 0.0
    %3274 = vmatpush1.msra.mxu0 0.0
    %3275 = vmatprep.subr.mxu0 0.0
    %3276 = vmatpush1.msra.mxu0 0.0
    %3277 = vmatprep.subr.mxu0 0.0
    %3278 = vmatpush1.msra.mxu0 0.0
    %3279 = vmatprep.subr.mxu0 0.0
    %3280 = vmatpush1.msra.mxu0 0.0
    %3281 = vmatprep.subr.mxu0 0.0
    %3282 = vmatpush1.msra.mxu0 0.0
    %3283 = vmatprep.subr.mxu0 0.0
    %3284 = vmatpush1.msra.mxu0 0.0
    %3285 = vmatprep.subr.mxu0 0.0
    %3286 = vmatpush1.msra.mxu0 0.0
    %3287 = vmatprep.subr.mxu0 0.0
    %3288 = vmatpush1.msra.mxu0 0.0
    %3289 = vmatprep.subr.mxu0 0.0
    %3290 = vmatpush1.msra.mxu0 0.0
    %3291 = vmatprep.subr.mxu0 0.0
    %3292 = vmatpush1.msra.mxu0 0.0
    %3293 = vmatprep.subr.mxu0 0.0
    %3294 = vmatpush1.msra.mxu0 0.0
    %3295 = vmatprep.subr.mxu0 0.0
    %3296 = vmatpush1.msra.mxu0 0.0
    %3297 = vmatprep.subr.mxu0 0.0
    %3298 = vmatpush1.msra.mxu0 0.0
    %3299 = vmatprep.subr.mxu0 0.0
    %3300 = vmatpush1.msra.mxu0 0.0
    %3301 = vmatprep.subr.mxu0 0.0
    %3302 = vmatpush1.msra.mxu0 0.0
    %3303 = vmatprep.subr.mxu0 0.0
    %3304 = vmatpush1.msra.mxu0 0.0
    %3305 = vmatprep.subr.mxu0 0.0
    %3306 = vmatpush1.msra.mxu0 0.0
    %3307 = vmatprep.subr.mxu0 0.0
    %3308 = vmatpush1.msra.mxu0 0.0
    %3309 = vmatprep.subr.mxu0 0.0
    %3310 = vmatpush1.msra.mxu0 0.0
    %3311 = vmatprep.mubr.f32.mxu0 0.0
    %3312 = vmatmul.mubr.f32.gmra.mrb[0].mxu0 %v3245
    %v3313 = vpop.f32.mrb[0].mxu0
    %v3314 = vadd.f32 0.0, %v3313
    %v3315 = vpop.f32.mrb[0].mxu0
    %3316 = vdwg.mxu0
    %v3318 = vrot.slane %v3314, 6
    %v3320 = vadd.f32 %v2191, %v3318
    %v3321 = vxor.u32 %v3320, 2147483648
    %v3322 = vmul.f32 %v3321, 1.442695
    %v3323 = vpow.pop %v3322
    %v3324 = vadd.f32 %v3323, 1.0
    %v3325 = vrcp.pop %v3324
    %v3326 = vmul.f32 1.0, %v3325
    %v3327 = vtanh.pop %v3320
    %v3329 = vrot.slane %v3129, 6
    %v3331 = vmul.f32 %v3326, %v3329
    %3333 = vrot.lane.b32.xlu0 %v3327, 64
    %v3334 = vpop.permute.xlu0 %3333
    %v3336 = vmul.f32 %v3326, %v3334
    %3338 = vrot.lane.b32.xlu0 %v3336, 32
    %v3339 = vpop.permute.xlu0 %3338
    %v3341 = vadd.f32 %v3331, %v3339
    %v3342 = vtanh.pop %v3341
    %3344 = vrot.lane.b32.xlu0 %v3342, 64
    %v3345 = vpop.permute.xlu0 %3344
    %v3347 = vmul.f32 %v3326, %v3345
    %v3349 = vrot.slane %v3241, 6
    %3350 = vrot.lane.b32.xlu0 %v3349, 32
    %v3351 = vpop.permute.xlu0 %3350
    %v3352 = vsel %vm244, %v3351, 0
    %3354 = vmatprep.subr.mxu0 0.0
    %3355 = vmatpush1.msra.mxu0 %v2197
    %3356 = vmatprep.subr.mxu0 0.0
    %3357 = vmatpush1.msra.mxu0 %v2198
    %3358 = vmatprep.subr.mxu0 0.0
    %3359 = vmatpush1.msra.mxu0 %v2199
    %3360 = vmatprep.subr.mxu0 0.0
    %3361 = vmatpush1.msra.mxu0 %v2200
    %3362 = vmatprep.subr.mxu0 0.0
    %3363 = vmatpush1.msra.mxu0 0.0
    %3364 = vmatprep.subr.mxu0 0.0
    %3365 = vmatpush1.msra.mxu0 0.0
    %3366 = vmatprep.subr.mxu0 0.0
    %3367 = vmatpush1.msra.mxu0 0.0
    %3368 = vmatprep.subr.mxu0 0.0
    %3369 = vmatpush1.msra.mxu0 0.0
    %3370 = vmatprep.subr.mxu0 0.0
    %3371 = vmatpush1.msra.mxu0 0.0
    %3372 = vmatprep.subr.mxu0 0.0
    %3373 = vmatpush1.msra.mxu0 0.0
    %3374 = vmatprep.subr.mxu0 0.0
    %3375 = vmatpush1.msra.mxu0 0.0
    %3376 = vmatprep.subr.mxu0 0.0
    %3377 = vmatpush1.msra.mxu0 0.0
    %3378 = vmatprep.subr.mxu0 0.0
    %3379 = vmatpush1.msra.mxu0 0.0
    %3380 = vmatprep.subr.mxu0 0.0
    %3381 = vmatpush1.msra.mxu0 0.0
    %3382 = vmatprep.subr.mxu0 0.0
    %3383 = vmatpush1.msra.mxu0 0.0
    %3384 = vmatprep.subr.mxu0 0.0
    %3385 = vmatpush1.msra.mxu0 0.0
    %3386 = vmatprep.subr.mxu0 0.0
    %3387 = vmatpush1.msra.mxu0 0.0
    %3388 = vmatprep.subr.mxu0 0.0
    %3389 = vmatpush1.msra.mxu0 0.0
    %3390 = vmatprep.subr.mxu0 0.0
    %3391 = vmatpush1.msra.mxu0 0.0
    %3392 = vmatprep.subr.mxu0 0.0
    %3393 = vmatpush1.msra.mxu0 0.0
    %3394 = vmatprep.subr.mxu0 0.0
    %3395 = vmatpush1.msra.mxu0 0.0
    %3396 = vmatprep.subr.mxu0 0.0
    %3397 = vmatpush1.msra.mxu0 0.0
    %3398 = vmatprep.subr.mxu0 0.0
    %3399 = vmatpush1.msra.mxu0 0.0
    %3400 = vmatprep.subr.mxu0 0.0
    %3401 = vmatpush1.msra.mxu0 0.0
    %3402 = vmatprep.subr.mxu0 0.0
    %3403 = vmatpush1.msra.mxu0 0.0
    %3404 = vmatprep.subr.mxu0 0.0
    %3405 = vmatpush1.msra.mxu0 0.0
    %3406 = vmatprep.subr.mxu0 0.0
    %3407 = vmatpush1.msra.mxu0 0.0
    %3408 = vmatprep.subr.mxu0 0.0
    %3409 = vmatpush1.msra.mxu0 0.0
    %3410 = vmatprep.subr.mxu0 0.0
    %3411 = vmatpush1.msra.mxu0 0.0
    %3412 = vmatprep.subr.mxu0 0.0
    %3413 = vmatpush1.msra.mxu0 0.0
    %3414 = vmatprep.subr.mxu0 0.0
    %3415 = vmatpush1.msra.mxu0 0.0
    %3416 = vmatprep.subr.mxu0 0.0
    %3417 = vmatpush1.msra.mxu0 0.0
    %3418 = vmatprep.mubr.f32.mxu0 0.0
    %3419 = vmatmul.mubr.f32.gmra.mrb[0].mxu0 %v3352
    %v3420 = vpop.f32.mrb[0].mxu0
    %v3421 = vadd.f32 0.0, %v3420
    %v3422 = vpop.f32.mrb[0].mxu0
    %3423 = vdwg.mxu0
    %v3425 = vrot.slane %v3421, 4
    %v3427 = vadd.f32 %v2190, %v3425
    %v3428 = vxor.u32 %v3427, 2147483648
    %v3429 = vmul.f32 %v3428, 1.442695
    %v3430 = vpow.pop %v3429
    %v3431 = vadd.f32 %v3430, 1.0
    %v3432 = vrcp.pop %v3431
    %v3433 = vmul.f32 1.0, %v3432
    %v3434 = vtanh.pop %v3427
    %v3436 = vrot.slane %v3235, 2
    %v3438 = vmul.f32 %v3433, %v3436
    %3440 = vrot.lane.b32.xlu0 %v3434, 64
    %v3441 = vpop.permute.xlu0 %3440
    %v3443 = vmul.f32 %v3433, %v3441
    %3445 = vrot.lane.b32.xlu0 %v3443, 32
    %v3446 = vpop.permute.xlu0 %3445
    %v3448 = vadd.f32 %v3438, %v3446
    %v3449 = vtanh.pop %v3448
    %3451 = vrot.lane.b32.xlu0 %v3449, 64
    %v3452 = vpop.permute.xlu0 %3451
    %v3454 = vmul.f32 %v3433, %v3452
    %v3456 = vrot.slane %v3347, 2
    %3457 = vrot.lane.b32.xlu0 %v3456, 32
    %v3458 = vpop.permute.xlu0 %3457
    %v3459 = vsel %vm244, %v3458, 0
    %3461 = vmatprep.subr.mxu0 0.0
    %3462 = vmatpush1.msra.mxu0 %v2193
    %3463 = vmatprep.subr.mxu0 0.0
    %3464 = vmatpush1.msra.mxu0 %v2194
    %3465 = vmatprep.subr.mxu0 0.0
    %3466 = vmatpush1.msra.mxu0 %v2195
    %3467 = vmatprep.subr.mxu0 0.0
    %3468 = vmatpush1.msra.mxu0 %v2196
    %3469 = vmatprep.subr.mxu0 0.0
    %3470 = vmatpush1.msra.mxu0 0.0
    %3471 = vmatprep.subr.mxu0 0.0
    %3472 = vmatpush1.msra.mxu0 0.0
    %3473 = vmatprep.subr.mxu0 0.0
    %3474 = vmatpush1.msra.mxu0 0.0
    %3475 = vmatprep.subr.mxu0 0.0
    %3476 = vmatpush1.msra.mxu0 0.0
    %3477 = vmatprep.subr.mxu0 0.0
    %3478 = vmatpush1.msra.mxu0 0.0
    %3479 = vmatprep.subr.mxu0 0.0
    %3480 = vmatpush1.msra.mxu0 0.0
    %3481 = vmatprep.subr.mxu0 0.0
    %3482 = vmatpush1.msra.mxu0 0.0
    %3483 = vmatprep.subr.mxu0 0.0
    %3484 = vmatpush1.msra.mxu0 0.0
    %3485 = vmatprep.subr.mxu0 0.0
    %3486 = vmatpush1.msra.mxu0 0.0
    %3487 = vmatprep.subr.mxu0 0.0
    %3488 = vmatpush1.msra.mxu0 0.0
    %3489 = vmatprep.subr.mxu0 0.0
    %3490 = vmatpush1.msra.mxu0 0.0
    %3491 = vmatprep.subr.mxu0 0.0
    %3492 = vmatpush1.msra.mxu0 0.0
    %3493 = vmatprep.subr.mxu0 0.0
    %3494 = vmatpush1.msra.mxu0 0.0
    %3495 = vmatprep.subr.mxu0 0.0
    %3496 = vmatpush1.msra.mxu0 0.0
    %3497 = vmatprep.subr.mxu0 0.0
    %3498 = vmatpush1.msra.mxu0 0.0
    %3499 = vmatprep.subr.mxu0 0.0
    %3500 = vmatpush1.msra.mxu0 0.0
    %3501 = vmatprep.subr.mxu0 0.0
    %3502 = vmatpush1.msra.mxu0 0.0
    %3503 = vmatprep.subr.mxu0 0.0
    %3504 = vmatpush1.msra.mxu0 0.0
    %3505 = vmatprep.subr.mxu0 0.0
    %3506 = vmatpush1.msra.mxu0 0.0
    %3507 = vmatprep.subr.mxu0 0.0
    %3508 = vmatpush1.msra.mxu0 0.0
    %3509 = vmatprep.subr.mxu0 0.0
    %3510 = vmatpush1.msra.mxu0 0.0
    %3511 = vmatprep.subr.mxu0 0.0
    %3512 = vmatpush1.msra.mxu0 0.0
    %3513 = vmatprep.subr.mxu0 0.0
    %3514 = vmatpush1.msra.mxu0 0.0
    %3515 = vmatprep.subr.mxu0 0.0
    %3516 = vmatpush1.msra.mxu0 0.0
    %3517 = vmatprep.subr.mxu0 0.0
    %3518 = vmatpush1.msra.mxu0 0.0
    %3519 = vmatprep.subr.mxu0 0.0
    %3520 = vmatpush1.msra.mxu0 0.0
    %3521 = vmatprep.subr.mxu0 0.0
    %3522 = vmatpush1.msra.mxu0 0.0
    %3523 = vmatprep.subr.mxu0 0.0
    %3524 = vmatpush1.msra.mxu0 0.0
    %3525 = vmatprep.mubr.f32.mxu0 0.0
    %3526 = vmatmul.mubr.f32.gmra.mrb[0].mxu0 %v3459
    %v3527 = vpop.f32.mrb[0].mxu0
    %v3528 = vadd.f32 0.0, %v3527
    %v3529 = vpop.f32.mrb[0].mxu0
    %3530 = vdwg.mxu0
    %v3532 = vrot.slane %v3528, 4
    %v3534 = vadd.f32 %v2191, %v3532
    %v3535 = vxor.u32 %v3534, 2147483648
    %v3536 = vmul.f32 %v3535, 1.442695
    %v3537 = vpow.pop %v3536
    %v3538 = vadd.f32 %v3537, 1.0
    %v3539 = vrcp.pop %v3538
    %v3540 = vmul.f32 1.0, %v3539
    %v3541 = vtanh.pop %v3534
    %v3543 = vrot.slane %v3341, 6
    %v3545 = vmul.f32 %v3540, %v3543
    %3547 = vrot.lane.b32.xlu0 %v3541, 64
    %v3548 = vpop.permute.xlu0 %3547
    %v3550 = vmul.f32 %v3540, %v3548
    %3552 = vrot.lane.b32.xlu0 %v3550, 32
    %v3553 = vpop.permute.xlu0 %3552
    %v3555 = vadd.f32 %v3545, %v3553
    %v3556 = vtanh.pop %v3555
    %3558 = vrot.lane.b32.xlu0 %v3556, 64
    %v3559 = vpop.permute.xlu0 %3558
    %v3561 = vmul.f32 %v3540, %v3559
    %v3563 = vrot.slane %v3454, 4
    %3564 = vrot.lane.b32.xlu0 %v3563, 32
    %v3565 = vpop.permute.xlu0 %3564
    %v3566 = vsel %vm244, %v3565, 0
    %3568 = vmatprep.subr.mxu0 0.0
    %3569 = vmatpush1.msra.mxu0 %v2197
    %3570 = vmatprep.subr.mxu0 0.0
    %3571 = vmatpush1.msra.mxu0 %v2198
    %3572 = vmatprep.subr.mxu0 0.0
    %3573 = vmatpush1.msra.mxu0 %v2199
    %3574 = vmatprep.subr.mxu0 0.0
    %3575 = vmatpush1.msra.mxu0 %v2200
    %3576 = vmatprep.subr.mxu0 0.0
    %3577 = vmatpush1.msra.mxu0 0.0
    %3578 = vmatprep.subr.mxu0 0.0
    %3579 = vmatpush1.msra.mxu0 0.0
    %3580 = vmatprep.subr.mxu0 0.0
    %3581 = vmatpush1.msra.mxu0 0.0
    %3582 = vmatprep.subr.mxu0 0.0
    %3583 = vmatpush1.msra.mxu0 0.0
    %3584 = vmatprep.subr.mxu0 0.0
    %3585 = vmatpush1.msra.mxu0 0.0
    %3586 = vmatprep.subr.mxu0 0.0
    %3587 = vmatpush1.msra.mxu0 0.0
    %3588 = vmatprep.subr.mxu0 0.0
    %3589 = vmatpush1.msra.mxu0 0.0
    %3590 = vmatprep.subr.mxu0 0.0
    %3591 = vmatpush1.msra.mxu0 0.0
    %3592 = vmatprep.subr.mxu0 0.0
    %3593 = vmatpush1.msra.mxu0 0.0
    %3594 = vmatprep.subr.mxu0 0.0
    %3595 = vmatpush1.msra.mxu0 0.0
    %3596 = vmatprep.subr.mxu0 0.0
    %3597 = vmatpush1.msra.mxu0 0.0
    %3598 = vmatprep.subr.mxu0 0.0
    %3599 = vmatpush1.msra.mxu0 0.0
    %3600 = vmatprep.subr.mxu0 0.0
    %3601 = vmatpush1.msra.mxu0 0.0
    %3602 = vmatprep.subr.mxu0 0.0
    %3603 = vmatpush1.msra.mxu0 0.0
    %3604 = vmatprep.subr.mxu0 0.0
    %3605 = vmatpush1.msra.mxu0 0.0
    %3606 = vmatprep.subr.mxu0 0.0
    %3607 = vmatpush1.msra.mxu0 0.0
    %3608 = vmatprep.subr.mxu0 0.0
    %3609 = vmatpush1.msra.mxu0 0.0
    %3610 = vmatprep.subr.mxu0 0.0
    %3611 = vmatpush1.msra.mxu0 0.0
    %3612 = vmatprep.subr.mxu0 0.0
    %3613 = vmatpush1.msra.mxu0 0.0
    %3614 = vmatprep.subr.mxu0 0.0
    %3615 = vmatpush1.msra.mxu0 0.0
    %3616 = vmatprep.subr.mxu0 0.0
    %3617 = vmatpush1.msra.mxu0 0.0
    %3618 = vmatprep.subr.mxu0 0.0
    %3619 = vmatpush1.msra.mxu0 0.0
    %3620 = vmatprep.subr.mxu0 0.0
    %3621 = vmatpush1.msra.mxu0 0.0
    %3622 = vmatprep.subr.mxu0 0.0
    %3623 = vmatpush1.msra.mxu0 0.0
    %3624 = vmatprep.subr.mxu0 0.0
    %3625 = vmatpush1.msra.mxu0 0.0
    %3626 = vmatprep.subr.mxu0 0.0
    %3627 = vmatpush1.msra.mxu0 0.0
    %3628 = vmatprep.subr.mxu0 0.0
    %3629 = vmatpush1.msra.mxu0 0.0
    %3630 = vmatprep.subr.mxu0 0.0
    %3631 = vmatpush1.msra.mxu0 0.0
    %3632 = vmatprep.mubr.f32.mxu0 0.0
    %3633 = vmatmul.mubr.f32.gmra.mrb[0].mxu0 %v3566
    %v3634 = vpop.f32.mrb[0].mxu0
    %v3635 = vadd.f32 0.0, %v3634
    %v3636 = vpop.f32.mrb[0].mxu0
    %3637 = vdwg.mxu0
    %v3639 = vrot.slane %v3635, 6
    %v3641 = vadd.f32 %v2190, %v3639
    %v3642 = vxor.u32 %v3641, 2147483648
    %v3643 = vmul.f32 %v3642, 1.442695
    %v3644 = vpow.pop %v3643
    %v3645 = vadd.f32 %v3644, 1.0
    %v3646 = vrcp.pop %v3645
    %v3647 = vmul.f32 1.0, %v3646
    %v3648 = vtanh.pop %v3641
    %v3650 = vrot.slane %v3448, 2
    %v3652 = vmul.f32 %v3647, %v3650
    %3654 = vrot.lane.b32.xlu0 %v3648, 64
    %v3655 = vpop.permute.xlu0 %3654
    %v3657 = vmul.f32 %v3647, %v3655
    %3659 = vrot.lane.b32.xlu0 %v3657, 32
    %v3660 = vpop.permute.xlu0 %3659
    %v3662 = vadd.f32 %v3652, %v3660
    %v3663 = vtanh.pop %v3662
    %3665 = vrot.lane.b32.xlu0 %v3663, 64
    %v3666 = vpop.permute.xlu0 %3665
    %v3668 = vmul.f32 %v3647, %v3666
    %v3670 = vrot.slane %v3561, 4
    %3671 = vrot.lane.b32.xlu0 %v3670, 32
    %v3672 = vpop.permute.xlu0 %3671
    %v3673 = vsel %vm244, %v3672, 0
    %3675 = vmatprep.subr.mxu0 0.0
    %3676 = vmatpush1.msra.mxu0 %v2193
    %3677 = vmatprep.subr.mxu0 0.0
    %3678 = vmatpush1.msra.mxu0 %v2194
    %3679 = vmatprep.subr.mxu0 0.0
    %3680 = vmatpush1.msra.mxu0 %v2195
    %3681 = vmatprep.subr.mxu0 0.0
    %3682 = vmatpush1.msra.mxu0 %v2196
    %3683 = vmatprep.subr.mxu0 0.0
    %3684 = vmatpush1.msra.mxu0 0.0
    %3685 = vmatprep.subr.mxu0 0.0
    %3686 = vmatpush1.msra.mxu0 0.0
    %3687 = vmatprep.subr.mxu0 0.0
    %3688 = vmatpush1.msra.mxu0 0.0
    %3689 = vmatprep.subr.mxu0 0.0
    %3690 = vmatpush1.msra.mxu0 0.0
    %3691 = vmatprep.subr.mxu0 0.0
    %3692 = vmatpush1.msra.mxu0 0.0
    %3693 = vmatprep.subr.mxu0 0.0
    %3694 = vmatpush1.msra.mxu0 0.0
    %3695 = vmatprep.subr.mxu0 0.0
    %3696 = vmatpush1.msra.mxu0 0.0
    %3697 = vmatprep.subr.mxu0 0.0
    %3698 = vmatpush1.msra.mxu0 0.0
    %3699 = vmatprep.subr.mxu0 0.0
    %3700 = vmatpush1.msra.mxu0 0.0
    %3701 = vmatprep.subr.mxu0 0.0
    %3702 = vmatpush1.msra.mxu0 0.0
    %3703 = vmatprep.subr.mxu0 0.0
    %3704 = vmatpush1.msra.mxu0 0.0
    %3705 = vmatprep.subr.mxu0 0.0
    %3706 = vmatpush1.msra.mxu0 0.0
    %3707 = vmatprep.subr.mxu0 0.0
    %3708 = vmatpush1.msra.mxu0 0.0
    %3709 = vmatprep.subr.mxu0 0.0
    %3710 = vmatpush1.msra.mxu0 0.0
    %3711 = vmatprep.subr.mxu0 0.0
    %3712 = vmatpush1.msra.mxu0 0.0
    %3713 = vmatprep.subr.mxu0 0.0
    %3714 = vmatpush1.msra.mxu0 0.0
    %3715 = vmatprep.subr.mxu0 0.0
    %3716 = vmatpush1.msra.mxu0 0.0
    %3717 = vmatprep.subr.mxu0 0.0
    %3718 = vmatpush1.msra.mxu0 0.0
    %3719 = vmatprep.subr.mxu0 0.0
    %3720 = vmatpush1.msra.mxu0 0.0
    %3721 = vmatprep.subr.mxu0 0.0
    %3722 = vmatpush1.msra.mxu0 0.0
    %3723 = vmatprep.subr.mxu0 0.0
    %3724 = vmatpush1.msra.mxu0 0.0
    %3725 = vmatprep.subr.mxu0 0.0
    %3726 = vmatpush1.msra.mxu0 0.0
    %3727 = vmatprep.subr.mxu0 0.0
    %3728 = vmatpush1.msra.mxu0 0.0
    %3729 = vmatprep.subr.mxu0 0.0
    %3730 = vmatpush1.msra.mxu0 0.0
    %3731 = vmatprep.subr.mxu0 0.0
    %3732 = vmatpush1.msra.mxu0 0.0
    %3733 = vmatprep.subr.mxu0 0.0
    %3734 = vmatpush1.msra.mxu0 0.0
    %3735 = vmatprep.subr.mxu0 0.0
    %3736 = vmatpush1.msra.mxu0 0.0
    %3737 = vmatprep.subr.mxu0 0.0
    %3738 = vmatpush1.msra.mxu0 0.0
    %3739 = vmatprep.mubr.f32.mxu0 0.0
    %3740 = vmatmul.mubr.f32.gmra.mrb[0].mxu0 %v3673
    %v3741 = vpop.f32.mrb[0].mxu0
    %v3742 = vadd.f32 0.0, %v3741
    %v3743 = vpop.f32.mrb[0].mxu0
    %3744 = vdwg.mxu0
    %v3746 = vrot.slane %v3742, 2
    %v3748 = vadd.f32 %v2191, %v3746
    %v3749 = vxor.u32 %v3748, 2147483648
    %v3750 = vmul.f32 %v3749, 1.442695
    %v3751 = vpow.pop %v3750
    %v3752 = vadd.f32 %v3751, 1.0
    %v3753 = vrcp.pop %v3752
    %v3754 = vmul.f32 1.0, %v3753
    %v3755 = vtanh.pop %v3748
    %v3757 = vrot.slane %v3555, 6
    %v3759 = vmul.f32 %v3754, %v3757
    %3761 = vrot.lane.b32.xlu0 %v3755, 64
    %v3762 = vpop.permute.xlu0 %3761
    %v3764 = vmul.f32 %v3754, %v3762
    %3766 = vrot.lane.b32.xlu0 %v3764, 32
    %v3767 = vpop.permute.xlu0 %3766
    %v3769 = vadd.f32 %v3759, %v3767
    %v3770 = vtanh.pop %v3769
    %3772 = vrot.lane.b32.xlu0 %v3770, 64
    %v3773 = vpop.permute.xlu0 %3772
    %v3775 = vmul.f32 %v3754, %v3773
    %v3777 = vrot.slane %v3668, 2
    %3778 = vrot.lane.b32.xlu0 %v3777, 32
    %v3779 = vpop.permute.xlu0 %3778
    %v3780 = vsel %vm244, %v3779, 0
    %3782 = vmatprep.subr.mxu0 0.0
    %3783 = vmatpush1.msra.mxu0 %v2197
    %3784 = vmatprep.subr.mxu0 0.0
    %3785 = vmatpush1.msra.mxu0 %v2198
    %3786 = vmatprep.subr.mxu0 0.0
    %3787 = vmatpush1.msra.mxu0 %v2199
    %3788 = vmatprep.subr.mxu0 0.0
    %3789 = vmatpush1.msra.mxu0 %v2200
    %3790 = vmatprep.subr.mxu0 0.0
    %3791 = vmatpush1.msra.mxu0 0.0
    %3792 = vmatprep.subr.mxu0 0.0
    %3793 = vmatpush1.msra.mxu0 0.0
    %3794 = vmatprep.subr.mxu0 0.0
    %3795 = vmatpush1.msra.mxu0 0.0
    %3796 = vmatprep.subr.mxu0 0.0
    %3797 = vmatpush1.msra.mxu0 0.0
    %3798 = vmatprep.subr.mxu0 0.0
    %3799 = vmatpush1.msra.mxu0 0.0
    %3800 = vmatprep.subr.mxu0 0.0
    %3801 = vmatpush1.msra.mxu0 0.0
    %3802 = vmatprep.subr.mxu0 0.0
    %3803 = vmatpush1.msra.mxu0 0.0
    %3804 = vmatprep.subr.mxu0 0.0
    %3805 = vmatpush1.msra.mxu0 0.0
    %3806 = vmatprep.subr.mxu0 0.0
    %3807 = vmatpush1.msra.mxu0 0.0
    %3808 = vmatprep.subr.mxu0 0.0
    %3809 = vmatpush1.msra.mxu0 0.0
    %3810 = vmatprep.subr.mxu0 0.0
    %3811 = vmatpush1.msra.mxu0 0.0
    %3812 = vmatprep.subr.mxu0 0.0
    %3813 = vmatpush1.msra.mxu0 0.0
    %3814 = vmatprep.subr.mxu0 0.0
    %3815 = vmatpush1.msra.mxu0 0.0
    %3816 = vmatprep.subr.mxu0 0.0
    %3817 = vmatpush1.msra.mxu0 0.0
    %3818 = vmatprep.subr.mxu0 0.0
    %3819 = vmatpush1.msra.mxu0 0.0
    %3820 = vmatprep.subr.mxu0 0.0
    %3821 = vmatpush1.msra.mxu0 0.0
    %3822 = vmatprep.subr.mxu0 0.0
    %3823 = vmatpush1.msra.mxu0 0.0
    %3824 = vmatprep.subr.mxu0 0.0
    %3825 = vmatpush1.msra.mxu0 0.0
    %3826 = vmatprep.subr.mxu0 0.0
    %3827 = vmatpush1.msra.mxu0 0.0
    %3828 = vmatprep.subr.mxu0 0.0
    %3829 = vmatpush1.msra.mxu0 0.0
    %3830 = vmatprep.subr.mxu0 0.0
    %3831 = vmatpush1.msra.mxu0 0.0
    %3832 = vmatprep.subr.mxu0 0.0
    %3833 = vmatpush1.msra.mxu0 0.0
    %3834 = vmatprep.subr.mxu0 0.0
    %3835 = vmatpush1.msra.mxu0 0.0
    %3836 = vmatprep.subr.mxu0 0.0
    %3837 = vmatpush1.msra.mxu0 0.0
    %3838 = vmatprep.subr.mxu0 0.0
    %3839 = vmatpush1.msra.mxu0 0.0
    %3840 = vmatprep.subr.mxu0 0.0
    %3841 = vmatpush1.msra.mxu0 0.0
    %3842 = vmatprep.subr.mxu0 0.0
    %3843 = vmatpush1.msra.mxu0 0.0
    %3844 = vmatprep.subr.mxu0 0.0
    %3845 = vmatpush1.msra.mxu0 0.0
    %3846 = vmatprep.mubr.f32.mxu0 0.0
    %3847 = vmatmul.mubr.f32.gmra.mrb[0].mxu0 %v3780
    %v3848 = vpop.f32.mrb[0].mxu0
    %v3849 = vadd.f32 0.0, %v3848
    %v3850 = vpop.f32.mrb[0].mxu0
    %3851 = vdwg.mxu0
    %v3852 = vadd.f32 %v2190, %v3849
    %v3853 = vxor.u32 %v3852, 2147483648
    %v3854 = vmul.f32 %v3853, 1.442695
    %v3855 = vpow.pop %v3854
    %v3856 = vadd.f32 %v3855, 1.0
    %v3857 = vrcp.pop %v3856
    %v3858 = vmul.f32 1.0, %v3857
    %v3859 = vtanh.pop %v3852
    %v3861 = vrot.slane %v3662, 2
    %v3863 = vmul.f32 %v3858, %v3861
    %3865 = vrot.lane.b32.xlu0 %v3859, 64
    %v3866 = vpop.permute.xlu0 %3865
    %v3868 = vmul.f32 %v3858, %v3866
    %3870 = vrot.lane.b32.xlu0 %v3868, 32
    %v3871 = vpop.permute.xlu0 %3870
    %v3873 = vadd.f32 %v3863, %v3871
    %v3874 = vtanh.pop %v3873
    %3876 = vrot.lane.b32.xlu0 %v3874, 64
    %v3877 = vpop.permute.xlu0 %3876
    %v3879 = vmul.f32 %v3858, %v3877
    %v3880 = vld [vmem:[#allocation15] sm:$0xff]
    %v3881 = vld [vmem:[#allocation15 + $0x8] sm:$0xff]
    %v3882 = vld [vmem:[#allocation15 + $0x10] sm:$0xff]
    %v3883 = vld [vmem:[#allocation15 + $0x18] sm:$0xff]
    %v3884 = vld [vmem:[#allocation15 + $0x20] sm:$0xff]
    %v3885 = vld [vmem:[#allocation15 + $0x28] sm:$0xff]
    %v3886 = vld [vmem:[#allocation15 + $0x30] sm:$0xff]
    %v3887 = vld [vmem:[#allocation15 + $0x38] sm:$0xff]
    %v3888 = vld [vmem:[#allocation15 + $0x40] sm:$0xff]
    %v3889 = vld [vmem:[#allocation15 + $0x48] sm:$0xff]
    %v3890 = vld [vmem:[#allocation15 + $0x50] sm:$0xff]
    %v3891 = vld [vmem:[#allocation15 + $0x58] sm:$0xff]
    %v3892 = vld [vmem:[#allocation15 + $0x60] sm:$0xff]
    %v3893 = vld [vmem:[#allocation15 + $0x68] sm:$0xff]
    %v3894 = vld [vmem:[#allocation15 + $0x70] sm:$0xff]
    %v3895 = vld [vmem:[#allocation15 + $0x78] sm:$0xff]
    %v3896 = vld [vmem:[#allocation15 + $0x80] sm:$0xff]
    %v3897 = vld [vmem:[#allocation15 + $0x88] sm:$0xff]
    %v3898 = vld [vmem:[#allocation15 + $0x90] sm:$0xff]
    %v3899 = vld [vmem:[#allocation15 + $0x98] sm:$0xff]
    %v3900 = vld [vmem:[#allocation15 + $0xa0] sm:$0xff]
    %v3901 = vld [vmem:[#allocation15 + $0xa8] sm:$0xff]
    %v3902 = vld [vmem:[#allocation15 + $0xb0] sm:$0xff]
    %v3903 = vld [vmem:[#allocation15 + $0xb8] sm:$0xff]
    %v3904 = vld [vmem:[#allocation15 + $0xc0] sm:$0xff]
    %v3905 = vld [vmem:[#allocation15 + $0xc8] sm:$0xff]
    %v3906 = vld [vmem:[#allocation15 + $0xd0] sm:$0xff]
    %v3907 = vld [vmem:[#allocation15 + $0xd8] sm:$0xff]
    %v3908 = vld [vmem:[#allocation15 + $0xe0] sm:$0xff]
    %v3909 = vld [vmem:[#allocation15 + $0xe8] sm:$0xff]
    %v3910 = vld [vmem:[#allocation15 + $0xf0] sm:$0xff]
    %v3911 = vld [vmem:[#allocation15 + $0xf8] sm:$0xff]
    %v3912 = vld [vmem:[#allocation15 + $0x100] sm:$0xff]
    %v3913 = vld [vmem:[#allocation15 + $0x108] sm:$0xff]
    %v3914 = vld [vmem:[#allocation15 + $0x110] sm:$0xff]
    %v3915 = vld [vmem:[#allocation15 + $0x118] sm:$0xff]
    %v3916 = vld [vmem:[#allocation15 + $0x120] sm:$0xff]
    %v3917 = vld [vmem:[#allocation15 + $0x128] sm:$0xff]
    %v3918 = vld [vmem:[#allocation15 + $0x130] sm:$0xff]
    %v3919 = vld [vmem:[#allocation15 + $0x138] sm:$0xff]
    %v3920 = vld [vmem:[#allocation15 + $0x140] sm:$0xff]
    %v3921 = vld [vmem:[#allocation15 + $0x148] sm:$0xff]
    %v3922 = vld [vmem:[#allocation15 + $0x150] sm:$0xff]
    %v3923 = vld [vmem:[#allocation15 + $0x158] sm:$0xff]
    %v3924 = vld [vmem:[#allocation15 + $0x160] sm:$0xff]
    %v3925 = vld [vmem:[#allocation15 + $0x168] sm:$0xff]
    %v3926 = vld [vmem:[#allocation15 + $0x170] sm:$0xff]
    %v3927 = vld [vmem:[#allocation15 + $0x178] sm:$0xff]
    %v3928 = vld [vmem:[#allocation15 + $0x180] sm:$0xff]
    %v3929 = vld [vmem:[#allocation15 + $0x188] sm:$0xff]
    %v3930 = vld [vmem:[#allocation15 + $0x190] sm:$0xff]
    %v3931 = vld [vmem:[#allocation15 + $0x198] sm:$0xff]
    %v3932 = vld [vmem:[#allocation15 + $0x1a0] sm:$0xff]
    %v3933 = vld [vmem:[#allocation15 + $0x1a8] sm:$0xff]
    %v3934 = vld [vmem:[#allocation15 + $0x1b0] sm:$0xff]
    %v3935 = vld [vmem:[#allocation15 + $0x1b8] sm:$0xff]
    %v3936 = vld [vmem:[#allocation15 + $0x1c0] sm:$0xff]
    %v3937 = vld [vmem:[#allocation15 + $0x1c8] sm:$0xff]
    %v3938 = vld [vmem:[#allocation15 + $0x1d0] sm:$0xff]
    %v3939 = vld [vmem:[#allocation15 + $0x1d8] sm:$0xff]
    %v3940 = vld [vmem:[#allocation15 + $0x1e0] sm:$0xff]
    %v3941 = vld [vmem:[#allocation15 + $0x1e8] sm:$0xff]
    %v3942 = vld [vmem:[#allocation15 + $0x1f0] sm:$0xff]
    %v3943 = vld [vmem:[#allocation15 + $0x1f8] sm:$0xff]
    %v3944 = vsel %vm244, %v1988, 0
    %3946 = vmatprep.subr.mxu0 %v3913
    %3947 = vmatpush1.msra.mxu0 %v3912
    %3948 = vmatprep.subr.mxu0 %v3921
    %3949 = vmatpush1.msra.mxu0 %v3920
    %3950 = vmatprep.subr.mxu0 %v3929
    %3951 = vmatpush1.msra.mxu0 %v3928
    %3952 = vmatprep.subr.mxu0 %v3937
    %3953 = vmatpush1.msra.mxu0 %v3936
    %3954 = vmatprep.subr.mxu0 0.0
    %3955 = vmatpush1.msra.mxu0 0.0
    %3956 = vmatprep.subr.mxu0 0.0
    %3957 = vmatpush1.msra.mxu0 0.0
    %3958 = vmatprep.subr.mxu0 0.0
    %3959 = vmatpush1.msra.mxu0 0.0
    %3960 = vmatprep.subr.mxu0 0.0
    %3961 = vmatpush1.msra.mxu0 0.0
    %3962 = vmatprep.subr.mxu0 0.0
    %3963 = vmatpush1.msra.mxu0 0.0
    %3964 = vmatprep.subr.mxu0 0.0
    %3965 = vmatpush1.msra.mxu0 0.0
    %3966 = vmatprep.subr.mxu0 0.0
    %3967 = vmatpush1.msra.mxu0 0.0
    %3968 = vmatprep.subr.mxu0 0.0
    %3969 = vmatpush1.msra.mxu0 0.0
    %3970 = vmatprep.subr.mxu0 0.0
    %3971 = vmatpush1.msra.mxu0 0.0
    %3972 = vmatprep.subr.mxu0 0.0
    %3973 = vmatpush1.msra.mxu0 0.0
    %3974 = vmatprep.subr.mxu0 0.0
    %3975 = vmatpush1.msra.mxu0 0.0
    %3976 = vmatprep.subr.mxu0 0.0
    %3977 = vmatpush1.msra.mxu0 0.0
    %3978 = vmatprep.subr.mxu0 0.0
    %3979 = vmatpush1.msra.mxu0 0.0
    %3980 = vmatprep.subr.mxu0 0.0
    %3981 = vmatpush1.msra.mxu0 0.0
    %3982 = vmatprep.subr.mxu0 0.0
    %3983 = vmatpush1.msra.mxu0 0.0
    %3984 = vmatprep.subr.mxu0 0.0
    %3985 = vmatpush1.msra.mxu0 0.0
    %3986 = vmatprep.subr.mxu0 0.0
    %3987 = vmatpush1.msra.mxu0 0.0
    %3988 = vmatprep.subr.mxu0 0.0
    %3989 = vmatpush1.msra.mxu0 0.0
    %3990 = vmatprep.subr.mxu0 0.0
    %3991 = vmatpush1.msra.mxu0 0.0
    %3992 = vmatprep.subr.mxu0 0.0
    %3993 = vmatpush1.msra.mxu0 0.0
    %3994 = vmatprep.subr.mxu0 0.0
    %3995 = vmatpush1.msra.mxu0 0.0
    %3996 = vmatprep.subr.mxu0 0.0
    %3997 = vmatpush1.msra.mxu0 0.0
    %3998 = vmatprep.subr.mxu0 0.0
    %3999 = vmatpush1.msra.mxu0 0.0
    %4000 = vmatprep.subr.mxu0 0.0
    %4001 = vmatpush1.msra.mxu0 0.0
    %4002 = vmatprep.subr.mxu0 0.0
    %4003 = vmatpush1.msra.mxu0 0.0
    %4004 = vmatprep.subr.mxu0 0.0
    %4005 = vmatpush1.msra.mxu0 0.0
    %4006 = vmatprep.subr.mxu0 0.0
    %4007 = vmatpush1.msra.mxu0 0.0
    %4008 = vmatprep.subr.mxu0 0.0
    %4009 = vmatpush1.msra.mxu0 0.0
    %4010 = vmatprep.mubr.f32.mxu0 0.0
    %4011 = vmatmul.mubr.f32.gmra.mrb[0].mxu0 %v3944
    %v4012 = vpop.f32.mrb[0].mxu0
    %v4013 = vadd.f32 0.0, %v4012
    %v4014 = vpop.f32.mrb[0].mxu0
    %v4015 = vadd.f32 0.0, %v4014
    %4016 = vdwg.mxu0
    %4017 = vmatprep.subr.mxu0 %v3915
    %4018 = vmatpush1.msra.mxu0 %v3914
    %4019 = vmatprep.subr.mxu0 %v3923
    %4020 = vmatpush1.msra.mxu0 %v3922
    %4021 = vmatprep.subr.mxu0 %v3931
    %4022 = vmatpush1.msra.mxu0 %v3930
    %4023 = vmatprep.subr.mxu0 %v3939
    %4024 = vmatpush1.msra.mxu0 %v3938
    %4025 = vmatprep.subr.mxu0 0.0
    %4026 = vmatpush1.msra.mxu0 0.0
    %4027 = vmatprep.subr.mxu0 0.0
    %4028 = vmatpush1.msra.mxu0 0.0
    %4029 = vmatprep.subr.mxu0 0.0
    %4030 = vmatpush1.msra.mxu0 0.0
    %4031 = vmatprep.subr.mxu0 0.0
    %4032 = vmatpush1.msra.mxu0 0.0
    %4033 = vmatprep.subr.mxu0 0.0
    %4034 = vmatpush1.msra.mxu0 0.0
    %4035 = vmatprep.subr.mxu0 0.0
    %4036 = vmatpush1.msra.mxu0 0.0
    %4037 = vmatprep.subr.mxu0 0.0
    %4038 = vmatpush1.msra.mxu0 0.0
    %4039 = vmatprep.subr.mxu0 0.0
    %4040 = vmatpush1.msra.mxu0 0.0
    %4041 = vmatprep.subr.mxu0 0.0
    %4042 = vmatpush1.msra.mxu0 0.0
    %4043 = vmatprep.subr.mxu0 0.0
    %4044 = vmatpush1.msra.mxu0 0.0
    %4045 = vmatprep.subr.mxu0 0.0
    %4046 = vmatpush1.msra.mxu0 0.0
    %4047 = vmatprep.subr.mxu0 0.0
    %4048 = vmatpush1.msra.mxu0 0.0
    %4049 = vmatprep.subr.mxu0 0.0
    %4050 = vmatpush1.msra.mxu0 0.0
    %4051 = vmatprep.subr.mxu0 0.0
    %4052 = vmatpush1.msra.mxu0 0.0
    %4053 = vmatprep.subr.mxu0 0.0
    %4054 = vmatpush1.msra.mxu0 0.0
    %4055 = vmatprep.subr.mxu0 0.0
    %4056 = vmatpush1.msra.mxu0 0.0
    %4057 = vmatprep.subr.mxu0 0.0
    %4058 = vmatpush1.msra.mxu0 0.0
    %4059 = vmatprep.subr.mxu0 0.0
    %4060 = vmatpush1.msra.mxu0 0.0
    %4061 = vmatprep.subr.mxu0 0.0
    %4062 = vmatpush1.msra.mxu0 0.0
    %4063 = vmatprep.subr.mxu0 0.0
    %4064 = vmatpush1.msra.mxu0 0.0
    %4065 = vmatprep.subr.mxu0 0.0
    %4066 = vmatpush1.msra.mxu0 0.0
    %4067 = vmatprep.subr.mxu0 0.0
    %4068 = vmatpush1.msra.mxu0 0.0
    %4069 = vmatprep.subr.mxu0 0.0
    %4070 = vmatpush1.msra.mxu0 0.0
    %4071 = vmatprep.subr.mxu0 0.0
    %4072 = vmatpush1.msra.mxu0 0.0
    %4073 = vmatprep.subr.mxu0 0.0
    %4074 = vmatpush1.msra.mxu0 0.0
    %4075 = vmatprep.subr.mxu0 0.0
    %4076 = vmatpush1.msra.mxu0 0.0
    %4077 = vmatprep.subr.mxu0 0.0
    %4078 = vmatpush1.msra.mxu0 0.0
    %4079 = vmatprep.subr.mxu0 0.0
    %4080 = vmatpush1.msra.mxu0 0.0
    %4081 = vmatprep.mubr.f32.mxu0 0.0
    %4082 = vmatmul.mubr.f32.gmra.mrb[0].mxu0 %v3944
    %v4083 = vpop.f32.mrb[0].mxu0
    %v4084 = vadd.f32 0.0, %v4083
    %v4085 = vpop.f32.mrb[0].mxu0
    %v4086 = vadd.f32 0.0, %v4085
    %4087 = vdwg.mxu0
    %4088 = vmatprep.subr.mxu0 %v3917
    %4089 = vmatpush1.msra.mxu0 %v3916
    %4090 = vmatprep.subr.mxu0 %v3925
    %4091 = vmatpush1.msra.mxu0 %v3924
    %4092 = vmatprep.subr.mxu0 %v3933
    %4093 = vmatpush1.msra.mxu0 %v3932
    %4094 = vmatprep.subr.mxu0 %v3941
    %4095 = vmatpush1.msra.mxu0 %v3940
    %4096 = vmatprep.subr.mxu0 0.0
    %4097 = vmatpush1.msra.mxu0 0.0
    %4098 = vmatprep.subr.mxu0 0.0
    %4099 = vmatpush1.msra.mxu0 0.0
    %4100 = vmatprep.subr.mxu0 0.0
    %4101 = vmatpush1.msra.mxu0 0.0
    %4102 = vmatprep.subr.mxu0 0.0
    %4103 = vmatpush1.msra.mxu0 0.0
    %4104 = vmatprep.subr.mxu0 0.0
    %4105 = vmatpush1.msra.mxu0 0.0
    %4106 = vmatprep.subr.mxu0 0.0
    %4107 = vmatpush1.msra.mxu0 0.0
    %4108 = vmatprep.subr.mxu0 0.0
    %4109 = vmatpush1.msra.mxu0 0.0
    %4110 = vmatprep.subr.mxu0 0.0
    %4111 = vmatpush1.msra.mxu0 0.0
    %4112 = vmatprep.subr.mxu0 0.0
    %4113 = vmatpush1.msra.mxu0 0.0
    %4114 = vmatprep.subr.mxu0 0.0
    %4115 = vmatpush1.msra.mxu0 0.0
    %4116 = vmatprep.subr.mxu0 0.0
    %4117 = vmatpush1.msra.mxu0 0.0
    %4118 = vmatprep.subr.mxu0 0.0
    %4119 = vmatpush1.msra.mxu0 0.0
    %4120 = vmatprep.subr.mxu0 0.0
    %4121 = vmatpush1.msra.mxu0 0.0
    %4122 = vmatprep.subr.mxu0 0.0
    %4123 = vmatpush1.msra.mxu0 0.0
    %4124 = vmatprep.subr.mxu0 0.0
    %4125 = vmatpush1.msra.mxu0 0.0
    %4126 = vmatprep.subr.mxu0 0.0
    %4127 = vmatpush1.msra.mxu0 0.0
    %4128 = vmatprep.subr.mxu0 0.0
    %4129 = vmatpush1.msra.mxu0 0.0
    %4130 = vmatprep.subr.mxu0 0.0
    %4131 = vmatpush1.msra.mxu0 0.0
    %4132 = vmatprep.subr.mxu0 0.0
    %4133 = vmatpush1.msra.mxu0 0.0
    %4134 = vmatprep.subr.mxu0 0.0
    %4135 = vmatpush1.msra.mxu0 0.0
    %4136 = vmatprep.subr.mxu0 0.0
    %4137 = vmatpush1.msra.mxu0 0.0
    %4138 = vmatprep.subr.mxu0 0.0
    %4139 = vmatpush1.msra.mxu0 0.0
    %4140 = vmatprep.subr.mxu0 0.0
    %4141 = vmatpush1.msra.mxu0 0.0
    %4142 = vmatprep.subr.mxu0 0.0
    %4143 = vmatpush1.msra.mxu0 0.0
    %4144 = vmatprep.subr.mxu0 0.0
    %4145 = vmatpush1.msra.mxu0 0.0
    %4146 = vmatprep.subr.mxu0 0.0
    %4147 = vmatpush1.msra.mxu0 0.0
    %4148 = vmatprep.subr.mxu0 0.0
    %4149 = vmatpush1.msra.mxu0 0.0
    %4150 = vmatprep.subr.mxu0 0.0
    %4151 = vmatpush1.msra.mxu0 0.0
    %4152 = vmatprep.mubr.f32.mxu0 0.0
    %4153 = vmatmul.mubr.f32.gmra.mrb[0].mxu0 %v3944
    %v4154 = vpop.f32.mrb[0].mxu0
    %v4155 = vadd.f32 0.0, %v4154
    %v4156 = vpop.f32.mrb[0].mxu0
    %v4157 = vadd.f32 0.0, %v4156
    %4158 = vdwg.mxu0
    %4159 = vmatprep.subr.mxu0 %v3919
    %4160 = vmatpush1.msra.mxu0 %v3918
    %4161 = vmatprep.subr.mxu0 %v3927
    %4162 = vmatpush1.msra.mxu0 %v3926
    %4163 = vmatprep.subr.mxu0 %v3935
    %4164 = vmatpush1.msra.mxu0 %v3934
    %4165 = vmatprep.subr.mxu0 %v3943
    %4166 = vmatpush1.msra.mxu0 %v3942
    %4167 = vmatprep.subr.mxu0 0.0
    %4168 = vmatpush1.msra.mxu0 0.0
    %4169 = vmatprep.subr.mxu0 0.0
    %4170 = vmatpush1.msra.mxu0 0.0
    %4171 = vmatprep.subr.mxu0 0.0
    %4172 = vmatpush1.msra.mxu0 0.0
    %4173 = vmatprep.subr.mxu0 0.0
    %4174 = vmatpush1.msra.mxu0 0.0
    %4175 = vmatprep.subr.mxu0 0.0
    %4176 = vmatpush1.msra.mxu0 0.0
    %4177 = vmatprep.subr.mxu0 0.0
    %4178 = vmatpush1.msra.mxu0 0.0
    %4179 = vmatprep.subr.mxu0 0.0
    %4180 = vmatpush1.msra.mxu0 0.0
    %4181 = vmatprep.subr.mxu0 0.0
    %4182 = vmatpush1.msra.mxu0 0.0
    %4183 = vmatprep.subr.mxu0 0.0
    %4184 = vmatpush1.msra.mxu0 0.0
    %4185 = vmatprep.subr.mxu0 0.0
    %4186 = vmatpush1.msra.mxu0 0.0
    %4187 = vmatprep.subr.mxu0 0.0
    %4188 = vmatpush1.msra.mxu0 0.0
    %4189 = vmatprep.subr.mxu0 0.0
    %4190 = vmatpush1.msra.mxu0 0.0
    %4191 = vmatprep.subr.mxu0 0.0
    %4192 = vmatpush1.msra.mxu0 0.0
    %4193 = vmatprep.subr.mxu0 0.0
    %4194 = vmatpush1.msra.mxu0 0.0
    %4195 = vmatprep.subr.mxu0 0.0
    %4196 = vmatpush1.msra.mxu0 0.0
    %4197 = vmatprep.subr.mxu0 0.0
    %4198 = vmatpush1.msra.mxu0 0.0
    %4199 = vmatprep.subr.mxu0 0.0
    %4200 = vmatpush1.msra.mxu0 0.0
    %4201 = vmatprep.subr.mxu0 0.0
    %4202 = vmatpush1.msra.mxu0 0.0
    %4203 = vmatprep.subr.mxu0 0.0
    %4204 = vmatpush1.msra.mxu0 0.0
    %4205 = vmatprep.subr.mxu0 0.0
    %4206 = vmatpush1.msra.mxu0 0.0
    %4207 = vmatprep.subr.mxu0 0.0
    %4208 = vmatpush1.msra.mxu0 0.0
    %4209 = vmatprep.subr.mxu0 0.0
    %4210 = vmatpush1.msra.mxu0 0.0
    %4211 = vmatprep.subr.mxu0 0.0
    %4212 = vmatpush1.msra.mxu0 0.0
    %4213 = vmatprep.subr.mxu0 0.0
    %4214 = vmatpush1.msra.mxu0 0.0
    %4215 = vmatprep.subr.mxu0 0.0
    %4216 = vmatpush1.msra.mxu0 0.0
    %4217 = vmatprep.subr.mxu0 0.0
    %4218 = vmatpush1.msra.mxu0 0.0
    %4219 = vmatprep.subr.mxu0 0.0
    %4220 = vmatpush1.msra.mxu0 0.0
    %4221 = vmatprep.subr.mxu0 0.0
    %4222 = vmatpush1.msra.mxu0 0.0
    %4223 = vmatprep.mubr.f32.mxu0 0.0
    %4224 = vmatmul.mubr.f32.gmra.mrb[0].mxu0 %v3944
    %v4225 = vpop.f32.mrb[0].mxu0
    %v4226 = vadd.f32 0.0, %v4225
    %v4227 = vpop.f32.mrb[0].mxu0
    %v4228 = vadd.f32 0.0, %v4227
    %4229 = vdwg.mxu0
    %v4230 = vrot.slane %v1877, 6
    %4231 = vrot.lane.b32.xlu0 %v4230, 32
    %v4232 = vpop.permute.xlu0 %4231
    %v4233 = vsel %vm244, %v4232, 0
    %4235 = vmatprep.subr.mxu0 %v3881
    %4236 = vmatpush1.msra.mxu0 %v3880
    %4237 = vmatprep.subr.mxu0 %v3889
    %4238 = vmatpush1.msra.mxu0 %v3888
    %4239 = vmatprep.subr.mxu0 %v3897
    %4240 = vmatpush1.msra.mxu0 %v3896
    %4241 = vmatprep.subr.mxu0 %v3905
    %4242 = vmatpush1.msra.mxu0 %v3904
    %4243 = vmatprep.subr.mxu0 0.0
    %4244 = vmatpush1.msra.mxu0 0.0
    %4245 = vmatprep.subr.mxu0 0.0
    %4246 = vmatpush1.msra.mxu0 0.0
    %4247 = vmatprep.subr.mxu0 0.0
    %4248 = vmatpush1.msra.mxu0 0.0
    %4249 = vmatprep.subr.mxu0 0.0
    %4250 = vmatpush1.msra.mxu0 0.0
    %4251 = vmatprep.subr.mxu0 0.0
    %4252 = vmatpush1.msra.mxu0 0.0
    %4253 = vmatprep.subr.mxu0 0.0
    %4254 = vmatpush1.msra.mxu0 0.0
    %4255 = vmatprep.subr.mxu0 0.0
    %4256 = vmatpush1.msra.mxu0 0.0
    %4257 = vmatprep.subr.mxu0 0.0
    %4258 = vmatpush1.msra.mxu0 0.0
    %4259 = vmatprep.subr.mxu0 0.0
    %4260 = vmatpush1.msra.mxu0 0.0
    %4261 = vmatprep.subr.mxu0 0.0
    %4262 = vmatpush1.msra.mxu0 0.0
    %4263 = vmatprep.subr.mxu0 0.0
    %4264 = vmatpush1.msra.mxu0 0.0
    %4265 = vmatprep.subr.mxu0 0.0
    %4266 = vmatpush1.msra.mxu0 0.0
    %4267 = vmatprep.subr.mxu0 0.0
    %4268 = vmatpush1.msra.mxu0 0.0
    %4269 = vmatprep.subr.mxu0 0.0
    %4270 = vmatpush1.msra.mxu0 0.0
    %4271 = vmatprep.subr.mxu0 0.0
    %4272 = vmatpush1.msra.mxu0 0.0
    %4273 = vmatprep.subr.mxu0 0.0
    %4274 = vmatpush1.msra.mxu0 0.0
    %4275 = vmatprep.subr.mxu0 0.0
    %4276 = vmatpush1.msra.mxu0 0.0
    %4277 = vmatprep.subr.mxu0 0.0
    %4278 = vmatpush1.msra.mxu0 0.0
    %4279 = vmatprep.subr.mxu0 0.0
    %4280 = vmatpush1.msra.mxu0 0.0
    %4281 = vmatprep.subr.mxu0 0.0
    %4282 = vmatpush1.msra.mxu0 0.0
    %4283 = vmatprep.subr.mxu0 0.0
    %4284 = vmatpush1.msra.mxu0 0.0
    %4285 = vmatprep.subr.mxu0 0.0
    %4286 = vmatpush1.msra.mxu0 0.0
    %4287 = vmatprep.subr.mxu0 0.0
    %4288 = vmatpush1.msra.mxu0 0.0
    %4289 = vmatprep.subr.mxu0 0.0
    %4290 = vmatpush1.msra.mxu0 0.0
    %4291 = vmatprep.subr.mxu0 0.0
    %4292 = vmatpush1.msra.mxu0 0.0
    %4293 = vmatprep.subr.mxu0 0.0
    %4294 = vmatpush1.msra.mxu0 0.0
    %4295 = vmatprep.subr.mxu0 0.0
    %4296 = vmatpush1.msra.mxu0 0.0
    %4297 = vmatprep.subr.mxu0 0.0
    %4298 = vmatpush1.msra.mxu0 0.0
    %4299 = vmatprep.mubr.f32.mxu0 0.0
    %4300 = vmatmul.mubr.f32.gmra.mrb[0].mxu0 %v4233
    %v4301 = vpop.f32.mrb[0].mxu0
    %v4302 = vadd.f32 %v4013, %v4301
    %v4303 = vpop.f32.mrb[0].mxu0
    %v4304 = vadd.f32 %v4015, %v4303
    %4305 = vdwg.mxu0
    %4306 = vmatprep.subr.mxu0 %v3883
    %4307 = vmatpush1.msra.mxu0 %v3882
    %4308 = vmatprep.subr.mxu0 %v3891
    %4309 = vmatpush1.msra.mxu0 %v3890
    %4310 = vmatprep.subr.mxu0 %v3899
    %4311 = vmatpush1.msra.mxu0 %v3898
    %4312 = vmatprep.subr.mxu0 %v3907
    %4313 = vmatpush1.msra.mxu0 %v3906
    %4314 = vmatprep.subr.mxu0 0.0
    %4315 = vmatpush1.msra.mxu0 0.0
    %4316 = vmatprep.subr.mxu0 0.0
    %4317 = vmatpush1.msra.mxu0 0.0
    %4318 = vmatprep.subr.mxu0 0.0
    %4319 = vmatpush1.msra.mxu0 0.0
    %4320 = vmatprep.subr.mxu0 0.0
    %4321 = vmatpush1.msra.mxu0 0.0
    %4322 = vmatprep.subr.mxu0 0.0
    %4323 = vmatpush1.msra.mxu0 0.0
    %4324 = vmatprep.subr.mxu0 0.0
    %4325 = vmatpush1.msra.mxu0 0.0
    %4326 = vmatprep.subr.mxu0 0.0
    %4327 = vmatpush1.msra.mxu0 0.0
    %4328 = vmatprep.subr.mxu0 0.0
    %4329 = vmatpush1.msra.mxu0 0.0
    %4330 = vmatprep.subr.mxu0 0.0
    %4331 = vmatpush1.msra.mxu0 0.0
    %4332 = vmatprep.subr.mxu0 0.0
    %4333 = vmatpush1.msra.mxu0 0.0
    %4334 = vmatprep.subr.mxu0 0.0
    %4335 = vmatpush1.msra.mxu0 0.0
    %4336 = vmatprep.subr.mxu0 0.0
    %4337 = vmatpush1.msra.mxu0 0.0
    %4338 = vmatprep.subr.mxu0 0.0
    %4339 = vmatpush1.msra.mxu0 0.0
    %4340 = vmatprep.subr.mxu0 0.0
    %4341 = vmatpush1.msra.mxu0 0.0
    %4342 = vmatprep.subr.mxu0 0.0
    %4343 = vmatpush1.msra.mxu0 0.0
    %4344 = vmatprep.subr.mxu0 0.0
    %4345 = vmatpush1.msra.mxu0 0.0
    %4346 = vmatprep.subr.mxu0 0.0
    %4347 = vmatpush1.msra.mxu0 0.0
    %4348 = vmatprep.subr.mxu0 0.0
    %4349 = vmatpush1.msra.mxu0 0.0
    %4350 = vmatprep.subr.mxu0 0.0
    %4351 = vmatpush1.msra.mxu0 0.0
    %4352 = vmatprep.subr.mxu0 0.0
    %4353 = vmatpush1.msra.mxu0 0.0
    %4354 = vmatprep.subr.mxu0 0.0
    %4355 = vmatpush1.msra.mxu0 0.0
    %4356 = vmatprep.subr.mxu0 0.0
    %4357 = vmatpush1.msra.mxu0 0.0
    %4358 = vmatprep.subr.mxu0 0.0
    %4359 = vmatpush1.msra.mxu0 0.0
    %4360 = vmatprep.subr.mxu0 0.0
    %4361 = vmatpush1.msra.mxu0 0.0
    %4362 = vmatprep.subr.mxu0 0.0
    %4363 = vmatpush1.msra.mxu0 0.0
    %4364 = vmatprep.subr.mxu0 0.0
    %4365 = vmatpush1.msra.mxu0 0.0
    %4366 = vmatprep.subr.mxu0 0.0
    %4367 = vmatpush1.msra.mxu0 0.0
    %4368 = vmatprep.subr.mxu0 0.0
    %4369 = vmatpush1.msra.mxu0 0.0
    %4370 = vmatprep.mubr.f32.mxu0 0.0
    %4371 = vmatmul.mubr.f32.gmra.mrb[0].mxu0 %v4233
    %v4372 = vpop.f32.mrb[0].mxu0
    %v4373 = vadd.f32 %v4084, %v4372
    %v4374 = vpop.f32.mrb[0].mxu0
    %v4375 = vadd.f32 %v4086, %v4374
    %4376 = vdwg.mxu0
    %4377 = vmatprep.subr.mxu0 %v3885
    %4378 = vmatpush1.msra.mxu0 %v3884
    %4379 = vmatprep.subr.mxu0 %v3893
    %4380 = vmatpush1.msra.mxu0 %v3892
    %4381 = vmatprep.subr.mxu0 %v3901
    %4382 = vmatpush1.msra.mxu0 %v3900
    %4383 = vmatprep.subr.mxu0 %v3909
    %4384 = vmatpush1.msra.mxu0 %v3908
    %4385 = vmatprep.subr.mxu0 0.0
    %4386 = vmatpush1.msra.mxu0 0.0
    %4387 = vmatprep.subr.mxu0 0.0
    %4388 = vmatpush1.msra.mxu0 0.0
    %4389 = vmatprep.subr.mxu0 0.0
    %4390 = vmatpush1.msra.mxu0 0.0
    %4391 = vmatprep.subr.mxu0 0.0
    %4392 = vmatpush1.msra.mxu0 0.0
    %4393 = vmatprep.subr.mxu0 0.0
    %4394 = vmatpush1.msra.mxu0 0.0
    %4395 = vmatprep.subr.mxu0 0.0
    %4396 = vmatpush1.msra.mxu0 0.0
    %4397 = vmatprep.subr.mxu0 0.0
    %4398 = vmatpush1.msra.mxu0 0.0
    %4399 = vmatprep.subr.mxu0 0.0
    %4400 = vmatpush1.msra.mxu0 0.0
    %4401 = vmatprep.subr.mxu0 0.0
    %4402 = vmatpush1.msra.mxu0 0.0
    %4403 = vmatprep.subr.mxu0 0.0
    %4404 = vmatpush1.msra.mxu0 0.0
    %4405 = vmatprep.subr.mxu0 0.0
    %4406 = vmatpush1.msra.mxu0 0.0
    %4407 = vmatprep.subr.mxu0 0.0
    %4408 = vmatpush1.msra.mxu0 0.0
    %4409 = vmatprep.subr.mxu0 0.0
    %4410 = vmatpush1.msra.mxu0 0.0
    %4411 = vmatprep.subr.mxu0 0.0
    %4412 = vmatpush1.msra.mxu0 0.0
    %4413 = vmatprep.subr.mxu0 0.0
    %4414 = vmatpush1.msra.mxu0 0.0
    %4415 = vmatprep.subr.mxu0 0.0
    %4416 = vmatpush1.msra.mxu0 0.0
    %4417 = vmatprep.subr.mxu0 0.0
    %4418 = vmatpush1.msra.mxu0 0.0
    %4419 = vmatprep.subr.mxu0 0.0
    %4420 = vmatpush1.msra.mxu0 0.0
    %4421 = vmatprep.subr.mxu0 0.0
    %4422 = vmatpush1.msra.mxu0 0.0
    %4423 = vmatprep.subr.mxu0 0.0
    %4424 = vmatpush1.msra.mxu0 0.0
    %4425 = vmatprep.subr.mxu0 0.0
    %4426 = vmatpush1.msra.mxu0 0.0
    %4427 = vmatprep.subr.mxu0 0.0
    %4428 = vmatpush1.msra.mxu0 0.0
    %4429 = vmatprep.subr.mxu0 0.0
    %4430 = vmatpush1.msra.mxu0 0.0
    %4431 = vmatprep.subr.mxu0 0.0
    %4432 = vmatpush1.msra.mxu0 0.0
    %4433 = vmatprep.subr.mxu0 0.0
    %4434 = vmatpush1.msra.mxu0 0.0
    %4435 = vmatprep.subr.mxu0 0.0
    %4436 = vmatpush1.msra.mxu0 0.0
    %4437 = vmatprep.subr.mxu0 0.0
    %4438 = vmatpush1.msra.mxu0 0.0
    %4439 = vmatprep.subr.mxu0 0.0
    %4440 = vmatpush1.msra.mxu0 0.0
    %4441 = vmatprep.mubr.f32.mxu0 0.0
    %4442 = vmatmul.mubr.f32.gmra.mrb[0].mxu0 %v4233
    %v4443 = vpop.f32.mrb[0].mxu0
    %v4444 = vadd.f32 %v4155, %v4443
    %v4445 = vpop.f32.mrb[0].mxu0
    %v4446 = vadd.f32 %v4157, %v4445
    %4447 = vdwg.mxu0
    %4448 = vmatprep.subr.mxu0 %v3887
    %4449 = vmatpush1.msra.mxu0 %v3886
    %4450 = vmatprep.subr.mxu0 %v3895
    %4451 = vmatpush1.msra.mxu0 %v3894
    %4452 = vmatprep.subr.mxu0 %v3903
    %4453 = vmatpush1.msra.mxu0 %v3902
    %4454 = vmatprep.subr.mxu0 %v3911
    %4455 = vmatpush1.msra.mxu0 %v3910
    %4456 = vmatprep.subr.mxu0 0.0
    %4457 = vmatpush1.msra.mxu0 0.0
    %4458 = vmatprep.subr.mxu0 0.0
    %4459 = vmatpush1.msra.mxu0 0.0
    %4460 = vmatprep.subr.mxu0 0.0
    %4461 = vmatpush1.msra.mxu0 0.0
    %4462 = vmatprep.subr.mxu0 0.0
    %4463 = vmatpush1.msra.mxu0 0.0
    %4464 = vmatprep.subr.mxu0 0.0
    %4465 = vmatpush1.msra.mxu0 0.0
    %4466 = vmatprep.subr.mxu0 0.0
    %4467 = vmatpush1.msra.mxu0 0.0
    %4468 = vmatprep.subr.mxu0 0.0
    %4469 = vmatpush1.msra.mxu0 0.0
    %4470 = vmatprep.subr.mxu0 0.0
    %4471 = vmatpush1.msra.mxu0 0.0
    %4472 = vmatprep.subr.mxu0 0.0
    %4473 = vmatpush1.msra.mxu0 0.0
    %4474 = vmatprep.subr.mxu0 0.0
    %4475 = vmatpush1.msra.mxu0 0.0
    %4476 = vmatprep.subr.mxu0 0.0
    %4477 = vmatpush1.msra.mxu0 0.0
    %4478 = vmatprep.subr.mxu0 0.0
    %4479 = vmatpush1.msra.mxu0 0.0
    %4480 = vmatprep.subr.mxu0 0.0
    %4481 = vmatpush1.msra.mxu0 0.0
    %4482 = vmatprep.subr.mxu0 0.0
    %4483 = vmatpush1.msra.mxu0 0.0
    %4484 = vmatprep.subr.mxu0 0.0
    %4485 = vmatpush1.msra.mxu0 0.0
    %4486 = vmatprep.subr.mxu0 0.0
    %4487 = vmatpush1.msra.mxu0 0.0
    %4488 = vmatprep.subr.mxu0 0.0
    %4489 = vmatpush1.msra.mxu0 0.0
    %4490 = vmatprep.subr.mxu0 0.0
    %4491 = vmatpush1.msra.mxu0 0.0
    %4492 = vmatprep.subr.mxu0 0.0
    %4493 = vmatpush1.msra.mxu0 0.0
    %4494 = vmatprep.subr.mxu0 0.0
    %4495 = vmatpush1.msra.mxu0 0.0
    %4496 = vmatprep.subr.mxu0 0.0
    %4497 = vmatpush1.msra.mxu0 0.0
    %4498 = vmatprep.subr.mxu0 0.0
    %4499 = vmatpush1.msra.mxu0 0.0
    %4500 = vmatprep.subr.mxu0 0.0
    %4501 = vmatpush1.msra.mxu0 0.0
    %4502 = vmatprep.subr.mxu0 0.0
    %4503 = vmatpush1.msra.mxu0 0.0
    %4504 = vmatprep.subr.mxu0 0.0
    %4505 = vmatpush1.msra.mxu0 0.0
    %4506 = vmatprep.subr.mxu0 0.0
    %4507 = vmatpush1.msra.mxu0 0.0
    %4508 = vmatprep.subr.mxu0 0.0
    %4509 = vmatpush1.msra.mxu0 0.0
    %4510 = vmatprep.subr.mxu0 0.0
    %4511 = vmatpush1.msra.mxu0 0.0
    %4512 = vmatprep.mubr.f32.mxu0 0.0
    %4513 = vmatmul.mubr.f32.gmra.mrb[0].mxu0 %v4233
    %v4514 = vpop.f32.mrb[0].mxu0
    %v4515 = vadd.f32 %v4226, %v4514
    %v4516 = vpop.f32.mrb[0].mxu0
    %v4517 = vadd.f32 %v4228, %v4516
    %4518 = vdwg.mxu0
    %v4519 = vld [vmem:[#allocation15 + $0x200] sm:$0xff]
    %v4520 = vld [vmem:[#allocation15 + $0x208] sm:$0xff]
    %v4521 = vld [vmem:[#allocation15 + $0x210] sm:$0xff]
    %v4522 = vld [vmem:[#allocation15 + $0x218] sm:$0xff]
    %v4523 = vld [vmem:[#allocation15 + $0x220] sm:$0xff]
    %v4524 = vld [vmem:[#allocation15 + $0x228] sm:$0xff]
    %v4525 = vld [vmem:[#allocation15 + $0x230] sm:$0xff]
    %v4526 = vld [vmem:[#allocation15 + $0x238] sm:$0xff]
    %v4527 = vld [vmem:[#allocation15 + $0x240] sm:$0xff]
    %v4528 = vld [vmem:[#allocation15 + $0x248] sm:$0xff]
    %v4529 = vld [vmem:[#allocation15 + $0x250] sm:$0xff]
    %v4530 = vld [vmem:[#allocation15 + $0x258] sm:$0xff]
    %v4531 = vld [vmem:[#allocation15 + $0x260] sm:$0xff]
    %v4532 = vld [vmem:[#allocation15 + $0x268] sm:$0xff]
    %v4533 = vld [vmem:[#allocation15 + $0x270] sm:$0xff]
    %v4534 = vld [vmem:[#allocation15 + $0x278] sm:$0xff]
    %v4535 = vld [vmem:[#allocation15 + $0x280] sm:$0xff]
    %v4536 = vld [vmem:[#allocation15 + $0x288] sm:$0xff]
    %v4537 = vld [vmem:[#allocation15 + $0x290] sm:$0xff]
    %v4538 = vld [vmem:[#allocation15 + $0x298] sm:$0xff]
    %v4539 = vld [vmem:[#allocation15 + $0x2a0] sm:$0xff]
    %v4540 = vld [vmem:[#allocation15 + $0x2a8] sm:$0xff]
    %v4541 = vld [vmem:[#allocation15 + $0x2b0] sm:$0xff]
    %v4542 = vld [vmem:[#allocation15 + $0x2b8] sm:$0xff]
    %v4543 = vld [vmem:[#allocation15 + $0x2c0] sm:$0xff]
    %v4544 = vld [vmem:[#allocation15 + $0x2c8] sm:$0xff]
    %v4545 = vld [vmem:[#allocation15 + $0x2d0] sm:$0xff]
    %v4546 = vld [vmem:[#allocation15 + $0x2d8] sm:$0xff]
    %v4547 = vld [vmem:[#allocation15 + $0x2e0] sm:$0xff]
    %v4548 = vld [vmem:[#allocation15 + $0x2e8] sm:$0xff]
    %v4549 = vld [vmem:[#allocation15 + $0x2f0] sm:$0xff]
    %v4550 = vld [vmem:[#allocation15 + $0x2f8] sm:$0xff]
    %v4552 = vrot.slane %v3775, 6
    %4553 = vrot.lane.b32.xlu0 %v4552, 32
    %v4554 = vpop.permute.xlu0 %4553
    %v4555 = vsel %vm244, %v4554, 0
    %4557 = vmatprep.subr.mxu0 %v4520
    %4558 = vmatpush1.msra.mxu0 %v4519
    %4559 = vmatprep.subr.mxu0 %v4528
    %4560 = vmatpush1.msra.mxu0 %v4527
    %4561 = vmatprep.subr.mxu0 %v4536
    %4562 = vmatpush1.msra.mxu0 %v4535
    %4563 = vmatprep.subr.mxu0 %v4544
    %4564 = vmatpush1.msra.mxu0 %v4543
    %4565 = vmatprep.subr.mxu0 0.0
    %4566 = vmatpush1.msra.mxu0 0.0
    %4567 = vmatprep.subr.mxu0 0.0
    %4568 = vmatpush1.msra.mxu0 0.0
    %4569 = vmatprep.subr.mxu0 0.0
    %4570 = vmatpush1.msra.mxu0 0.0
    %4571 = vmatprep.subr.mxu0 0.0
    %4572 = vmatpush1.msra.mxu0 0.0
    %4573 = vmatprep.subr.mxu0 0.0
    %4574 = vmatpush1.msra.mxu0 0.0
    %4575 = vmatprep.subr.mxu0 0.0
    %4576 = vmatpush1.msra.mxu0 0.0
    %4577 = vmatprep.subr.mxu0 0.0
    %4578 = vmatpush1.msra.mxu0 0.0
    %4579 = vmatprep.subr.mxu0 0.0
    %4580 = vmatpush1.msra.mxu0 0.0
    %4581 = vmatprep.subr.mxu0 0.0
    %4582 = vmatpush1.msra.mxu0 0.0
    %4583 = vmatprep.subr.mxu0 0.0
    %4584 = vmatpush1.msra.mxu0 0.0
    %4585 = vmatprep.subr.mxu0 0.0
    %4586 = vmatpush1.msra.mxu0 0.0
    %4587 = vmatprep.subr.mxu0 0.0
    %4588 = vmatpush1.msra.mxu0 0.0
    %4589 = vmatprep.subr.mxu0 0.0
    %4590 = vmatpush1.msra.mxu0 0.0
    %4591 = vmatprep.subr.mxu0 0.0
    %4592 = vmatpush1.msra.mxu0 0.0
    %4593 = vmatprep.subr.mxu0 0.0
    %4594 = vmatpush1.msra.mxu0 0.0
    %4595 = vmatprep.subr.mxu0 0.0
    %4596 = vmatpush1.msra.mxu0 0.0
    %4597 = vmatprep.subr.mxu0 0.0
    %4598 = vmatpush1.msra.mxu0 0.0
    %4599 = vmatprep.subr.mxu0 0.0
    %4600 = vmatpush1.msra.mxu0 0.0
    %4601 = vmatprep.subr.mxu0 0.0
    %4602 = vmatpush1.msra.mxu0 0.0
    %4603 = vmatprep.subr.mxu0 0.0
    %4604 = vmatpush1.msra.mxu0 0.0
    %4605 = vmatprep.subr.mxu0 0.0
    %4606 = vmatpush1.msra.mxu0 0.0
    %4607 = vmatprep.subr.mxu0 0.0
    %4608 = vmatpush1.msra.mxu0 0.0
    %4609 = vmatprep.subr.mxu0 0.0
    %4610 = vmatpush1.msra.mxu0 0.0
    %4611 = vmatprep.subr.mxu0 0.0
    %4612 = vmatpush1.msra.mxu0 0.0
    %4613 = vmatprep.subr.mxu0 0.0
    %4614 = vmatpush1.msra.mxu0 0.0
    %4615 = vmatprep.subr.mxu0 0.0
    %4616 = vmatpush1.msra.mxu0 0.0
    %4617 = vmatprep.subr.mxu0 0.0
    %4618 = vmatpush1.msra.mxu0 0.0
    %4619 = vmatprep.subr.mxu0 0.0
    %4620 = vmatpush1.msra.mxu0 0.0
    %4621 = vmatprep.mubr.f32.mxu0 0.0
    %4622 = vmatmul.mubr.f32.gmra.mrb[0].mxu0 %v4555
    %v4623 = vpop.f32.mrb[0].mxu0
    %v4624 = vadd.f32 0.0, %v4623
    %v4625 = vpop.f32.mrb[0].mxu0
    %v4626 = vadd.f32 0.0, %v4625
    %4627 = vdwg.mxu0
    %4628 = vmatprep.subr.mxu0 %v4522
    %4629 = vmatpush1.msra.mxu0 %v4521
    %4630 = vmatprep.subr.mxu0 %v4530
    %4631 = vmatpush1.msra.mxu0 %v4529
    %4632 = vmatprep.subr.mxu0 %v4538
    %4633 = vmatpush1.msra.mxu0 %v4537
    %4634 = vmatprep.subr.mxu0 %v4546
    %4635 = vmatpush1.msra.mxu0 %v4545
    %4636 = vmatprep.subr.mxu0 0.0
    %4637 = vmatpush1.msra.mxu0 0.0
    %4638 = vmatprep.subr.mxu0 0.0
    %4639 = vmatpush1.msra.mxu0 0.0
    %4640 = vmatprep.subr.mxu0 0.0
    %4641 = vmatpush1.msra.mxu0 0.0
    %4642 = vmatprep.subr.mxu0 0.0
    %4643 = vmatpush1.msra.mxu0 0.0
    %4644 = vmatprep.subr.mxu0 0.0
    %4645 = vmatpush1.msra.mxu0 0.0
    %4646 = vmatprep.subr.mxu0 0.0
    %4647 = vmatpush1.msra.mxu0 0.0
    %4648 = vmatprep.subr.mxu0 0.0
    %4649 = vmatpush1.msra.mxu0 0.0
    %4650 = vmatprep.subr.mxu0 0.0
    %4651 = vmatpush1.msra.mxu0 0.0
    %4652 = vmatprep.subr.mxu0 0.0
    %4653 = vmatpush1.msra.mxu0 0.0
    %4654 = vmatprep.subr.mxu0 0.0
    %4655 = vmatpush1.msra.mxu0 0.0
    %4656 = vmatprep.subr.mxu0 0.0
    %4657 = vmatpush1.msra.mxu0 0.0
    %4658 = vmatprep.subr.mxu0 0.0
    %4659 = vmatpush1.msra.mxu0 0.0
    %4660 = vmatprep.subr.mxu0 0.0
    %4661 = vmatpush1.msra.mxu0 0.0
    %4662 = vmatprep.subr.mxu0 0.0
    %4663 = vmatpush1.msra.mxu0 0.0
    %4664 = vmatprep.subr.mxu0 0.0
    %4665 = vmatpush1.msra.mxu0 0.0
    %4666 = vmatprep.subr.mxu0 0.0
    %4667 = vmatpush1.msra.mxu0 0.0
    %4668 = vmatprep.subr.mxu0 0.0
    %4669 = vmatpush1.msra.mxu0 0.0
    %4670 = vmatprep.subr.mxu0 0.0
    %4671 = vmatpush1.msra.mxu0 0.0
    %4672 = vmatprep.subr.mxu0 0.0
    %4673 = vmatpush1.msra.mxu0 0.0
    %4674 = vmatprep.subr.mxu0 0.0
    %4675 = vmatpush1.msra.mxu0 0.0
    %4676 = vmatprep.subr.mxu0 0.0
    %4677 = vmatpush1.msra.mxu0 0.0
    %4678 = vmatprep.subr.mxu0 0.0
    %4679 = vmatpush1.msra.mxu0 0.0
    %4680 = vmatprep.subr.mxu0 0.0
    %4681 = vmatpush1.msra.mxu0 0.0
    %4682 = vmatprep.subr.mxu0 0.0
    %4683 = vmatpush1.msra.mxu0 0.0
    %4684 = vmatprep.subr.mxu0 0.0
    %4685 = vmatpush1.msra.mxu0 0.0
    %4686 = vmatprep.subr.mxu0 0.0
    %4687 = vmatpush1.msra.mxu0 0.0
    %4688 = vmatprep.subr.mxu0 0.0
    %4689 = vmatpush1.msra.mxu0 0.0
    %4690 = vmatprep.subr.mxu0 0.0
    %4691 = vmatpush1.msra.mxu0 0.0
    %4692 = vmatprep.mubr.f32.mxu0 0.0
    %4693 = vmatmul.mubr.f32.gmra.mrb[0].mxu0 %v4555
    %v4694 = vpop.f32.mrb[0].mxu0
    %v4695 = vadd.f32 0.0, %v4694
    %v4696 = vpop.f32.mrb[0].mxu0
    %v4697 = vadd.f32 0.0, %v4696
    %4698 = vdwg.mxu0
    %4699 = vmatprep.subr.mxu0 %v4524
    %4700 = vmatpush1.msra.mxu0 %v4523
    %4701 = vmatprep.subr.mxu0 %v4532
    %4702 = vmatpush1.msra.mxu0 %v4531
    %4703 = vmatprep.subr.mxu0 %v4540
    %4704 = vmatpush1.msra.mxu0 %v4539
    %4705 = vmatprep.subr.mxu0 %v4548
    %4706 = vmatpush1.msra.mxu0 %v4547
    %4707 = vmatprep.subr.mxu0 0.0
    %4708 = vmatpush1.msra.mxu0 0.0
    %4709 = vmatprep.subr.mxu0 0.0
    %4710 = vmatpush1.msra.mxu0 0.0
    %4711 = vmatprep.subr.mxu0 0.0
    %4712 = vmatpush1.msra.mxu0 0.0
    %4713 = vmatprep.subr.mxu0 0.0
    %4714 = vmatpush1.msra.mxu0 0.0
    %4715 = vmatprep.subr.mxu0 0.0
    %4716 = vmatpush1.msra.mxu0 0.0
    %4717 = vmatprep.subr.mxu0 0.0
    %4718 = vmatpush1.msra.mxu0 0.0
    %4719 = vmatprep.subr.mxu0 0.0
    %4720 = vmatpush1.msra.mxu0 0.0
    %4721 = vmatprep.subr.mxu0 0.0
    %4722 = vmatpush1.msra.mxu0 0.0
    %4723 = vmatprep.subr.mxu0 0.0
    %4724 = vmatpush1.msra.mxu0 0.0
    %4725 = vmatprep.subr.mxu0 0.0
    %4726 = vmatpush1.msra.mxu0 0.0
    %4727 = vmatprep.subr.mxu0 0.0
    %4728 = vmatpush1.msra.mxu0 0.0
    %4729 = vmatprep.subr.mxu0 0.0
    %4730 = vmatpush1.msra.mxu0 0.0
    %4731 = vmatprep.subr.mxu0 0.0
    %4732 = vmatpush1.msra.mxu0 0.0
    %4733 = vmatprep.subr.mxu0 0.0
    %4734 = vmatpush1.msra.mxu0 0.0
    %4735 = vmatprep.subr.mxu0 0.0
    %4736 = vmatpush1.msra.mxu0 0.0
    %4737 = vmatprep.subr.mxu0 0.0
    %4738 = vmatpush1.msra.mxu0 0.0
    %4739 = vmatprep.subr.mxu0 0.0
    %4740 = vmatpush1.msra.mxu0 0.0
    %4741 = vmatprep.subr.mxu0 0.0
    %4742 = vmatpush1.msra.mxu0 0.0
    %4743 = vmatprep.subr.mxu0 0.0
    %4744 = vmatpush1.msra.mxu0 0.0
    %4745 = vmatprep.subr.mxu0 0.0
    %4746 = vmatpush1.msra.mxu0 0.0
    %4747 = vmatprep.subr.mxu0 0.0
    %4748 = vmatpush1.msra.mxu0 0.0
    %4749 = vmatprep.subr.mxu0 0.0
    %4750 = vmatpush1.msra.mxu0 0.0
    %4751 = vmatprep.subr.mxu0 0.0
    %4752 = vmatpush1.msra.mxu0 0.0
    %4753 = vmatprep.subr.mxu0 0.0
    %4754 = vmatpush1.msra.mxu0 0.0
    %4755 = vmatprep.subr.mxu0 0.0
    %4756 = vmatpush1.msra.mxu0 0.0
    %4757 = vmatprep.subr.mxu0 0.0
    %4758 = vmatpush1.msra.mxu0 0.0
    %4759 = vmatprep.subr.mxu0 0.0
    %4760 = vmatpush1.msra.mxu0 0.0
    %4761 = vmatprep.subr.mxu0 0.0
    %4762 = vmatpush1.msra.mxu0 0.0
    %4763 = vmatprep.mubr.f32.mxu0 0.0
    %4764 = vmatmul.mubr.f32.gmra.mrb[0].mxu0 %v4555
    %v4765 = vpop.f32.mrb[0].mxu0
    %v4766 = vadd.f32 0.0, %v4765
    %v4767 = vpop.f32.mrb[0].mxu0
    %v4768 = vadd.f32 0.0, %v4767
    %4769 = vdwg.mxu0
    %4770 = vmatprep.subr.mxu0 %v4526
    %4771 = vmatpush1.msra.mxu0 %v4525
    %4772 = vmatprep.subr.mxu0 %v4534
    %4773 = vmatpush1.msra.mxu0 %v4533
    %4774 = vmatprep.subr.mxu0 %v4542
    %4775 = vmatpush1.msra.mxu0 %v4541
    %4776 = vmatprep.subr.mxu0 %v4550
    %4777 = vmatpush1.msra.mxu0 %v4549
    %4778 = vmatprep.subr.mxu0 0.0
    %4779 = vmatpush1.msra.mxu0 0.0
    %4780 = vmatprep.subr.mxu0 0.0
    %4781 = vmatpush1.msra.mxu0 0.0
    %4782 = vmatprep.subr.mxu0 0.0
    %4783 = vmatpush1.msra.mxu0 0.0
    %4784 = vmatprep.subr.mxu0 0.0
    %4785 = vmatpush1.msra.mxu0 0.0
    %4786 = vmatprep.subr.mxu0 0.0
    %4787 = vmatpush1.msra.mxu0 0.0
    %4788 = vmatprep.subr.mxu0 0.0
    %4789 = vmatpush1.msra.mxu0 0.0
    %4790 = vmatprep.subr.mxu0 0.0
    %4791 = vmatpush1.msra.mxu0 0.0
    %4792 = vmatprep.subr.mxu0 0.0
    %4793 = vmatpush1.msra.mxu0 0.0
    %4794 = vmatprep.subr.mxu0 0.0
    %4795 = vmatpush1.msra.mxu0 0.0
    %4796 = vmatprep.subr.mxu0 0.0
    %4797 = vmatpush1.msra.mxu0 0.0
    %4798 = vmatprep.subr.mxu0 0.0
    %4799 = vmatpush1.msra.mxu0 0.0
    %4800 = vmatprep.subr.mxu0 0.0
    %4801 = vmatpush1.msra.mxu0 0.0
    %4802 = vmatprep.subr.mxu0 0.0
    %4803 = vmatpush1.msra.mxu0 0.0
    %4804 = vmatprep.subr.mxu0 0.0
    %4805 = vmatpush1.msra.mxu0 0.0
    %4806 = vmatprep.subr.mxu0 0.0
    %4807 = vmatpush1.msra.mxu0 0.0
    %4808 = vmatprep.subr.mxu0 0.0
    %4809 = vmatpush1.msra.mxu0 0.0
    %4810 = vmatprep.subr.mxu0 0.0
    %4811 = vmatpush1.msra.mxu0 0.0
    %4812 = vmatprep.subr.mxu0 0.0
    %4813 = vmatpush1.msra.mxu0 0.0
    %4814 = vmatprep.subr.mxu0 0.0
    %4815 = vmatpush1.msra.mxu0 0.0
    %4816 = vmatprep.subr.mxu0 0.0
    %4817 = vmatpush1.msra.mxu0 0.0
    %4818 = vmatprep.subr.mxu0 0.0
    %4819 = vmatpush1.msra.mxu0 0.0
    %4820 = vmatprep.subr.mxu0 0.0
    %4821 = vmatpush1.msra.mxu0 0.0
    %4822 = vmatprep.subr.mxu0 0.0
    %4823 = vmatpush1.msra.mxu0 0.0
    %4824 = vmatprep.subr.mxu0 0.0
    %4825 = vmatpush1.msra.mxu0 0.0
    %4826 = vmatprep.subr.mxu0 0.0
    %4827 = vmatpush1.msra.mxu0 0.0
    %4828 = vmatprep.subr.mxu0 0.0
    %4829 = vmatpush1.msra.mxu0 0.0
    %4830 = vmatprep.subr.mxu0 0.0
    %4831 = vmatpush1.msra.mxu0 0.0
    %4832 = vmatprep.subr.mxu0 0.0
    %4833 = vmatpush1.msra.mxu0 0.0
    %4834 = vmatprep.mubr.f32.mxu0 0.0
    %4835 = vmatmul.mubr.f32.gmra.mrb[0].mxu0 %v4555
    %v4836 = vpop.f32.mrb[0].mxu0
    %v4837 = vadd.f32 0.0, %v4836
    %v4838 = vpop.f32.mrb[0].mxu0
    %v4839 = vadd.f32 0.0, %v4838
    %4840 = vdwg.mxu0
    %v4841 = vadd.f32 %v4302, %v4624
    %v4842 = vadd.f32 %v4304, %v4626
    %v4843 = vadd.f32 %v4373, %v4695
    %v4844 = vadd.f32 %v4375, %v4697
    %v4845 = vadd.f32 %v4444, %v4766
    %v4846 = vadd.f32 %v4446, %v4768
    %v4847 = vadd.f32 %v4515, %v4837
    %v4848 = vadd.f32 %v4517, %v4839
    %v4849 = vld [vmem:[#allocation15 + $0x300] sm:$0xff]
    %v4850 = vld [vmem:[#allocation15 + $0x308] sm:$0xff]
    %v4851 = vld [vmem:[#allocation15 + $0x310] sm:$0xff]
    %v4852 = vld [vmem:[#allocation15 + $0x318] sm:$0xff]
    %v4853 = vld [vmem:[#allocation15 + $0x320] sm:$0xff]
    %v4854 = vld [vmem:[#allocation15 + $0x328] sm:$0xff]
    %v4855 = vld [vmem:[#allocation15 + $0x330] sm:$0xff]
    %v4856 = vld [vmem:[#allocation15 + $0x338] sm:$0xff]
    %v4857 = vld [vmem:[#allocation15 + $0x340] sm:$0xff]
    %v4858 = vld [vmem:[#allocation15 + $0x348] sm:$0xff]
    %v4859 = vld [vmem:[#allocation15 + $0x350] sm:$0xff]
    %v4860 = vld [vmem:[#allocation15 + $0x358] sm:$0xff]
    %v4861 = vld [vmem:[#allocation15 + $0x360] sm:$0xff]
    %v4862 = vld [vmem:[#allocation15 + $0x368] sm:$0xff]
    %v4863 = vld [vmem:[#allocation15 + $0x370] sm:$0xff]
    %v4864 = vld [vmem:[#allocation15 + $0x378] sm:$0xff]
    %v4865 = vld [vmem:[#allocation15 + $0x380] sm:$0xff]
    %v4866 = vld [vmem:[#allocation15 + $0x388] sm:$0xff]
    %v4867 = vld [vmem:[#allocation15 + $0x390] sm:$0xff]
    %v4868 = vld [vmem:[#allocation15 + $0x398] sm:$0xff]
    %v4869 = vld [vmem:[#allocation15 + $0x3a0] sm:$0xff]
    %v4870 = vld [vmem:[#allocation15 + $0x3a8] sm:$0xff]
    %v4871 = vld [vmem:[#allocation15 + $0x3b0] sm:$0xff]
    %v4872 = vld [vmem:[#allocation15 + $0x3b8] sm:$0xff]
    %v4873 = vld [vmem:[#allocation15 + $0x3c0] sm:$0xff]
    %v4874 = vld [vmem:[#allocation15 + $0x3c8] sm:$0xff]
    %v4875 = vld [vmem:[#allocation15 + $0x3d0] sm:$0xff]
    %v4876 = vld [vmem:[#allocation15 + $0x3d8] sm:$0xff]
    %v4877 = vld [vmem:[#allocation15 + $0x3e0] sm:$0xff]
    %v4878 = vld [vmem:[#allocation15 + $0x3e8] sm:$0xff]
    %v4879 = vld [vmem:[#allocation15 + $0x3f0] sm:$0xff]
    %v4880 = vld [vmem:[#allocation15 + $0x3f8] sm:$0xff]
    %4882 = vrot.lane.b32.xlu0 %v3879, 32
    %v4883 = vpop.permute.xlu0 %4882
    %v4884 = vsel %vm244, %v4883, 0
    %4886 = vmatprep.subr.mxu0 %v4850
    %4887 = vmatpush1.msra.mxu0 %v4849
    %4888 = vmatprep.subr.mxu0 %v4858
    %4889 = vmatpush1.msra.mxu0 %v4857
    %4890 = vmatprep.subr.mxu0 %v4866
    %4891 = vmatpush1.msra.mxu0 %v4865
    %4892 = vmatprep.subr.mxu0 %v4874
    %4893 = vmatpush1.msra.mxu0 %v4873
    %4894 = vmatprep.subr.mxu0 0.0
    %4895 = vmatpush1.msra.mxu0 0.0
    %4896 = vmatprep.subr.mxu0 0.0
    %4897 = vmatpush1.msra.mxu0 0.0
    %4898 = vmatprep.subr.mxu0 0.0
    %4899 = vmatpush1.msra.mxu0 0.0
    %4900 = vmatprep.subr.mxu0 0.0
    %4901 = vmatpush1.msra.mxu0 0.0
    %4902 = vmatprep.subr.mxu0 0.0
    %4903 = vmatpush1.msra.mxu0 0.0
    %4904 = vmatprep.subr.mxu0 0.0
    %4905 = vmatpush1.msra.mxu0 0.0
    %4906 = vmatprep.subr.mxu0 0.0
    %4907 = vmatpush1.msra.mxu0 0.0
    %4908 = vmatprep.subr.mxu0 0.0
    %4909 = vmatpush1.msra.mxu0 0.0
    %4910 = vmatprep.subr.mxu0 0.0
    %4911 = vmatpush1.msra.mxu0 0.0
    %4912 = vmatprep.subr.mxu0 0.0
    %4913 = vmatpush1.msra.mxu0 0.0
    %4914 = vmatprep.subr.mxu0 0.0
    %4915 = vmatpush1.msra.mxu0 0.0
    %4916 = vmatprep.subr.mxu0 0.0
    %4917 = vmatpush1.msra.mxu0 0.0
    %4918 = vmatprep.subr.mxu0 0.0
    %4919 = vmatpush1.msra.mxu0 0.0
    %4920 = vmatprep.subr.mxu0 0.0
    %4921 = vmatpush1.msra.mxu0 0.0
    %4922 = vmatprep.subr.mxu0 0.0
    %4923 = vmatpush1.msra.mxu0 0.0
    %4924 = vmatprep.subr.mxu0 0.0
    %4925 = vmatpush1.msra.mxu0 0.0
    %4926 = vmatprep.subr.mxu0 0.0
    %4927 = vmatpush1.msra.mxu0 0.0
    %4928 = vmatprep.subr.mxu0 0.0
    %4929 = vmatpush1.msra.mxu0 0.0
    %4930 = vmatprep.subr.mxu0 0.0
    %4931 = vmatpush1.msra.mxu0 0.0
    %4932 = vmatprep.subr.mxu0 0.0
    %4933 = vmatpush1.msra.mxu0 0.0
    %4934 = vmatprep.subr.mxu0 0.0
    %4935 = vmatpush1.msra.mxu0 0.0
    %4936 = vmatprep.subr.mxu0 0.0
    %4937 = vmatpush1.msra.mxu0 0.0
    %4938 = vmatprep.subr.mxu0 0.0
    %4939 = vmatpush1.msra.mxu0 0.0
    %4940 = vmatprep.subr.mxu0 0.0
    %4941 = vmatpush1.msra.mxu0 0.0
    %4942 = vmatprep.subr.mxu0 0.0
    %4943 = vmatpush1.msra.mxu0 0.0
    %4944 = vmatprep.subr.mxu0 0.0
    %4945 = vmatpush1.msra.mxu0 0.0
    %4946 = vmatprep.subr.mxu0 0.0
    %4947 = vmatpush1.msra.mxu0 0.0
    %4948 = vmatprep.subr.mxu0 0.0
    %4949 = vmatpush1.msra.mxu0 0.0
    %4950 = vmatprep.mubr.f32.mxu0 0.0
    %4951 = vmatmul.mubr.f32.gmra.mrb[0].mxu0 %v4884
    %v4952 = vpop.f32.mrb[0].mxu0
    %v4953 = vadd.f32 0.0, %v4952
    %v4954 = vpop.f32.mrb[0].mxu0
    %v4955 = vadd.f32 0.0, %v4954
    %4956 = vdwg.mxu0
    %4957 = vmatprep.subr.mxu0 %v4852
    %4958 = vmatpush1.msra.mxu0 %v4851
    %4959 = vmatprep.subr.mxu0 %v4860
    %4960 = vmatpush1.msra.mxu0 %v4859
    %4961 = vmatprep.subr.mxu0 %v4868
    %4962 = vmatpush1.msra.mxu0 %v4867
    %4963 = vmatprep.subr.mxu0 %v4876
    %4964 = vmatpush1.msra.mxu0 %v4875
    %4965 = vmatprep.subr.mxu0 0.0
    %4966 = vmatpush1.msra.mxu0 0.0
    %4967 = vmatprep.subr.mxu0 0.0
    %4968 = vmatpush1.msra.mxu0 0.0
    %4969 = vmatprep.subr.mxu0 0.0
    %4970 = vmatpush1.msra.mxu0 0.0
    %4971 = vmatprep.subr.mxu0 0.0
    %4972 = vmatpush1.msra.mxu0 0.0
    %4973 = vmatprep.subr.mxu0 0.0
    %4974 = vmatpush1.msra.mxu0 0.0
    %4975 = vmatprep.subr.mxu0 0.0
    %4976 = vmatpush1.msra.mxu0 0.0
    %4977 = vmatprep.subr.mxu0 0.0
    %4978 = vmatpush1.msra.mxu0 0.0
    %4979 = vmatprep.subr.mxu0 0.0
    %4980 = vmatpush1.msra.mxu0 0.0
    %4981 = vmatprep.subr.mxu0 0.0
    %4982 = vmatpush1.msra.mxu0 0.0
    %4983 = vmatprep.subr.mxu0 0.0
    %4984 = vmatpush1.msra.mxu0 0.0
    %4985 = vmatprep.subr.mxu0 0.0
    %4986 = vmatpush1.msra.mxu0 0.0
    %4987 = vmatprep.subr.mxu0 0.0
    %4988 = vmatpush1.msra.mxu0 0.0
    %4989 = vmatprep.subr.mxu0 0.0
    %4990 = vmatpush1.msra.mxu0 0.0
    %4991 = vmatprep.subr.mxu0 0.0
    %4992 = vmatpush1.msra.mxu0 0.0
    %4993 = vmatprep.subr.mxu0 0.0
    %4994 = vmatpush1.msra.mxu0 0.0
    %4995 = vmatprep.subr.mxu0 0.0
    %4996 = vmatpush1.msra.mxu0 0.0
    %4997 = vmatprep.subr.mxu0 0.0
    %4998 = vmatpush1.msra.mxu0 0.0
    %4999 = vmatprep.subr.mxu0 0.0
    %5000 = vmatpush1.msra.mxu0 0.0
    %5001 = vmatprep.subr.mxu0 0.0
    %5002 = vmatpush1.msra.mxu0 0.0
    %5003 = vmatprep.subr.mxu0 0.0
    %5004 = vmatpush1.msra.mxu0 0.0
    %5005 = vmatprep.subr.mxu0 0.0
    %5006 = vmatpush1.msra.mxu0 0.0
    %5007 = vmatprep.subr.mxu0 0.0
    %5008 = vmatpush1.msra.mxu0 0.0
    %5009 = vmatprep.subr.mxu0 0.0
    %5010 = vmatpush1.msra.mxu0 0.0
    %5011 = vmatprep.subr.mxu0 0.0
    %5012 = vmatpush1.msra.mxu0 0.0
    %5013 = vmatprep.subr.mxu0 0.0
    %5014 = vmatpush1.msra.mxu0 0.0
    %5015 = vmatprep.subr.mxu0 0.0
    %5016 = vmatpush1.msra.mxu0 0.0
    %5017 = vmatprep.subr.mxu0 0.0
    %5018 = vmatpush1.msra.mxu0 0.0
    %5019 = vmatprep.subr.mxu0 0.0
    %5020 = vmatpush1.msra.mxu0 0.0
    %5021 = vmatprep.mubr.f32.mxu0 0.0
    %5022 = vmatmul.mubr.f32.gmra.mrb[0].mxu0 %v4884
    %v5023 = vpop.f32.mrb[0].mxu0
    %v5024 = vadd.f32 0.0, %v5023
    %v5025 = vpop.f32.mrb[0].mxu0
    %v5026 = vadd.f32 0.0, %v5025
    %5027 = vdwg.mxu0
    %5028 = vmatprep.subr.mxu0 %v4854
    %5029 = vmatpush1.msra.mxu0 %v4853
    %5030 = vmatprep.subr.mxu0 %v4862
    %5031 = vmatpush1.msra.mxu0 %v4861
    %5032 = vmatprep.subr.mxu0 %v4870
    %5033 = vmatpush1.msra.mxu0 %v4869
    %5034 = vmatprep.subr.mxu0 %v4878
    %5035 = vmatpush1.msra.mxu0 %v4877
    %5036 = vmatprep.subr.mxu0 0.0
    %5037 = vmatpush1.msra.mxu0 0.0
    %5038 = vmatprep.subr.mxu0 0.0
    %5039 = vmatpush1.msra.mxu0 0.0
    %5040 = vmatprep.subr.mxu0 0.0
    %5041 = vmatpush1.msra.mxu0 0.0
    %5042 = vmatprep.subr.mxu0 0.0
    %5043 = vmatpush1.msra.mxu0 0.0
    %5044 = vmatprep.subr.mxu0 0.0
    %5045 = vmatpush1.msra.mxu0 0.0
    %5046 = vmatprep.subr.mxu0 0.0
    %5047 = vmatpush1.msra.mxu0 0.0
    %5048 = vmatprep.subr.mxu0 0.0
    %5049 = vmatpush1.msra.mxu0 0.0
    %5050 = vmatprep.subr.mxu0 0.0
    %5051 = vmatpush1.msra.mxu0 0.0
    %5052 = vmatprep.subr.mxu0 0.0
    %5053 = vmatpush1.msra.mxu0 0.0
    %5054 = vmatprep.subr.mxu0 0.0
    %5055 = vmatpush1.msra.mxu0 0.0
    %5056 = vmatprep.subr.mxu0 0.0
    %5057 = vmatpush1.msra.mxu0 0.0
    %5058 = vmatprep.subr.mxu0 0.0
    %5059 = vmatpush1.msra.mxu0 0.0
    %5060 = vmatprep.subr.mxu0 0.0
    %5061 = vmatpush1.msra.mxu0 0.0
    %5062 = vmatprep.subr.mxu0 0.0
    %5063 = vmatpush1.msra.mxu0 0.0
    %5064 = vmatprep.subr.mxu0 0.0
    %5065 = vmatpush1.msra.mxu0 0.0
    %5066 = vmatprep.subr.mxu0 0.0
    %5067 = vmatpush1.msra.mxu0 0.0
    %5068 = vmatprep.subr.mxu0 0.0
    %5069 = vmatpush1.msra.mxu0 0.0
    %5070 = vmatprep.subr.mxu0 0.0
    %5071 = vmatpush1.msra.mxu0 0.0
    %5072 = vmatprep.subr.mxu0 0.0
    %5073 = vmatpush1.msra.mxu0 0.0
    %5074 = vmatprep.subr.mxu0 0.0
    %5075 = vmatpush1.msra.mxu0 0.0
    %5076 = vmatprep.subr.mxu0 0.0
    %5077 = vmatpush1.msra.mxu0 0.0
    %5078 = vmatprep.subr.mxu0 0.0
    %5079 = vmatpush1.msra.mxu0 0.0
    %5080 = vmatprep.subr.mxu0 0.0
    %5081 = vmatpush1.msra.mxu0 0.0
    %5082 = vmatprep.subr.mxu0 0.0
    %5083 = vmatpush1.msra.mxu0 0.0
    %5084 = vmatprep.subr.mxu0 0.0
    %5085 = vmatpush1.msra.mxu0 0.0
    %5086 = vmatprep.subr.mxu0 0.0
    %5087 = vmatpush1.msra.mxu0 0.0
    %5088 = vmatprep.subr.mxu0 0.0
    %5089 = vmatpush1.msra.mxu0 0.0
    %5090 = vmatprep.subr.mxu0 0.0
    %5091 = vmatpush1.msra.mxu0 0.0
    %5092 = vmatprep.mubr.f32.mxu0 0.0
    %5093 = vmatmul.mubr.f32.gmra.mrb[0].mxu0 %v4884
    %v5094 = vpop.f32.mrb[0].mxu0
    %v5095 = vadd.f32 0.0, %v5094
    %v5096 = vpop.f32.mrb[0].mxu0
    %v5097 = vadd.f32 0.0, %v5096
    %5098 = vdwg.mxu0
    %5099 = vmatprep.subr.mxu0 %v4856
    %5100 = vmatpush1.msra.mxu0 %v4855
    %5101 = vmatprep.subr.mxu0 %v4864
    %5102 = vmatpush1.msra.mxu0 %v4863
    %5103 = vmatprep.subr.mxu0 %v4872
    %5104 = vmatpush1.msra.mxu0 %v4871
    %5105 = vmatprep.subr.mxu0 %v4880
    %5106 = vmatpush1.msra.mxu0 %v4879
    %5107 = vmatprep.subr.mxu0 0.0
    %5108 = vmatpush1.msra.mxu0 0.0
    %5109 = vmatprep.subr.mxu0 0.0
    %5110 = vmatpush1.msra.mxu0 0.0
    %5111 = vmatprep.subr.mxu0 0.0
    %5112 = vmatpush1.msra.mxu0 0.0
    %5113 = vmatprep.subr.mxu0 0.0
    %5114 = vmatpush1.msra.mxu0 0.0
    %5115 = vmatprep.subr.mxu0 0.0
    %5116 = vmatpush1.msra.mxu0 0.0
    %5117 = vmatprep.subr.mxu0 0.0
    %5118 = vmatpush1.msra.mxu0 0.0
    %5119 = vmatprep.subr.mxu0 0.0
    %5120 = vmatpush1.msra.mxu0 0.0
    %5121 = vmatprep.subr.mxu0 0.0
    %5122 = vmatpush1.msra.mxu0 0.0
    %5123 = vmatprep.subr.mxu0 0.0
    %5124 = vmatpush1.msra.mxu0 0.0
    %5125 = vmatprep.subr.mxu0 0.0
    %5126 = vmatpush1.msra.mxu0 0.0
    %5127 = vmatprep.subr.mxu0 0.0
    %5128 = vmatpush1.msra.mxu0 0.0
    %5129 = vmatprep.subr.mxu0 0.0
    %5130 = vmatpush1.msra.mxu0 0.0
    %5131 = vmatprep.subr.mxu0 0.0
    %5132 = vmatpush1.msra.mxu0 0.0
    %5133 = vmatprep.subr.mxu0 0.0
    %5134 = vmatpush1.msra.mxu0 0.0
    %5135 = vmatprep.subr.mxu0 0.0
    %5136 = vmatpush1.msra.mxu0 0.0
    %5137 = vmatprep.subr.mxu0 0.0
    %5138 = vmatpush1.msra.mxu0 0.0
    %5139 = vmatprep.subr.mxu0 0.0
    %5140 = vmatpush1.msra.mxu0 0.0
    %5141 = vmatprep.subr.mxu0 0.0
    %5142 = vmatpush1.msra.mxu0 0.0
    %5143 = vmatprep.subr.mxu0 0.0
    %5144 = vmatpush1.msra.mxu0 0.0
    %5145 = vmatprep.subr.mxu0 0.0
    %5146 = vmatpush1.msra.mxu0 0.0
    %5147 = vmatprep.subr.mxu0 0.0
    %5148 = vmatpush1.msra.mxu0 0.0
    %5149 = vmatprep.subr.mxu0 0.0
    %5150 = vmatpush1.msra.mxu0 0.0
    %5151 = vmatprep.subr.mxu0 0.0
    %5152 = vmatpush1.msra.mxu0 0.0
    %5153 = vmatprep.subr.mxu0 0.0
    %5154 = vmatpush1.msra.mxu0 0.0
    %5155 = vmatprep.subr.mxu0 0.0
    %5156 = vmatpush1.msra.mxu0 0.0
    %5157 = vmatprep.subr.mxu0 0.0
    %5158 = vmatpush1.msra.mxu0 0.0
    %5159 = vmatprep.subr.mxu0 0.0
    %5160 = vmatpush1.msra.mxu0 0.0
    %5161 = vmatprep.subr.mxu0 0.0
    %5162 = vmatpush1.msra.mxu0 0.0
    %5163 = vmatprep.mubr.f32.mxu0 0.0
    %5164 = vmatmul.mubr.f32.gmra.mrb[0].mxu0 %v4884
    %v5165 = vpop.f32.mrb[0].mxu0
    %v5166 = vadd.f32 0.0, %v5165
    %v5167 = vpop.f32.mrb[0].mxu0
    %v5168 = vadd.f32 0.0, %v5167
    %5169 = vdwg.mxu0
    %v5170 = vadd.f32 %v4841, %v4953
    %v5171 = vadd.f32 %v4842, %v4955
    %v5172 = vadd.f32 %v4843, %v5024
    %v5173 = vadd.f32 %v4844, %v5026
    %v5174 = vadd.f32 %v4845, %v5095
    %v5175 = vadd.f32 %v4846, %v5097
    %v5176 = vadd.f32 %v4847, %v5166
    %v5177 = vadd.f32 %v4848, %v5168
    %v5178 = vld [vmem:[%s10] sm:$0xff]
    %v5180 = vlaneseq
    %v5181 = vshrl.u32 %v5180, 7
    %v5182 = vsub.s32 0, %v5181
    %v5183 = vrot.slane %v5178, %v5182
    %v5184 = vlaneseq
    %v5185 = vshrl.u32 %v5184, 7
    %v5186 = vsub.s32 1, %v5185
    %v5187 = vrot.slane %v5178, %v5186
    %v5188 = vlaneseq
    %v5189 = vshrl.u32 %v5188, 7
    %v5190 = vsub.s32 2, %v5189
    %v5191 = vrot.slane %v5178, %v5190
    %v5192 = vlaneseq
    %v5193 = vshrl.u32 %v5192, 7
    %v5194 = vsub.s32 3, %v5193
    %v5195 = vrot.slane %v5178, %v5194
    %v5196 = vlaneseq
    %v5197 = vshrl.u32 %v5196, 7
    %v5198 = vsub.s32 4, %v5197
    %v5199 = vrot.slane %v5178, %v5198
    %v5200 = vlaneseq
    %v5201 = vshrl.u32 %v5200, 7
    %v5202 = vsub.s32 5, %v5201
    %v5203 = vrot.slane %v5178, %v5202
    %v5204 = vlaneseq
    %v5205 = vshrl.u32 %v5204, 7
    %v5206 = vsub.s32 6, %v5205
    %v5207 = vrot.slane %v5178, %v5206
    %v5208 = vlaneseq
    %v5209 = vshrl.u32 %v5208, 7
    %v5210 = vsub.s32 7, %v5209
    %v5211 = vrot.slane %v5178, %v5210
    %v5220 = vadd.f32 %v5170, %v5183
    %v5221 = vadd.f32 %v5171, %v5187
    %v5222 = vadd.f32 %v5172, %v5191
    %v5223 = vadd.f32 %v5173, %v5195
    %v5224 = vadd.f32 %v5174, %v5199
    %v5225 = vadd.f32 %v5175, %v5203
    %v5226 = vadd.f32 %v5176, %v5207
    %v5227 = vadd.f32 %v5177, %v5211
    %v5236 = vcombine.low %v5220, %v5221
    %v5237 = vcombine.low %v5222, %v5223
    %v5239 = vunpack.c.l.s4 1983009808
    %v5240 = vunpack.c.0.s8 %v5239
    %v5241 = vlaneseq
    %v5242 = vshrl.u32 %v5241, 7
    %v5243 = vsub.s32 %v5240, %v5242
    %v5244 = vrot.slane %v5236, %v5243
    %v5246 = vunpack.c.l.s4 1983009808
    %v5247 = vunpack.c.0.s8 %v5246
    %v5248 = vlaneseq
    %v5249 = vshrl.u32 %v5248, 7
    %v5250 = vsub.s32 %v5247, %v5249
    %v5251 = vrot.slane %v5237, %v5250
    %v5252 = vcombine.low %v5244, %v5251
    %v5253 = vcombine.low %v5224, %v5225
    %v5254 = vcombine.low %v5226, %v5227
    %v5256 = vunpack.c.l.s4 1983009808
    %v5257 = vunpack.c.0.s8 %v5256
    %v5258 = vlaneseq
    %v5259 = vshrl.u32 %v5258, 7
    %v5260 = vsub.s32 %v5257, %v5259
    %v5261 = vrot.slane %v5253, %v5260
    %v5263 = vunpack.c.l.s4 1983009808
    %v5264 = vunpack.c.0.s8 %v5263
    %v5265 = vlaneseq
    %v5266 = vshrl.u32 %v5265, 7
    %v5267 = vsub.s32 %v5264, %v5266
    %v5268 = vrot.slane %v5254, %v5267
    %v5269 = vcombine.low %v5261, %v5268
    %5272 = vst [vmem:[#allocation16] sm:$0xff] %v5252
    %5273 = vst [vmem:[#allocation16 + $0x8] sm:$0xff] %v5269
    // Predicated region
    $region74: #{tpu_custom_call.1} parent=1 // pred_check
      _
    $region75: #{tpu_custom_call.1} parent=1 // pred_check_branch
      %5275 = sbr.rel (0) target = $region77
    $region76: #{tpu_custom_call.1} parent=1 // pred_region
      %s5277 = ssub.s32 256, 256
      %5278 = vsyncadd [#allocation6], %s5277
      %s5280 = sshll.u32 [#allocation16], 4
      %s5281 = int_to_ptr.vmem [resolvable:$true] %s5280
      %5283 = dma.vmem_to_hbm [thread:$0]  %s5281, 256, %s11, [#allocation6]
    $region77: #{tpu_custom_call.1} parent=1 // pred_fallthru
      _
    // Predicated region
    $region78: #{tpu_custom_call.1} parent=1 // pred_check
      _
    $region79: #{tpu_custom_call.1} parent=1 // pred_check_branch
      %5285 = sbr.rel (0) target = $region81
    $region80: #{tpu_custom_call.1} parent=1 // pred_region
      %5286 = dma.done [#allocation6], 256
    $region81: #{tpu_custom_call.1} parent=1 // pred_fallthru
      _
    %5287 = vsyncpa [#allocation5], 1
    %5288 = vsyncpa [#allocation8], 1
    %5289 = vsyncpa [#allocation11], 1
    %5290 = vsyncpa [#allocation14], 1
    %5291 = vsyncpa [#allocation6], 1

</llo_original>
